<compile_context>
chip_gen: v6e
topology: v6e:2x2x1
jax: 0.10.0
libtpu: 0.0.40
codegen_flags: <defaults>
</compile_context>

<pallas_src>
import functools
import math

import jax
import jax.numpy as jnp
from jax.experimental import pallas as pl
from jax.experimental.pallas import tpu as pltpu

BN_EPS = 1e-5
CHANNELS = (16, 24, 32, 40, 48, 56, 64)
BOTTLENECK = 16


# ---------------------------------------------------------------------------
# Static architecture description (mirrors ECGAutoEncoder.forward exactly)
# ---------------------------------------------------------------------------
def _conv(cin, cout, k, act="relu", bn=False, pad=None):
    return dict(op="conv", cin=cin, cout=cout, k=k,
                pad=(k // 2 if pad is None else pad), act=act, bn=bn)


def build_arch(channels=CHANNELS, bottleneck=BOTTLENECK, batch_norm=True):
    c = channels
    a = []
    # ------------------------------ encoder ------------------------------
    a.append(_conv(2, c[0], 7, bn=batch_norm))                 # conv1 (+BN)
    a.append(_conv(c[0], c[1], 7))                             # conv2
    for i, k in ((1, 5), (2, 5), (3, 5), (4, 3), (5, 3)):      # down1..down5
        a.append(_conv(c[i], c[i + 1], k))
        a.append(_conv(c[i + 1], c[i + 1], k))
        a.append(dict(op="pool"))
    a.append(_conv(c[6], c[6], 3, bn=batch_norm))              # conv3 (+BN)
    a.append(_conv(c[6], c[6], 3))                             # conv4
    a.append(_conv(c[6], bottleneck, 4, act="tanh", pad=0))    # bottleneck+tanh
    a.append(dict(op="emb"))                                   # emit embedding
    # ------------------------------ decoder ------------------------------
    a.append(_conv(bottleneck, c[6], 1, pad=0))                # bottleneck+relu
    for ci, co, k in ((c[6], c[6], 3), (c[6], c[5], 3), (c[5], c[4], 3)):
        a.append(dict(op="up"))                                # up1..up3
        a.append(_conv(ci, co, k))
        a.append(_conv(co, co, k))
    a.append(_conv(c[4], c[4], 3, bn=batch_norm))              # conv5 (+BN)
    a.append(_conv(c[4], c[4], 3))                             # conv6
    for ci, co, k in ((c[4], c[3], 5), (c[3], c[2], 5)):       # up4..up5
        a.append(dict(op="up"))
        a.append(_conv(ci, co, k))
        a.append(_conv(co, co, k))
    a.append(_conv(c[2], c[2], 3, bn=batch_norm))              # conv7 (+BN)
    a.append(_conv(c[2], c[2], 3))                             # conv8
    for ci, co, k in ((c[2], c[2], 7), (c[2], c[2], 7)):       # up6..up7
        a.append(dict(op="up"))
        a.append(_conv(ci, co, k))
        a.append(_conv(co, co, k))
    a.append(_conv(c[2], c[1], 3, bn=batch_norm))              # conv9 (+BN)
    a.append(_conv(c[1], c[0], 3))                             # conv10
    a.append(_conv(c[0], 2, 1, act="none", pad=0))             # output conv
    return tuple(a)


ARCH = build_arch()


def _trace_lengths(arch, L_in):
    """Static walk of the architecture to get embedding / output lengths."""
    L, L_emb = L_in, None
    for layer in arch:
        if layer["op"] == "conv":
            L = L + 2 * layer["pad"] - layer["k"] + 1
        elif layer["op"] == "pool":
            L = L // 2
        elif layer["op"] == "up":
            L = 2 * L
        elif layer["op"] == "emb":
            L_emb = L
    return L_emb, L


# ---------------------------------------------------------------------------
# Fused Pallas kernel: whole autoencoder for one sample, (C, L) layout
# ---------------------------------------------------------------------------
def _fused_ecg_kernel(x_ref, w_ref, emb_ref, out_ref, *, arch):
    x = x_ref[...].astype(jnp.float32)            # (2, L): channels x length
    L = x.shape[1]
    ci = 0
    for layer in arch:
        op = layer["op"]
        if op == "conv":
            cin, cout, k = layer["cin"], layer["cout"], layer["k"]
            pad, act = layer["pad"], layer["act"]
            if pad:
                z = jnp.zeros((cin, pad), jnp.float32)
                x = jnp.concatenate([z, x, z], axis=1)
            L_out = L + 2 * pad - k + 1
            # im2col: merge the K taps into ONE lane-dense MXU matmul; the
            # appended constant-1 row folds bias + BN shift into the same dot.
            cols = [x[:, t:t + L_out] for t in range(k)]
            cols.append(jnp.ones((1, L_out), jnp.float32))
            xcol = jnp.concatenate(cols, axis=0)           # (k*cin + 1, L_out)
            w = w_ref[ci, 0:cout, 0:k * cin + 1]           # (cout, k*cin + 1)
            y = jnp.dot(w, xcol, preferred_element_type=jnp.float32)
            if act == "relu":
                y = jnp.maximum(y, 0.0)
            elif act == "tanh":
                y = jnp.tanh(y)
            x, L = y, L_out
            ci += 1
        elif op == "pool":
            # MaxPool1d(2): pairwise max, then pick even columns with a 0/1
            # selection matmul (no strided lane slices / sublane reshapes).
            xs = jnp.concatenate([x[:, 1:], x[:, -1:]], axis=1)
            m = jnp.maximum(x, xs)
            Lh = L // 2
            r = jax.lax.broadcasted_iota(jnp.int32, (L, Lh), 0)
            c = jax.lax.broadcasted_iota(jnp.int32, (L, Lh), 1)
            sel = (r == 2 * c).astype(jnp.float32)
            x = jnp.dot(m, sel, preferred_element_type=jnp.float32)
            L = Lh
        elif op == "up":
            # F.interpolate(scale_factor=2, mode='linear', align_corners=False)
            # as a single matmul with a constant (L, 2L) interpolation matrix.
            L2 = 2 * L
            r = jax.lax.broadcasted_iota(jnp.int32, (L, L2), 0).astype(jnp.float32)
            c = jax.lax.broadcasted_iota(jnp.int32, (L, L2), 1).astype(jnp.float32)
            pos = jnp.maximum(c * 0.5 - 0.25, 0.0)
            lo = jnp.floor(pos)
            hi = jnp.minimum(lo + 1.0, float(L - 1))
            frac = pos - lo
            U = (jnp.where(r == lo, 1.0 - frac, 0.0)
                 + jnp.where(r == hi, frac, 0.0))
            x = jnp.dot(x, U, preferred_element_type=jnp.float32)
            L = L2
        elif op == "emb":
            emb_ref[...] = x.astype(emb_ref.dtype)
    out_ref[...] = x.astype(out_ref.dtype)


# ---------------------------------------------------------------------------
# Parameter init: pack all conv weights (BN scale folded in) + bias/shift
# column into a single padded (n_conv, Cout_max, KCin_max+1->256) f32 array.
# ---------------------------------------------------------------------------
def init_ecg_autoencoder(key, arch=ARCH):
    convs = [l for l in arch if l["op"] == "conv"]
    n = len(convs)
    kcin_max = max(l["k"] * l["cin"] for l in convs) + 1       # +1 bias column
    kcin_max = ((kcin_max + 127) // 128) * 128                 # lane-align
    cout_max = ((max(l["cout"] for l in convs) + 7) // 8) * 8  # sublane-align
    w_all = jnp.zeros((n, cout_max, kcin_max), jnp.float32)
    keys = jax.random.split(key, n)
    for i, (l, k) in enumerate(zip(convs, keys)):
        cin, cout, ksz = l["cin"], l["cout"], l["k"]
        kw, kb = jax.random.split(k)
        bound = 1.0 / math.sqrt(cin * ksz)
        w = jax.random.uniform(kw, (cout, cin, ksz), jnp.float32, -bound, bound)
        b = jax.random.uniform(kb, (cout,), jnp.float32, -bound, bound)
        # TODO(synk): BatchNorm1d folded in eval mode (running_mean=0,
        # running_var=1, gamma=1, beta=0) as scale/shift; training-mode batch
        # statistics are not reproduced.
        scale = (1.0 / math.sqrt(1.0 + BN_EPS)) if l["bn"] else 1.0
        w_flat = (w * scale).transpose(0, 2, 1).reshape(cout, ksz * cin)
        shift = b * scale                                       # bias folded in
        w_all = w_all.at[i, :cout, :ksz * cin].set(w_flat)
        w_all = w_all.at[i, :cout, ksz * cin].set(shift)
    return w_all


# ---------------------------------------------------------------------------
# Forward pass (matches ECGAutoEncoder.forward): one pallas_call, grid=(N,)
# ---------------------------------------------------------------------------
def ecg_autoencoder_forward(w_all, x_ncl, arch=ARCH):
    """x_ncl: (N, 2, L) PyTorch NCL layout.  Returns dict of NCL arrays."""
    N, c_in, L = x_ncl.shape
    n_conv, cout_max, kcin_max = w_all.shape
    L_emb, L_out = _trace_lengths(arch, L)
    emb_c = next(l["cout"] for l in arch if l["op"] == "conv" and l["act"] == "tanh")
    out_c = [l["cout"] for l in arch if l["op"] == "conv"][-1]

    kernel = functools.partial(_fused_ecg_kernel, arch=arch)
    emb, out = pl.pallas_call(
        kernel,
        out_shape=(
            jax.ShapeDtypeStruct((N, emb_c, L_emb), jnp.float32),
            jax.ShapeDtypeStruct((N, out_c, L_out), jnp.float32),
        ),
        grid_spec=pltpu.PrefetchScalarGridSpec(
            num_scalar_prefetch=0,
            grid=(N,),
            in_specs=[
                pl.BlockSpec((None, c_in, L), lambda n: (n, 0, 0)),
                pl.BlockSpec((n_conv, cout_max, kcin_max), lambda n: (0, 0, 0)),
            ],
            out_specs=[
                pl.BlockSpec((None, emb_c, L_emb), lambda n: (n, 0, 0)),
                pl.BlockSpec((None, out_c, L_out), lambda n: (n, 0, 0)),
            ],
        ),
        compiler_params=pltpu.CompilerParams(
            dimension_semantics=("parallel",),
            vmem_limit_bytes=32 * 1024 * 1024,
        ),
    )(x_ncl.astype(jnp.float32), w_all)

    return {"bottleneck": emb, "autoencoded": out}


if __name__ == "__main__":
    key = jax.random.PRNGKey(0)
    pkey, xkey = jax.random.split(key)
    w_all = init_ecg_autoencoder(pkey)

    # Smallest length consistent with the architecture: 5 maxpools (÷32) then a
    # valid k=4 conv needs L/32 >= 4  =>  L = 128.  Input is NCL like PyTorch.
    x = jax.random.normal(xkey, (2, 2, 128), jnp.float32)

    out = jax.jit(ecg_autoencoder_forward)(w_all, x)
    out = jax.block_until_ready(out)

    assert out["bottleneck"].shape == (2, 16, 1), out["bottleneck"].shape
    assert out["autoencoded"].shape == (2, 2, 128), out["autoencoded"].shape
    assert out["bottleneck"].dtype == jnp.float32
    assert out["autoencoded"].dtype == jnp.float32
    assert bool(jnp.all(jnp.isfinite(out["autoencoded"])))
    print("KERNEL_OK")
</pallas_src>

<mosaic_0001>
module attributes {stable_mosaic.version = 11 : i64} {
  func.func @_fused_ecg_kernel(%arg0: i32, %arg1: memref<1x2x128xf32, #tpu.memory_space<vmem>>, %arg2: memref<37x64x384xf32, #tpu.memory_space<vmem>>, %arg3: memref<1x16x1xf32, #tpu.memory_space<vmem>>, %arg4: memref<1x2x128xf32, #tpu.memory_space<vmem>>) attributes {dimension_semantics = [#tpu.dimension_semantics<parallel>], iteration_bounds = array<i64: 2>, scalar_prefetch = 0 : i64, scratch_operands = 0 : i64, tpu.core_type = #tpu.core_type<tc>, window_params = [{transform_indices = @transform_0, window_bounds = array<i64: 1, 2, 128>}, {pipeline_mode = #tpu.pipeline_mode<synchronous>, transform_indices = @transform_1, window_bounds = array<i64: 37, 64, 384>}, {transform_indices = @transform_2, window_bounds = array<i64: 1, 16, 1>}, {transform_indices = @transform_3, window_bounds = array<i64: 1, 2, 128>}]} {
    %c0 = arith.constant 0 : index
    %c0_0 = arith.constant 0 : index
    %c0_1 = arith.constant 0 : index
    %0 = vector.load %arg1[%c0, %c0_0, %c0_1] : memref<1x2x128xf32, #tpu.memory_space<vmem>>, vector<1x2x128xf32>
    %1 = vector.shape_cast %0 : vector<1x2x128xf32> to vector<2x128xf32>
    %cst = arith.constant 0.000000e+00 : f32
    %2 = vector.broadcast %cst : f32 to vector<2x3xf32>
    %3 = tpu.concatenate %2, %1, %2 in 1 : vector<2x3xf32>, vector<2x128xf32>, vector<2x3xf32> -> vector<2x134xf32>
    %4 = vector.extract_strided_slice %3 {offsets = [0, 0], sizes = [2, 128], strides = [1, 1]} : vector<2x134xf32> to vector<2x128xf32>
    %5 = vector.extract_strided_slice %3 {offsets = [0, 1], sizes = [2, 128], strides = [1, 1]} : vector<2x134xf32> to vector<2x128xf32>
    %6 = vector.extract_strided_slice %3 {offsets = [0, 2], sizes = [2, 128], strides = [1, 1]} : vector<2x134xf32> to vector<2x128xf32>
    %7 = vector.extract_strided_slice %3 {offsets = [0, 3], sizes = [2, 128], strides = [1, 1]} : vector<2x134xf32> to vector<2x128xf32>
    %8 = vector.extract_strided_slice %3 {offsets = [0, 4], sizes = [2, 128], strides = [1, 1]} : vector<2x134xf32> to vector<2x128xf32>
    %9 = vector.extract_strided_slice %3 {offsets = [0, 5], sizes = [2, 128], strides = [1, 1]} : vector<2x134xf32> to vector<2x128xf32>
    %10 = vector.extract_strided_slice %3 {offsets = [0, 6], sizes = [2, 128], strides = [1, 1]} : vector<2x134xf32> to vector<2x128xf32>
    %cst_2 = arith.constant 1.000000e+00 : f32
    %11 = vector.broadcast %cst_2 : f32 to vector<1x128xf32>
    %12 = tpu.concatenate %4, %5, %6, %7, %8, %9, %10, %11 in 0 : vector<2x128xf32>, vector<2x128xf32>, vector<2x128xf32>, vector<2x128xf32>, vector<2x128xf32>, vector<2x128xf32>, vector<2x128xf32>, vector<1x128xf32> -> vector<15x128xf32>
    %c0_3 = arith.constant 0 : index
    %c0_4 = arith.constant 0 : index
    %c0_5 = arith.constant 0 : index
    %13 = vector.load %arg2[%c0_3, %c0_4, %c0_5] : memref<37x64x384xf32, #tpu.memory_space<vmem>>, vector<1x16x15xf32>
    %14 = vector.shape_cast %13 : vector<1x16x15xf32> to vector<16x15xf32>
    %cst_6 = arith.constant dense<0.000000e+00> : vector<16x128xf32>
    %15 = tpu.matmul %14, %12, %cst_6 {dimension_numbers = #tpu.dot_dimension_numbers<[1], [0], [0], [1], [0, 0, 1, 1], [], []>} : vector<16x15xf32>, vector<15x128xf32>, vector<16x128xf32> -> vector<16x128xf32>
    %cst_7 = arith.constant 0.000000e+00 : f32
    %16 = vector.broadcast %cst_7 : f32 to vector<16x128xf32>
    %17 = arith.maximumf %15, %16 : vector<16x128xf32>
    %cst_8 = arith.constant 0.000000e+00 : f32
    %18 = vector.broadcast %cst_8 : f32 to vector<16x3xf32>
    %19 = tpu.concatenate %18, %17, %18 in 1 : vector<16x3xf32>, vector<16x128xf32>, vector<16x3xf32> -> vector<16x134xf32>
    %20 = vector.extract_strided_slice %19 {offsets = [0, 0], sizes = [16, 128], strides = [1, 1]} : vector<16x134xf32> to vector<16x128xf32>
    %21 = vector.extract_strided_slice %19 {offsets = [0, 1], sizes = [16, 128], strides = [1, 1]} : vector<16x134xf32> to vector<16x128xf32>
    %22 = vector.extract_strided_slice %19 {offsets = [0, 2], sizes = [16, 128], strides = [1, 1]} : vector<16x134xf32> to vector<16x128xf32>
    %23 = vector.extract_strided_slice %19 {offsets = [0, 3], sizes = [16, 128], strides = [1, 1]} : vector<16x134xf32> to vector<16x128xf32>
    %24 = vector.extract_strided_slice %19 {offsets = [0, 4], sizes = [16, 128], strides = [1, 1]} : vector<16x134xf32> to vector<16x128xf32>
    %25 = vector.extract_strided_slice %19 {offsets = [0, 5], sizes = [16, 128], strides = [1, 1]} : vector<16x134xf32> to vector<16x128xf32>
    %26 = vector.extract_strided_slice %19 {offsets = [0, 6], sizes = [16, 128], strides = [1, 1]} : vector<16x134xf32> to vector<16x128xf32>
    %cst_9 = arith.constant 1.000000e+00 : f32
    %27 = vector.broadcast %cst_9 : f32 to vector<1x128xf32>
    %28 = tpu.concatenate %20, %21, %22, %23, %24, %25, %26, %27 in 0 : vector<16x128xf32>, vector<16x128xf32>, vector<16x128xf32>, vector<16x128xf32>, vector<16x128xf32>, vector<16x128xf32>, vector<16x128xf32>, vector<1x128xf32> -> vector<113x128xf32>
    %c1 = arith.constant 1 : index
    %c0_10 = arith.constant 0 : index
    %c0_11 = arith.constant 0 : index
    %29 = vector.load %arg2[%c1, %c0_10, %c0_11] : memref<37x64x384xf32, #tpu.memory_space<vmem>>, vector<1x24x113xf32>
    %30 = vector.shape_cast %29 : vector<1x24x113xf32> to vector<24x113xf32>
    %cst_12 = arith.constant dense<0.000000e+00> : vector<24x128xf32>
    %31 = tpu.matmul %30, %28, %cst_12 {dimension_numbers = #tpu.dot_dimension_numbers<[1], [0], [0], [1], [0, 0, 1, 1], [], []>} : vector<24x113xf32>, vector<113x128xf32>, vector<24x128xf32> -> vector<24x128xf32>
    %cst_13 = arith.constant 0.000000e+00 : f32
    %32 = vector.broadcast %cst_13 : f32 to vector<24x128xf32>
    %33 = arith.maximumf %31, %32 : vector<24x128xf32>
    %cst_14 = arith.constant 0.000000e+00 : f32
    %34 = vector.broadcast %cst_14 : f32 to vector<24x2xf32>
    %35 = tpu.concatenate %34, %33, %34 in 1 : vector<24x2xf32>, vector<24x128xf32>, vector<24x2xf32> -> vector<24x132xf32>
    %36 = vector.extract_strided_slice %35 {offsets = [0, 0], sizes = [24, 128], strides = [1, 1]} : vector<24x132xf32> to vector<24x128xf32>
    %37 = vector.extract_strided_slice %35 {offsets = [0, 1], sizes = [24, 128], strides = [1, 1]} : vector<24x132xf32> to vector<24x128xf32>
    %38 = vector.extract_strided_slice %35 {offsets = [0, 2], sizes = [24, 128], strides = [1, 1]} : vector<24x132xf32> to vector<24x128xf32>
    %39 = vector.extract_strided_slice %35 {offsets = [0, 3], sizes = [24, 128], strides = [1, 1]} : vector<24x132xf32> to vector<24x128xf32>
    %40 = vector.extract_strided_slice %35 {offsets = [0, 4], sizes = [24, 128], strides = [1, 1]} : vector<24x132xf32> to vector<24x128xf32>
    %cst_15 = arith.constant 1.000000e+00 : f32
    %41 = vector.broadcast %cst_15 : f32 to vector<1x128xf32>
    %42 = tpu.concatenate %36, %37, %38, %39, %40, %41 in 0 : vector<24x128xf32>, vector<24x128xf32>, vector<24x128xf32>, vector<24x128xf32>, vector<24x128xf32>, vector<1x128xf32> -> vector<121x128xf32>
    %c2 = arith.constant 2 : index
    %c0_16 = arith.constant 0 : index
    %c0_17 = arith.constant 0 : index
    %43 = vector.load %arg2[%c2, %c0_16, %c0_17] : memref<37x64x384xf32, #tpu.memory_space<vmem>>, vector<1x32x121xf32>
    %44 = vector.shape_cast %43 : vector<1x32x121xf32> to vector<32x121xf32>
    %cst_18 = arith.constant dense<0.000000e+00> : vector<32x128xf32>
    %45 = tpu.matmul %44, %42, %cst_18 {dimension_numbers = #tpu.dot_dimension_numbers<[1], [0], [0], [1], [0, 0, 1, 1], [], []>} : vector<32x121xf32>, vector<121x128xf32>, vector<32x128xf32> -> vector<32x128xf32>
    %cst_19 = arith.constant 0.000000e+00 : f32
    %46 = vector.broadcast %cst_19 : f32 to vector<32x128xf32>
    %47 = arith.maximumf %45, %46 : vector<32x128xf32>
    %cst_20 = arith.constant 0.000000e+00 : f32
    %48 = vector.broadcast %cst_20 : f32 to vector<32x2xf32>
    %49 = tpu.concatenate %48, %47, %48 in 1 : vector<32x2xf32>, vector<32x128xf32>, vector<32x2xf32> -> vector<32x132xf32>
    %50 = vector.extract_strided_slice %49 {offsets = [0, 0], sizes = [32, 128], strides = [1, 1]} : vector<32x132xf32> to vector<32x128xf32>
    %51 = vector.extract_strided_slice %49 {offsets = [0, 1], sizes = [32, 128], strides = [1, 1]} : vector<32x132xf32> to vector<32x128xf32>
    %52 = vector.extract_strided_slice %49 {offsets = [0, 2], sizes = [32, 128], strides = [1, 1]} : vector<32x132xf32> to vector<32x128xf32>
    %53 = vector.extract_strided_slice %49 {offsets = [0, 3], sizes = [32, 128], strides = [1, 1]} : vector<32x132xf32> to vector<32x128xf32>
    %54 = vector.extract_strided_slice %49 {offsets = [0, 4], sizes = [32, 128], strides = [1, 1]} : vector<32x132xf32> to vector<32x128xf32>
    %cst_21 = arith.constant 1.000000e+00 : f32
    %55 = vector.broadcast %cst_21 : f32 to vector<1x128xf32>
    %56 = tpu.concatenate %50, %51, %52, %53, %54, %55 in 0 : vector<32x128xf32>, vector<32x128xf32>, vector<32x128xf32>, vector<32x128xf32>, vector<32x128xf32>, vector<1x128xf32> -> vector<161x128xf32>
    %c3 = arith.constant 3 : index
    %c0_22 = arith.constant 0 : index
    %c0_23 = arith.constant 0 : index
    %57 = vector.load %arg2[%c3, %c0_22, %c0_23] : memref<37x64x384xf32, #tpu.memory_space<vmem>>, vector<1x32x161xf32>
    %58 = vector.shape_cast %57 : vector<1x32x161xf32> to vector<32x161xf32>
    %cst_24 = arith.constant dense<0.000000e+00> : vector<32x128xf32>
    %59 = tpu.matmul %58, %56, %cst_24 {dimension_numbers = #tpu.dot_dimension_numbers<[1], [0], [0], [1], [0, 0, 1, 1], [], []>} : vector<32x161xf32>, vector<161x128xf32>, vector<32x128xf32> -> vector<32x128xf32>
    %cst_25 = arith.constant 0.000000e+00 : f32
    %60 = vector.broadcast %cst_25 : f32 to vector<32x128xf32>
    %61 = arith.maximumf %59, %60 : vector<32x128xf32>
    %62 = vector.extract_strided_slice %61 {offsets = [0, 1], sizes = [32, 127], strides = [1, 1]} : vector<32x128xf32> to vector<32x127xf32>
    %63 = vector.extract_strided_slice %61 {offsets = [0, 127], sizes = [32, 1], strides = [1, 1]} : vector<32x128xf32> to vector<32x1xf32>
    %64 = tpu.concatenate %62, %63 in 1 : vector<32x127xf32>, vector<32x1xf32> -> vector<32x128xf32>
    %65 = arith.maximumf %61, %64 : vector<32x128xf32>
    %66 = tpu.iota {dimensions = array<i32: 0>} : vector<128x64xi32>
    %67 = tpu.iota {dimensions = array<i32: 1>} : vector<128x64xi32>
    %c2_i32 = arith.constant 2 : i32
    %68 = vector.broadcast %c2_i32 : i32 to vector<128x64xi32>
    %69 = arith.muli %68, %67 : vector<128x64xi32>
    %70 = arith.cmpi eq, %66, %69 : vector<128x64xi32>
    %71 = arith.extui %70 : vector<128x64xi1> to vector<128x64xi32>
    %72 = arith.sitofp %71 : vector<128x64xi32> to vector<128x64xf32>
    %cst_26 = arith.constant dense<0.000000e+00> : vector<32x64xf32>
    %73 = tpu.matmul %65, %72, %cst_26 {dimension_numbers = #tpu.dot_dimension_numbers<[1], [0], [0], [1], [0, 0, 1, 1], [], []>} : vector<32x128xf32>, vector<128x64xf32>, vector<32x64xf32> -> vector<32x64xf32>
    %cst_27 = arith.constant 0.000000e+00 : f32
    %74 = vector.broadcast %cst_27 : f32 to vector<32x2xf32>
    %75 = tpu.concatenate %74, %73, %74 in 1 : vector<32x2xf32>, vector<32x64xf32>, vector<32x2xf32> -> vector<32x68xf32>
    %76 = vector.extract_strided_slice %75 {offsets = [0, 0], sizes = [32, 64], strides = [1, 1]} : vector<32x68xf32> to vector<32x64xf32>
    %77 = vector.extract_strided_slice %75 {offsets = [0, 1], sizes = [32, 64], strides = [1, 1]} : vector<32x68xf32> to vector<32x64xf32>
    %78 = vector.extract_strided_slice %75 {offsets = [0, 2], sizes = [32, 64], strides = [1, 1]} : vector<32x68xf32> to vector<32x64xf32>
    %79 = vector.extract_strided_slice %75 {offsets = [0, 3], sizes = [32, 64], strides = [1, 1]} : vector<32x68xf32> to vector<32x64xf32>
    %80 = vector.extract_strided_slice %75 {offsets = [0, 4], sizes = [32, 64], strides = [1, 1]} : vector<32x68xf32> to vector<32x64xf32>
    %cst_28 = arith.constant 1.000000e+00 : f32
    %81 = vector.broadcast %cst_28 : f32 to vector<1x64xf32>
    %82 = tpu.concatenate %76, %77, %78, %79, %80, %81 in 0 : vector<32x64xf32>, vector<32x64xf32>, vector<32x64xf32>, vector<32x64xf32>, vector<32x64xf32>, vector<1x64xf32> -> vector<161x64xf32>
    %c4 = arith.constant 4 : index
    %c0_29 = arith.constant 0 : index
    %c0_30 = arith.constant 0 : index
    %83 = vector.load %arg2[%c4, %c0_29, %c0_30] : memref<37x64x384xf32, #tpu.memory_space<vmem>>, vector<1x40x161xf32>
    %84 = vector.shape_cast %83 : vector<1x40x161xf32> to vector<40x161xf32>
    %cst_31 = arith.constant dense<0.000000e+00> : vector<40x64xf32>
    %85 = tpu.matmul %84, %82, %cst_31 {dimension_numbers = #tpu.dot_dimension_numbers<[1], [0], [0], [1], [0, 0, 1, 1], [], []>} : vector<40x161xf32>, vector<161x64xf32>, vector<40x64xf32> -> vector<40x64xf32>
    %cst_32 = arith.constant 0.000000e+00 : f32
    %86 = vector.broadcast %cst_32 : f32 to vector<40x64xf32>
    %87 = arith.maximumf %85, %86 : vector<40x64xf32>
    %cst_33 = arith.constant 0.000000e+00 : f32
    %88 = vector.broadcast %cst_33 : f32 to vector<40x2xf32>
    %89 = tpu.concatenate %88, %87, %88 in 1 : vector<40x2xf32>, vector<40x64xf32>, vector<40x2xf32> -> vector<40x68xf32>
    %90 = vector.extract_strided_slice %89 {offsets = [0, 0], sizes = [40, 64], strides = [1, 1]} : vector<40x68xf32> to vector<40x64xf32>
    %91 = vector.extract_strided_slice %89 {offsets = [0, 1], sizes = [40, 64], strides = [1, 1]} : vector<40x68xf32> to vector<40x64xf32>
    %92 = vector.extract_strided_slice %89 {offsets = [0, 2], sizes = [40, 64], strides = [1, 1]} : vector<40x68xf32> to vector<40x64xf32>
    %93 = vector.extract_strided_slice %89 {offsets = [0, 3], sizes = [40, 64], strides = [1, 1]} : vector<40x68xf32> to vector<40x64xf32>
    %94 = vector.extract_strided_slice %89 {offsets = [0, 4], sizes = [40, 64], strides = [1, 1]} : vector<40x68xf32> to vector<40x64xf32>
    %cst_34 = arith.constant 1.000000e+00 : f32
    %95 = vector.broadcast %cst_34 : f32 to vector<1x64xf32>
    %96 = tpu.concatenate %90, %91, %92, %93, %94, %95 in 0 : vector<40x64xf32>, vector<40x64xf32>, vector<40x64xf32>, vector<40x64xf32>, vector<40x64xf32>, vector<1x64xf32> -> vector<201x64xf32>
    %c5 = arith.constant 5 : index
    %c0_35 = arith.constant 0 : index
    %c0_36 = arith.constant 0 : index
    %97 = vector.load %arg2[%c5, %c0_35, %c0_36] : memref<37x64x384xf32, #tpu.memory_space<vmem>>, vector<1x40x201xf32>
    %98 = vector.shape_cast %97 : vector<1x40x201xf32> to vector<40x201xf32>
    %cst_37 = arith.constant dense<0.000000e+00> : vector<40x64xf32>
    %99 = tpu.matmul %98, %96, %cst_37 {dimension_numbers = #tpu.dot_dimension_numbers<[1], [0], [0], [1], [0, 0, 1, 1], [], []>} : vector<40x201xf32>, vector<201x64xf32>, vector<40x64xf32> -> vector<40x64xf32>
    %cst_38 = arith.constant 0.000000e+00 : f32
    %100 = vector.broadcast %cst_38 : f32 to vector<40x64xf32>
    %101 = arith.maximumf %99, %100 : vector<40x64xf32>
    %102 = vector.extract_strided_slice %101 {offsets = [0, 1], sizes = [40, 63], strides = [1, 1]} : vector<40x64xf32> to vector<40x63xf32>
    %103 = vector.extract_strided_slice %101 {offsets = [0, 63], sizes = [40, 1], strides = [1, 1]} : vector<40x64xf32> to vector<40x1xf32>
    %104 = tpu.concatenate %102, %103 in 1 : vector<40x63xf32>, vector<40x1xf32> -> vector<40x64xf32>
    %105 = arith.maximumf %101, %104 : vector<40x64xf32>
    %106 = tpu.iota {dimensions = array<i32: 0>} : vector<64x32xi32>
    %107 = tpu.iota {dimensions = array<i32: 1>} : vector<64x32xi32>
    %c2_i32_39 = arith.constant 2 : i32
    %108 = vector.broadcast %c2_i32_39 : i32 to vector<64x32xi32>
    %109 = arith.muli %108, %107 : vector<64x32xi32>
    %110 = arith.cmpi eq, %106, %109 : vector<64x32xi32>
    %111 = arith.extui %110 : vector<64x32xi1> to vector<64x32xi32>
    %112 = arith.sitofp %111 : vector<64x32xi32> to vector<64x32xf32>
    %cst_40 = arith.constant dense<0.000000e+00> : vector<40x32xf32>
    %113 = tpu.matmul %105, %112, %cst_40 {dimension_numbers = #tpu.dot_dimension_numbers<[1], [0], [0], [1], [0, 0, 1, 1], [], []>} : vector<40x64xf32>, vector<64x32xf32>, vector<40x32xf32> -> vector<40x32xf32>
    %cst_41 = arith.constant 0.000000e+00 : f32
    %114 = vector.broadcast %cst_41 : f32 to vector<40x2xf32>
    %115 = tpu.concatenate %114, %113, %114 in 1 : vector<40x2xf32>, vector<40x32xf32>, vector<40x2xf32> -> vector<40x36xf32>
    %116 = vector.extract_strided_slice %115 {offsets = [0, 0], sizes = [40, 32], strides = [1, 1]} : vector<40x36xf32> to vector<40x32xf32>
    %117 = vector.extract_strided_slice %115 {offsets = [0, 1], sizes = [40, 32], strides = [1, 1]} : vector<40x36xf32> to vector<40x32xf32>
    %118 = vector.extract_strided_slice %115 {offsets = [0, 2], sizes = [40, 32], strides = [1, 1]} : vector<40x36xf32> to vector<40x32xf32>
    %119 = vector.extract_strided_slice %115 {offsets = [0, 3], sizes = [40, 32], strides = [1, 1]} : vector<40x36xf32> to vector<40x32xf32>
    %120 = vector.extract_strided_slice %115 {offsets = [0, 4], sizes = [40, 32], strides = [1, 1]} : vector<40x36xf32> to vector<40x32xf32>
    %cst_42 = arith.constant 1.000000e+00 : f32
    %121 = vector.broadcast %cst_42 : f32 to vector<1x32xf32>
    %122 = tpu.concatenate %116, %117, %118, %119, %120, %121 in 0 : vector<40x32xf32>, vector<40x32xf32>, vector<40x32xf32>, vector<40x32xf32>, vector<40x32xf32>, vector<1x32xf32> -> vector<201x32xf32>
    %c6 = arith.constant 6 : index
    %c0_43 = arith.constant 0 : index
    %c0_44 = arith.constant 0 : index
    %123 = vector.load %arg2[%c6, %c0_43, %c0_44] : memref<37x64x384xf32, #tpu.memory_space<vmem>>, vector<1x48x201xf32>
    %124 = vector.shape_cast %123 : vector<1x48x201xf32> to vector<48x201xf32>
    %cst_45 = arith.constant dense<0.000000e+00> : vector<48x32xf32>
    %125 = tpu.matmul %124, %122, %cst_45 {dimension_numbers = #tpu.dot_dimension_numbers<[1], [0], [0], [1], [0, 0, 1, 1], [], []>} : vector<48x201xf32>, vector<201x32xf32>, vector<48x32xf32> -> vector<48x32xf32>
    %cst_46 = arith.constant 0.000000e+00 : f32
    %126 = vector.broadcast %cst_46 : f32 to vector<48x32xf32>
    %127 = arith.maximumf %125, %126 : vector<48x32xf32>
    %cst_47 = arith.constant 0.000000e+00 : f32
    %128 = vector.broadcast %cst_47 : f32 to vector<48x2xf32>
    %129 = tpu.concatenate %128, %127, %128 in 1 : vector<48x2xf32>, vector<48x32xf32>, vector<48x2xf32> -> vector<48x36xf32>
    %130 = vector.extract_strided_slice %129 {offsets = [0, 0], sizes = [48, 32], strides = [1, 1]} : vector<48x36xf32> to vector<48x32xf32>
    %131 = vector.extract_strided_slice %129 {offsets = [0, 1], sizes = [48, 32], strides = [1, 1]} : vector<48x36xf32> to vector<48x32xf32>
    %132 = vector.extract_strided_slice %129 {offsets = [0, 2], sizes = [48, 32], strides = [1, 1]} : vector<48x36xf32> to vector<48x32xf32>
    %133 = vector.extract_strided_slice %129 {offsets = [0, 3], sizes = [48, 32], strides = [1, 1]} : vector<48x36xf32> to vector<48x32xf32>
    %134 = vector.extract_strided_slice %129 {offsets = [0, 4], sizes = [48, 32], strides = [1, 1]} : vector<48x36xf32> to vector<48x32xf32>
    %cst_48 = arith.constant 1.000000e+00 : f32
    %135 = vector.broadcast %cst_48 : f32 to vector<1x32xf32>
    %136 = tpu.concatenate %130, %131, %132, %133, %134, %135 in 0 : vector<48x32xf32>, vector<48x32xf32>, vector<48x32xf32>, vector<48x32xf32>, vector<48x32xf32>, vector<1x32xf32> -> vector<241x32xf32>
    %c7 = arith.constant 7 : index
    %c0_49 = arith.constant 0 : index
    %c0_50 = arith.constant 0 : index
    %137 = vector.load %arg2[%c7, %c0_49, %c0_50] : memref<37x64x384xf32, #tpu.memory_space<vmem>>, vector<1x48x241xf32>
    %138 = vector.shape_cast %137 : vector<1x48x241xf32> to vector<48x241xf32>
    %cst_51 = arith.constant dense<0.000000e+00> : vector<48x32xf32>
    %139 = tpu.matmul %138, %136, %cst_51 {dimension_numbers = #tpu.dot_dimension_numbers<[1], [0], [0], [1], [0, 0, 1, 1], [], []>} : vector<48x241xf32>, vector<241x32xf32>, vector<48x32xf32> -> vector<48x32xf32>
    %cst_52 = arith.constant 0.000000e+00 : f32
    %140 = vector.broadcast %cst_52 : f32 to vector<48x32xf32>
    %141 = arith.maximumf %139, %140 : vector<48x32xf32>
    %142 = vector.extract_strided_slice %141 {offsets = [0, 1], sizes = [48, 31], strides = [1, 1]} : vector<48x32xf32> to vector<48x31xf32>
    %143 = vector.extract_strided_slice %141 {offsets = [0, 31], sizes = [48, 1], strides = [1, 1]} : vector<48x32xf32> to vector<48x1xf32>
    %144 = tpu.concatenate %142, %143 in 1 : vector<48x31xf32>, vector<48x1xf32> -> vector<48x32xf32>
    %145 = arith.maximumf %141, %144 : vector<48x32xf32>
    %146 = tpu.iota {dimensions = array<i32: 0>} : vector<32x16xi32>
    %147 = tpu.iota {dimensions = array<i32: 1>} : vector<32x16xi32>
    %c2_i32_53 = arith.constant 2 : i32
    %148 = vector.broadcast %c2_i32_53 : i32 to vector<32x16xi32>
    %149 = arith.muli %148, %147 : vector<32x16xi32>
    %150 = arith.cmpi eq, %146, %149 : vector<32x16xi32>
    %151 = arith.extui %150 : vector<32x16xi1> to vector<32x16xi32>
    %152 = arith.sitofp %151 : vector<32x16xi32> to vector<32x16xf32>
    %cst_54 = arith.constant dense<0.000000e+00> : vector<48x16xf32>
    %153 = tpu.matmul %145, %152, %cst_54 {dimension_numbers = #tpu.dot_dimension_numbers<[1], [0], [0], [1], [0, 0, 1, 1], [], []>} : vector<48x32xf32>, vector<32x16xf32>, vector<48x16xf32> -> vector<48x16xf32>
    %cst_55 = arith.constant 0.000000e+00 : f32
    %154 = vector.broadcast %cst_55 : f32 to vector<48x1xf32>
    %155 = tpu.concatenate %154, %153, %154 in 1 : vector<48x1xf32>, vector<48x16xf32>, vector<48x1xf32> -> vector<48x18xf32>
    %156 = vector.extract_strided_slice %155 {offsets = [0, 0], sizes = [48, 16], strides = [1, 1]} : vector<48x18xf32> to vector<48x16xf32>
    %157 = vector.extract_strided_slice %155 {offsets = [0, 1], sizes = [48, 16], strides = [1, 1]} : vector<48x18xf32> to vector<48x16xf32>
    %158 = vector.extract_strided_slice %155 {offsets = [0, 2], sizes = [48, 16], strides = [1, 1]} : vector<48x18xf32> to vector<48x16xf32>
    %cst_56 = arith.constant 1.000000e+00 : f32
    %159 = vector.broadcast %cst_56 : f32 to vector<1x16xf32>
    %160 = tpu.concatenate %156, %157, %158, %159 in 0 : vector<48x16xf32>, vector<48x16xf32>, vector<48x16xf32>, vector<1x16xf32> -> vector<145x16xf32>
    %c8 = arith.constant 8 : index
    %c0_57 = arith.constant 0 : index
    %c0_58 = arith.constant 0 : index
    %161 = vector.load %arg2[%c8, %c0_57, %c0_58] : memref<37x64x384xf32, #tpu.memory_space<vmem>>, vector<1x56x145xf32>
    %162 = vector.shape_cast %161 : vector<1x56x145xf32> to vector<56x145xf32>
    %cst_59 = arith.constant dense<0.000000e+00> : vector<56x16xf32>
    %163 = tpu.matmul %162, %160, %cst_59 {dimension_numbers = #tpu.dot_dimension_numbers<[1], [0], [0], [1], [0, 0, 1, 1], [], []>} : vector<56x145xf32>, vector<145x16xf32>, vector<56x16xf32> -> vector<56x16xf32>
    %cst_60 = arith.constant 0.000000e+00 : f32
    %164 = vector.broadcast %cst_60 : f32 to vector<56x16xf32>
    %165 = arith.maximumf %163, %164 : vector<56x16xf32>
    %cst_61 = arith.constant 0.000000e+00 : f32
    %166 = vector.broadcast %cst_61 : f32 to vector<56x1xf32>
    %167 = tpu.concatenate %166, %165, %166 in 1 : vector<56x1xf32>, vector<56x16xf32>, vector<56x1xf32> -> vector<56x18xf32>
    %168 = vector.extract_strided_slice %167 {offsets = [0, 0], sizes = [56, 16], strides = [1, 1]} : vector<56x18xf32> to vector<56x16xf32>
    %169 = vector.extract_strided_slice %167 {offsets = [0, 1], sizes = [56, 16], strides = [1, 1]} : vector<56x18xf32> to vector<56x16xf32>
    %170 = vector.extract_strided_slice %167 {offsets = [0, 2], sizes = [56, 16], strides = [1, 1]} : vector<56x18xf32> to vector<56x16xf32>
    %cst_62 = arith.constant 1.000000e+00 : f32
    %171 = vector.broadcast %cst_62 : f32 to vector<1x16xf32>
    %172 = tpu.concatenate %168, %169, %170, %171 in 0 : vector<56x16xf32>, vector<56x16xf32>, vector<56x16xf32>, vector<1x16xf32> -> vector<169x16xf32>
    %c9 = arith.constant 9 : index
    %c0_63 = arith.constant 0 : index
    %c0_64 = arith.constant 0 : index
    %173 = vector.load %arg2[%c9, %c0_63, %c0_64] : memref<37x64x384xf32, #tpu.memory_space<vmem>>, vector<1x56x169xf32>
    %174 = vector.shape_cast %173 : vector<1x56x169xf32> to vector<56x169xf32>
    %cst_65 = arith.constant dense<0.000000e+00> : vector<56x16xf32>
    %175 = tpu.matmul %174, %172, %cst_65 {dimension_numbers = #tpu.dot_dimension_numbers<[1], [0], [0], [1], [0, 0, 1, 1], [], []>} : vector<56x169xf32>, vector<169x16xf32>, vector<56x16xf32> -> vector<56x16xf32>
    %cst_66 = arith.constant 0.000000e+00 : f32
    %176 = vector.broadcast %cst_66 : f32 to vector<56x16xf32>
    %177 = arith.maximumf %175, %176 : vector<56x16xf32>
    %178 = vector.extract_strided_slice %177 {offsets = [0, 1], sizes = [56, 15], strides = [1, 1]} : vector<56x16xf32> to vector<56x15xf32>
    %179 = vector.extract_strided_slice %177 {offsets = [0, 15], sizes = [56, 1], strides = [1, 1]} : vector<56x16xf32> to vector<56x1xf32>
    %180 = tpu.concatenate %178, %179 in 1 : vector<56x15xf32>, vector<56x1xf32> -> vector<56x16xf32>
    %181 = arith.maximumf %177, %180 : vector<56x16xf32>
    %182 = tpu.iota {dimensions = array<i32: 0>} : vector<16x8xi32>
    %183 = tpu.iota {dimensions = array<i32: 1>} : vector<16x8xi32>
    %c2_i32_67 = arith.constant 2 : i32
    %184 = vector.broadcast %c2_i32_67 : i32 to vector<16x8xi32>
    %185 = arith.muli %184, %183 : vector<16x8xi32>
    %186 = arith.cmpi eq, %182, %185 : vector<16x8xi32>
    %187 = arith.extui %186 : vector<16x8xi1> to vector<16x8xi32>
    %188 = arith.sitofp %187 : vector<16x8xi32> to vector<16x8xf32>
    %cst_68 = arith.constant dense<0.000000e+00> : vector<56x8xf32>
    %189 = tpu.matmul %181, %188, %cst_68 {dimension_numbers = #tpu.dot_dimension_numbers<[1], [0], [0], [1], [0, 0, 1, 1], [], []>} : vector<56x16xf32>, vector<16x8xf32>, vector<56x8xf32> -> vector<56x8xf32>
    %cst_69 = arith.constant 0.000000e+00 : f32
    %190 = vector.broadcast %cst_69 : f32 to vector<56x1xf32>
    %191 = tpu.concatenate %190, %189, %190 in 1 : vector<56x1xf32>, vector<56x8xf32>, vector<56x1xf32> -> vector<56x10xf32>
    %192 = vector.extract_strided_slice %191 {offsets = [0, 0], sizes = [56, 8], strides = [1, 1]} : vector<56x10xf32> to vector<56x8xf32>
    %193 = vector.extract_strided_slice %191 {offsets = [0, 1], sizes = [56, 8], strides = [1, 1]} : vector<56x10xf32> to vector<56x8xf32>
    %194 = vector.extract_strided_slice %191 {offsets = [0, 2], sizes = [56, 8], strides = [1, 1]} : vector<56x10xf32> to vector<56x8xf32>
    %cst_70 = arith.constant 1.000000e+00 : f32
    %195 = vector.broadcast %cst_70 : f32 to vector<1x8xf32>
    %196 = tpu.concatenate %192, %193, %194, %195 in 0 : vector<56x8xf32>, vector<56x8xf32>, vector<56x8xf32>, vector<1x8xf32> -> vector<169x8xf32>
    %c10 = arith.constant 10 : index
    %c0_71 = arith.constant 0 : index
    %c0_72 = arith.constant 0 : index
    %197 = vector.load %arg2[%c10, %c0_71, %c0_72] : memref<37x64x384xf32, #tpu.memory_space<vmem>>, vector<1x64x169xf32>
    %198 = vector.shape_cast %197 : vector<1x64x169xf32> to vector<64x169xf32>
    %cst_73 = arith.constant dense<0.000000e+00> : vector<64x8xf32>
    %199 = tpu.matmul %198, %196, %cst_73 {dimension_numbers = #tpu.dot_dimension_numbers<[1], [0], [0], [1], [0, 0, 1, 1], [], []>} : vector<64x169xf32>, vector<169x8xf32>, vector<64x8xf32> -> vector<64x8xf32>
    %cst_74 = arith.constant 0.000000e+00 : f32
    %200 = vector.broadcast %cst_74 : f32 to vector<64x8xf32>
    %201 = arith.maximumf %199, %200 : vector<64x8xf32>
    %cst_75 = arith.constant 0.000000e+00 : f32
    %202 = vector.broadcast %cst_75 : f32 to vector<64x1xf32>
    %203 = tpu.concatenate %202, %201, %202 in 1 : vector<64x1xf32>, vector<64x8xf32>, vector<64x1xf32> -> vector<64x10xf32>
    %204 = vector.extract_strided_slice %203 {offsets = [0, 0], sizes = [64, 8], strides = [1, 1]} : vector<64x10xf32> to vector<64x8xf32>
    %205 = vector.extract_strided_slice %203 {offsets = [0, 1], sizes = [64, 8], strides = [1, 1]} : vector<64x10xf32> to vector<64x8xf32>
    %206 = vector.extract_strided_slice %203 {offsets = [0, 2], sizes = [64, 8], strides = [1, 1]} : vector<64x10xf32> to vector<64x8xf32>
    %cst_76 = arith.constant 1.000000e+00 : f32
    %207 = vector.broadcast %cst_76 : f32 to vector<1x8xf32>
    %208 = tpu.concatenate %204, %205, %206, %207 in 0 : vector<64x8xf32>, vector<64x8xf32>, vector<64x8xf32>, vector<1x8xf32> -> vector<193x8xf32>
    %c11 = arith.constant 11 : index
    %c0_77 = arith.constant 0 : index
    %c0_78 = arith.constant 0 : index
    %209 = vector.load %arg2[%c11, %c0_77, %c0_78] : memref<37x64x384xf32, #tpu.memory_space<vmem>>, vector<1x64x193xf32>
    %210 = vector.shape_cast %209 : vector<1x64x193xf32> to vector<64x193xf32>
    %cst_79 = arith.constant dense<0.000000e+00> : vector<64x8xf32>
    %211 = tpu.matmul %210, %208, %cst_79 {dimension_numbers = #tpu.dot_dimension_numbers<[1], [0], [0], [1], [0, 0, 1, 1], [], []>} : vector<64x193xf32>, vector<193x8xf32>, vector<64x8xf32> -> vector<64x8xf32>
    %cst_80 = arith.constant 0.000000e+00 : f32
    %212 = vector.broadcast %cst_80 : f32 to vector<64x8xf32>
    %213 = arith.maximumf %211, %212 : vector<64x8xf32>
    %214 = vector.extract_strided_slice %213 {offsets = [0, 1], sizes = [64, 7], strides = [1, 1]} : vector<64x8xf32> to vector<64x7xf32>
    %215 = vector.extract_strided_slice %213 {offsets = [0, 7], sizes = [64, 1], strides = [1, 1]} : vector<64x8xf32> to vector<64x1xf32>
    %216 = tpu.concatenate %214, %215 in 1 : vector<64x7xf32>, vector<64x1xf32> -> vector<64x8xf32>
    %217 = arith.maximumf %213, %216 : vector<64x8xf32>
    %218 = tpu.iota {dimensions = array<i32: 0>} : vector<8x4xi32>
    %219 = tpu.iota {dimensions = array<i32: 1>} : vector<8x4xi32>
    %c2_i32_81 = arith.constant 2 : i32
    %220 = vector.broadcast %c2_i32_81 : i32 to vector<8x4xi32>
    %221 = arith.muli %220, %219 : vector<8x4xi32>
    %222 = arith.cmpi eq, %218, %221 : vector<8x4xi32>
    %223 = arith.extui %222 : vector<8x4xi1> to vector<8x4xi32>
    %224 = arith.sitofp %223 : vector<8x4xi32> to vector<8x4xf32>
    %cst_82 = arith.constant dense<0.000000e+00> : vector<64x4xf32>
    %225 = tpu.matmul %217, %224, %cst_82 {dimension_numbers = #tpu.dot_dimension_numbers<[1], [0], [0], [1], [0, 0, 1, 1], [], []>} : vector<64x8xf32>, vector<8x4xf32>, vector<64x4xf32> -> vector<64x4xf32>
    %cst_83 = arith.constant 0.000000e+00 : f32
    %226 = vector.broadcast %cst_83 : f32 to vector<64x1xf32>
    %227 = tpu.concatenate %226, %225, %226 in 1 : vector<64x1xf32>, vector<64x4xf32>, vector<64x1xf32> -> vector<64x6xf32>
    %228 = vector.extract_strided_slice %227 {offsets = [0, 0], sizes = [64, 4], strides = [1, 1]} : vector<64x6xf32> to vector<64x4xf32>
    %229 = vector.extract_strided_slice %227 {offsets = [0, 1], sizes = [64, 4], strides = [1, 1]} : vector<64x6xf32> to vector<64x4xf32>
    %230 = vector.extract_strided_slice %227 {offsets = [0, 2], sizes = [64, 4], strides = [1, 1]} : vector<64x6xf32> to vector<64x4xf32>
    %cst_84 = arith.constant 1.000000e+00 : f32
    %231 = vector.broadcast %cst_84 : f32 to vector<1x4xf32>
    %232 = tpu.concatenate %228, %229, %230, %231 in 0 : vector<64x4xf32>, vector<64x4xf32>, vector<64x4xf32>, vector<1x4xf32> -> vector<193x4xf32>
    %c12 = arith.constant 12 : index
    %c0_85 = arith.constant 0 : index
    %c0_86 = arith.constant 0 : index
    %233 = vector.load %arg2[%c12, %c0_85, %c0_86] : memref<37x64x384xf32, #tpu.memory_space<vmem>>, vector<1x64x193xf32>
    %234 = vector.shape_cast %233 : vector<1x64x193xf32> to vector<64x193xf32>
    %cst_87 = arith.constant dense<0.000000e+00> : vector<64x4xf32>
    %235 = tpu.matmul %234, %232, %cst_87 {dimension_numbers = #tpu.dot_dimension_numbers<[1], [0], [0], [1], [0, 0, 1, 1], [], []>} : vector<64x193xf32>, vector<193x4xf32>, vector<64x4xf32> -> vector<64x4xf32>
    %cst_88 = arith.constant 0.000000e+00 : f32
    %236 = vector.broadcast %cst_88 : f32 to vector<64x4xf32>
    %237 = arith.maximumf %235, %236 : vector<64x4xf32>
    %cst_89 = arith.constant 0.000000e+00 : f32
    %238 = vector.broadcast %cst_89 : f32 to vector<64x1xf32>
    %239 = tpu.concatenate %238, %237, %238 in 1 : vector<64x1xf32>, vector<64x4xf32>, vector<64x1xf32> -> vector<64x6xf32>
    %240 = vector.extract_strided_slice %239 {offsets = [0, 0], sizes = [64, 4], strides = [1, 1]} : vector<64x6xf32> to vector<64x4xf32>
    %241 = vector.extract_strided_slice %239 {offsets = [0, 1], sizes = [64, 4], strides = [1, 1]} : vector<64x6xf32> to vector<64x4xf32>
    %242 = vector.extract_strided_slice %239 {offsets = [0, 2], sizes = [64, 4], strides = [1, 1]} : vector<64x6xf32> to vector<64x4xf32>
    %cst_90 = arith.constant 1.000000e+00 : f32
    %243 = vector.broadcast %cst_90 : f32 to vector<1x4xf32>
    %244 = tpu.concatenate %240, %241, %242, %243 in 0 : vector<64x4xf32>, vector<64x4xf32>, vector<64x4xf32>, vector<1x4xf32> -> vector<193x4xf32>
    %c13 = arith.constant 13 : index
    %c0_91 = arith.constant 0 : index
    %c0_92 = arith.constant 0 : index
    %245 = vector.load %arg2[%c13, %c0_91, %c0_92] : memref<37x64x384xf32, #tpu.memory_space<vmem>>, vector<1x64x193xf32>
    %246 = vector.shape_cast %245 : vector<1x64x193xf32> to vector<64x193xf32>
    %cst_93 = arith.constant dense<0.000000e+00> : vector<64x4xf32>
    %247 = tpu.matmul %246, %244, %cst_93 {dimension_numbers = #tpu.dot_dimension_numbers<[1], [0], [0], [1], [0, 0, 1, 1], [], []>} : vector<64x193xf32>, vector<193x4xf32>, vector<64x4xf32> -> vector<64x4xf32>
    %cst_94 = arith.constant 0.000000e+00 : f32
    %248 = vector.broadcast %cst_94 : f32 to vector<64x4xf32>
    %249 = arith.maximumf %247, %248 : vector<64x4xf32>
    %250 = vector.extract_strided_slice %249 {offsets = [0, 0], sizes = [64, 1], strides = [1, 1]} : vector<64x4xf32> to vector<64x1xf32>
    %251 = vector.extract_strided_slice %249 {offsets = [0, 1], sizes = [64, 1], strides = [1, 1]} : vector<64x4xf32> to vector<64x1xf32>
    %252 = vector.extract_strided_slice %249 {offsets = [0, 2], sizes = [64, 1], strides = [1, 1]} : vector<64x4xf32> to vector<64x1xf32>
    %253 = vector.extract_strided_slice %249 {offsets = [0, 3], sizes = [64, 1], strides = [1, 1]} : vector<64x4xf32> to vector<64x1xf32>
    %cst_95 = arith.constant 1.000000e+00 : f32
    %254 = vector.broadcast %cst_95 : f32 to vector<1x1xf32>
    %255 = tpu.concatenate %250, %251, %252, %253, %254 in 0 : vector<64x1xf32>, vector<64x1xf32>, vector<64x1xf32>, vector<64x1xf32>, vector<1x1xf32> -> vector<257x1xf32>
    %c14 = arith.constant 14 : index
    %c0_96 = arith.constant 0 : index
    %c0_97 = arith.constant 0 : index
    %256 = vector.load %arg2[%c14, %c0_96, %c0_97] : memref<37x64x384xf32, #tpu.memory_space<vmem>>, vector<1x16x257xf32>
    %257 = vector.shape_cast %256 : vector<1x16x257xf32> to vector<16x257xf32>
    %cst_98 = arith.constant dense<0.000000e+00> : vector<16x1xf32>
    %258 = tpu.matmul %257, %255, %cst_98 {dimension_numbers = #tpu.dot_dimension_numbers<[1], [0], [0], [1], [0, 0, 1, 1], [], []>} : vector<16x257xf32>, vector<257x1xf32>, vector<16x1xf32> -> vector<16x1xf32>
    %259 = math.tanh %258 : vector<16x1xf32>
    %c0_99 = arith.constant 0 : index
    %c0_100 = arith.constant 0 : index
    %c0_101 = arith.constant 0 : index
    %260 = vector.load %arg3[%c0_99, %c0_100, %c0_101] : memref<1x16x1xf32, #tpu.memory_space<vmem>>, vector<1x16x1xf32>
    %261 = vector.shape_cast %260 : vector<1x16x1xf32> to vector<16x1xf32>
    %262 = vector.shape_cast %259 : vector<16x1xf32> to vector<1x16x1xf32>
    tpu.vector_store %arg3[%c0_99, %c0_100, %c0_101], %262 {strides = array<i32>} : memref<1x16x1xf32, #tpu.memory_space<vmem>>, vector<1x16x1xf32>,
    %cst_102 = arith.constant 1.000000e+00 : f32
    %263 = vector.broadcast %cst_102 : f32 to vector<1x1xf32>
    %264 = tpu.concatenate %259, %263 in 0 : vector<16x1xf32>, vector<1x1xf32> -> vector<17x1xf32>
    %c15 = arith.constant 15 : index
    %c0_103 = arith.constant 0 : index
    %c0_104 = arith.constant 0 : index
    %265 = vector.load %arg2[%c15, %c0_103, %c0_104] : memref<37x64x384xf32, #tpu.memory_space<vmem>>, vector<1x64x17xf32>
    %266 = vector.shape_cast %265 : vector<1x64x17xf32> to vector<64x17xf32>
    %cst_105 = arith.constant dense<0.000000e+00> : vector<64x1xf32>
    %267 = tpu.matmul %266, %264, %cst_105 {dimension_numbers = #tpu.dot_dimension_numbers<[1], [0], [0], [1], [0, 0, 1, 1], [], []>} : vector<64x17xf32>, vector<17x1xf32>, vector<64x1xf32> -> vector<64x1xf32>
    %cst_106 = arith.constant 0.000000e+00 : f32
    %268 = vector.broadcast %cst_106 : f32 to vector<64x1xf32>
    %269 = arith.maximumf %267, %268 : vector<64x1xf32>
    %270 = tpu.iota {dimensions = array<i32: 0>} : vector<1x2xi32>
    %271 = arith.sitofp %270 : vector<1x2xi32> to vector<1x2xf32>
    %272 = tpu.iota {dimensions = array<i32: 1>} : vector<1x2xi32>
    %273 = arith.sitofp %272 : vector<1x2xi32> to vector<1x2xf32>
    %cst_107 = arith.constant 5.000000e-01 : f32
    %274 = vector.broadcast %cst_107 : f32 to vector<1x2xf32>
    %275 = arith.mulf %273, %274 : vector<1x2xf32>
    %cst_108 = arith.constant 2.500000e-01 : f32
    %276 = vector.broadcast %cst_108 : f32 to vector<1x2xf32>
    %277 = arith.subf %275, %276 : vector<1x2xf32>
    %cst_109 = arith.constant 0.000000e+00 : f32
    %278 = vector.broadcast %cst_109 : f32 to vector<1x2xf32>
    %279 = arith.maximumf %277, %278 : vector<1x2xf32>
    %280 = math.floor %279 : vector<1x2xf32>
    %cst_110 = arith.constant 1.000000e+00 : f32
    %281 = vector.broadcast %cst_110 : f32 to vector<1x2xf32>
    %282 = arith.addf %280, %281 : vector<1x2xf32>
    %cst_111 = arith.constant 0.000000e+00 : f32
    %283 = vector.broadcast %cst_111 : f32 to vector<1x2xf32>
    %284 = arith.minimumf %282, %283 : vector<1x2xf32>
    %285 = arith.subf %279, %280 : vector<1x2xf32>
    %286 = arith.cmpf oeq, %271, %280 : vector<1x2xf32>
    %cst_112 = arith.constant 1.000000e+00 : f32
    %287 = vector.broadcast %cst_112 : f32 to vector<1x2xf32>
    %288 = arith.subf %287, %285 : vector<1x2xf32>
    %cst_113 = arith.constant 0.000000e+00 : f32
    %289 = vector.broadcast %cst_113 : f32 to vector<1x2xf32>
    %290 = arith.select %286, %288, %289 : vector<1x2xi1>, vector<1x2xf32>
    %291 = arith.cmpf oeq, %271, %284 : vector<1x2xf32>
    %cst_114 = arith.constant 0.000000e+00 : f32
    %292 = vector.broadcast %cst_114 : f32 to vector<1x2xf32>
    %293 = arith.select %291, %285, %292 : vector<1x2xi1>, vector<1x2xf32>
    %294 = arith.addf %290, %293 : vector<1x2xf32>
    %cst_115 = arith.constant dense<0.000000e+00> : vector<64x2xf32>
    %295 = tpu.matmul %269, %294, %cst_115 {dimension_numbers = #tpu.dot_dimension_numbers<[1], [0], [0], [1], [0, 0, 1, 1], [], []>} : vector<64x1xf32>, vector<1x2xf32>, vector<64x2xf32> -> vector<64x2xf32>
    %cst_116 = arith.constant 0.000000e+00 : f32
    %296 = vector.broadcast %cst_116 : f32 to vector<64x1xf32>
    %297 = tpu.concatenate %296, %295, %296 in 1 : vector<64x1xf32>, vector<64x2xf32>, vector<64x1xf32> -> vector<64x4xf32>
    %298 = vector.extract_strided_slice %297 {offsets = [0, 0], sizes = [64, 2], strides = [1, 1]} : vector<64x4xf32> to vector<64x2xf32>
    %299 = vector.extract_strided_slice %297 {offsets = [0, 1], sizes = [64, 2], strides = [1, 1]} : vector<64x4xf32> to vector<64x2xf32>
    %300 = vector.extract_strided_slice %297 {offsets = [0, 2], sizes = [64, 2], strides = [1, 1]} : vector<64x4xf32> to vector<64x2xf32>
    %cst_117 = arith.constant 1.000000e+00 : f32
    %301 = vector.broadcast %cst_117 : f32 to vector<1x2xf32>
    %302 = tpu.concatenate %298, %299, %300, %301 in 0 : vector<64x2xf32>, vector<64x2xf32>, vector<64x2xf32>, vector<1x2xf32> -> vector<193x2xf32>
    %c16 = arith.constant 16 : index
    %c0_118 = arith.constant 0 : index
    %c0_119 = arith.constant 0 : index
    %303 = vector.load %arg2[%c16, %c0_118, %c0_119] : memref<37x64x384xf32, #tpu.memory_space<vmem>>, vector<1x64x193xf32>
    %304 = vector.shape_cast %303 : vector<1x64x193xf32> to vector<64x193xf32>
    %cst_120 = arith.constant dense<0.000000e+00> : vector<64x2xf32>
    %305 = tpu.matmul %304, %302, %cst_120 {dimension_numbers = #tpu.dot_dimension_numbers<[1], [0], [0], [1], [0, 0, 1, 1], [], []>} : vector<64x193xf32>, vector<193x2xf32>, vector<64x2xf32> -> vector<64x2xf32>
    %cst_121 = arith.constant 0.000000e+00 : f32
    %306 = vector.broadcast %cst_121 : f32 to vector<64x2xf32>
    %307 = arith.maximumf %305, %306 : vector<64x2xf32>
    %cst_122 = arith.constant 0.000000e+00 : f32
    %308 = vector.broadcast %cst_122 : f32 to vector<64x1xf32>
    %309 = tpu.concatenate %308, %307, %308 in 1 : vector<64x1xf32>, vector<64x2xf32>, vector<64x1xf32> -> vector<64x4xf32>
    %310 = vector.extract_strided_slice %309 {offsets = [0, 0], sizes = [64, 2], strides = [1, 1]} : vector<64x4xf32> to vector<64x2xf32>
    %311 = vector.extract_strided_slice %309 {offsets = [0, 1], sizes = [64, 2], strides = [1, 1]} : vector<64x4xf32> to vector<64x2xf32>
    %312 = vector.extract_strided_slice %309 {offsets = [0, 2], sizes = [64, 2], strides = [1, 1]} : vector<64x4xf32> to vector<64x2xf32>
    %cst_123 = arith.constant 1.000000e+00 : f32
    %313 = vector.broadcast %cst_123 : f32 to vector<1x2xf32>
    %314 = tpu.concatenate %310, %311, %312, %313 in 0 : vector<64x2xf32>, vector<64x2xf32>, vector<64x2xf32>, vector<1x2xf32> -> vector<193x2xf32>
    %c17 = arith.constant 17 : index
    %c0_124 = arith.constant 0 : index
    %c0_125 = arith.constant 0 : index
    %315 = vector.load %arg2[%c17, %c0_124, %c0_125] : memref<37x64x384xf32, #tpu.memory_space<vmem>>, vector<1x64x193xf32>
    %316 = vector.shape_cast %315 : vector<1x64x193xf32> to vector<64x193xf32>
    %cst_126 = arith.constant dense<0.000000e+00> : vector<64x2xf32>
    %317 = tpu.matmul %316, %314, %cst_126 {dimension_numbers = #tpu.dot_dimension_numbers<[1], [0], [0], [1], [0, 0, 1, 1], [], []>} : vector<64x193xf32>, vector<193x2xf32>, vector<64x2xf32> -> vector<64x2xf32>
    %cst_127 = arith.constant 0.000000e+00 : f32
    %318 = vector.broadcast %cst_127 : f32 to vector<64x2xf32>
    %319 = arith.maximumf %317, %318 : vector<64x2xf32>
    %320 = tpu.iota {dimensions = array<i32: 0>} : vector<2x4xi32>
    %321 = arith.sitofp %320 : vector<2x4xi32> to vector<2x4xf32>
    %322 = tpu.iota {dimensions = array<i32: 1>} : vector<2x4xi32>
    %323 = arith.sitofp %322 : vector<2x4xi32> to vector<2x4xf32>
    %cst_128 = arith.constant 5.000000e-01 : f32
    %324 = vector.broadcast %cst_128 : f32 to vector<2x4xf32>
    %325 = arith.mulf %323, %324 : vector<2x4xf32>
    %cst_129 = arith.constant 2.500000e-01 : f32
    %326 = vector.broadcast %cst_129 : f32 to vector<2x4xf32>
    %327 = arith.subf %325, %326 : vector<2x4xf32>
    %cst_130 = arith.constant 0.000000e+00 : f32
    %328 = vector.broadcast %cst_130 : f32 to vector<2x4xf32>
    %329 = arith.maximumf %327, %328 : vector<2x4xf32>
    %330 = math.floor %329 : vector<2x4xf32>
    %cst_131 = arith.constant 1.000000e+00 : f32
    %331 = vector.broadcast %cst_131 : f32 to vector<2x4xf32>
    %332 = arith.addf %330, %331 : vector<2x4xf32>
    %cst_132 = arith.constant 1.000000e+00 : f32
    %333 = vector.broadcast %cst_132 : f32 to vector<2x4xf32>
    %334 = arith.minimumf %332, %333 : vector<2x4xf32>
    %335 = arith.subf %329, %330 : vector<2x4xf32>
    %336 = arith.cmpf oeq, %321, %330 : vector<2x4xf32>
    %cst_133 = arith.constant 1.000000e+00 : f32
    %337 = vector.broadcast %cst_133 : f32 to vector<2x4xf32>
    %338 = arith.subf %337, %335 : vector<2x4xf32>
    %cst_134 = arith.constant 0.000000e+00 : f32
    %339 = vector.broadcast %cst_134 : f32 to vector<2x4xf32>
    %340 = arith.select %336, %338, %339 : vector<2x4xi1>, vector<2x4xf32>
    %341 = arith.cmpf oeq, %321, %334 : vector<2x4xf32>
    %cst_135 = arith.constant 0.000000e+00 : f32
    %342 = vector.broadcast %cst_135 : f32 to vector<2x4xf32>
    %343 = arith.select %341, %335, %342 : vector<2x4xi1>, vector<2x4xf32>
    %344 = arith.addf %340, %343 : vector<2x4xf32>
    %cst_136 = arith.constant dense<0.000000e+00> : vector<64x4xf32>
    %345 = tpu.matmul %319, %344, %cst_136 {dimension_numbers = #tpu.dot_dimension_numbers<[1], [0], [0], [1], [0, 0, 1, 1], [], []>} : vector<64x2xf32>, vector<2x4xf32>, vector<64x4xf32> -> vector<64x4xf32>
    %cst_137 = arith.constant 0.000000e+00 : f32
    %346 = vector.broadcast %cst_137 : f32 to vector<64x1xf32>
    %347 = tpu.concatenate %346, %345, %346 in 1 : vector<64x1xf32>, vector<64x4xf32>, vector<64x1xf32> -> vector<64x6xf32>
    %348 = vector.extract_strided_slice %347 {offsets = [0, 0], sizes = [64, 4], strides = [1, 1]} : vector<64x6xf32> to vector<64x4xf32>
    %349 = vector.extract_strided_slice %347 {offsets = [0, 1], sizes = [64, 4], strides = [1, 1]} : vector<64x6xf32> to vector<64x4xf32>
    %350 = vector.extract_strided_slice %347 {offsets = [0, 2], sizes = [64, 4], strides = [1, 1]} : vector<64x6xf32> to vector<64x4xf32>
    %cst_138 = arith.constant 1.000000e+00 : f32
    %351 = vector.broadcast %cst_138 : f32 to vector<1x4xf32>
    %352 = tpu.concatenate %348, %349, %350, %351 in 0 : vector<64x4xf32>, vector<64x4xf32>, vector<64x4xf32>, vector<1x4xf32> -> vector<193x4xf32>
    %c18 = arith.constant 18 : index
    %c0_139 = arith.constant 0 : index
    %c0_140 = arith.constant 0 : index
    %353 = vector.load %arg2[%c18, %c0_139, %c0_140] : memref<37x64x384xf32, #tpu.memory_space<vmem>>, vector<1x56x193xf32>
    %354 = vector.shape_cast %353 : vector<1x56x193xf32> to vector<56x193xf32>
    %cst_141 = arith.constant dense<0.000000e+00> : vector<56x4xf32>
    %355 = tpu.matmul %354, %352, %cst_141 {dimension_numbers = #tpu.dot_dimension_numbers<[1], [0], [0], [1], [0, 0, 1, 1], [], []>} : vector<56x193xf32>, vector<193x4xf32>, vector<56x4xf32> -> vector<56x4xf32>
    %cst_142 = arith.constant 0.000000e+00 : f32
    %356 = vector.broadcast %cst_142 : f32 to vector<56x4xf32>
    %357 = arith.maximumf %355, %356 : vector<56x4xf32>
    %cst_143 = arith.constant 0.000000e+00 : f32
    %358 = vector.broadcast %cst_143 : f32 to vector<56x1xf32>
    %359 = tpu.concatenate %358, %357, %358 in 1 : vector<56x1xf32>, vector<56x4xf32>, vector<56x1xf32> -> vector<56x6xf32>
    %360 = vector.extract_strided_slice %359 {offsets = [0, 0], sizes = [56, 4], strides = [1, 1]} : vector<56x6xf32> to vector<56x4xf32>
    %361 = vector.extract_strided_slice %359 {offsets = [0, 1], sizes = [56, 4], strides = [1, 1]} : vector<56x6xf32> to vector<56x4xf32>
    %362 = vector.extract_strided_slice %359 {offsets = [0, 2], sizes = [56, 4], strides = [1, 1]} : vector<56x6xf32> to vector<56x4xf32>
    %cst_144 = arith.constant 1.000000e+00 : f32
    %363 = vector.broadcast %cst_144 : f32 to vector<1x4xf32>
    %364 = tpu.concatenate %360, %361, %362, %363 in 0 : vector<56x4xf32>, vector<56x4xf32>, vector<56x4xf32>, vector<1x4xf32> -> vector<169x4xf32>
    %c19 = arith.constant 19 : index
    %c0_145 = arith.constant 0 : index
    %c0_146 = arith.constant 0 : index
    %365 = vector.load %arg2[%c19, %c0_145, %c0_146] : memref<37x64x384xf32, #tpu.memory_space<vmem>>, vector<1x56x169xf32>
    %366 = vector.shape_cast %365 : vector<1x56x169xf32> to vector<56x169xf32>
    %cst_147 = arith.constant dense<0.000000e+00> : vector<56x4xf32>
    %367 = tpu.matmul %366, %364, %cst_147 {dimension_numbers = #tpu.dot_dimension_numbers<[1], [0], [0], [1], [0, 0, 1, 1], [], []>} : vector<56x169xf32>, vector<169x4xf32>, vector<56x4xf32> -> vector<56x4xf32>
    %cst_148 = arith.constant 0.000000e+00 : f32
    %368 = vector.broadcast %cst_148 : f32 to vector<56x4xf32>
    %369 = arith.maximumf %367, %368 : vector<56x4xf32>
    %370 = tpu.iota {dimensions = array<i32: 0>} : vector<4x8xi32>
    %371 = arith.sitofp %370 : vector<4x8xi32> to vector<4x8xf32>
    %372 = tpu.iota {dimensions = array<i32: 1>} : vector<4x8xi32>
    %373 = arith.sitofp %372 : vector<4x8xi32> to vector<4x8xf32>
    %cst_149 = arith.constant 5.000000e-01 : f32
    %374 = vector.broadcast %cst_149 : f32 to vector<4x8xf32>
    %375 = arith.mulf %373, %374 : vector<4x8xf32>
    %cst_150 = arith.constant 2.500000e-01 : f32
    %376 = vector.broadcast %cst_150 : f32 to vector<4x8xf32>
    %377 = arith.subf %375, %376 : vector<4x8xf32>
    %cst_151 = arith.constant 0.000000e+00 : f32
    %378 = vector.broadcast %cst_151 : f32 to vector<4x8xf32>
    %379 = arith.maximumf %377, %378 : vector<4x8xf32>
    %380 = math.floor %379 : vector<4x8xf32>
    %cst_152 = arith.constant 1.000000e+00 : f32
    %381 = vector.broadcast %cst_152 : f32 to vector<4x8xf32>
    %382 = arith.addf %380, %381 : vector<4x8xf32>
    %cst_153 = arith.constant 3.000000e+00 : f32
    %383 = vector.broadcast %cst_153 : f32 to vector<4x8xf32>
    %384 = arith.minimumf %382, %383 : vector<4x8xf32>
    %385 = arith.subf %379, %380 : vector<4x8xf32>
    %386 = arith.cmpf oeq, %371, %380 : vector<4x8xf32>
    %cst_154 = arith.constant 1.000000e+00 : f32
    %387 = vector.broadcast %cst_154 : f32 to vector<4x8xf32>
    %388 = arith.subf %387, %385 : vector<4x8xf32>
    %cst_155 = arith.constant 0.000000e+00 : f32
    %389 = vector.broadcast %cst_155 : f32 to vector<4x8xf32>
    %390 = arith.select %386, %388, %389 : vector<4x8xi1>, vector<4x8xf32>
    %391 = arith.cmpf oeq, %371, %384 : vector<4x8xf32>
    %cst_156 = arith.constant 0.000000e+00 : f32
    %392 = vector.broadcast %cst_156 : f32 to vector<4x8xf32>
    %393 = arith.select %391, %385, %392 : vector<4x8xi1>, vector<4x8xf32>
    %394 = arith.addf %390, %393 : vector<4x8xf32>
    %cst_157 = arith.constant dense<0.000000e+00> : vector<56x8xf32>
    %395 = tpu.matmul %369, %394, %cst_157 {dimension_numbers = #tpu.dot_dimension_numbers<[1], [0], [0], [1], [0, 0, 1, 1], [], []>} : vector<56x4xf32>, vector<4x8xf32>, vector<56x8xf32> -> vector<56x8xf32>
    %cst_158 = arith.constant 0.000000e+00 : f32
    %396 = vector.broadcast %cst_158 : f32 to vector<56x1xf32>
    %397 = tpu.concatenate %396, %395, %396 in 1 : vector<56x1xf32>, vector<56x8xf32>, vector<56x1xf32> -> vector<56x10xf32>
    %398 = vector.extract_strided_slice %397 {offsets = [0, 0], sizes = [56, 8], strides = [1, 1]} : vector<56x10xf32> to vector<56x8xf32>
    %399 = vector.extract_strided_slice %397 {offsets = [0, 1], sizes = [56, 8], strides = [1, 1]} : vector<56x10xf32> to vector<56x8xf32>
    %400 = vector.extract_strided_slice %397 {offsets = [0, 2], sizes = [56, 8], strides = [1, 1]} : vector<56x10xf32> to vector<56x8xf32>
    %cst_159 = arith.constant 1.000000e+00 : f32
    %401 = vector.broadcast %cst_159 : f32 to vector<1x8xf32>
    %402 = tpu.concatenate %398, %399, %400, %401 in 0 : vector<56x8xf32>, vector<56x8xf32>, vector<56x8xf32>, vector<1x8xf32> -> vector<169x8xf32>
    %c20 = arith.constant 20 : index
    %c0_160 = arith.constant 0 : index
    %c0_161 = arith.constant 0 : index
    %403 = vector.load %arg2[%c20, %c0_160, %c0_161] : memref<37x64x384xf32, #tpu.memory_space<vmem>>, vector<1x48x169xf32>
    %404 = vector.shape_cast %403 : vector<1x48x169xf32> to vector<48x169xf32>
    %cst_162 = arith.constant dense<0.000000e+00> : vector<48x8xf32>
    %405 = tpu.matmul %404, %402, %cst_162 {dimension_numbers = #tpu.dot_dimension_numbers<[1], [0], [0], [1], [0, 0, 1, 1], [], []>} : vector<48x169xf32>, vector<169x8xf32>, vector<48x8xf32> -> vector<48x8xf32>
    %cst_163 = arith.constant 0.000000e+00 : f32
    %406 = vector.broadcast %cst_163 : f32 to vector<48x8xf32>
    %407 = arith.maximumf %405, %406 : vector<48x8xf32>
    %cst_164 = arith.constant 0.000000e+00 : f32
    %408 = vector.broadcast %cst_164 : f32 to vector<48x1xf32>
    %409 = tpu.concatenate %408, %407, %408 in 1 : vector<48x1xf32>, vector<48x8xf32>, vector<48x1xf32> -> vector<48x10xf32>
    %410 = vector.extract_strided_slice %409 {offsets = [0, 0], sizes = [48, 8], strides = [1, 1]} : vector<48x10xf32> to vector<48x8xf32>
    %411 = vector.extract_strided_slice %409 {offsets = [0, 1], sizes = [48, 8], strides = [1, 1]} : vector<48x10xf32> to vector<48x8xf32>
    %412 = vector.extract_strided_slice %409 {offsets = [0, 2], sizes = [48, 8], strides = [1, 1]} : vector<48x10xf32> to vector<48x8xf32>
    %cst_165 = arith.constant 1.000000e+00 : f32
    %413 = vector.broadcast %cst_165 : f32 to vector<1x8xf32>
    %414 = tpu.concatenate %410, %411, %412, %413 in 0 : vector<48x8xf32>, vector<48x8xf32>, vector<48x8xf32>, vector<1x8xf32> -> vector<145x8xf32>
    %c21 = arith.constant 21 : index
    %c0_166 = arith.constant 0 : index
    %c0_167 = arith.constant 0 : index
    %415 = vector.load %arg2[%c21, %c0_166, %c0_167] : memref<37x64x384xf32, #tpu.memory_space<vmem>>, vector<1x48x145xf32>
    %416 = vector.shape_cast %415 : vector<1x48x145xf32> to vector<48x145xf32>
    %cst_168 = arith.constant dense<0.000000e+00> : vector<48x8xf32>
    %417 = tpu.matmul %416, %414, %cst_168 {dimension_numbers = #tpu.dot_dimension_numbers<[1], [0], [0], [1], [0, 0, 1, 1], [], []>} : vector<48x145xf32>, vector<145x8xf32>, vector<48x8xf32> -> vector<48x8xf32>
    %cst_169 = arith.constant 0.000000e+00 : f32
    %418 = vector.broadcast %cst_169 : f32 to vector<48x8xf32>
    %419 = arith.maximumf %417, %418 : vector<48x8xf32>
    %cst_170 = arith.constant 0.000000e+00 : f32
    %420 = vector.broadcast %cst_170 : f32 to vector<48x1xf32>
    %421 = tpu.concatenate %420, %419, %420 in 1 : vector<48x1xf32>, vector<48x8xf32>, vector<48x1xf32> -> vector<48x10xf32>
    %422 = vector.extract_strided_slice %421 {offsets = [0, 0], sizes = [48, 8], strides = [1, 1]} : vector<48x10xf32> to vector<48x8xf32>
    %423 = vector.extract_strided_slice %421 {offsets = [0, 1], sizes = [48, 8], strides = [1, 1]} : vector<48x10xf32> to vector<48x8xf32>
    %424 = vector.extract_strided_slice %421 {offsets = [0, 2], sizes = [48, 8], strides = [1, 1]} : vector<48x10xf32> to vector<48x8xf32>
    %cst_171 = arith.constant 1.000000e+00 : f32
    %425 = vector.broadcast %cst_171 : f32 to vector<1x8xf32>
    %426 = tpu.concatenate %422, %423, %424, %425 in 0 : vector<48x8xf32>, vector<48x8xf32>, vector<48x8xf32>, vector<1x8xf32> -> vector<145x8xf32>
    %c22 = arith.constant 22 : index
    %c0_172 = arith.constant 0 : index
    %c0_173 = arith.constant 0 : index
    %427 = vector.load %arg2[%c22, %c0_172, %c0_173] : memref<37x64x384xf32, #tpu.memory_space<vmem>>, vector<1x48x145xf32>
    %428 = vector.shape_cast %427 : vector<1x48x145xf32> to vector<48x145xf32>
    %cst_174 = arith.constant dense<0.000000e+00> : vector<48x8xf32>
    %429 = tpu.matmul %428, %426, %cst_174 {dimension_numbers = #tpu.dot_dimension_numbers<[1], [0], [0], [1], [0, 0, 1, 1], [], []>} : vector<48x145xf32>, vector<145x8xf32>, vector<48x8xf32> -> vector<48x8xf32>
    %cst_175 = arith.constant 0.000000e+00 : f32
    %430 = vector.broadcast %cst_175 : f32 to vector<48x8xf32>
    %431 = arith.maximumf %429, %430 : vector<48x8xf32>
    %cst_176 = arith.constant 0.000000e+00 : f32
    %432 = vector.broadcast %cst_176 : f32 to vector<48x1xf32>
    %433 = tpu.concatenate %432, %431, %432 in 1 : vector<48x1xf32>, vector<48x8xf32>, vector<48x1xf32> -> vector<48x10xf32>
    %434 = vector.extract_strided_slice %433 {offsets = [0, 0], sizes = [48, 8], strides = [1, 1]} : vector<48x10xf32> to vector<48x8xf32>
    %435 = vector.extract_strided_slice %433 {offsets = [0, 1], sizes = [48, 8], strides = [1, 1]} : vector<48x10xf32> to vector<48x8xf32>
    %436 = vector.extract_strided_slice %433 {offsets = [0, 2], sizes = [48, 8], strides = [1, 1]} : vector<48x10xf32> to vector<48x8xf32>
    %cst_177 = arith.constant 1.000000e+00 : f32
    %437 = vector.broadcast %cst_177 : f32 to vector<1x8xf32>
    %438 = tpu.concatenate %434, %435, %436, %437 in 0 : vector<48x8xf32>, vector<48x8xf32>, vector<48x8xf32>, vector<1x8xf32> -> vector<145x8xf32>
    %c23 = arith.constant 23 : index
    %c0_178 = arith.constant 0 : index
    %c0_179 = arith.constant 0 : index
    %439 = vector.load %arg2[%c23, %c0_178, %c0_179] : memref<37x64x384xf32, #tpu.memory_space<vmem>>, vector<1x48x145xf32>
    %440 = vector.shape_cast %439 : vector<1x48x145xf32> to vector<48x145xf32>
    %cst_180 = arith.constant dense<0.000000e+00> : vector<48x8xf32>
    %441 = tpu.matmul %440, %438, %cst_180 {dimension_numbers = #tpu.dot_dimension_numbers<[1], [0], [0], [1], [0, 0, 1, 1], [], []>} : vector<48x145xf32>, vector<145x8xf32>, vector<48x8xf32> -> vector<48x8xf32>
    %cst_181 = arith.constant 0.000000e+00 : f32
    %442 = vector.broadcast %cst_181 : f32 to vector<48x8xf32>
    %443 = arith.maximumf %441, %442 : vector<48x8xf32>
    %444 = tpu.iota {dimensions = array<i32: 0>} : vector<8x16xi32>
    %445 = arith.sitofp %444 : vector<8x16xi32> to vector<8x16xf32>
    %446 = tpu.iota {dimensions = array<i32: 1>} : vector<8x16xi32>
    %447 = arith.sitofp %446 : vector<8x16xi32> to vector<8x16xf32>
    %cst_182 = arith.constant 5.000000e-01 : f32
    %448 = vector.broadcast %cst_182 : f32 to vector<8x16xf32>
    %449 = arith.mulf %447, %448 : vector<8x16xf32>
    %cst_183 = arith.constant 2.500000e-01 : f32
    %450 = vector.broadcast %cst_183 : f32 to vector<8x16xf32>
    %451 = arith.subf %449, %450 : vector<8x16xf32>
    %cst_184 = arith.constant 0.000000e+00 : f32
    %452 = vector.broadcast %cst_184 : f32 to vector<8x16xf32>
    %453 = arith.maximumf %451, %452 : vector<8x16xf32>
    %454 = math.floor %453 : vector<8x16xf32>
    %cst_185 = arith.constant 1.000000e+00 : f32
    %455 = vector.broadcast %cst_185 : f32 to vector<8x16xf32>
    %456 = arith.addf %454, %455 : vector<8x16xf32>
    %cst_186 = arith.constant 7.000000e+00 : f32
    %457 = vector.broadcast %cst_186 : f32 to vector<8x16xf32>
    %458 = arith.minimumf %456, %457 : vector<8x16xf32>
    %459 = arith.subf %453, %454 : vector<8x16xf32>
    %460 = arith.cmpf oeq, %445, %454 : vector<8x16xf32>
    %cst_187 = arith.constant 1.000000e+00 : f32
    %461 = vector.broadcast %cst_187 : f32 to vector<8x16xf32>
    %462 = arith.subf %461, %459 : vector<8x16xf32>
    %cst_188 = arith.constant 0.000000e+00 : f32
    %463 = vector.broadcast %cst_188 : f32 to vector<8x16xf32>
    %464 = arith.select %460, %462, %463 : vector<8x16xi1>, vector<8x16xf32>
    %465 = arith.cmpf oeq, %445, %458 : vector<8x16xf32>
    %cst_189 = arith.constant 0.000000e+00 : f32
    %466 = vector.broadcast %cst_189 : f32 to vector<8x16xf32>
    %467 = arith.select %465, %459, %466 : vector<8x16xi1>, vector<8x16xf32>
    %468 = arith.addf %464, %467 : vector<8x16xf32>
    %cst_190 = arith.constant dense<0.000000e+00> : vector<48x16xf32>
    %469 = tpu.matmul %443, %468, %cst_190 {dimension_numbers = #tpu.dot_dimension_numbers<[1], [0], [0], [1], [0, 0, 1, 1], [], []>} : vector<48x8xf32>, vector<8x16xf32>, vector<48x16xf32> -> vector<48x16xf32>
    %cst_191 = arith.constant 0.000000e+00 : f32
    %470 = vector.broadcast %cst_191 : f32 to vector<48x2xf32>
    %471 = tpu.concatenate %470, %469, %470 in 1 : vector<48x2xf32>, vector<48x16xf32>, vector<48x2xf32> -> vector<48x20xf32>
    %472 = vector.extract_strided_slice %471 {offsets = [0, 0], sizes = [48, 16], strides = [1, 1]} : vector<48x20xf32> to vector<48x16xf32>
    %473 = vector.extract_strided_slice %471 {offsets = [0, 1], sizes = [48, 16], strides = [1, 1]} : vector<48x20xf32> to vector<48x16xf32>
    %474 = vector.extract_strided_slice %471 {offsets = [0, 2], sizes = [48, 16], strides = [1, 1]} : vector<48x20xf32> to vector<48x16xf32>
    %475 = vector.extract_strided_slice %471 {offsets = [0, 3], sizes = [48, 16], strides = [1, 1]} : vector<48x20xf32> to vector<48x16xf32>
    %476 = vector.extract_strided_slice %471 {offsets = [0, 4], sizes = [48, 16], strides = [1, 1]} : vector<48x20xf32> to vector<48x16xf32>
    %cst_192 = arith.constant 1.000000e+00 : f32
    %477 = vector.broadcast %cst_192 : f32 to vector<1x16xf32>
    %478 = tpu.concatenate %472, %473, %474, %475, %476, %477 in 0 : vector<48x16xf32>, vector<48x16xf32>, vector<48x16xf32>, vector<48x16xf32>, vector<48x16xf32>, vector<1x16xf32> -> vector<241x16xf32>
    %c24 = arith.constant 24 : index
    %c0_193 = arith.constant 0 : index
    %c0_194 = arith.constant 0 : index
    %479 = vector.load %arg2[%c24, %c0_193, %c0_194] : memref<37x64x384xf32, #tpu.memory_space<vmem>>, vector<1x40x241xf32>
    %480 = vector.shape_cast %479 : vector<1x40x241xf32> to vector<40x241xf32>
    %cst_195 = arith.constant dense<0.000000e+00> : vector<40x16xf32>
    %481 = tpu.matmul %480, %478, %cst_195 {dimension_numbers = #tpu.dot_dimension_numbers<[1], [0], [0], [1], [0, 0, 1, 1], [], []>} : vector<40x241xf32>, vector<241x16xf32>, vector<40x16xf32> -> vector<40x16xf32>
    %cst_196 = arith.constant 0.000000e+00 : f32
    %482 = vector.broadcast %cst_196 : f32 to vector<40x16xf32>
    %483 = arith.maximumf %481, %482 : vector<40x16xf32>
    %cst_197 = arith.constant 0.000000e+00 : f32
    %484 = vector.broadcast %cst_197 : f32 to vector<40x2xf32>
    %485 = tpu.concatenate %484, %483, %484 in 1 : vector<40x2xf32>, vector<40x16xf32>, vector<40x2xf32> -> vector<40x20xf32>
    %486 = vector.extract_strided_slice %485 {offsets = [0, 0], sizes = [40, 16], strides = [1, 1]} : vector<40x20xf32> to vector<40x16xf32>
    %487 = vector.extract_strided_slice %485 {offsets = [0, 1], sizes = [40, 16], strides = [1, 1]} : vector<40x20xf32> to vector<40x16xf32>
    %488 = vector.extract_strided_slice %485 {offsets = [0, 2], sizes = [40, 16], strides = [1, 1]} : vector<40x20xf32> to vector<40x16xf32>
    %489 = vector.extract_strided_slice %485 {offsets = [0, 3], sizes = [40, 16], strides = [1, 1]} : vector<40x20xf32> to vector<40x16xf32>
    %490 = vector.extract_strided_slice %485 {offsets = [0, 4], sizes = [40, 16], strides = [1, 1]} : vector<40x20xf32> to vector<40x16xf32>
    %cst_198 = arith.constant 1.000000e+00 : f32
    %491 = vector.broadcast %cst_198 : f32 to vector<1x16xf32>
    %492 = tpu.concatenate %486, %487, %488, %489, %490, %491 in 0 : vector<40x16xf32>, vector<40x16xf32>, vector<40x16xf32>, vector<40x16xf32>, vector<40x16xf32>, vector<1x16xf32> -> vector<201x16xf32>
    %c25 = arith.constant 25 : index
    %c0_199 = arith.constant 0 : index
    %c0_200 = arith.constant 0 : index
    %493 = vector.load %arg2[%c25, %c0_199, %c0_200] : memref<37x64x384xf32, #tpu.memory_space<vmem>>, vector<1x40x201xf32>
    %494 = vector.shape_cast %493 : vector<1x40x201xf32> to vector<40x201xf32>
    %cst_201 = arith.constant dense<0.000000e+00> : vector<40x16xf32>
    %495 = tpu.matmul %494, %492, %cst_201 {dimension_numbers = #tpu.dot_dimension_numbers<[1], [0], [0], [1], [0, 0, 1, 1], [], []>} : vector<40x201xf32>, vector<201x16xf32>, vector<40x16xf32> -> vector<40x16xf32>
    %cst_202 = arith.constant 0.000000e+00 : f32
    %496 = vector.broadcast %cst_202 : f32 to vector<40x16xf32>
    %497 = arith.maximumf %495, %496 : vector<40x16xf32>
    %498 = tpu.iota {dimensions = array<i32: 0>} : vector<16x32xi32>
    %499 = arith.sitofp %498 : vector<16x32xi32> to vector<16x32xf32>
    %500 = tpu.iota {dimensions = array<i32: 1>} : vector<16x32xi32>
    %501 = arith.sitofp %500 : vector<16x32xi32> to vector<16x32xf32>
    %cst_203 = arith.constant 5.000000e-01 : f32
    %502 = vector.broadcast %cst_203 : f32 to vector<16x32xf32>
    %503 = arith.mulf %501, %502 : vector<16x32xf32>
    %cst_204 = arith.constant 2.500000e-01 : f32
    %504 = vector.broadcast %cst_204 : f32 to vector<16x32xf32>
    %505 = arith.subf %503, %504 : vector<16x32xf32>
    %cst_205 = arith.constant 0.000000e+00 : f32
    %506 = vector.broadcast %cst_205 : f32 to vector<16x32xf32>
    %507 = arith.maximumf %505, %506 : vector<16x32xf32>
    %508 = math.floor %507 : vector<16x32xf32>
    %cst_206 = arith.constant 1.000000e+00 : f32
    %509 = vector.broadcast %cst_206 : f32 to vector<16x32xf32>
    %510 = arith.addf %508, %509 : vector<16x32xf32>
    %cst_207 = arith.constant 1.500000e+01 : f32
    %511 = vector.broadcast %cst_207 : f32 to vector<16x32xf32>
    %512 = arith.minimumf %510, %511 : vector<16x32xf32>
    %513 = arith.subf %507, %508 : vector<16x32xf32>
    %514 = arith.cmpf oeq, %499, %508 : vector<16x32xf32>
    %cst_208 = arith.constant 1.000000e+00 : f32
    %515 = vector.broadcast %cst_208 : f32 to vector<16x32xf32>
    %516 = arith.subf %515, %513 : vector<16x32xf32>
    %cst_209 = arith.constant 0.000000e+00 : f32
    %517 = vector.broadcast %cst_209 : f32 to vector<16x32xf32>
    %518 = arith.select %514, %516, %517 : vector<16x32xi1>, vector<16x32xf32>
    %519 = arith.cmpf oeq, %499, %512 : vector<16x32xf32>
    %cst_210 = arith.constant 0.000000e+00 : f32
    %520 = vector.broadcast %cst_210 : f32 to vector<16x32xf32>
    %521 = arith.select %519, %513, %520 : vector<16x32xi1>, vector<16x32xf32>
    %522 = arith.addf %518, %521 : vector<16x32xf32>
    %cst_211 = arith.constant dense<0.000000e+00> : vector<40x32xf32>
    %523 = tpu.matmul %497, %522, %cst_211 {dimension_numbers = #tpu.dot_dimension_numbers<[1], [0], [0], [1], [0, 0, 1, 1], [], []>} : vector<40x16xf32>, vector<16x32xf32>, vector<40x32xf32> -> vector<40x32xf32>
    %cst_212 = arith.constant 0.000000e+00 : f32
    %524 = vector.broadcast %cst_212 : f32 to vector<40x2xf32>
    %525 = tpu.concatenate %524, %523, %524 in 1 : vector<40x2xf32>, vector<40x32xf32>, vector<40x2xf32> -> vector<40x36xf32>
    %526 = vector.extract_strided_slice %525 {offsets = [0, 0], sizes = [40, 32], strides = [1, 1]} : vector<40x36xf32> to vector<40x32xf32>
    %527 = vector.extract_strided_slice %525 {offsets = [0, 1], sizes = [40, 32], strides = [1, 1]} : vector<40x36xf32> to vector<40x32xf32>
    %528 = vector.extract_strided_slice %525 {offsets = [0, 2], sizes = [40, 32], strides = [1, 1]} : vector<40x36xf32> to vector<40x32xf32>
    %529 = vector.extract_strided_slice %525 {offsets = [0, 3], sizes = [40, 32], strides = [1, 1]} : vector<40x36xf32> to vector<40x32xf32>
    %530 = vector.extract_strided_slice %525 {offsets = [0, 4], sizes = [40, 32], strides = [1, 1]} : vector<40x36xf32> to vector<40x32xf32>
    %cst_213 = arith.constant 1.000000e+00 : f32
    %531 = vector.broadcast %cst_213 : f32 to vector<1x32xf32>
    %532 = tpu.concatenate %526, %527, %528, %529, %530, %531 in 0 : vector<40x32xf32>, vector<40x32xf32>, vector<40x32xf32>, vector<40x32xf32>, vector<40x32xf32>, vector<1x32xf32> -> vector<201x32xf32>
    %c26 = arith.constant 26 : index
    %c0_214 = arith.constant 0 : index
    %c0_215 = arith.constant 0 : index
    %533 = vector.load %arg2[%c26, %c0_214, %c0_215] : memref<37x64x384xf32, #tpu.memory_space<vmem>>, vector<1x32x201xf32>
    %534 = vector.shape_cast %533 : vector<1x32x201xf32> to vector<32x201xf32>
    %cst_216 = arith.constant dense<0.000000e+00> : vector<32x32xf32>
    %535 = tpu.matmul %534, %532, %cst_216 {dimension_numbers = #tpu.dot_dimension_numbers<[1], [0], [0], [1], [0, 0, 1, 1], [], []>} : vector<32x201xf32>, vector<201x32xf32>, vector<32x32xf32> -> vector<32x32xf32>
    %cst_217 = arith.constant 0.000000e+00 : f32
    %536 = vector.broadcast %cst_217 : f32 to vector<32x32xf32>
    %537 = arith.maximumf %535, %536 : vector<32x32xf32>
    %cst_218 = arith.constant 0.000000e+00 : f32
    %538 = vector.broadcast %cst_218 : f32 to vector<32x2xf32>
    %539 = tpu.concatenate %538, %537, %538 in 1 : vector<32x2xf32>, vector<32x32xf32>, vector<32x2xf32> -> vector<32x36xf32>
    %540 = vector.extract_strided_slice %539 {offsets = [0, 0], sizes = [32, 32], strides = [1, 1]} : vector<32x36xf32> to vector<32x32xf32>
    %541 = vector.extract_strided_slice %539 {offsets = [0, 1], sizes = [32, 32], strides = [1, 1]} : vector<32x36xf32> to vector<32x32xf32>
    %542 = vector.extract_strided_slice %539 {offsets = [0, 2], sizes = [32, 32], strides = [1, 1]} : vector<32x36xf32> to vector<32x32xf32>
    %543 = vector.extract_strided_slice %539 {offsets = [0, 3], sizes = [32, 32], strides = [1, 1]} : vector<32x36xf32> to vector<32x32xf32>
    %544 = vector.extract_strided_slice %539 {offsets = [0, 4], sizes = [32, 32], strides = [1, 1]} : vector<32x36xf32> to vector<32x32xf32>
    %cst_219 = arith.constant 1.000000e+00 : f32
    %545 = vector.broadcast %cst_219 : f32 to vector<1x32xf32>
    %546 = tpu.concatenate %540, %541, %542, %543, %544, %545 in 0 : vector<32x32xf32>, vector<32x32xf32>, vector<32x32xf32>, vector<32x32xf32>, vector<32x32xf32>, vector<1x32xf32> -> vector<161x32xf32>
    %c27 = arith.constant 27 : index
    %c0_220 = arith.constant 0 : index
    %c0_221 = arith.constant 0 : index
    %547 = vector.load %arg2[%c27, %c0_220, %c0_221] : memref<37x64x384xf32, #tpu.memory_space<vmem>>, vector<1x32x161xf32>
    %548 = vector.shape_cast %547 : vector<1x32x161xf32> to vector<32x161xf32>
    %cst_222 = arith.constant dense<0.000000e+00> : vector<32x32xf32>
    %549 = tpu.matmul %548, %546, %cst_222 {dimension_numbers = #tpu.dot_dimension_numbers<[1], [0], [0], [1], [0, 0, 1, 1], [], []>} : vector<32x161xf32>, vector<161x32xf32>, vector<32x32xf32> -> vector<32x32xf32>
    %cst_223 = arith.constant 0.000000e+00 : f32
    %550 = vector.broadcast %cst_223 : f32 to vector<32x32xf32>
    %551 = arith.maximumf %549, %550 : vector<32x32xf32>
    %cst_224 = arith.constant 0.000000e+00 : f32
    %552 = vector.broadcast %cst_224 : f32 to vector<32x1xf32>
    %553 = tpu.concatenate %552, %551, %552 in 1 : vector<32x1xf32>, vector<32x32xf32>, vector<32x1xf32> -> vector<32x34xf32>
    %554 = vector.extract_strided_slice %553 {offsets = [0, 0], sizes = [32, 32], strides = [1, 1]} : vector<32x34xf32> to vector<32x32xf32>
    %555 = vector.extract_strided_slice %553 {offsets = [0, 1], sizes = [32, 32], strides = [1, 1]} : vector<32x34xf32> to vector<32x32xf32>
    %556 = vector.extract_strided_slice %553 {offsets = [0, 2], sizes = [32, 32], strides = [1, 1]} : vector<32x34xf32> to vector<32x32xf32>
    %cst_225 = arith.constant 1.000000e+00 : f32
    %557 = vector.broadcast %cst_225 : f32 to vector<1x32xf32>
    %558 = tpu.concatenate %554, %555, %556, %557 in 0 : vector<32x32xf32>, vector<32x32xf32>, vector<32x32xf32>, vector<1x32xf32> -> vector<97x32xf32>
    %c28 = arith.constant 28 : index
    %c0_226 = arith.constant 0 : index
    %c0_227 = arith.constant 0 : index
    %559 = vector.load %arg2[%c28, %c0_226, %c0_227] : memref<37x64x384xf32, #tpu.memory_space<vmem>>, vector<1x32x97xf32>
    %560 = vector.shape_cast %559 : vector<1x32x97xf32> to vector<32x97xf32>
    %cst_228 = arith.constant dense<0.000000e+00> : vector<32x32xf32>
    %561 = tpu.matmul %560, %558, %cst_228 {dimension_numbers = #tpu.dot_dimension_numbers<[1], [0], [0], [1], [0, 0, 1, 1], [], []>} : vector<32x97xf32>, vector<97x32xf32>, vector<32x32xf32> -> vector<32x32xf32>
    %cst_229 = arith.constant 0.000000e+00 : f32
    %562 = vector.broadcast %cst_229 : f32 to vector<32x32xf32>
    %563 = arith.maximumf %561, %562 : vector<32x32xf32>
    %cst_230 = arith.constant 0.000000e+00 : f32
    %564 = vector.broadcast %cst_230 : f32 to vector<32x1xf32>
    %565 = tpu.concatenate %564, %563, %564 in 1 : vector<32x1xf32>, vector<32x32xf32>, vector<32x1xf32> -> vector<32x34xf32>
    %566 = vector.extract_strided_slice %565 {offsets = [0, 0], sizes = [32, 32], strides = [1, 1]} : vector<32x34xf32> to vector<32x32xf32>
    %567 = vector.extract_strided_slice %565 {offsets = [0, 1], sizes = [32, 32], strides = [1, 1]} : vector<32x34xf32> to vector<32x32xf32>
    %568 = vector.extract_strided_slice %565 {offsets = [0, 2], sizes = [32, 32], strides = [1, 1]} : vector<32x34xf32> to vector<32x32xf32>
    %cst_231 = arith.constant 1.000000e+00 : f32
    %569 = vector.broadcast %cst_231 : f32 to vector<1x32xf32>
    %570 = tpu.concatenate %566, %567, %568, %569 in 0 : vector<32x32xf32>, vector<32x32xf32>, vector<32x32xf32>, vector<1x32xf32> -> vector<97x32xf32>
    %c29 = arith.constant 29 : index
    %c0_232 = arith.constant 0 : index
    %c0_233 = arith.constant 0 : index
    %571 = vector.load %arg2[%c29, %c0_232, %c0_233] : memref<37x64x384xf32, #tpu.memory_space<vmem>>, vector<1x32x97xf32>
    %572 = vector.shape_cast %571 : vector<1x32x97xf32> to vector<32x97xf32>
    %cst_234 = arith.constant dense<0.000000e+00> : vector<32x32xf32>
    %573 = tpu.matmul %572, %570, %cst_234 {dimension_numbers = #tpu.dot_dimension_numbers<[1], [0], [0], [1], [0, 0, 1, 1], [], []>} : vector<32x97xf32>, vector<97x32xf32>, vector<32x32xf32> -> vector<32x32xf32>
    %cst_235 = arith.constant 0.000000e+00 : f32
    %574 = vector.broadcast %cst_235 : f32 to vector<32x32xf32>
    %575 = arith.maximumf %573, %574 : vector<32x32xf32>
    %576 = tpu.iota {dimensions = array<i32: 0>} : vector<32x64xi32>
    %577 = arith.sitofp %576 : vector<32x64xi32> to vector<32x64xf32>
    %578 = tpu.iota {dimensions = array<i32: 1>} : vector<32x64xi32>
    %579 = arith.sitofp %578 : vector<32x64xi32> to vector<32x64xf32>
    %cst_236 = arith.constant 5.000000e-01 : f32
    %580 = vector.broadcast %cst_236 : f32 to vector<32x64xf32>
    %581 = arith.mulf %579, %580 : vector<32x64xf32>
    %cst_237 = arith.constant 2.500000e-01 : f32
    %582 = vector.broadcast %cst_237 : f32 to vector<32x64xf32>
    %583 = arith.subf %581, %582 : vector<32x64xf32>
    %cst_238 = arith.constant 0.000000e+00 : f32
    %584 = vector.broadcast %cst_238 : f32 to vector<32x64xf32>
    %585 = arith.maximumf %583, %584 : vector<32x64xf32>
    %586 = math.floor %585 : vector<32x64xf32>
    %cst_239 = arith.constant 1.000000e+00 : f32
    %587 = vector.broadcast %cst_239 : f32 to vector<32x64xf32>
    %588 = arith.addf %586, %587 : vector<32x64xf32>
    %cst_240 = arith.constant 3.100000e+01 : f32
    %589 = vector.broadcast %cst_240 : f32 to vector<32x64xf32>
    %590 = arith.minimumf %588, %589 : vector<32x64xf32>
    %591 = arith.subf %585, %586 : vector<32x64xf32>
    %592 = arith.cmpf oeq, %577, %586 : vector<32x64xf32>
    %cst_241 = arith.constant 1.000000e+00 : f32
    %593 = vector.broadcast %cst_241 : f32 to vector<32x64xf32>
    %594 = arith.subf %593, %591 : vector<32x64xf32>
    %cst_242 = arith.constant 0.000000e+00 : f32
    %595 = vector.broadcast %cst_242 : f32 to vector<32x64xf32>
    %596 = arith.select %592, %594, %595 : vector<32x64xi1>, vector<32x64xf32>
    %597 = arith.cmpf oeq, %577, %590 : vector<32x64xf32>
    %cst_243 = arith.constant 0.000000e+00 : f32
    %598 = vector.broadcast %cst_243 : f32 to vector<32x64xf32>
    %599 = arith.select %597, %591, %598 : vector<32x64xi1>, vector<32x64xf32>
    %600 = arith.addf %596, %599 : vector<32x64xf32>
    %cst_244 = arith.constant dense<0.000000e+00> : vector<32x64xf32>
    %601 = tpu.matmul %575, %600, %cst_244 {dimension_numbers = #tpu.dot_dimension_numbers<[1], [0], [0], [1], [0, 0, 1, 1], [], []>} : vector<32x32xf32>, vector<32x64xf32>, vector<32x64xf32> -> vector<32x64xf32>
    %cst_245 = arith.constant 0.000000e+00 : f32
    %602 = vector.broadcast %cst_245 : f32 to vector<32x3xf32>
    %603 = tpu.concatenate %602, %601, %602 in 1 : vector<32x3xf32>, vector<32x64xf32>, vector<32x3xf32> -> vector<32x70xf32>
    %604 = vector.extract_strided_slice %603 {offsets = [0, 0], sizes = [32, 64], strides = [1, 1]} : vector<32x70xf32> to vector<32x64xf32>
    %605 = vector.extract_strided_slice %603 {offsets = [0, 1], sizes = [32, 64], strides = [1, 1]} : vector<32x70xf32> to vector<32x64xf32>
    %606 = vector.extract_strided_slice %603 {offsets = [0, 2], sizes = [32, 64], strides = [1, 1]} : vector<32x70xf32> to vector<32x64xf32>
    %607 = vector.extract_strided_slice %603 {offsets = [0, 3], sizes = [32, 64], strides = [1, 1]} : vector<32x70xf32> to vector<32x64xf32>
    %608 = vector.extract_strided_slice %603 {offsets = [0, 4], sizes = [32, 64], strides = [1, 1]} : vector<32x70xf32> to vector<32x64xf32>
    %609 = vector.extract_strided_slice %603 {offsets = [0, 5], sizes = [32, 64], strides = [1, 1]} : vector<32x70xf32> to vector<32x64xf32>
    %610 = vector.extract_strided_slice %603 {offsets = [0, 6], sizes = [32, 64], strides = [1, 1]} : vector<32x70xf32> to vector<32x64xf32>
    %cst_246 = arith.constant 1.000000e+00 : f32
    %611 = vector.broadcast %cst_246 : f32 to vector<1x64xf32>
    %612 = tpu.concatenate %604, %605, %606, %607, %608, %609, %610, %611 in 0 : vector<32x64xf32>, vector<32x64xf32>, vector<32x64xf32>, vector<32x64xf32>, vector<32x64xf32>, vector<32x64xf32>, vector<32x64xf32>, vector<1x64xf32> -> vector<225x64xf32>
    %c30 = arith.constant 30 : index
    %c0_247 = arith.constant 0 : index
    %c0_248 = arith.constant 0 : index
    %613 = vector.load %arg2[%c30, %c0_247, %c0_248] : memref<37x64x384xf32, #tpu.memory_space<vmem>>, vector<1x32x225xf32>
    %614 = vector.shape_cast %613 : vector<1x32x225xf32> to vector<32x225xf32>
    %cst_249 = arith.constant dense<0.000000e+00> : vector<32x64xf32>
    %615 = tpu.matmul %614, %612, %cst_249 {dimension_numbers = #tpu.dot_dimension_numbers<[1], [0], [0], [1], [0, 0, 1, 1], [], []>} : vector<32x225xf32>, vector<225x64xf32>, vector<32x64xf32> -> vector<32x64xf32>
    %cst_250 = arith.constant 0.000000e+00 : f32
    %616 = vector.broadcast %cst_250 : f32 to vector<32x64xf32>
    %617 = arith.maximumf %615, %616 : vector<32x64xf32>
    %cst_251 = arith.constant 0.000000e+00 : f32
    %618 = vector.broadcast %cst_251 : f32 to vector<32x3xf32>
    %619 = tpu.concatenate %618, %617, %618 in 1 : vector<32x3xf32>, vector<32x64xf32>, vector<32x3xf32> -> vector<32x70xf32>
    %620 = vector.extract_strided_slice %619 {offsets = [0, 0], sizes = [32, 64], strides = [1, 1]} : vector<32x70xf32> to vector<32x64xf32>
    %621 = vector.extract_strided_slice %619 {offsets = [0, 1], sizes = [32, 64], strides = [1, 1]} : vector<32x70xf32> to vector<32x64xf32>
    %622 = vector.extract_strided_slice %619 {offsets = [0, 2], sizes = [32, 64], strides = [1, 1]} : vector<32x70xf32> to vector<32x64xf32>
    %623 = vector.extract_strided_slice %619 {offsets = [0, 3], sizes = [32, 64], strides = [1, 1]} : vector<32x70xf32> to vector<32x64xf32>
    %624 = vector.extract_strided_slice %619 {offsets = [0, 4], sizes = [32, 64], strides = [1, 1]} : vector<32x70xf32> to vector<32x64xf32>
    %625 = vector.extract_strided_slice %619 {offsets = [0, 5], sizes = [32, 64], strides = [1, 1]} : vector<32x70xf32> to vector<32x64xf32>
    %626 = vector.extract_strided_slice %619 {offsets = [0, 6], sizes = [32, 64], strides = [1, 1]} : vector<32x70xf32> to vector<32x64xf32>
    %cst_252 = arith.constant 1.000000e+00 : f32
    %627 = vector.broadcast %cst_252 : f32 to vector<1x64xf32>
    %628 = tpu.concatenate %620, %621, %622, %623, %624, %625, %626, %627 in 0 : vector<32x64xf32>, vector<32x64xf32>, vector<32x64xf32>, vector<32x64xf32>, vector<32x64xf32>, vector<32x64xf32>, vector<32x64xf32>, vector<1x64xf32> -> vector<225x64xf32>
    %c31 = arith.constant 31 : index
    %c0_253 = arith.constant 0 : index
    %c0_254 = arith.constant 0 : index
    %629 = vector.load %arg2[%c31, %c0_253, %c0_254] : memref<37x64x384xf32, #tpu.memory_space<vmem>>, vector<1x32x225xf32>
    %630 = vector.shape_cast %629 : vector<1x32x225xf32> to vector<32x225xf32>
    %cst_255 = arith.constant dense<0.000000e+00> : vector<32x64xf32>
    %631 = tpu.matmul %630, %628, %cst_255 {dimension_numbers = #tpu.dot_dimension_numbers<[1], [0], [0], [1], [0, 0, 1, 1], [], []>} : vector<32x225xf32>, vector<225x64xf32>, vector<32x64xf32> -> vector<32x64xf32>
    %cst_256 = arith.constant 0.000000e+00 : f32
    %632 = vector.broadcast %cst_256 : f32 to vector<32x64xf32>
    %633 = arith.maximumf %631, %632 : vector<32x64xf32>
    %634 = tpu.iota {dimensions = array<i32: 0>} : vector<64x128xi32>
    %635 = arith.sitofp %634 : vector<64x128xi32> to vector<64x128xf32>
    %636 = tpu.iota {dimensions = array<i32: 1>} : vector<64x128xi32>
    %637 = arith.sitofp %636 : vector<64x128xi32> to vector<64x128xf32>
    %cst_257 = arith.constant 5.000000e-01 : f32
    %638 = vector.broadcast %cst_257 : f32 to vector<64x128xf32>
    %639 = arith.mulf %637, %638 : vector<64x128xf32>
    %cst_258 = arith.constant 2.500000e-01 : f32
    %640 = vector.broadcast %cst_258 : f32 to vector<64x128xf32>
    %641 = arith.subf %639, %640 : vector<64x128xf32>
    %cst_259 = arith.constant 0.000000e+00 : f32
    %642 = vector.broadcast %cst_259 : f32 to vector<64x128xf32>
    %643 = arith.maximumf %641, %642 : vector<64x128xf32>
    %644 = math.floor %643 : vector<64x128xf32>
    %cst_260 = arith.constant 1.000000e+00 : f32
    %645 = vector.broadcast %cst_260 : f32 to vector<64x128xf32>
    %646 = arith.addf %644, %645 : vector<64x128xf32>
    %cst_261 = arith.constant 6.300000e+01 : f32
    %647 = vector.broadcast %cst_261 : f32 to vector<64x128xf32>
    %648 = arith.minimumf %646, %647 : vector<64x128xf32>
    %649 = arith.subf %643, %644 : vector<64x128xf32>
    %650 = arith.cmpf oeq, %635, %644 : vector<64x128xf32>
    %cst_262 = arith.constant 1.000000e+00 : f32
    %651 = vector.broadcast %cst_262 : f32 to vector<64x128xf32>
    %652 = arith.subf %651, %649 : vector<64x128xf32>
    %cst_263 = arith.constant 0.000000e+00 : f32
    %653 = vector.broadcast %cst_263 : f32 to vector<64x128xf32>
    %654 = arith.select %650, %652, %653 : vector<64x128xi1>, vector<64x128xf32>
    %655 = arith.cmpf oeq, %635, %648 : vector<64x128xf32>
    %cst_264 = arith.constant 0.000000e+00 : f32
    %656 = vector.broadcast %cst_264 : f32 to vector<64x128xf32>
    %657 = arith.select %655, %649, %656 : vector<64x128xi1>, vector<64x128xf32>
    %658 = arith.addf %654, %657 : vector<64x128xf32>
    %cst_265 = arith.constant dense<0.000000e+00> : vector<32x128xf32>
    %659 = tpu.matmul %633, %658, %cst_265 {dimension_numbers = #tpu.dot_dimension_numbers<[1], [0], [0], [1], [0, 0, 1, 1], [], []>} : vector<32x64xf32>, vector<64x128xf32>, vector<32x128xf32> -> vector<32x128xf32>
    %cst_266 = arith.constant 0.000000e+00 : f32
    %660 = vector.broadcast %cst_266 : f32 to vector<32x3xf32>
    %661 = tpu.concatenate %660, %659, %660 in 1 : vector<32x3xf32>, vector<32x128xf32>, vector<32x3xf32> -> vector<32x134xf32>
    %662 = vector.extract_strided_slice %661 {offsets = [0, 0], sizes = [32, 128], strides = [1, 1]} : vector<32x134xf32> to vector<32x128xf32>
    %663 = vector.extract_strided_slice %661 {offsets = [0, 1], sizes = [32, 128], strides = [1, 1]} : vector<32x134xf32> to vector<32x128xf32>
    %664 = vector.extract_strided_slice %661 {offsets = [0, 2], sizes = [32, 128], strides = [1, 1]} : vector<32x134xf32> to vector<32x128xf32>
    %665 = vector.extract_strided_slice %661 {offsets = [0, 3], sizes = [32, 128], strides = [1, 1]} : vector<32x134xf32> to vector<32x128xf32>
    %666 = vector.extract_strided_slice %661 {offsets = [0, 4], sizes = [32, 128], strides = [1, 1]} : vector<32x134xf32> to vector<32x128xf32>
    %667 = vector.extract_strided_slice %661 {offsets = [0, 5], sizes = [32, 128], strides = [1, 1]} : vector<32x134xf32> to vector<32x128xf32>
    %668 = vector.extract_strided_slice %661 {offsets = [0, 6], sizes = [32, 128], strides = [1, 1]} : vector<32x134xf32> to vector<32x128xf32>
    %cst_267 = arith.constant 1.000000e+00 : f32
    %669 = vector.broadcast %cst_267 : f32 to vector<1x128xf32>
    %670 = tpu.concatenate %662, %663, %664, %665, %666, %667, %668, %669 in 0 : vector<32x128xf32>, vector<32x128xf32>, vector<32x128xf32>, vector<32x128xf32>, vector<32x128xf32>, vector<32x128xf32>, vector<32x128xf32>, vector<1x128xf32> -> vector<225x128xf32>
    %c32 = arith.constant 32 : index
    %c0_268 = arith.constant 0 : index
    %c0_269 = arith.constant 0 : index
    %671 = vector.load %arg2[%c32, %c0_268, %c0_269] : memref<37x64x384xf32, #tpu.memory_space<vmem>>, vector<1x32x225xf32>
    %672 = vector.shape_cast %671 : vector<1x32x225xf32> to vector<32x225xf32>
    %cst_270 = arith.constant dense<0.000000e+00> : vector<32x128xf32>
    %673 = tpu.matmul %672, %670, %cst_270 {dimension_numbers = #tpu.dot_dimension_numbers<[1], [0], [0], [1], [0, 0, 1, 1], [], []>} : vector<32x225xf32>, vector<225x128xf32>, vector<32x128xf32> -> vector<32x128xf32>
    %cst_271 = arith.constant 0.000000e+00 : f32
    %674 = vector.broadcast %cst_271 : f32 to vector<32x128xf32>
    %675 = arith.maximumf %673, %674 : vector<32x128xf32>
    %cst_272 = arith.constant 0.000000e+00 : f32
    %676 = vector.broadcast %cst_272 : f32 to vector<32x3xf32>
    %677 = tpu.concatenate %676, %675, %676 in 1 : vector<32x3xf32>, vector<32x128xf32>, vector<32x3xf32> -> vector<32x134xf32>
    %678 = vector.extract_strided_slice %677 {offsets = [0, 0], sizes = [32, 128], strides = [1, 1]} : vector<32x134xf32> to vector<32x128xf32>
    %679 = vector.extract_strided_slice %677 {offsets = [0, 1], sizes = [32, 128], strides = [1, 1]} : vector<32x134xf32> to vector<32x128xf32>
    %680 = vector.extract_strided_slice %677 {offsets = [0, 2], sizes = [32, 128], strides = [1, 1]} : vector<32x134xf32> to vector<32x128xf32>
    %681 = vector.extract_strided_slice %677 {offsets = [0, 3], sizes = [32, 128], strides = [1, 1]} : vector<32x134xf32> to vector<32x128xf32>
    %682 = vector.extract_strided_slice %677 {offsets = [0, 4], sizes = [32, 128], strides = [1, 1]} : vector<32x134xf32> to vector<32x128xf32>
    %683 = vector.extract_strided_slice %677 {offsets = [0, 5], sizes = [32, 128], strides = [1, 1]} : vector<32x134xf32> to vector<32x128xf32>
    %684 = vector.extract_strided_slice %677 {offsets = [0, 6], sizes = [32, 128], strides = [1, 1]} : vector<32x134xf32> to vector<32x128xf32>
    %cst_273 = arith.constant 1.000000e+00 : f32
    %685 = vector.broadcast %cst_273 : f32 to vector<1x128xf32>
    %686 = tpu.concatenate %678, %679, %680, %681, %682, %683, %684, %685 in 0 : vector<32x128xf32>, vector<32x128xf32>, vector<32x128xf32>, vector<32x128xf32>, vector<32x128xf32>, vector<32x128xf32>, vector<32x128xf32>, vector<1x128xf32> -> vector<225x128xf32>
    %c33 = arith.constant 33 : index
    %c0_274 = arith.constant 0 : index
    %c0_275 = arith.constant 0 : index
    %687 = vector.load %arg2[%c33, %c0_274, %c0_275] : memref<37x64x384xf32, #tpu.memory_space<vmem>>, vector<1x32x225xf32>
    %688 = vector.shape_cast %687 : vector<1x32x225xf32> to vector<32x225xf32>
    %cst_276 = arith.constant dense<0.000000e+00> : vector<32x128xf32>
    %689 = tpu.matmul %688, %686, %cst_276 {dimension_numbers = #tpu.dot_dimension_numbers<[1], [0], [0], [1], [0, 0, 1, 1], [], []>} : vector<32x225xf32>, vector<225x128xf32>, vector<32x128xf32> -> vector<32x128xf32>
    %cst_277 = arith.constant 0.000000e+00 : f32
    %690 = vector.broadcast %cst_277 : f32 to vector<32x128xf32>
    %691 = arith.maximumf %689, %690 : vector<32x128xf32>
    %cst_278 = arith.constant 0.000000e+00 : f32
    %692 = vector.broadcast %cst_278 : f32 to vector<32x1xf32>
    %693 = tpu.concatenate %692, %691, %692 in 1 : vector<32x1xf32>, vector<32x128xf32>, vector<32x1xf32> -> vector<32x130xf32>
    %694 = vector.extract_strided_slice %693 {offsets = [0, 0], sizes = [32, 128], strides = [1, 1]} : vector<32x130xf32> to vector<32x128xf32>
    %695 = vector.extract_strided_slice %693 {offsets = [0, 1], sizes = [32, 128], strides = [1, 1]} : vector<32x130xf32> to vector<32x128xf32>
    %696 = vector.extract_strided_slice %693 {offsets = [0, 2], sizes = [32, 128], strides = [1, 1]} : vector<32x130xf32> to vector<32x128xf32>
    %cst_279 = arith.constant 1.000000e+00 : f32
    %697 = vector.broadcast %cst_279 : f32 to vector<1x128xf32>
    %698 = tpu.concatenate %694, %695, %696, %697 in 0 : vector<32x128xf32>, vector<32x128xf32>, vector<32x128xf32>, vector<1x128xf32> -> vector<97x128xf32>
    %c34 = arith.constant 34 : index
    %c0_280 = arith.constant 0 : index
    %c0_281 = arith.constant 0 : index
    %699 = vector.load %arg2[%c34, %c0_280, %c0_281] : memref<37x64x384xf32, #tpu.memory_space<vmem>>, vector<1x24x97xf32>
    %700 = vector.shape_cast %699 : vector<1x24x97xf32> to vector<24x97xf32>
    %cst_282 = arith.constant dense<0.000000e+00> : vector<24x128xf32>
    %701 = tpu.matmul %700, %698, %cst_282 {dimension_numbers = #tpu.dot_dimension_numbers<[1], [0], [0], [1], [0, 0, 1, 1], [], []>} : vector<24x97xf32>, vector<97x128xf32>, vector<24x128xf32> -> vector<24x128xf32>
    %cst_283 = arith.constant 0.000000e+00 : f32
    %702 = vector.broadcast %cst_283 : f32 to vector<24x128xf32>
    %703 = arith.maximumf %701, %702 : vector<24x128xf32>
    %cst_284 = arith.constant 0.000000e+00 : f32
    %704 = vector.broadcast %cst_284 : f32 to vector<24x1xf32>
    %705 = tpu.concatenate %704, %703, %704 in 1 : vector<24x1xf32>, vector<24x128xf32>, vector<24x1xf32> -> vector<24x130xf32>
    %706 = vector.extract_strided_slice %705 {offsets = [0, 0], sizes = [24, 128], strides = [1, 1]} : vector<24x130xf32> to vector<24x128xf32>
    %707 = vector.extract_strided_slice %705 {offsets = [0, 1], sizes = [24, 128], strides = [1, 1]} : vector<24x130xf32> to vector<24x128xf32>
    %708 = vector.extract_strided_slice %705 {offsets = [0, 2], sizes = [24, 128], strides = [1, 1]} : vector<24x130xf32> to vector<24x128xf32>
    %cst_285 = arith.constant 1.000000e+00 : f32
    %709 = vector.broadcast %cst_285 : f32 to vector<1x128xf32>
    %710 = tpu.concatenate %706, %707, %708, %709 in 0 : vector<24x128xf32>, vector<24x128xf32>, vector<24x128xf32>, vector<1x128xf32> -> vector<73x128xf32>
    %c35 = arith.constant 35 : index
    %c0_286 = arith.constant 0 : index
    %c0_287 = arith.constant 0 : index
    %711 = vector.load %arg2[%c35, %c0_286, %c0_287] : memref<37x64x384xf32, #tpu.memory_space<vmem>>, vector<1x16x73xf32>
    %712 = vector.shape_cast %711 : vector<1x16x73xf32> to vector<16x73xf32>
    %cst_288 = arith.constant dense<0.000000e+00> : vector<16x128xf32>
    %713 = tpu.matmul %712, %710, %cst_288 {dimension_numbers = #tpu.dot_dimension_numbers<[1], [0], [0], [1], [0, 0, 1, 1], [], []>} : vector<16x73xf32>, vector<73x128xf32>, vector<16x128xf32> -> vector<16x128xf32>
    %cst_289 = arith.constant 0.000000e+00 : f32
    %714 = vector.broadcast %cst_289 : f32 to vector<16x128xf32>
    %715 = arith.maximumf %713, %714 : vector<16x128xf32>
    %cst_290 = arith.constant 1.000000e+00 : f32
    %716 = vector.broadcast %cst_290 : f32 to vector<1x128xf32>
    %717 = tpu.concatenate %715, %716 in 0 : vector<16x128xf32>, vector<1x128xf32> -> vector<17x128xf32>
    %c36 = arith.constant 36 : index
    %c0_291 = arith.constant 0 : index
    %c0_292 = arith.constant 0 : index
    %718 = vector.load %arg2[%c36, %c0_291, %c0_292] : memref<37x64x384xf32, #tpu.memory_space<vmem>>, vector<1x2x17xf32>
    %719 = vector.shape_cast %718 : vector<1x2x17xf32> to vector<2x17xf32>
    %cst_293 = arith.constant dense<0.000000e+00> : vector<2x128xf32>
    %720 = tpu.matmul %719, %717, %cst_293 {dimension_numbers = #tpu.dot_dimension_numbers<[1], [0], [0], [1], [0, 0, 1, 1], [], []>} : vector<2x17xf32>, vector<17x128xf32>, vector<2x128xf32> -> vector<2x128xf32>
    %c0_294 = arith.constant 0 : index
    %c0_295 = arith.constant 0 : index
    %c0_296 = arith.constant 0 : index
    %721 = vector.load %arg4[%c0_294, %c0_295, %c0_296] : memref<1x2x128xf32, #tpu.memory_space<vmem>>, vector<1x2x128xf32>
    %722 = vector.shape_cast %721 : vector<1x2x128xf32> to vector<2x128xf32>
    %723 = vector.shape_cast %720 : vector<2x128xf32> to vector<1x2x128xf32>
    tpu.vector_store %arg4[%c0_294, %c0_295, %c0_296], %723 {strides = array<i32>} : memref<1x2x128xf32, #tpu.memory_space<vmem>>, vector<1x2x128xf32>,
    return
  }
  func.func @transform_0(%arg0: i32) -> (i32, i32, i32) {
    %c0_i32 = arith.constant 0 : i32
    %c0_i32_0 = arith.constant 0 : i32
    %c0_i32_1 = arith.constant 0 : i32
    return %arg0, %c0_i32, %c0_i32_0 : i32, i32, i32
  }
  func.func @transform_1(%arg0: i32) -> (i32, i32, i32) {
    %c0_i32 = arith.constant 0 : i32
    %c0_i32_0 = arith.constant 0 : i32
    %c0_i32_1 = arith.constant 0 : i32
    %c0_i32_2 = arith.constant 0 : i32
    return %c0_i32, %c0_i32_0, %c0_i32_1 : i32, i32, i32
  }
  func.func @transform_2(%arg0: i32) -> (i32, i32, i32) {
    %c0_i32 = arith.constant 0 : i32
    %c0_i32_0 = arith.constant 0 : i32
    %c0_i32_1 = arith.constant 0 : i32
    return %arg0, %c0_i32, %c0_i32_0 : i32, i32, i32
  }
  func.func @transform_3(%arg0: i32) -> (i32, i32, i32) {
    %c0_i32 = arith.constant 0 : i32
    %c0_i32_0 = arith.constant 0 : i32
    %c0_i32_1 = arith.constant 0 : i32
    return %arg0, %c0_i32, %c0_i32_0 : i32, i32, i32
  }
}

</mosaic_0001>

<llo_original>
// kernel: ecg_autoencoder_forward.1
$region0: #{ecg_autoencoder_forward.1}
  #allocation0 [shape = 'u32[]', space=smem, size = 0x4, offset = 0x4, fixed_abs, tag = 'smem constant byte address 0x4 - core index']
  #allocation1 [shape = 'u32[144,128]{1,0:T(1,128)}', space=vmem, size = 0x12000, scoped, tag = 'internal scratch']
  %s0 = inlined_call_operand.hbm [shape: f32[2,2,128], index: 0, kind: input, shape index: {}]
  %s1 = inlined_call_operand.hbm [shape: f32[37,64,384], index: 1, kind: input, shape index: {}]
  %s2 = inlined_call_operand.vmem [shape: f32[2,16,1], index: 2, kind: output, shape index: {0}]
  %s3 = inlined_call_operand.hbm [shape: f32[2,2,128], index: 3, kind: output, shape index: {1}]
  %4 = xla_tuple %s2, %s3
  %s5 = sld [smem:[#allocation0]]
  $region57: #{ecg_autoencoder_forward.1} parent=0
    _
  %s7 = ssub.s32 1, %s5
  %s8 = scalar_select 0, %s7, %s5
  $region1: #{ecg_autoencoder_forward.1} parent=0
    #allocation2 [shape = 'u8[2048]{0}', space=vmem, size = 0x800, scoped, tag = 'input window, operand 0']
    #allocation3 [shape = 's32[2]{0}', space=sflag, size = 0x8, scoped, tag = 'scoped memory for ecg_autoencoder_forward.1']
    #allocation4 [shape = 's32[2]{0}', space=sflag, size = 0x8, scoped, tag = 'scoped memory for ecg_autoencoder_forward.1']
    #allocation5 [shape = 'u8[3637248]{0}', space=vmem, size = 0x378000, scoped, tag = 'input window, operand 1, single buffered']
    #allocation6 [shape = 's32[1]{0}', space=sflag, size = 0x4, scoped, tag = 'scoped memory for ecg_autoencoder_forward.1']
    #allocation7 [shape = 'u8[2048]{0}', space=vmem, size = 0x800, scoped, tag = 'output window, operand 1']
    %9 = vsyncpa [#allocation3], 0
    %s10 = scalar_lea.sflag [#allocation3], 1
    %11 = vsyncpa %s10, 0
    %12 = vsyncpa [#allocation6], 0
    %13 = vsyncpa [#allocation4], 0
    %s14 = scalar_lea.sflag [#allocation4], 1
    %15 = vsyncpa %s14, 0
    loop: start=0, step=1, limit=4
    $region2: #{ecg_autoencoder_forward.1} parent=1 // loop_pre_header
      _
    $region3: #{ecg_autoencoder_forward.1} parent=1 // loop_header
      %s17 = sphi 0, %s21
      %p18 = scmp.ge.s32.totalorder %s17, 4
      %s27 = sphi 0, %s29
      %s30 = sphi 0, %s27
      %s31 = sphi 0, %s30
      %s47 = sphi 0, %s31
      %s51 = sphi 0, %s51
      %s53 = sphi 0, %s51
      %s54 = sphi 0, %s53
      %s68 = sphi 0, %s54
      %s74 = sphi 0, %s76
      %s77 = sphi 0, %s74
      %s78 = sphi 0, %s77
      %s94 = sphi 0, %s78
      %s100 = sphi 0, %s102
      %s103 = sphi 0, %s100
      %s104 = sphi 0, %s103
      %s120 = sphi 0, %s104
    $region4: #{ecg_autoencoder_forward.1} parent=1 // loop_header_branch
      %20 = sbr.rel (%p18) target = $region8
    $region5: #{ecg_autoencoder_forward.1} parent=1 // loop_body
      %s22 = ssub.s32 %s17, 1
      %s23 = ssub.s32 %s17, 2
      %s24 = sadd.s32 %s17, 1
      %s25 = ssub.s32 %s17, %s24
      %p26 = scmp.eq.s32.totalorder %s25, 0
      %s28 = sadd.s32 %s27, 1
      %s29 = scalar_select %p26, %s27, %s28
      %p32 = pneg %p26
      %p33 = scmp.eq.s32.totalorder %s17, 1
      %p34 = por %p32, %p33
      %p35 = scmp.ne.s32.totalorder %s27, %s30
      %p36 = scmp.eq.s32.totalorder %s17, 0
      %p37 = por %p35, %p36
      %p38 = scmp.ne.s32.totalorder %s27, %s30
      %p39 = scmp.eq.s32.totalorder %s22, 1
      %p40 = por %p38, %p39
      %p41 = scmp.ne.s32.totalorder %s30, %s31
      %p42 = scmp.eq.s32.totalorder %s22, 0
      %p43 = por %p41, %p42
      %p44 = scmp.ne.s32.totalorder %s30, %s31
      %p45 = scmp.eq.s32.totalorder %s23, 1
      %p46 = por %p44, %p45
      %p48 = scmp.ne.s32.totalorder %s31, %s47
      %p49 = scmp.eq.s32.totalorder %s23, 0
      %p50 = por %p48, %p49
      %s52 = sadd.s32 %s51, 1
      %p55 = scmp.eq.s32.totalorder %s17, 1
      %p56 = scmp.ne.s32.totalorder %s51, %s53
      %p57 = scmp.eq.s32.totalorder %s17, 0
      %p58 = por %p56, %p57
      %p59 = scmp.ne.s32.totalorder %s51, %s53
      %p60 = scmp.eq.s32.totalorder %s22, 1
      %p61 = por %p59, %p60
      %p62 = scmp.ne.s32.totalorder %s53, %s54
      %p63 = scmp.eq.s32.totalorder %s22, 0
      %p64 = por %p62, %p63
      %p65 = scmp.ne.s32.totalorder %s53, %s54
      %p66 = scmp.eq.s32.totalorder %s23, 1
      %p67 = por %p65, %p66
      %p69 = scmp.ne.s32.totalorder %s54, %s68
      %p70 = scmp.eq.s32.totalorder %s23, 0
      %p71 = por %p69, %p70
      %s72 = ssub.s32 %s17, %s24
      %p73 = scmp.eq.s32.totalorder %s72, 0
      %s75 = sadd.s32 %s74, 1
      %s76 = scalar_select %p73, %s74, %s75
      %p79 = pneg %p73
      %p80 = scmp.eq.s32.totalorder %s17, 1
      %p81 = por %p79, %p80
      %p82 = scmp.ne.s32.totalorder %s74, %s77
      %p83 = scmp.eq.s32.totalorder %s17, 0
      %p84 = por %p82, %p83
      %p85 = scmp.ne.s32.totalorder %s74, %s77
      %p86 = scmp.eq.s32.totalorder %s22, 1
      %p87 = por %p85, %p86
      %p88 = scmp.ne.s32.totalorder %s77, %s78
      %p89 = scmp.eq.s32.totalorder %s22, 0
      %p90 = por %p88, %p89
      %p91 = scmp.ne.s32.totalorder %s77, %s78
      %p92 = scmp.eq.s32.totalorder %s23, 1
      %p93 = por %p91, %p92
      %p95 = scmp.ne.s32.totalorder %s78, %s94
      %p96 = scmp.eq.s32.totalorder %s23, 0
      %p97 = por %p95, %p96
      %s98 = ssub.s32 %s17, %s24
      %p99 = scmp.eq.s32.totalorder %s98, 0
      %s101 = sadd.s32 %s100, 1
      %s102 = scalar_select %p99, %s100, %s101
      %p105 = pneg %p99
      %p106 = scmp.eq.s32.totalorder %s17, 1
      %p107 = por %p105, %p106
      %p108 = scmp.ne.s32.totalorder %s100, %s103
      %p109 = scmp.eq.s32.totalorder %s17, 0
      %p110 = por %p108, %p109
      %p111 = scmp.ne.s32.totalorder %s100, %s103
      %p112 = scmp.eq.s32.totalorder %s22, 1
      %p113 = por %p111, %p112
      %p114 = scmp.ne.s32.totalorder %s103, %s104
      %p115 = scmp.eq.s32.totalorder %s22, 0
      %p116 = por %p114, %p115
      %p117 = scmp.ne.s32.totalorder %s103, %s104
      %p118 = scmp.eq.s32.totalorder %s23, 1
      %p119 = por %p117, %p118
      %p121 = scmp.ne.s32.totalorder %s104, %s120
      %p122 = scmp.eq.s32.totalorder %s23, 0
      %p123 = por %p121, %p122
      %p124 = scmp.le.s32.totalorder 1, %s17
      %p125 = scmp.lt.s32.totalorder %s17, 3
      %p126 = pnand %p124, %p125
      %p127 = pneg %p126
      // Predicated region
      $region9: #{ecg_autoencoder_forward.1} parent=5 // pred_check
        _
      $region10: #{ecg_autoencoder_forward.1} parent=5 // pred_check_branch
        %129 = sbr.rel (%p126) target = $region12
      $region11: #{ecg_autoencoder_forward.1} parent=5 // pred_region
        %s130 = ssub.s32 %s17, 1
        // Predicated region
        $region13: #{ecg_autoencoder_forward.1} parent=11 // pred_check
          %p131 = pneg %p64
        $region14: #{ecg_autoencoder_forward.1} parent=11 // pred_check_branch
          %133 = sbr.rel (%p131) target = $region16
        $region15: #{ecg_autoencoder_forward.1} parent=11 // pred_region
          %s135 = ssub.s32 113664, 113664
          %136 = vsyncadd [#allocation6], %s135
          %s137 = sshll.u32 [#allocation5], 4
          %s138 = int_to_ptr.vmem [resolvable:$true] %s137
          %143 = dma.hbm_to_vmem [thread:$0]  %s1, 113664, %s138, [#allocation6], 384, 384, 24
        $region16: #{ecg_autoencoder_forward.1} parent=11 // pred_fallthru
          _
      $region12: #{ecg_autoencoder_forward.1} parent=5 // pred_fallthru
        _
      %p144 = scmp.lt.s32.totalorder %s17, 2
      // Predicated region
      $region17: #{ecg_autoencoder_forward.1} parent=5 // pred_check
        %p145 = pneg %p144
      $region18: #{ecg_autoencoder_forward.1} parent=5 // pred_check_branch
        %147 = sbr.rel (%p145) target = $region20
      $region19: #{ecg_autoencoder_forward.1} parent=5 // pred_region
        // Predicated region
        $region21: #{ecg_autoencoder_forward.1} parent=19 // pred_check
          %p148 = pneg %p37
        $region22: #{ecg_autoencoder_forward.1} parent=19 // pred_check_branch
          %150 = sbr.rel (%p148) target = $region24
        $region23: #{ecg_autoencoder_forward.1} parent=19 // pred_region
          %s151 = sand.u32 %s27, 1
          %s152 = scalar_lea.sflag [#allocation3], %s151
          %s153 = sand.u32 %s27, 1
          %s154 = smul.addr %s153, 2
          %s155 = scalar_lea.vmem [#allocation2], %s154
          %s157 = ssub.s32 32, 32
          %158 = vsyncadd %s152, %s157
          %s159 = smul.addr %s17, 32
          %s160 = scalar_lea.hbm %s0, %s159
          %s162 = sshll.u32 %s155, 4
          %s163 = int_to_ptr.vmem [resolvable:$true] %s162
          %165 = dma.hbm_to_vmem [thread:$0]  %s160, 32, %s163, %s152
        $region24: #{ecg_autoencoder_forward.1} parent=19 // pred_fallthru
          _
      $region20: #{ecg_autoencoder_forward.1} parent=5 // pred_fallthru
        _
      %p166 = scmp.le.s32.totalorder 1, %s17
      %p167 = scmp.lt.s32.totalorder %s17, 3
      %p168 = pnand %p166, %p167
      %p169 = pneg %p168
      // Predicated region
      $region25: #{ecg_autoencoder_forward.1} parent=5 // pred_check
        _
      $region26: #{ecg_autoencoder_forward.1} parent=5 // pred_check_branch
        %171 = sbr.rel (%p168) target = $region28
      $region27: #{ecg_autoencoder_forward.1} parent=5 // pred_region
        %s172 = ssub.s32 %s17, 1
        %s173 = sand.u32 %s30, 1
        %s174 = scalar_lea.sflag [#allocation3], %s173
        %s175 = sand.u32 %s30, 1
        %s176 = smul.addr %s175, 2
        %s177 = scalar_lea.vmem [#allocation2], %s176
        // Predicated region
        $region29: #{ecg_autoencoder_forward.1} parent=27 // pred_check
          %p178 = pneg %p43
        $region30: #{ecg_autoencoder_forward.1} parent=27 // pred_check_branch
          %180 = sbr.rel (%p178) target = $region32
        $region31: #{ecg_autoencoder_forward.1} parent=27 // pred_region
          %181 = dma.done %s174, 32
        $region32: #{ecg_autoencoder_forward.1} parent=27 // pred_fallthru
          _
        // Predicated region
        $region33: #{ecg_autoencoder_forward.1} parent=27 // pred_check
          %p182 = pneg %p64
        $region34: #{ecg_autoencoder_forward.1} parent=27 // pred_check_branch
          %184 = sbr.rel (%p182) target = $region36
        $region35: #{ecg_autoencoder_forward.1} parent=27 // pred_region
          %185 = dma.done [#allocation6], 113664
        $region36: #{ecg_autoencoder_forward.1} parent=27 // pred_fallthru
          _
        %s186 = sand.u32 %s30, 1
        %s187 = scalar_lea.sflag [#allocation3], %s186
        %s188 = sand.u32 %s30, 1
        %s189 = smul.addr %s188, 2
        %s190 = scalar_lea.vmem [#allocation2], %s189
        %p191 = pneg %p43
        %p192 = pneg %p40
        %p193 = pneg %p64
        %p194 = pneg %p61
        %p195 = pneg %p90
        %p196 = pneg %p87
        %p197 = scmp.lt.s32.totalorder %s22, 1
        %s198 = scalar_select %p197, %s22, 1
        %s199 = smul.addr %s198, 2
        %s200 = smul.addr %s199, 8
        %s201 = scalar_lea.vmem %s2, %s200
        %p202 = pneg %p116
        %p203 = pneg %p113
        %s204 = sand.u32 %s103, 1
        %s205 = scalar_lea.sflag [#allocation4], %s204
        %s206 = sand.u32 %s103, 1
        %s207 = smul.addr %s206, 2
        %s208 = scalar_lea.vmem [#allocation7], %s207
        %p209 = scmp.lt.s32.totalorder %s22, 1
        %s210 = scalar_select %p209, %s22, 1
        %s211 = smul.addr %s210, 2
        %s212 = smul.addr %s211, 8
        %s213 = scalar_lea.vmem %s2, %s212
        %v214 = vld [vmem:[%s177] sm:$0x3]
        %216 = vrot.lane.b32.xlu0 %v214, 3
        %v217 = vpop.permute.xlu0 %216
        %vm219 = vcmask 23552
        %v220 = vsel %vm219, 0.0, %v217
        %v221 = vsel %vm219, %v217, 0.0
        %v224 = vrot.slane %v220, 6
        %v225 = vrot.slane %v221, 6
        %226 = vrot.lane.b32.xlu0 %v224, 127
        %v227 = vpop.permute.xlu0 %226
        %228 = vrot.lane.b32.xlu0 %v225, 127
        %v229 = vpop.permute.xlu0 %228
        %vm230 = vcmask 1039360
        %v231 = vsel %vm230, %v227, %v229
        %v233 = vrot.slane %v220, 4
        %v234 = vrot.slane %v221, 4
        %235 = vrot.lane.b32.xlu0 %v233, 126
        %v236 = vpop.permute.xlu0 %235
        %237 = vrot.lane.b32.xlu0 %v234, 126
        %v238 = vpop.permute.xlu0 %237
        %vm239 = vcmask 1031168
        %v240 = vsel %vm239, %v236, %v238
        %v242 = vrot.slane %v220, 2
        %v243 = vrot.slane %v221, 2
        %244 = vrot.lane.b32.xlu0 %v242, 125
        %v245 = vpop.permute.xlu0 %244
        %246 = vrot.lane.b32.xlu0 %v243, 125
        %v247 = vpop.permute.xlu0 %246
        %vm248 = vcmask 1022976
        %v249 = vsel %vm248, %v245, %v247
        %251 = vrot.lane.b32.xlu0 %v220, 124
        %v252 = vpop.permute.xlu0 %251
        %253 = vrot.lane.b32.xlu0 %v221, 124
        %v254 = vpop.permute.xlu0 %253
        %vm255 = vcmask 1014784
        %v256 = vsel %vm255, %v252, %v254
        %258 = vrot.lane.b32.xlu0 %v224, 123
        %v259 = vpop.permute.xlu0 %258
        %260 = vrot.lane.b32.xlu0 %v225, 123
        %v261 = vpop.permute.xlu0 %260
        %vm262 = vcmask 1006592
        %v263 = vsel %vm262, %v259, %v261
        %265 = vrot.lane.b32.xlu0 %v233, 122
        %v266 = vpop.permute.xlu0 %265
        %267 = vrot.lane.b32.xlu0 %v234, 122
        %v268 = vpop.permute.xlu0 %267
        %vm269 = vcmask 998400
        %v270 = vsel %vm269, %v266, %v268
        %vm272 = vcmask 1041408
        %v273 = vsel %vm272, %v220, %v231
        %vm274 = vcmask 1043456
        %v275 = vsel %vm274, %v273, %v240
        %vm276 = vcmask 1045504
        %v277 = vsel %vm276, %v275, %v249
        %v278 = vsel %vm272, %v256, %v263
        %v279 = vsel %vm274, %v278, %v270
        %v280 = vsel %vm276, %v279, 1.0
        %v281 = vld [vmem:[#allocation5] sm:$0xff]
        %v282 = vld [vmem:[#allocation5 + $0x18] sm:$0xff]
        %vm283 = vcmask 121856
        %v285 = vsel %vm283, %v281, 0
        %v288 = vsel %vm283, %v282, 0
        %vm290 = vcmask 1046528
        %v292 = vsel %vm290, %v280, 0
        %294 = vmatprep.subr.mxu0 0.0
        %295 = vmatpush1.msra.mxu0 0.0
        %296 = vmatprep.subr.mxu0 0.0
        %297 = vmatpush1.msra.mxu0 0.0
        %298 = vmatprep.subr.mxu0 0.0
        %299 = vmatpush1.msra.mxu0 0.0
        %300 = vmatprep.subr.mxu0 0.0
        %301 = vmatpush1.msra.mxu0 0.0
        %302 = vmatprep.subr.mxu0 0.0
        %303 = vmatpush1.msra.mxu0 0.0
        %304 = vmatprep.subr.mxu0 0.0
        %305 = vmatpush1.msra.mxu0 0.0
        %306 = vmatprep.subr.mxu0 0.0
        %307 = vmatpush1.msra.mxu0 0.0
        %308 = vmatprep.subr.mxu0 0.0
        %309 = vmatpush1.msra.mxu0 0.0
        %310 = vmatprep.subr.mxu0 0.0
        %311 = vmatpush1.msra.mxu0 0.0
        %312 = vmatprep.subr.mxu0 0.0
        %313 = vmatpush1.msra.mxu0 0.0
        %314 = vmatprep.subr.mxu0 0.0
        %315 = vmatpush1.msra.mxu0 0.0
        %316 = vmatprep.subr.mxu0 0.0
        %317 = vmatpush1.msra.mxu0 0.0
        %318 = vmatprep.subr.mxu0 0.0
        %319 = vmatpush1.msra.mxu0 0.0
        %320 = vmatprep.subr.mxu0 0.0
        %321 = vmatpush1.msra.mxu0 0.0
        %322 = vmatprep.subr.mxu0 0.0
        %323 = vmatpush1.msra.mxu0 %v292
        %324 = vmatprep.subr.mxu0 0.0
        %325 = vmatpush1.msra.mxu0 %v277
        %326 = vmatprep.subr.mxu0 0.0
        %327 = vmatpush2.msra.mxu0 0.0
        %328 = vmatprep.subr.mxu0 0.0
        %329 = vmatpush2.msra.mxu0 0.0
        %330 = vmatprep.subr.mxu0 0.0
        %331 = vmatpush2.msra.mxu0 0.0
        %332 = vmatprep.subr.mxu0 0.0
        %333 = vmatpush2.msra.mxu0 0.0
        %334 = vmatprep.subr.mxu0 0.0
        %335 = vmatpush2.msra.mxu0 0.0
        %336 = vmatprep.subr.mxu0 0.0
        %337 = vmatpush2.msra.mxu0 0.0
        %338 = vmatprep.subr.mxu0 0.0
        %339 = vmatpush2.msra.mxu0 0.0
        %340 = vmatprep.subr.mxu0 0.0
        %341 = vmatpush2.msra.mxu0 0.0
        %342 = vmatprep.subr.mxu0 0.0
        %343 = vmatpush2.msra.mxu0 0.0
        %344 = vmatprep.subr.mxu0 0.0
        %345 = vmatpush2.msra.mxu0 0.0
        %346 = vmatprep.subr.mxu0 0.0
        %347 = vmatpush2.msra.mxu0 0.0
        %348 = vmatprep.subr.mxu0 0.0
        %349 = vmatpush2.msra.mxu0 0.0
        %350 = vmatprep.subr.mxu0 0.0
        %351 = vmatpush2.msra.mxu0 0.0
        %352 = vmatprep.subr.mxu0 0.0
        %353 = vmatpush2.msra.mxu0 0.0
        %354 = vmatprep.subr.mxu0 0.0
        %355 = vmatpush2.msra.mxu0 0.0
        %356 = vmatprep.subr.mxu0 0.0
        %357 = vmatpush2.msra.mxu0 0.0
        %358 = vmatprep.mubr.f32.mxu0 0.0
        %359 = vmatmul.mubr.f32.gmra.mxu0 %v285
        %v360 = vpop.f32.mrf.mxu0
        %v361 = vadd.f32 0.0, %v360
        %v362 = vpop.f32.mrf.mxu0
        %363 = vmatprep.mubr.f32.mxu0 0.0
        %364 = vmatmul.mubr.f32.gmra.mxu0 %v288
        %v365 = vpop.f32.mrf.mxu0
        %v366 = vadd.f32 0.0, %v365
        %v367 = vpop.f32.mrf.mxu0
        %368 = vdwg.mxu0
        %v369 = vmax.f32 %v361, 0.0
        %v370 = vmax.f32 %v366, 0.0
        %373 = vrot.lane.b32.xlu0 %v369, 3
        %v374 = vpop.permute.xlu0 %373
        %375 = vrot.lane.b32.xlu0 %v370, 3
        %v376 = vpop.permute.xlu0 %375
        %v379 = vsel %vm219, 0.0, %v374
        %v380 = vsel %vm219, 0.0, %v376
        %v381 = vsel %vm219, %v374, 0.0
        %v382 = vsel %vm219, %v376, 0.0
        %387 = vrot.lane.b32.xlu0 %v379, 127
        %v388 = vpop.permute.xlu0 %387
        %389 = vrot.lane.b32.xlu0 %v381, 127
        %v390 = vpop.permute.xlu0 %389
        %391 = vrot.lane.b32.xlu0 %v380, 127
        %v392 = vpop.permute.xlu0 %391
        %393 = vrot.lane.b32.xlu0 %v382, 127
        %v394 = vpop.permute.xlu0 %393
        %v395 = vsel %vm230, %v388, %v390
        %v396 = vsel %vm230, %v392, %v394
        %399 = vrot.lane.b32.xlu0 %v379, 126
        %v400 = vpop.permute.xlu0 %399
        %401 = vrot.lane.b32.xlu0 %v381, 126
        %v402 = vpop.permute.xlu0 %401
        %403 = vrot.lane.b32.xlu0 %v380, 126
        %v404 = vpop.permute.xlu0 %403
        %405 = vrot.lane.b32.xlu0 %v382, 126
        %v406 = vpop.permute.xlu0 %405
        %v407 = vsel %vm239, %v400, %v402
        %v408 = vsel %vm239, %v404, %v406
        %411 = vrot.lane.b32.xlu0 %v379, 125
        %v412 = vpop.permute.xlu0 %411
        %413 = vrot.lane.b32.xlu0 %v381, 125
        %v414 = vpop.permute.xlu0 %413
        %415 = vrot.lane.b32.xlu0 %v380, 125
        %v416 = vpop.permute.xlu0 %415
        %417 = vrot.lane.b32.xlu0 %v382, 125
        %v418 = vpop.permute.xlu0 %417
        %v419 = vsel %vm248, %v412, %v414
        %v420 = vsel %vm248, %v416, %v418
        %423 = vrot.lane.b32.xlu0 %v379, 124
        %v424 = vpop.permute.xlu0 %423
        %425 = vrot.lane.b32.xlu0 %v381, 124
        %v426 = vpop.permute.xlu0 %425
        %427 = vrot.lane.b32.xlu0 %v380, 124
        %v428 = vpop.permute.xlu0 %427
        %429 = vrot.lane.b32.xlu0 %v382, 124
        %v430 = vpop.permute.xlu0 %429
        %v431 = vsel %vm255, %v424, %v426
        %v432 = vsel %vm255, %v428, %v430
        %435 = vrot.lane.b32.xlu0 %v379, 123
        %v436 = vpop.permute.xlu0 %435
        %437 = vrot.lane.b32.xlu0 %v381, 123
        %v438 = vpop.permute.xlu0 %437
        %439 = vrot.lane.b32.xlu0 %v380, 123
        %v440 = vpop.permute.xlu0 %439
        %441 = vrot.lane.b32.xlu0 %v382, 123
        %v442 = vpop.permute.xlu0 %441
        %v443 = vsel %vm262, %v436, %v438
        %v444 = vsel %vm262, %v440, %v442
        %447 = vrot.lane.b32.xlu0 %v379, 122
        %v448 = vpop.permute.xlu0 %447
        %449 = vrot.lane.b32.xlu0 %v381, 122
        %v450 = vpop.permute.xlu0 %449
        %451 = vrot.lane.b32.xlu0 %v380, 122
        %v452 = vpop.permute.xlu0 %451
        %453 = vrot.lane.b32.xlu0 %v382, 122
        %v454 = vpop.permute.xlu0 %453
        %v455 = vsel %vm269, %v448, %v450
        %v456 = vsel %vm269, %v452, %v454
        %s459 = scalar_lea.vmem [#allocation5], 192
        %v460 = vld [vmem:[%s459] sm:$0xff]
        %v461 = vld [vmem:[%s459 + $0x18] sm:$0xff]
        %v462 = vld [vmem:[%s459 + $0x30] sm:$0xff]
        %vm463 = vcmask 924672
        %v465 = vsel %vm463, %v460, 0
        %v468 = vsel %vm463, %v461, 0
        %v471 = vsel %vm463, %v462, 0
        %vm473 = vcmask 1040384
        %v475 = vsel %vm473, 1.0, 0
        %477 = vmatprep.subr.mxu0 0.0
        %478 = vmatpush1.msra.mxu0 0.0
        %479 = vmatprep.subr.mxu0 0.0
        %480 = vmatpush1.msra.mxu0 %v475
        %481 = vmatprep.subr.mxu0 0.0
        %482 = vmatpush1.msra.mxu0 %v456
        %483 = vmatprep.subr.mxu0 0.0
        %484 = vmatpush1.msra.mxu0 %v455
        %485 = vmatprep.subr.mxu0 0.0
        %486 = vmatpush1.msra.mxu0 %v444
        %487 = vmatprep.subr.mxu0 0.0
        %488 = vmatpush1.msra.mxu0 %v443
        %489 = vmatprep.subr.mxu0 0.0
        %490 = vmatpush1.msra.mxu0 %v432
        %491 = vmatprep.subr.mxu0 0.0
        %492 = vmatpush1.msra.mxu0 %v431
        %493 = vmatprep.subr.mxu0 0.0
        %494 = vmatpush1.msra.mxu0 %v420
        %495 = vmatprep.subr.mxu0 0.0
        %496 = vmatpush1.msra.mxu0 %v419
        %497 = vmatprep.subr.mxu0 0.0
        %498 = vmatpush1.msra.mxu0 %v408
        %499 = vmatprep.subr.mxu0 0.0
        %500 = vmatpush1.msra.mxu0 %v407
        %501 = vmatprep.subr.mxu0 0.0
        %502 = vmatpush1.msra.mxu0 %v396
        %503 = vmatprep.subr.mxu0 0.0
        %504 = vmatpush1.msra.mxu0 %v395
        %505 = vmatprep.subr.mxu0 0.0
        %506 = vmatpush1.msra.mxu0 %v380
        %507 = vmatprep.subr.mxu0 0.0
        %508 = vmatpush1.msra.mxu0 %v379
        %509 = vmatprep.subr.mxu0 0.0
        %510 = vmatpush2.msra.mxu0 0.0
        %511 = vmatprep.subr.mxu0 0.0
        %512 = vmatpush2.msra.mxu0 0.0
        %513 = vmatprep.subr.mxu0 0.0
        %514 = vmatpush2.msra.mxu0 0.0
        %515 = vmatprep.subr.mxu0 0.0
        %516 = vmatpush2.msra.mxu0 0.0
        %517 = vmatprep.subr.mxu0 0.0
        %518 = vmatpush2.msra.mxu0 0.0
        %519 = vmatprep.subr.mxu0 0.0
        %520 = vmatpush2.msra.mxu0 0.0
        %521 = vmatprep.subr.mxu0 0.0
        %522 = vmatpush2.msra.mxu0 0.0
        %523 = vmatprep.subr.mxu0 0.0
        %524 = vmatpush2.msra.mxu0 0.0
        %525 = vmatprep.subr.mxu0 0.0
        %526 = vmatpush2.msra.mxu0 0.0
        %527 = vmatprep.subr.mxu0 0.0
        %528 = vmatpush2.msra.mxu0 0.0
        %529 = vmatprep.subr.mxu0 0.0
        %530 = vmatpush2.msra.mxu0 0.0
        %531 = vmatprep.subr.mxu0 0.0
        %532 = vmatpush2.msra.mxu0 0.0
        %533 = vmatprep.subr.mxu0 0.0
        %534 = vmatpush2.msra.mxu0 0.0
        %535 = vmatprep.subr.mxu0 0.0
        %536 = vmatpush2.msra.mxu0 0.0
        %537 = vmatprep.subr.mxu0 0.0
        %538 = vmatpush2.msra.mxu0 0.0
        %539 = vmatprep.subr.mxu0 0.0
        %540 = vmatpush2.msra.mxu0 0.0
        %541 = vmatprep.mubr.f32.mxu0 0.0
        %542 = vmatmul.mubr.f32.gmra.mxu0 %v465
        %v543 = vpop.f32.mrf.mxu0
        %v544 = vadd.f32 0.0, %v543
        %v545 = vpop.f32.mrf.mxu0
        %546 = vmatprep.mubr.f32.mxu0 0.0
        %547 = vmatmul.mubr.f32.gmra.mxu0 %v468
        %v548 = vpop.f32.mrf.mxu0
        %v549 = vadd.f32 0.0, %v548
        %v550 = vpop.f32.mrf.mxu0
        %551 = vmatprep.mubr.f32.mxu0 0.0
        %552 = vmatmul.mubr.f32.gmra.mxu0 %v471
        %v553 = vpop.f32.mrf.mxu0
        %v554 = vadd.f32 0.0, %v553
        %v555 = vpop.f32.mrf.mxu0
        %556 = vdwg.mxu0
        %v557 = vmax.f32 %v544, 0.0
        %v558 = vmax.f32 %v549, 0.0
        %v559 = vmax.f32 %v554, 0.0
        %563 = vrot.lane.b32.xlu0 %v557, 2
        %v564 = vpop.permute.xlu0 %563
        %565 = vrot.lane.b32.xlu0 %v558, 2
        %v566 = vpop.permute.xlu0 %565
        %567 = vrot.lane.b32.xlu0 %v559, 2
        %v568 = vpop.permute.xlu0 %567
        %vm572 = vcmask 15360
        %v573 = vsel %vm572, 0.0, %v564
        %v574 = vsel %vm572, 0.0, %v566
        %v575 = vsel %vm572, 0.0, %v568
        %v576 = vsel %vm572, %v564, 0.0
        %v577 = vsel %vm572, %v566, 0.0
        %v578 = vsel %vm572, %v568, 0.0
        %585 = vrot.lane.b32.xlu0 %v573, 127
        %v586 = vpop.permute.xlu0 %585
        %587 = vrot.lane.b32.xlu0 %v576, 127
        %v588 = vpop.permute.xlu0 %587
        %589 = vrot.lane.b32.xlu0 %v574, 127
        %v590 = vpop.permute.xlu0 %589
        %591 = vrot.lane.b32.xlu0 %v577, 127
        %v592 = vpop.permute.xlu0 %591
        %593 = vrot.lane.b32.xlu0 %v575, 127
        %v594 = vpop.permute.xlu0 %593
        %595 = vrot.lane.b32.xlu0 %v578, 127
        %v596 = vpop.permute.xlu0 %595
        %v597 = vsel %vm230, %v586, %v588
        %v598 = vsel %vm230, %v590, %v592
        %v599 = vsel %vm230, %v594, %v596
        %603 = vrot.lane.b32.xlu0 %v573, 126
        %v604 = vpop.permute.xlu0 %603
        %605 = vrot.lane.b32.xlu0 %v576, 126
        %v606 = vpop.permute.xlu0 %605
        %607 = vrot.lane.b32.xlu0 %v574, 126
        %v608 = vpop.permute.xlu0 %607
        %609 = vrot.lane.b32.xlu0 %v577, 126
        %v610 = vpop.permute.xlu0 %609
        %611 = vrot.lane.b32.xlu0 %v575, 126
        %v612 = vpop.permute.xlu0 %611
        %613 = vrot.lane.b32.xlu0 %v578, 126
        %v614 = vpop.permute.xlu0 %613
        %v615 = vsel %vm239, %v604, %v606
        %v616 = vsel %vm239, %v608, %v610
        %v617 = vsel %vm239, %v612, %v614
        %621 = vrot.lane.b32.xlu0 %v573, 125
        %v622 = vpop.permute.xlu0 %621
        %623 = vrot.lane.b32.xlu0 %v576, 125
        %v624 = vpop.permute.xlu0 %623
        %625 = vrot.lane.b32.xlu0 %v574, 125
        %v626 = vpop.permute.xlu0 %625
        %627 = vrot.lane.b32.xlu0 %v577, 125
        %v628 = vpop.permute.xlu0 %627
        %629 = vrot.lane.b32.xlu0 %v575, 125
        %v630 = vpop.permute.xlu0 %629
        %631 = vrot.lane.b32.xlu0 %v578, 125
        %v632 = vpop.permute.xlu0 %631
        %v633 = vsel %vm248, %v622, %v624
        %v634 = vsel %vm248, %v626, %v628
        %v635 = vsel %vm248, %v630, %v632
        %639 = vrot.lane.b32.xlu0 %v573, 124
        %v640 = vpop.permute.xlu0 %639
        %641 = vrot.lane.b32.xlu0 %v576, 124
        %v642 = vpop.permute.xlu0 %641
        %643 = vrot.lane.b32.xlu0 %v574, 124
        %v644 = vpop.permute.xlu0 %643
        %645 = vrot.lane.b32.xlu0 %v577, 124
        %v646 = vpop.permute.xlu0 %645
        %647 = vrot.lane.b32.xlu0 %v575, 124
        %v648 = vpop.permute.xlu0 %647
        %649 = vrot.lane.b32.xlu0 %v578, 124
        %v650 = vpop.permute.xlu0 %649
        %v651 = vsel %vm255, %v640, %v642
        %v652 = vsel %vm255, %v644, %v646
        %v653 = vsel %vm255, %v648, %v650
        %s657 = scalar_lea.vmem [#allocation5], 384
        %v658 = vld [vmem:[%s657] sm:$0xff]
        %v659 = vld [vmem:[%s657 + $0x18] sm:$0xff]
        %v660 = vld [vmem:[%s657 + $0x30] sm:$0xff]
        %v661 = vld [vmem:[%s657 + $0x48] sm:$0xff]
        %vm662 = vcmask 990208
        %v664 = vsel %vm662, %v658, 0
        %v667 = vsel %vm662, %v659, 0
        %v670 = vsel %vm662, %v660, 0
        %v673 = vsel %vm662, %v661, 0
        %675 = vmatprep.subr.mxu0 0.0
        %676 = vmatpush1.msra.mxu0 %v475
        %677 = vmatprep.subr.mxu0 0.0
        %678 = vmatpush1.msra.mxu0 %v653
        %679 = vmatprep.subr.mxu0 0.0
        %680 = vmatpush1.msra.mxu0 %v652
        %681 = vmatprep.subr.mxu0 0.0
        %682 = vmatpush1.msra.mxu0 %v651
        %683 = vmatprep.subr.mxu0 0.0
        %684 = vmatpush1.msra.mxu0 %v635
        %685 = vmatprep.subr.mxu0 0.0
        %686 = vmatpush1.msra.mxu0 %v634
        %687 = vmatprep.subr.mxu0 0.0
        %688 = vmatpush1.msra.mxu0 %v633
        %689 = vmatprep.subr.mxu0 0.0
        %690 = vmatpush1.msra.mxu0 %v617
        %691 = vmatprep.subr.mxu0 0.0
        %692 = vmatpush1.msra.mxu0 %v616
        %693 = vmatprep.subr.mxu0 0.0
        %694 = vmatpush1.msra.mxu0 %v615
        %695 = vmatprep.subr.mxu0 0.0
        %696 = vmatpush1.msra.mxu0 %v599
        %697 = vmatprep.subr.mxu0 0.0
        %698 = vmatpush1.msra.mxu0 %v598
        %699 = vmatprep.subr.mxu0 0.0
        %700 = vmatpush1.msra.mxu0 %v597
        %701 = vmatprep.subr.mxu0 0.0
        %702 = vmatpush1.msra.mxu0 %v575
        %703 = vmatprep.subr.mxu0 0.0
        %704 = vmatpush1.msra.mxu0 %v574
        %705 = vmatprep.subr.mxu0 0.0
        %706 = vmatpush1.msra.mxu0 %v573
        %707 = vmatprep.subr.mxu0 0.0
        %708 = vmatpush2.msra.mxu0 0.0
        %709 = vmatprep.subr.mxu0 0.0
        %710 = vmatpush2.msra.mxu0 0.0
        %711 = vmatprep.subr.mxu0 0.0
        %712 = vmatpush2.msra.mxu0 0.0
        %713 = vmatprep.subr.mxu0 0.0
        %714 = vmatpush2.msra.mxu0 0.0
        %715 = vmatprep.subr.mxu0 0.0
        %716 = vmatpush2.msra.mxu0 0.0
        %717 = vmatprep.subr.mxu0 0.0
        %718 = vmatpush2.msra.mxu0 0.0
        %719 = vmatprep.subr.mxu0 0.0
        %720 = vmatpush2.msra.mxu0 0.0
        %721 = vmatprep.subr.mxu0 0.0
        %722 = vmatpush2.msra.mxu0 0.0
        %723 = vmatprep.subr.mxu0 0.0
        %724 = vmatpush2.msra.mxu0 0.0
        %725 = vmatprep.subr.mxu0 0.0
        %726 = vmatpush2.msra.mxu0 0.0
        %727 = vmatprep.subr.mxu0 0.0
        %728 = vmatpush2.msra.mxu0 0.0
        %729 = vmatprep.subr.mxu0 0.0
        %730 = vmatpush2.msra.mxu0 0.0
        %731 = vmatprep.subr.mxu0 0.0
        %732 = vmatpush2.msra.mxu0 0.0
        %733 = vmatprep.subr.mxu0 0.0
        %734 = vmatpush2.msra.mxu0 0.0
        %735 = vmatprep.subr.mxu0 0.0
        %736 = vmatpush2.msra.mxu0 0.0
        %737 = vmatprep.subr.mxu0 0.0
        %738 = vmatpush2.msra.mxu0 0.0
        %739 = vmatprep.mubr.f32.mxu0 0.0
        %740 = vmatmul.mubr.f32.gmra.mxu0 %v664
        %v741 = vpop.f32.mrf.mxu0
        %v742 = vadd.f32 0.0, %v741
        %v743 = vpop.f32.mrf.mxu0
        %744 = vmatprep.mubr.f32.mxu0 0.0
        %745 = vmatmul.mubr.f32.gmra.mxu0 %v667
        %v746 = vpop.f32.mrf.mxu0
        %v747 = vadd.f32 0.0, %v746
        %v748 = vpop.f32.mrf.mxu0
        %749 = vmatprep.mubr.f32.mxu0 0.0
        %750 = vmatmul.mubr.f32.gmra.mxu0 %v670
        %v751 = vpop.f32.mrf.mxu0
        %v752 = vadd.f32 0.0, %v751
        %v753 = vpop.f32.mrf.mxu0
        %754 = vmatprep.mubr.f32.mxu0 0.0
        %755 = vmatmul.mubr.f32.gmra.mxu0 %v673
        %v756 = vpop.f32.mrf.mxu0
        %v757 = vadd.f32 0.0, %v756
        %v758 = vpop.f32.mrf.mxu0
        %759 = vdwg.mxu0
        %v760 = vmax.f32 %v742, 0.0
        %v761 = vmax.f32 %v747, 0.0
        %v762 = vmax.f32 %v752, 0.0
        %v763 = vmax.f32 %v757, 0.0
        %768 = vrot.lane.b32.xlu0 %v760, 2
        %v769 = vpop.permute.xlu0 %768
        %770 = vrot.lane.b32.xlu0 %v761, 2
        %v771 = vpop.permute.xlu0 %770
        %772 = vrot.lane.b32.xlu0 %v762, 2
        %v773 = vpop.permute.xlu0 %772
        %774 = vrot.lane.b32.xlu0 %v763, 2
        %v775 = vpop.permute.xlu0 %774
        %v780 = vsel %vm572, 0.0, %v769
        %v781 = vsel %vm572, 0.0, %v771
        %v782 = vsel %vm572, 0.0, %v773
        %v783 = vsel %vm572, 0.0, %v775
        %v784 = vsel %vm572, %v769, 0.0
        %v785 = vsel %vm572, %v771, 0.0
        %v786 = vsel %vm572, %v773, 0.0
        %v787 = vsel %vm572, %v775, 0.0
        %796 = vrot.lane.b32.xlu0 %v780, 127
        %v797 = vpop.permute.xlu0 %796
        %798 = vrot.lane.b32.xlu0 %v784, 127
        %v799 = vpop.permute.xlu0 %798
        %800 = vrot.lane.b32.xlu0 %v781, 127
        %v801 = vpop.permute.xlu0 %800
        %802 = vrot.lane.b32.xlu0 %v785, 127
        %v803 = vpop.permute.xlu0 %802
        %804 = vrot.lane.b32.xlu0 %v782, 127
        %v805 = vpop.permute.xlu0 %804
        %806 = vrot.lane.b32.xlu0 %v786, 127
        %v807 = vpop.permute.xlu0 %806
        %808 = vrot.lane.b32.xlu0 %v783, 127
        %v809 = vpop.permute.xlu0 %808
        %810 = vrot.lane.b32.xlu0 %v787, 127
        %v811 = vpop.permute.xlu0 %810
        %v812 = vsel %vm230, %v797, %v799
        %v813 = vsel %vm230, %v801, %v803
        %v814 = vsel %vm230, %v805, %v807
        %v815 = vsel %vm230, %v809, %v811
        %820 = vrot.lane.b32.xlu0 %v780, 126
        %v821 = vpop.permute.xlu0 %820
        %822 = vrot.lane.b32.xlu0 %v784, 126
        %v823 = vpop.permute.xlu0 %822
        %824 = vrot.lane.b32.xlu0 %v781, 126
        %v825 = vpop.permute.xlu0 %824
        %826 = vrot.lane.b32.xlu0 %v785, 126
        %v827 = vpop.permute.xlu0 %826
        %828 = vrot.lane.b32.xlu0 %v782, 126
        %v829 = vpop.permute.xlu0 %828
        %830 = vrot.lane.b32.xlu0 %v786, 126
        %v831 = vpop.permute.xlu0 %830
        %832 = vrot.lane.b32.xlu0 %v783, 126
        %v833 = vpop.permute.xlu0 %832
        %834 = vrot.lane.b32.xlu0 %v787, 126
        %v835 = vpop.permute.xlu0 %834
        %v836 = vsel %vm239, %v821, %v823
        %v837 = vsel %vm239, %v825, %v827
        %v838 = vsel %vm239, %v829, %v831
        %v839 = vsel %vm239, %v833, %v835
        %844 = vrot.lane.b32.xlu0 %v780, 125
        %v845 = vpop.permute.xlu0 %844
        %846 = vrot.lane.b32.xlu0 %v784, 125
        %v847 = vpop.permute.xlu0 %846
        %848 = vrot.lane.b32.xlu0 %v781, 125
        %v849 = vpop.permute.xlu0 %848
        %850 = vrot.lane.b32.xlu0 %v785, 125
        %v851 = vpop.permute.xlu0 %850
        %852 = vrot.lane.b32.xlu0 %v782, 125
        %v853 = vpop.permute.xlu0 %852
        %854 = vrot.lane.b32.xlu0 %v786, 125
        %v855 = vpop.permute.xlu0 %854
        %856 = vrot.lane.b32.xlu0 %v783, 125
        %v857 = vpop.permute.xlu0 %856
        %858 = vrot.lane.b32.xlu0 %v787, 125
        %v859 = vpop.permute.xlu0 %858
        %v860 = vsel %vm248, %v845, %v847
        %v861 = vsel %vm248, %v849, %v851
        %v862 = vsel %vm248, %v853, %v855
        %v863 = vsel %vm248, %v857, %v859
        %868 = vrot.lane.b32.xlu0 %v780, 124
        %v869 = vpop.permute.xlu0 %868
        %870 = vrot.lane.b32.xlu0 %v784, 124
        %v871 = vpop.permute.xlu0 %870
        %872 = vrot.lane.b32.xlu0 %v781, 124
        %v873 = vpop.permute.xlu0 %872
        %874 = vrot.lane.b32.xlu0 %v785, 124
        %v875 = vpop.permute.xlu0 %874
        %876 = vrot.lane.b32.xlu0 %v782, 124
        %v877 = vpop.permute.xlu0 %876
        %878 = vrot.lane.b32.xlu0 %v786, 124
        %v879 = vpop.permute.xlu0 %878
        %880 = vrot.lane.b32.xlu0 %v783, 124
        %v881 = vpop.permute.xlu0 %880
        %882 = vrot.lane.b32.xlu0 %v787, 124
        %v883 = vpop.permute.xlu0 %882
        %v884 = vsel %vm255, %v869, %v871
        %v885 = vsel %vm255, %v873, %v875
        %v886 = vsel %vm255, %v877, %v879
        %v887 = vsel %vm255, %v881, %v883
        %s892 = scalar_lea.vmem [#allocation5], 576
        %v893 = vld [vmem:[%s892] sm:$0xff]
        %v894 = vld [vmem:[%s892 + $0x8] sm:$0xff]
        %v895 = vld [vmem:[%s892 + $0x18] sm:$0xff]
        %v896 = vld [vmem:[%s892 + $0x20] sm:$0xff]
        %v897 = vld [vmem:[%s892 + $0x30] sm:$0xff]
        %v898 = vld [vmem:[%s892 + $0x38] sm:$0xff]
        %v899 = vld [vmem:[%s892 + $0x48] sm:$0xff]
        %v900 = vld [vmem:[%s892 + $0x50] sm:$0xff]
        %vm901 = vcmask 269312
        %v903 = vsel %vm901, %v894, 0
        %v906 = vsel %vm901, %v896, 0
        %v909 = vsel %vm901, %v898, 0
        %v912 = vsel %vm901, %v900, 0
        %914 = vmatprep.subr.mxu0 0.0
        %915 = vmatpush1.msra.mxu0 %v863
        %916 = vmatprep.subr.mxu0 0.0
        %917 = vmatpush1.msra.mxu0 %v862
        %918 = vmatprep.subr.mxu0 0.0
        %919 = vmatpush1.msra.mxu0 %v861
        %920 = vmatprep.subr.mxu0 0.0
        %921 = vmatpush1.msra.mxu0 %v860
        %922 = vmatprep.subr.mxu0 0.0
        %923 = vmatpush1.msra.mxu0 %v839
        %924 = vmatprep.subr.mxu0 0.0
        %925 = vmatpush1.msra.mxu0 %v838
        %926 = vmatprep.subr.mxu0 0.0
        %927 = vmatpush1.msra.mxu0 %v837
        %928 = vmatprep.subr.mxu0 0.0
        %929 = vmatpush1.msra.mxu0 %v836
        %930 = vmatprep.subr.mxu0 0.0
        %931 = vmatpush1.msra.mxu0 %v815
        %932 = vmatprep.subr.mxu0 0.0
        %933 = vmatpush1.msra.mxu0 %v814
        %934 = vmatprep.subr.mxu0 0.0
        %935 = vmatpush1.msra.mxu0 %v813
        %936 = vmatprep.subr.mxu0 0.0
        %937 = vmatpush1.msra.mxu0 %v812
        %938 = vmatprep.subr.mxu0 0.0
        %939 = vmatpush1.msra.mxu0 %v783
        %940 = vmatprep.subr.mxu0 0.0
        %941 = vmatpush1.msra.mxu0 %v782
        %942 = vmatprep.subr.mxu0 0.0
        %943 = vmatpush1.msra.mxu0 %v781
        %944 = vmatprep.subr.mxu0 0.0
        %945 = vmatpush1.msra.mxu0 %v780
        %946 = vmatprep.subr.mxu0 0.0
        %947 = vmatpush2.msra.mxu0 0.0
        %948 = vmatprep.subr.mxu0 0.0
        %949 = vmatpush2.msra.mxu0 0.0
        %950 = vmatprep.subr.mxu0 0.0
        %951 = vmatpush2.msra.mxu0 0.0
        %952 = vmatprep.subr.mxu0 0.0
        %953 = vmatpush2.msra.mxu0 0.0
        %954 = vmatprep.subr.mxu0 0.0
        %955 = vmatpush2.msra.mxu0 0.0
        %956 = vmatprep.subr.mxu0 0.0
        %957 = vmatpush2.msra.mxu0 0.0
        %958 = vmatprep.subr.mxu0 0.0
        %959 = vmatpush2.msra.mxu0 0.0
        %960 = vmatprep.subr.mxu0 0.0
        %961 = vmatpush2.msra.mxu0 0.0
        %962 = vmatprep.subr.mxu0 0.0
        %963 = vmatpush2.msra.mxu0 0.0
        %964 = vmatprep.subr.mxu0 0.0
        %965 = vmatpush2.msra.mxu0 0.0
        %966 = vmatprep.subr.mxu0 0.0
        %967 = vmatpush2.msra.mxu0 0.0
        %968 = vmatprep.subr.mxu0 0.0
        %969 = vmatpush2.msra.mxu0 %v475
        %970 = vmatprep.subr.mxu0 0.0
        %971 = vmatpush2.msra.mxu0 %v887
        %972 = vmatprep.subr.mxu0 0.0
        %973 = vmatpush2.msra.mxu0 %v886
        %974 = vmatprep.subr.mxu0 0.0
        %975 = vmatpush2.msra.mxu0 %v885
        %976 = vmatprep.subr.mxu0 0.0
        %977 = vmatpush2.msra.mxu0 %v884
        %978 = vmatprep.mubr.f32.mxu0 %v903
        %979 = vmatmul.mubr.f32.gmra.mxu0 %v893
        %v980 = vpop.f32.mrf.mxu0
        %v981 = vadd.f32 0.0, %v980
        %v982 = vpop.f32.mrf.mxu0
        %983 = vmatprep.mubr.f32.mxu0 %v906
        %984 = vmatmul.mubr.f32.gmra.mxu0 %v895
        %v985 = vpop.f32.mrf.mxu0
        %v986 = vadd.f32 0.0, %v985
        %v987 = vpop.f32.mrf.mxu0
        %988 = vmatprep.mubr.f32.mxu0 %v909
        %989 = vmatmul.mubr.f32.gmra.mxu0 %v897
        %v990 = vpop.f32.mrf.mxu0
        %v991 = vadd.f32 0.0, %v990
        %v992 = vpop.f32.mrf.mxu0
        %993 = vmatprep.mubr.f32.mxu0 %v912
        %994 = vmatmul.mubr.f32.gmra.mxu0 %v899
        %v995 = vpop.f32.mrf.mxu0
        %v996 = vadd.f32 0.0, %v995
        %v997 = vpop.f32.mrf.mxu0
        %998 = vdwg.mxu0
        %v999 = vmax.f32 %v981, 0.0
        %v1000 = vmax.f32 %v986, 0.0
        %v1001 = vmax.f32 %v991, 0.0
        %v1002 = vmax.f32 %v996, 0.0
        %1007 = vrot.lane.b32.xlu0 %v999, 127
        %v1008 = vpop.permute.xlu0 %1007
        %1009 = vrot.lane.b32.xlu0 %v1000, 127
        %v1010 = vpop.permute.xlu0 %1009
        %1011 = vrot.lane.b32.xlu0 %v1001, 127
        %v1012 = vpop.permute.xlu0 %1011
        %1013 = vrot.lane.b32.xlu0 %v1002, 127
        %v1014 = vpop.permute.xlu0 %1013
        %v1019 = vsel %vm230, %v1008, %v999
        %v1020 = vsel %vm230, %v1010, %v1000
        %v1021 = vsel %vm230, %v1012, %v1001
        %v1022 = vsel %vm230, %v1014, %v1002
        %v1023 = vmax.f32 %v999, %v1019
        %v1024 = vmax.f32 %v1000, %v1020
        %v1025 = vmax.f32 %v1001, %v1021
        %v1026 = vmax.f32 %v1002, %v1022
        %v1027 = vlaneseq
        %v1028 = vshrl.u32 %v1027, 7
        %v1029 = vadd.s32 %v1028, 8
        %v1030 = vadd.s32 %v1028, 16
        %v1031 = vadd.s32 %v1028, 24
        %v1032 = vadd.s32 %v1028, 32
        %v1033 = vadd.s32 %v1028, 40
        %v1034 = vadd.s32 %v1028, 48
        %v1035 = vadd.s32 %v1028, 56
        %v1036 = vadd.s32 %v1028, 64
        %v1037 = vadd.s32 %v1028, 72
        %v1038 = vadd.s32 %v1028, 80
        %v1039 = vadd.s32 %v1028, 88
        %v1040 = vadd.s32 %v1028, 96
        %v1041 = vadd.s32 %v1028, 104
        %v1042 = vadd.s32 %v1028, 112
        %v1043 = vadd.s32 %v1028, 120
        %v1044 = vlaneseq
        %v1045 = vand.u32 %v1044, 127
        %v1046 = vmul.u32 %v1045, 2
        %vm1047 = vcmp.eq.s32.totalorder %v1028, %v1046
        %vm1048 = vcmp.eq.s32.totalorder %v1029, %v1046
        %vm1049 = vcmp.eq.s32.totalorder %v1030, %v1046
        %vm1050 = vcmp.eq.s32.totalorder %v1031, %v1046
        %vm1051 = vcmp.eq.s32.totalorder %v1032, %v1046
        %vm1052 = vcmp.eq.s32.totalorder %v1033, %v1046
        %vm1053 = vcmp.eq.s32.totalorder %v1034, %v1046
        %vm1054 = vcmp.eq.s32.totalorder %v1035, %v1046
        %vm1055 = vcmp.eq.s32.totalorder %v1036, %v1046
        %vm1056 = vcmp.eq.s32.totalorder %v1037, %v1046
        %vm1057 = vcmp.eq.s32.totalorder %v1038, %v1046
        %vm1058 = vcmp.eq.s32.totalorder %v1039, %v1046
        %vm1059 = vcmp.eq.s32.totalorder %v1040, %v1046
        %vm1060 = vcmp.eq.s32.totalorder %v1041, %v1046
        %vm1061 = vcmp.eq.s32.totalorder %v1042, %v1046
        %vm1062 = vcmp.eq.s32.totalorder %v1043, %v1046
        %v1063 = vsel %vm1047, 1, 0
        %v1064 = vsel %vm1048, 1, 0
        %v1065 = vsel %vm1049, 1, 0
        %v1066 = vsel %vm1050, 1, 0
        %v1067 = vsel %vm1051, 1, 0
        %v1068 = vsel %vm1052, 1, 0
        %v1069 = vsel %vm1053, 1, 0
        %v1070 = vsel %vm1054, 1, 0
        %v1071 = vsel %vm1055, 1, 0
        %v1072 = vsel %vm1056, 1, 0
        %v1073 = vsel %vm1057, 1, 0
        %v1074 = vsel %vm1058, 1, 0
        %v1075 = vsel %vm1059, 1, 0
        %v1076 = vsel %vm1060, 1, 0
        %v1077 = vsel %vm1061, 1, 0
        %v1078 = vsel %vm1062, 1, 0
        %v1079 = vcvt.s32.f32 %v1063
        %v1080 = vcvt.s32.f32 %v1064
        %v1081 = vcvt.s32.f32 %v1065
        %v1082 = vcvt.s32.f32 %v1066
        %v1083 = vcvt.s32.f32 %v1067
        %v1084 = vcvt.s32.f32 %v1068
        %v1085 = vcvt.s32.f32 %v1069
        %v1086 = vcvt.s32.f32 %v1070
        %v1087 = vcvt.s32.f32 %v1071
        %v1088 = vcvt.s32.f32 %v1072
        %v1089 = vcvt.s32.f32 %v1073
        %v1090 = vcvt.s32.f32 %v1074
        %v1091 = vcvt.s32.f32 %v1075
        %v1092 = vcvt.s32.f32 %v1076
        %v1093 = vcvt.s32.f32 %v1077
        %v1094 = vcvt.s32.f32 %v1078
        %1095 = vmatprep.subr.mxu0 0.0
        %1096 = vmatpush1.msra.mxu0 %v1094
        %1097 = vmatprep.subr.mxu0 0.0
        %1098 = vmatpush1.msra.mxu0 %v1093
        %1099 = vmatprep.subr.mxu0 0.0
        %1100 = vmatpush1.msra.mxu0 %v1092
        %1101 = vmatprep.subr.mxu0 0.0
        %1102 = vmatpush1.msra.mxu0 %v1091
        %1103 = vmatprep.subr.mxu0 0.0
        %1104 = vmatpush1.msra.mxu0 %v1090
        %1105 = vmatprep.subr.mxu0 0.0
        %1106 = vmatpush1.msra.mxu0 %v1089
        %1107 = vmatprep.subr.mxu0 0.0
        %1108 = vmatpush1.msra.mxu0 %v1088
        %1109 = vmatprep.subr.mxu0 0.0
        %1110 = vmatpush1.msra.mxu0 %v1087
        %1111 = vmatprep.subr.mxu0 0.0
        %1112 = vmatpush1.msra.mxu0 %v1086
        %1113 = vmatprep.subr.mxu0 0.0
        %1114 = vmatpush1.msra.mxu0 %v1085
        %1115 = vmatprep.subr.mxu0 0.0
        %1116 = vmatpush1.msra.mxu0 %v1084
        %1117 = vmatprep.subr.mxu0 0.0
        %1118 = vmatpush1.msra.mxu0 %v1083
        %1119 = vmatprep.subr.mxu0 0.0
        %1120 = vmatpush1.msra.mxu0 %v1082
        %1121 = vmatprep.subr.mxu0 0.0
        %1122 = vmatpush1.msra.mxu0 %v1081
        %1123 = vmatprep.subr.mxu0 0.0
        %1124 = vmatpush1.msra.mxu0 %v1080
        %1125 = vmatprep.subr.mxu0 0.0
        %1126 = vmatpush1.msra.mxu0 %v1079
        %1127 = vmatprep.subr.mxu0 0.0
        %1128 = vmatpush2.msra.mxu0 0.0
        %1129 = vmatprep.subr.mxu0 0.0
        %1130 = vmatpush2.msra.mxu0 0.0
        %1131 = vmatprep.subr.mxu0 0.0
        %1132 = vmatpush2.msra.mxu0 0.0
        %1133 = vmatprep.subr.mxu0 0.0
        %1134 = vmatpush2.msra.mxu0 0.0
        %1135 = vmatprep.subr.mxu0 0.0
        %1136 = vmatpush2.msra.mxu0 0.0
        %1137 = vmatprep.subr.mxu0 0.0
        %1138 = vmatpush2.msra.mxu0 0.0
        %1139 = vmatprep.subr.mxu0 0.0
        %1140 = vmatpush2.msra.mxu0 0.0
        %1141 = vmatprep.subr.mxu0 0.0
        %1142 = vmatpush2.msra.mxu0 0.0
        %1143 = vmatprep.subr.mxu0 0.0
        %1144 = vmatpush2.msra.mxu0 0.0
        %1145 = vmatprep.subr.mxu0 0.0
        %1146 = vmatpush2.msra.mxu0 0.0
        %1147 = vmatprep.subr.mxu0 0.0
        %1148 = vmatpush2.msra.mxu0 0.0
        %1149 = vmatprep.subr.mxu0 0.0
        %1150 = vmatpush2.msra.mxu0 0.0
        %1151 = vmatprep.subr.mxu0 0.0
        %1152 = vmatpush2.msra.mxu0 0.0
        %1153 = vmatprep.subr.mxu0 0.0
        %1154 = vmatpush2.msra.mxu0 0.0
        %1155 = vmatprep.subr.mxu0 0.0
        %1156 = vmatpush2.msra.mxu0 0.0
        %1157 = vmatprep.subr.mxu0 0.0
        %1158 = vmatpush2.msra.mxu0 0.0
        %1159 = vmatprep.mubr.f32.mxu0 0.0
        %1160 = vmatmul.mubr.f32.gmra.mxu0 %v1023
        %v1161 = vpop.f32.mrf.mxu0
        %v1162 = vadd.f32 0.0, %v1161
        %v1163 = vpop.f32.mrf.mxu0
        %1164 = vmatprep.mubr.f32.mxu0 0.0
        %1165 = vmatmul.mubr.f32.gmra.mxu0 %v1024
        %v1166 = vpop.f32.mrf.mxu0
        %v1167 = vadd.f32 0.0, %v1166
        %v1168 = vpop.f32.mrf.mxu0
        %1169 = vmatprep.mubr.f32.mxu0 0.0
        %1170 = vmatmul.mubr.f32.gmra.mxu0 %v1025
        %v1171 = vpop.f32.mrf.mxu0
        %v1172 = vadd.f32 0.0, %v1171
        %v1173 = vpop.f32.mrf.mxu0
        %1174 = vmatprep.mubr.f32.mxu0 0.0
        %1175 = vmatmul.mubr.f32.gmra.mxu0 %v1026
        %v1176 = vpop.f32.mrf.mxu0
        %v1177 = vadd.f32 0.0, %v1176
        %v1178 = vpop.f32.mrf.mxu0
        %1179 = vdwg.mxu0
        %1184 = vrot.lane.b32.xlu0 %v1162, 2
        %v1185 = vpop.permute.xlu0 %1184
        %1186 = vrot.lane.b32.xlu0 %v1167, 2
        %v1187 = vpop.permute.xlu0 %1186
        %1188 = vrot.lane.b32.xlu0 %v1172, 2
        %v1189 = vpop.permute.xlu0 %1188
        %1190 = vrot.lane.b32.xlu0 %v1177, 2
        %v1191 = vpop.permute.xlu0 %1190
        %v1196 = vsel %vm572, 0.0, %v1185
        %v1197 = vsel %vm572, 0.0, %v1187
        %v1198 = vsel %vm572, 0.0, %v1189
        %v1199 = vsel %vm572, 0.0, %v1191
        %vm1200 = vcmask 539648
        %v1201 = vsel %vm1200, %v1196, 0.0
        %v1202 = vsel %vm1200, %v1197, 0.0
        %v1203 = vsel %vm1200, %v1198, 0.0
        %v1204 = vsel %vm1200, %v1199, 0.0
        %1209 = vrot.lane.b32.xlu0 %v1201, 127
        %v1210 = vpop.permute.xlu0 %1209
        %1211 = vrot.lane.b32.xlu0 %v1202, 127
        %v1212 = vpop.permute.xlu0 %1211
        %1213 = vrot.lane.b32.xlu0 %v1203, 127
        %v1214 = vpop.permute.xlu0 %1213
        %1215 = vrot.lane.b32.xlu0 %v1204, 127
        %v1216 = vpop.permute.xlu0 %1215
        %1221 = vrot.lane.b32.xlu0 %v1201, 126
        %v1222 = vpop.permute.xlu0 %1221
        %1223 = vrot.lane.b32.xlu0 %v1202, 126
        %v1224 = vpop.permute.xlu0 %1223
        %1225 = vrot.lane.b32.xlu0 %v1203, 126
        %v1226 = vpop.permute.xlu0 %1225
        %1227 = vrot.lane.b32.xlu0 %v1204, 126
        %v1228 = vpop.permute.xlu0 %1227
        %1233 = vrot.lane.b32.xlu0 %v1201, 125
        %v1234 = vpop.permute.xlu0 %1233
        %1235 = vrot.lane.b32.xlu0 %v1202, 125
        %v1236 = vpop.permute.xlu0 %1235
        %1237 = vrot.lane.b32.xlu0 %v1203, 125
        %v1238 = vpop.permute.xlu0 %1237
        %1239 = vrot.lane.b32.xlu0 %v1204, 125
        %v1240 = vpop.permute.xlu0 %1239
        %1245 = vrot.lane.b32.xlu0 %v1201, 124
        %v1246 = vpop.permute.xlu0 %1245
        %1247 = vrot.lane.b32.xlu0 %v1202, 124
        %v1248 = vpop.permute.xlu0 %1247
        %1249 = vrot.lane.b32.xlu0 %v1203, 124
        %v1250 = vpop.permute.xlu0 %1249
        %1251 = vrot.lane.b32.xlu0 %v1204, 124
        %v1252 = vpop.permute.xlu0 %1251
        %s1257 = scalar_lea.vmem [#allocation5], 768
        %v1258 = vld [vmem:[%s1257] sm:$0xff]
        %v1259 = vld [vmem:[%s1257 + $0x8] sm:$0xff]
        %v1260 = vld [vmem:[%s1257 + $0x18] sm:$0xff]
        %v1261 = vld [vmem:[%s1257 + $0x20] sm:$0xff]
        %v1262 = vld [vmem:[%s1257 + $0x30] sm:$0xff]
        %v1263 = vld [vmem:[%s1257 + $0x38] sm:$0xff]
        %v1264 = vld [vmem:[%s1257 + $0x48] sm:$0xff]
        %v1265 = vld [vmem:[%s1257 + $0x50] sm:$0xff]
        %v1266 = vld [vmem:[%s1257 + $0x60] sm:$0xff]
        %v1267 = vld [vmem:[%s1257 + $0x68] sm:$0xff]
        %v1269 = vsel %vm901, %v1259, 0
        %v1272 = vsel %vm901, %v1261, 0
        %v1275 = vsel %vm901, %v1263, 0
        %v1278 = vsel %vm901, %v1265, 0
        %v1281 = vsel %vm901, %v1267, 0
        %1283 = vmatprep.subr.mxu0 0.0
        %1284 = vmatpush1.msra.mxu0 %v1240
        %1285 = vmatprep.subr.mxu0 0.0
        %1286 = vmatpush1.msra.mxu0 %v1238
        %1287 = vmatprep.subr.mxu0 0.0
        %1288 = vmatpush1.msra.mxu0 %v1236
        %1289 = vmatprep.subr.mxu0 0.0
        %1290 = vmatpush1.msra.mxu0 %v1234
        %1291 = vmatprep.subr.mxu0 0.0
        %1292 = vmatpush1.msra.mxu0 %v1228
        %1293 = vmatprep.subr.mxu0 0.0
        %1294 = vmatpush1.msra.mxu0 %v1226
        %1295 = vmatprep.subr.mxu0 0.0
        %1296 = vmatpush1.msra.mxu0 %v1224
        %1297 = vmatprep.subr.mxu0 0.0
        %1298 = vmatpush1.msra.mxu0 %v1222
        %1299 = vmatprep.subr.mxu0 0.0
        %1300 = vmatpush1.msra.mxu0 %v1216
        %1301 = vmatprep.subr.mxu0 0.0
        %1302 = vmatpush1.msra.mxu0 %v1214
        %1303 = vmatprep.subr.mxu0 0.0
        %1304 = vmatpush1.msra.mxu0 %v1212
        %1305 = vmatprep.subr.mxu0 0.0
        %1306 = vmatpush1.msra.mxu0 %v1210
        %1307 = vmatprep.subr.mxu0 0.0
        %1308 = vmatpush1.msra.mxu0 %v1204
        %1309 = vmatprep.subr.mxu0 0.0
        %1310 = vmatpush1.msra.mxu0 %v1203
        %1311 = vmatprep.subr.mxu0 0.0
        %1312 = vmatpush1.msra.mxu0 %v1202
        %1313 = vmatprep.subr.mxu0 0.0
        %1314 = vmatpush1.msra.mxu0 %v1201
        %1315 = vmatprep.subr.mxu0 0.0
        %1316 = vmatpush2.msra.mxu0 0.0
        %1317 = vmatprep.subr.mxu0 0.0
        %1318 = vmatpush2.msra.mxu0 0.0
        %1319 = vmatprep.subr.mxu0 0.0
        %1320 = vmatpush2.msra.mxu0 0.0
        %1321 = vmatprep.subr.mxu0 0.0
        %1322 = vmatpush2.msra.mxu0 0.0
        %1323 = vmatprep.subr.mxu0 0.0
        %1324 = vmatpush2.msra.mxu0 0.0
        %1325 = vmatprep.subr.mxu0 0.0
        %1326 = vmatpush2.msra.mxu0 0.0
        %1327 = vmatprep.subr.mxu0 0.0
        %1328 = vmatpush2.msra.mxu0 0.0
        %1329 = vmatprep.subr.mxu0 0.0
        %1330 = vmatpush2.msra.mxu0 0.0
        %1331 = vmatprep.subr.mxu0 0.0
        %1332 = vmatpush2.msra.mxu0 0.0
        %1333 = vmatprep.subr.mxu0 0.0
        %1334 = vmatpush2.msra.mxu0 0.0
        %1335 = vmatprep.subr.mxu0 0.0
        %1336 = vmatpush2.msra.mxu0 0.0
        %1337 = vmatprep.subr.mxu0 0.0
        %1338 = vmatpush2.msra.mxu0 %v475
        %1339 = vmatprep.subr.mxu0 0.0
        %1340 = vmatpush2.msra.mxu0 %v1252
        %1341 = vmatprep.subr.mxu0 0.0
        %1342 = vmatpush2.msra.mxu0 %v1250
        %1343 = vmatprep.subr.mxu0 0.0
        %1344 = vmatpush2.msra.mxu0 %v1248
        %1345 = vmatprep.subr.mxu0 0.0
        %1346 = vmatpush2.msra.mxu0 %v1246
        %1347 = vmatprep.mubr.f32.mxu0 %v1269
        %1348 = vmatmul.mubr.f32.gmra.mxu0 %v1258
        %v1349 = vpop.f32.mrf.mxu0
        %v1350 = vadd.f32 0.0, %v1349
        %v1351 = vpop.f32.mrf.mxu0
        %1352 = vmatprep.mubr.f32.mxu0 %v1272
        %1353 = vmatmul.mubr.f32.gmra.mxu0 %v1260
        %v1354 = vpop.f32.mrf.mxu0
        %v1355 = vadd.f32 0.0, %v1354
        %v1356 = vpop.f32.mrf.mxu0
        %1357 = vmatprep.mubr.f32.mxu0 %v1275
        %1358 = vmatmul.mubr.f32.gmra.mxu0 %v1262
        %v1359 = vpop.f32.mrf.mxu0
        %v1360 = vadd.f32 0.0, %v1359
        %v1361 = vpop.f32.mrf.mxu0
        %1362 = vmatprep.mubr.f32.mxu0 %v1278
        %1363 = vmatmul.mubr.f32.gmra.mxu0 %v1264
        %v1364 = vpop.f32.mrf.mxu0
        %v1365 = vadd.f32 0.0, %v1364
        %v1366 = vpop.f32.mrf.mxu0
        %1367 = vmatprep.mubr.f32.mxu0 %v1281
        %1368 = vmatmul.mubr.f32.gmra.mxu0 %v1266
        %v1369 = vpop.f32.mrf.mxu0
        %v1370 = vadd.f32 0.0, %v1369
        %v1371 = vpop.f32.mrf.mxu0
        %1372 = vdwg.mxu0
        %v1373 = vmax.f32 %v1350, 0.0
        %v1374 = vmax.f32 %v1355, 0.0
        %v1375 = vmax.f32 %v1360, 0.0
        %v1376 = vmax.f32 %v1365, 0.0
        %v1377 = vmax.f32 %v1370, 0.0
        %1383 = vrot.lane.b32.xlu0 %v1373, 2
        %v1384 = vpop.permute.xlu0 %1383
        %1385 = vrot.lane.b32.xlu0 %v1374, 2
        %v1386 = vpop.permute.xlu0 %1385
        %1387 = vrot.lane.b32.xlu0 %v1375, 2
        %v1388 = vpop.permute.xlu0 %1387
        %1389 = vrot.lane.b32.xlu0 %v1376, 2
        %v1390 = vpop.permute.xlu0 %1389
        %1391 = vrot.lane.b32.xlu0 %v1377, 2
        %v1392 = vpop.permute.xlu0 %1391
        %v1398 = vsel %vm572, 0.0, %v1384
        %v1399 = vsel %vm572, 0.0, %v1386
        %v1400 = vsel %vm572, 0.0, %v1388
        %v1401 = vsel %vm572, 0.0, %v1390
        %v1402 = vsel %vm572, 0.0, %v1392
        %v1403 = vsel %vm1200, %v1398, 0.0
        %v1404 = vsel %vm1200, %v1399, 0.0
        %v1405 = vsel %vm1200, %v1400, 0.0
        %v1406 = vsel %vm1200, %v1401, 0.0
        %v1407 = vsel %vm1200, %v1402, 0.0
        %1413 = vrot.lane.b32.xlu0 %v1403, 127
        %v1414 = vpop.permute.xlu0 %1413
        %1415 = vrot.lane.b32.xlu0 %v1404, 127
        %v1416 = vpop.permute.xlu0 %1415
        %1417 = vrot.lane.b32.xlu0 %v1405, 127
        %v1418 = vpop.permute.xlu0 %1417
        %1419 = vrot.lane.b32.xlu0 %v1406, 127
        %v1420 = vpop.permute.xlu0 %1419
        %1421 = vrot.lane.b32.xlu0 %v1407, 127
        %v1422 = vpop.permute.xlu0 %1421
        %1428 = vrot.lane.b32.xlu0 %v1403, 126
        %v1429 = vpop.permute.xlu0 %1428
        %1430 = vrot.lane.b32.xlu0 %v1404, 126
        %v1431 = vpop.permute.xlu0 %1430
        %1432 = vrot.lane.b32.xlu0 %v1405, 126
        %v1433 = vpop.permute.xlu0 %1432
        %1434 = vrot.lane.b32.xlu0 %v1406, 126
        %v1435 = vpop.permute.xlu0 %1434
        %1436 = vrot.lane.b32.xlu0 %v1407, 126
        %v1437 = vpop.permute.xlu0 %1436
        %1443 = vrot.lane.b32.xlu0 %v1403, 125
        %v1444 = vpop.permute.xlu0 %1443
        %1445 = vrot.lane.b32.xlu0 %v1404, 125
        %v1446 = vpop.permute.xlu0 %1445
        %1447 = vrot.lane.b32.xlu0 %v1405, 125
        %v1448 = vpop.permute.xlu0 %1447
        %1449 = vrot.lane.b32.xlu0 %v1406, 125
        %v1450 = vpop.permute.xlu0 %1449
        %1451 = vrot.lane.b32.xlu0 %v1407, 125
        %v1452 = vpop.permute.xlu0 %1451
        %1458 = vrot.lane.b32.xlu0 %v1403, 124
        %v1459 = vpop.permute.xlu0 %1458
        %1460 = vrot.lane.b32.xlu0 %v1404, 124
        %v1461 = vpop.permute.xlu0 %1460
        %1462 = vrot.lane.b32.xlu0 %v1405, 124
        %v1463 = vpop.permute.xlu0 %1462
        %1464 = vrot.lane.b32.xlu0 %v1406, 124
        %v1465 = vpop.permute.xlu0 %1464
        %1466 = vrot.lane.b32.xlu0 %v1407, 124
        %v1467 = vpop.permute.xlu0 %1466
        %s1473 = scalar_lea.vmem [#allocation5], 960
        %v1474 = vld [vmem:[%s1473] sm:$0xff]
        %v1475 = vld [vmem:[%s1473 + $0x8] sm:$0xff]
        %v1476 = vld [vmem:[%s1473 + $0x18] sm:$0xff]
        %v1477 = vld [vmem:[%s1473 + $0x20] sm:$0xff]
        %v1478 = vld [vmem:[%s1473 + $0x30] sm:$0xff]
        %v1479 = vld [vmem:[%s1473 + $0x38] sm:$0xff]
        %v1480 = vld [vmem:[%s1473 + $0x48] sm:$0xff]
        %v1481 = vld [vmem:[%s1473 + $0x50] sm:$0xff]
        %v1482 = vld [vmem:[%s1473 + $0x60] sm:$0xff]
        %v1483 = vld [vmem:[%s1473 + $0x68] sm:$0xff]
        %vm1484 = vcmask 596992
        %v1486 = vsel %vm1484, %v1475, 0
        %v1489 = vsel %vm1484, %v1477, 0
        %v1492 = vsel %vm1484, %v1479, 0
        %v1495 = vsel %vm1484, %v1481, 0
        %v1498 = vsel %vm1484, %v1483, 0
        %1500 = vmatprep.subr.mxu0 0.0
        %1501 = vmatpush1.msra.mxu0 %v1444
        %1502 = vmatprep.subr.mxu0 0.0
        %1503 = vmatpush1.msra.mxu0 %v1437
        %1504 = vmatprep.subr.mxu0 0.0
        %1505 = vmatpush1.msra.mxu0 %v1435
        %1506 = vmatprep.subr.mxu0 0.0
        %1507 = vmatpush1.msra.mxu0 %v1433
        %1508 = vmatprep.subr.mxu0 0.0
        %1509 = vmatpush1.msra.mxu0 %v1431
        %1510 = vmatprep.subr.mxu0 0.0
        %1511 = vmatpush1.msra.mxu0 %v1429
        %1512 = vmatprep.subr.mxu0 0.0
        %1513 = vmatpush1.msra.mxu0 %v1422
        %1514 = vmatprep.subr.mxu0 0.0
        %1515 = vmatpush1.msra.mxu0 %v1420
        %1516 = vmatprep.subr.mxu0 0.0
        %1517 = vmatpush1.msra.mxu0 %v1418
        %1518 = vmatprep.subr.mxu0 0.0
        %1519 = vmatpush1.msra.mxu0 %v1416
        %1520 = vmatprep.subr.mxu0 0.0
        %1521 = vmatpush1.msra.mxu0 %v1414
        %1522 = vmatprep.subr.mxu0 0.0
        %1523 = vmatpush1.msra.mxu0 %v1407
        %1524 = vmatprep.subr.mxu0 0.0
        %1525 = vmatpush1.msra.mxu0 %v1406
        %1526 = vmatprep.subr.mxu0 0.0
        %1527 = vmatpush1.msra.mxu0 %v1405
        %1528 = vmatprep.subr.mxu0 0.0
        %1529 = vmatpush1.msra.mxu0 %v1404
        %1530 = vmatprep.subr.mxu0 0.0
        %1531 = vmatpush1.msra.mxu0 %v1403
        %1532 = vmatprep.subr.mxu0 0.0
        %1533 = vmatpush2.msra.mxu0 0.0
        %1534 = vmatprep.subr.mxu0 0.0
        %1535 = vmatpush2.msra.mxu0 0.0
        %1536 = vmatprep.subr.mxu0 0.0
        %1537 = vmatpush2.msra.mxu0 0.0
        %1538 = vmatprep.subr.mxu0 0.0
        %1539 = vmatpush2.msra.mxu0 0.0
        %1540 = vmatprep.subr.mxu0 0.0
        %1541 = vmatpush2.msra.mxu0 0.0
        %1542 = vmatprep.subr.mxu0 0.0
        %1543 = vmatpush2.msra.mxu0 0.0
        %1544 = vmatprep.subr.mxu0 0.0
        %1545 = vmatpush2.msra.mxu0 %v475
        %1546 = vmatprep.subr.mxu0 0.0
        %1547 = vmatpush2.msra.mxu0 %v1467
        %1548 = vmatprep.subr.mxu0 0.0
        %1549 = vmatpush2.msra.mxu0 %v1465
        %1550 = vmatprep.subr.mxu0 0.0
        %1551 = vmatpush2.msra.mxu0 %v1463
        %1552 = vmatprep.subr.mxu0 0.0
        %1553 = vmatpush2.msra.mxu0 %v1461
        %1554 = vmatprep.subr.mxu0 0.0
        %1555 = vmatpush2.msra.mxu0 %v1459
        %1556 = vmatprep.subr.mxu0 0.0
        %1557 = vmatpush2.msra.mxu0 %v1452
        %1558 = vmatprep.subr.mxu0 0.0
        %1559 = vmatpush2.msra.mxu0 %v1450
        %1560 = vmatprep.subr.mxu0 0.0
        %1561 = vmatpush2.msra.mxu0 %v1448
        %1562 = vmatprep.subr.mxu0 0.0
        %1563 = vmatpush2.msra.mxu0 %v1446
        %1564 = vmatprep.mubr.f32.mxu0 %v1486
        %1565 = vmatmul.mubr.f32.gmra.mxu0 %v1474
        %v1566 = vpop.f32.mrf.mxu0
        %v1567 = vadd.f32 0.0, %v1566
        %v1568 = vpop.f32.mrf.mxu0
        %1569 = vmatprep.mubr.f32.mxu0 %v1489
        %1570 = vmatmul.mubr.f32.gmra.mxu0 %v1476
        %v1571 = vpop.f32.mrf.mxu0
        %v1572 = vadd.f32 0.0, %v1571
        %v1573 = vpop.f32.mrf.mxu0
        %1574 = vmatprep.mubr.f32.mxu0 %v1492
        %1575 = vmatmul.mubr.f32.gmra.mxu0 %v1478
        %v1576 = vpop.f32.mrf.mxu0
        %v1577 = vadd.f32 0.0, %v1576
        %v1578 = vpop.f32.mrf.mxu0
        %1579 = vmatprep.mubr.f32.mxu0 %v1495
        %1580 = vmatmul.mubr.f32.gmra.mxu0 %v1480
        %v1581 = vpop.f32.mrf.mxu0
        %v1582 = vadd.f32 0.0, %v1581
        %v1583 = vpop.f32.mrf.mxu0
        %1584 = vmatprep.mubr.f32.mxu0 %v1498
        %1585 = vmatmul.mubr.f32.gmra.mxu0 %v1482
        %v1586 = vpop.f32.mrf.mxu0
        %v1587 = vadd.f32 0.0, %v1586
        %v1588 = vpop.f32.mrf.mxu0
        %1589 = vdwg.mxu0
        %v1590 = vmax.f32 %v1567, 0.0
        %v1591 = vmax.f32 %v1572, 0.0
        %v1592 = vmax.f32 %v1577, 0.0
        %v1593 = vmax.f32 %v1582, 0.0
        %v1594 = vmax.f32 %v1587, 0.0
        %1600 = vrot.lane.b32.xlu0 %v1590, 127
        %v1601 = vpop.permute.xlu0 %1600
        %1602 = vrot.lane.b32.xlu0 %v1591, 127
        %v1603 = vpop.permute.xlu0 %1602
        %1604 = vrot.lane.b32.xlu0 %v1592, 127
        %v1605 = vpop.permute.xlu0 %1604
        %1606 = vrot.lane.b32.xlu0 %v1593, 127
        %v1607 = vpop.permute.xlu0 %1606
        %1608 = vrot.lane.b32.xlu0 %v1594, 127
        %v1609 = vpop.permute.xlu0 %1608
        %vm1615 = vcmask 515072
        %v1616 = vsel %vm1615, %v1601, %v1590
        %v1617 = vsel %vm1615, %v1603, %v1591
        %v1618 = vsel %vm1615, %v1605, %v1592
        %v1619 = vsel %vm1615, %v1607, %v1593
        %v1620 = vsel %vm1615, %v1609, %v1594
        %v1621 = vmax.f32 %v1590, %v1616
        %v1622 = vmax.f32 %v1591, %v1617
        %v1623 = vmax.f32 %v1592, %v1618
        %v1624 = vmax.f32 %v1593, %v1619
        %v1625 = vmax.f32 %v1594, %v1620
        %vm1626 = vcmask 523264
        %v1628 = vsel %vm1626, %v1621, 0
        %v1631 = vsel %vm1626, %v1622, 0
        %v1634 = vsel %vm1626, %v1623, 0
        %v1637 = vsel %vm1626, %v1624, 0
        %v1640 = vsel %vm1626, %v1625, 0
        %1642 = vmatprep.subr.mxu0 0.0
        %1643 = vmatpush1.msra.mxu0 0.0
        %1644 = vmatprep.subr.mxu0 0.0
        %1645 = vmatpush1.msra.mxu0 0.0
        %1646 = vmatprep.subr.mxu0 0.0
        %1647 = vmatpush1.msra.mxu0 0.0
        %1648 = vmatprep.subr.mxu0 0.0
        %1649 = vmatpush1.msra.mxu0 0.0
        %1650 = vmatprep.subr.mxu0 0.0
        %1651 = vmatpush1.msra.mxu0 0.0
        %1652 = vmatprep.subr.mxu0 0.0
        %1653 = vmatpush1.msra.mxu0 0.0
        %1654 = vmatprep.subr.mxu0 0.0
        %1655 = vmatpush1.msra.mxu0 0.0
        %1656 = vmatprep.subr.mxu0 0.0
        %1657 = vmatpush1.msra.mxu0 0.0
        %1658 = vmatprep.subr.mxu0 0.0
        %1659 = vmatpush1.msra.mxu0 %v1086
        %1660 = vmatprep.subr.mxu0 0.0
        %1661 = vmatpush1.msra.mxu0 %v1085
        %1662 = vmatprep.subr.mxu0 0.0
        %1663 = vmatpush1.msra.mxu0 %v1084
        %1664 = vmatprep.subr.mxu0 0.0
        %1665 = vmatpush1.msra.mxu0 %v1083
        %1666 = vmatprep.subr.mxu0 0.0
        %1667 = vmatpush1.msra.mxu0 %v1082
        %1668 = vmatprep.subr.mxu0 0.0
        %1669 = vmatpush1.msra.mxu0 %v1081
        %1670 = vmatprep.subr.mxu0 0.0
        %1671 = vmatpush1.msra.mxu0 %v1080
        %1672 = vmatprep.subr.mxu0 0.0
        %1673 = vmatpush1.msra.mxu0 %v1079
        %1674 = vmatprep.subr.mxu0 0.0
        %1675 = vmatpush2.msra.mxu0 0.0
        %1676 = vmatprep.subr.mxu0 0.0
        %1677 = vmatpush2.msra.mxu0 0.0
        %1678 = vmatprep.subr.mxu0 0.0
        %1679 = vmatpush2.msra.mxu0 0.0
        %1680 = vmatprep.subr.mxu0 0.0
        %1681 = vmatpush2.msra.mxu0 0.0
        %1682 = vmatprep.subr.mxu0 0.0
        %1683 = vmatpush2.msra.mxu0 0.0
        %1684 = vmatprep.subr.mxu0 0.0
        %1685 = vmatpush2.msra.mxu0 0.0
        %1686 = vmatprep.subr.mxu0 0.0
        %1687 = vmatpush2.msra.mxu0 0.0
        %1688 = vmatprep.subr.mxu0 0.0
        %1689 = vmatpush2.msra.mxu0 0.0
        %1690 = vmatprep.subr.mxu0 0.0
        %1691 = vmatpush2.msra.mxu0 0.0
        %1692 = vmatprep.subr.mxu0 0.0
        %1693 = vmatpush2.msra.mxu0 0.0
        %1694 = vmatprep.subr.mxu0 0.0
        %1695 = vmatpush2.msra.mxu0 0.0
        %1696 = vmatprep.subr.mxu0 0.0
        %1697 = vmatpush2.msra.mxu0 0.0
        %1698 = vmatprep.subr.mxu0 0.0
        %1699 = vmatpush2.msra.mxu0 0.0
        %1700 = vmatprep.subr.mxu0 0.0
        %1701 = vmatpush2.msra.mxu0 0.0
        %1702 = vmatprep.subr.mxu0 0.0
        %1703 = vmatpush2.msra.mxu0 0.0
        %1704 = vmatprep.subr.mxu0 0.0
        %1705 = vmatpush2.msra.mxu0 0.0
        %1706 = vmatprep.mubr.f32.mxu0 0.0
        %1707 = vmatmul.mubr.f32.gmra.mxu0 %v1628
        %v1708 = vpop.f32.mrf.mxu0
        %v1709 = vadd.f32 0.0, %v1708
        %v1710 = vpop.f32.mrf.mxu0
        %1711 = vmatprep.mubr.f32.mxu0 0.0
        %1712 = vmatmul.mubr.f32.gmra.mxu0 %v1631
        %v1713 = vpop.f32.mrf.mxu0
        %v1714 = vadd.f32 0.0, %v1713
        %v1715 = vpop.f32.mrf.mxu0
        %1716 = vmatprep.mubr.f32.mxu0 0.0
        %1717 = vmatmul.mubr.f32.gmra.mxu0 %v1634
        %v1718 = vpop.f32.mrf.mxu0
        %v1719 = vadd.f32 0.0, %v1718
        %v1720 = vpop.f32.mrf.mxu0
        %1721 = vmatprep.mubr.f32.mxu0 0.0
        %1722 = vmatmul.mubr.f32.gmra.mxu0 %v1637
        %v1723 = vpop.f32.mrf.mxu0
        %v1724 = vadd.f32 0.0, %v1723
        %v1725 = vpop.f32.mrf.mxu0
        %1726 = vmatprep.mubr.f32.mxu0 0.0
        %1727 = vmatmul.mubr.f32.gmra.mxu0 %v1640
        %v1728 = vpop.f32.mrf.mxu0
        %v1729 = vadd.f32 0.0, %v1728
        %v1730 = vpop.f32.mrf.mxu0
        %1731 = vdwg.mxu0
        %1737 = vrot.lane.b32.xlu0 %v1709, 2
        %v1738 = vpop.permute.xlu0 %1737
        %1739 = vrot.lane.b32.xlu0 %v1714, 2
        %v1740 = vpop.permute.xlu0 %1739
        %1741 = vrot.lane.b32.xlu0 %v1719, 2
        %v1742 = vpop.permute.xlu0 %1741
        %1743 = vrot.lane.b32.xlu0 %v1724, 2
        %v1744 = vpop.permute.xlu0 %1743
        %1745 = vrot.lane.b32.xlu0 %v1729, 2
        %v1746 = vpop.permute.xlu0 %1745
        %v1752 = vsel %vm572, 0.0, %v1738
        %v1753 = vsel %vm572, 0.0, %v1740
        %v1754 = vsel %vm572, 0.0, %v1742
        %v1755 = vsel %vm572, 0.0, %v1744
        %v1756 = vsel %vm572, 0.0, %v1746
        %vm1757 = vcmask 277504
        %v1758 = vsel %vm1757, %v1752, 0.0
        %v1759 = vsel %vm1757, %v1753, 0.0
        %v1760 = vsel %vm1757, %v1754, 0.0
        %v1761 = vsel %vm1757, %v1755, 0.0
        %v1762 = vsel %vm1757, %v1756, 0.0
        %1768 = vrot.lane.b32.xlu0 %v1758, 127
        %v1769 = vpop.permute.xlu0 %1768
        %1770 = vrot.lane.b32.xlu0 %v1759, 127
        %v1771 = vpop.permute.xlu0 %1770
        %1772 = vrot.lane.b32.xlu0 %v1760, 127
        %v1773 = vpop.permute.xlu0 %1772
        %1774 = vrot.lane.b32.xlu0 %v1761, 127
        %v1775 = vpop.permute.xlu0 %1774
        %1776 = vrot.lane.b32.xlu0 %v1762, 127
        %v1777 = vpop.permute.xlu0 %1776
        %1783 = vrot.lane.b32.xlu0 %v1758, 126
        %v1784 = vpop.permute.xlu0 %1783
        %1785 = vrot.lane.b32.xlu0 %v1759, 126
        %v1786 = vpop.permute.xlu0 %1785
        %1787 = vrot.lane.b32.xlu0 %v1760, 126
        %v1788 = vpop.permute.xlu0 %1787
        %1789 = vrot.lane.b32.xlu0 %v1761, 126
        %v1790 = vpop.permute.xlu0 %1789
        %1791 = vrot.lane.b32.xlu0 %v1762, 126
        %v1792 = vpop.permute.xlu0 %1791
        %1798 = vrot.lane.b32.xlu0 %v1758, 125
        %v1799 = vpop.permute.xlu0 %1798
        %1800 = vrot.lane.b32.xlu0 %v1759, 125
        %v1801 = vpop.permute.xlu0 %1800
        %1802 = vrot.lane.b32.xlu0 %v1760, 125
        %v1803 = vpop.permute.xlu0 %1802
        %1804 = vrot.lane.b32.xlu0 %v1761, 125
        %v1805 = vpop.permute.xlu0 %1804
        %1806 = vrot.lane.b32.xlu0 %v1762, 125
        %v1807 = vpop.permute.xlu0 %1806
        %1813 = vrot.lane.b32.xlu0 %v1758, 124
        %v1814 = vpop.permute.xlu0 %1813
        %1815 = vrot.lane.b32.xlu0 %v1759, 124
        %v1816 = vpop.permute.xlu0 %1815
        %1817 = vrot.lane.b32.xlu0 %v1760, 124
        %v1818 = vpop.permute.xlu0 %1817
        %1819 = vrot.lane.b32.xlu0 %v1761, 124
        %v1820 = vpop.permute.xlu0 %1819
        %1821 = vrot.lane.b32.xlu0 %v1762, 124
        %v1822 = vpop.permute.xlu0 %1821
        %s1828 = scalar_lea.vmem [#allocation5], 1152
        %v1829 = vld [vmem:[%s1828] sm:$0xff]
        %v1830 = vld [vmem:[%s1828 + $0x8] sm:$0xff]
        %v1831 = vld [vmem:[%s1828 + $0x18] sm:$0xff]
        %v1832 = vld [vmem:[%s1828 + $0x20] sm:$0xff]
        %v1833 = vld [vmem:[%s1828 + $0x30] sm:$0xff]
        %v1834 = vld [vmem:[%s1828 + $0x38] sm:$0xff]
        %v1835 = vld [vmem:[%s1828 + $0x48] sm:$0xff]
        %v1836 = vld [vmem:[%s1828 + $0x50] sm:$0xff]
        %v1837 = vld [vmem:[%s1828 + $0x60] sm:$0xff]
        %v1838 = vld [vmem:[%s1828 + $0x68] sm:$0xff]
        %v1839 = vld [vmem:[%s1828 + $0x78] sm:$0xff]
        %v1840 = vld [vmem:[%s1828 + $0x80] sm:$0xff]
        %v1842 = vsel %vm1484, %v1830, 0
        %v1845 = vsel %vm1484, %v1832, 0
        %v1848 = vsel %vm1484, %v1834, 0
        %v1851 = vsel %vm1484, %v1836, 0
        %v1854 = vsel %vm1484, %v1838, 0
        %v1857 = vsel %vm1484, %v1840, 0
        %1859 = vmatprep.subr.mxu0 0.0
        %1860 = vmatpush1.msra.mxu0 %v1799
        %1861 = vmatprep.subr.mxu0 0.0
        %1862 = vmatpush1.msra.mxu0 %v1792
        %1863 = vmatprep.subr.mxu0 0.0
        %1864 = vmatpush1.msra.mxu0 %v1790
        %1865 = vmatprep.subr.mxu0 0.0
        %1866 = vmatpush1.msra.mxu0 %v1788
        %1867 = vmatprep.subr.mxu0 0.0
        %1868 = vmatpush1.msra.mxu0 %v1786
        %1869 = vmatprep.subr.mxu0 0.0
        %1870 = vmatpush1.msra.mxu0 %v1784
        %1871 = vmatprep.subr.mxu0 0.0
        %1872 = vmatpush1.msra.mxu0 %v1777
        %1873 = vmatprep.subr.mxu0 0.0
        %1874 = vmatpush1.msra.mxu0 %v1775
        %1875 = vmatprep.subr.mxu0 0.0
        %1876 = vmatpush1.msra.mxu0 %v1773
        %1877 = vmatprep.subr.mxu0 0.0
        %1878 = vmatpush1.msra.mxu0 %v1771
        %1879 = vmatprep.subr.mxu0 0.0
        %1880 = vmatpush1.msra.mxu0 %v1769
        %1881 = vmatprep.subr.mxu0 0.0
        %1882 = vmatpush1.msra.mxu0 %v1762
        %1883 = vmatprep.subr.mxu0 0.0
        %1884 = vmatpush1.msra.mxu0 %v1761
        %1885 = vmatprep.subr.mxu0 0.0
        %1886 = vmatpush1.msra.mxu0 %v1760
        %1887 = vmatprep.subr.mxu0 0.0
        %1888 = vmatpush1.msra.mxu0 %v1759
        %1889 = vmatprep.subr.mxu0 0.0
        %1890 = vmatpush1.msra.mxu0 %v1758
        %1891 = vmatprep.subr.mxu0 0.0
        %1892 = vmatpush2.msra.mxu0 0.0
        %1893 = vmatprep.subr.mxu0 0.0
        %1894 = vmatpush2.msra.mxu0 0.0
        %1895 = vmatprep.subr.mxu0 0.0
        %1896 = vmatpush2.msra.mxu0 0.0
        %1897 = vmatprep.subr.mxu0 0.0
        %1898 = vmatpush2.msra.mxu0 0.0
        %1899 = vmatprep.subr.mxu0 0.0
        %1900 = vmatpush2.msra.mxu0 0.0
        %1901 = vmatprep.subr.mxu0 0.0
        %1902 = vmatpush2.msra.mxu0 0.0
        %1903 = vmatprep.subr.mxu0 0.0
        %1904 = vmatpush2.msra.mxu0 %v475
        %1905 = vmatprep.subr.mxu0 0.0
        %1906 = vmatpush2.msra.mxu0 %v1822
        %1907 = vmatprep.subr.mxu0 0.0
        %1908 = vmatpush2.msra.mxu0 %v1820
        %1909 = vmatprep.subr.mxu0 0.0
        %1910 = vmatpush2.msra.mxu0 %v1818
        %1911 = vmatprep.subr.mxu0 0.0
        %1912 = vmatpush2.msra.mxu0 %v1816
        %1913 = vmatprep.subr.mxu0 0.0
        %1914 = vmatpush2.msra.mxu0 %v1814
        %1915 = vmatprep.subr.mxu0 0.0
        %1916 = vmatpush2.msra.mxu0 %v1807
        %1917 = vmatprep.subr.mxu0 0.0
        %1918 = vmatpush2.msra.mxu0 %v1805
        %1919 = vmatprep.subr.mxu0 0.0
        %1920 = vmatpush2.msra.mxu0 %v1803
        %1921 = vmatprep.subr.mxu0 0.0
        %1922 = vmatpush2.msra.mxu0 %v1801
        %1923 = vmatprep.mubr.f32.mxu0 %v1842
        %1924 = vmatmul.mubr.f32.gmra.mxu0 %v1829
        %v1925 = vpop.f32.mrf.mxu0
        %v1926 = vadd.f32 0.0, %v1925
        %v1927 = vpop.f32.mrf.mxu0
        %1928 = vmatprep.mubr.f32.mxu0 %v1845
        %1929 = vmatmul.mubr.f32.gmra.mxu0 %v1831
        %v1930 = vpop.f32.mrf.mxu0
        %v1931 = vadd.f32 0.0, %v1930
        %v1932 = vpop.f32.mrf.mxu0
        %1933 = vmatprep.mubr.f32.mxu0 %v1848
        %1934 = vmatmul.mubr.f32.gmra.mxu0 %v1833
        %v1935 = vpop.f32.mrf.mxu0
        %v1936 = vadd.f32 0.0, %v1935
        %v1937 = vpop.f32.mrf.mxu0
        %1938 = vmatprep.mubr.f32.mxu0 %v1851
        %1939 = vmatmul.mubr.f32.gmra.mxu0 %v1835
        %v1940 = vpop.f32.mrf.mxu0
        %v1941 = vadd.f32 0.0, %v1940
        %v1942 = vpop.f32.mrf.mxu0
        %1943 = vmatprep.mubr.f32.mxu0 %v1854
        %1944 = vmatmul.mubr.f32.gmra.mxu0 %v1837
        %v1945 = vpop.f32.mrf.mxu0
        %v1946 = vadd.f32 0.0, %v1945
        %v1947 = vpop.f32.mrf.mxu0
        %1948 = vmatprep.mubr.f32.mxu0 %v1857
        %1949 = vmatmul.mubr.f32.gmra.mxu0 %v1839
        %v1950 = vpop.f32.mrf.mxu0
        %v1951 = vadd.f32 0.0, %v1950
        %v1952 = vpop.f32.mrf.mxu0
        %1953 = vdwg.mxu0
        %v1954 = vmax.f32 %v1926, 0.0
        %v1955 = vmax.f32 %v1931, 0.0
        %v1956 = vmax.f32 %v1936, 0.0
        %v1957 = vmax.f32 %v1941, 0.0
        %v1958 = vmax.f32 %v1946, 0.0
        %v1959 = vmax.f32 %v1951, 0.0
        %1966 = vrot.lane.b32.xlu0 %v1954, 2
        %v1967 = vpop.permute.xlu0 %1966
        %1968 = vrot.lane.b32.xlu0 %v1955, 2
        %v1969 = vpop.permute.xlu0 %1968
        %1970 = vrot.lane.b32.xlu0 %v1956, 2
        %v1971 = vpop.permute.xlu0 %1970
        %1972 = vrot.lane.b32.xlu0 %v1957, 2
        %v1973 = vpop.permute.xlu0 %1972
        %1974 = vrot.lane.b32.xlu0 %v1958, 2
        %v1975 = vpop.permute.xlu0 %1974
        %1976 = vrot.lane.b32.xlu0 %v1959, 2
        %v1977 = vpop.permute.xlu0 %1976
        %v1984 = vsel %vm572, 0.0, %v1967
        %v1985 = vsel %vm572, 0.0, %v1969
        %v1986 = vsel %vm572, 0.0, %v1971
        %v1987 = vsel %vm572, 0.0, %v1973
        %v1988 = vsel %vm572, 0.0, %v1975
        %v1989 = vsel %vm572, 0.0, %v1977
        %v1990 = vsel %vm1757, %v1984, 0.0
        %v1991 = vsel %vm1757, %v1985, 0.0
        %v1992 = vsel %vm1757, %v1986, 0.0
        %v1993 = vsel %vm1757, %v1987, 0.0
        %v1994 = vsel %vm1757, %v1988, 0.0
        %v1995 = vsel %vm1757, %v1989, 0.0
        %2002 = vrot.lane.b32.xlu0 %v1990, 127
        %v2003 = vpop.permute.xlu0 %2002
        %2004 = vrot.lane.b32.xlu0 %v1991, 127
        %v2005 = vpop.permute.xlu0 %2004
        %2006 = vrot.lane.b32.xlu0 %v1992, 127
        %v2007 = vpop.permute.xlu0 %2006
        %2008 = vrot.lane.b32.xlu0 %v1993, 127
        %v2009 = vpop.permute.xlu0 %2008
        %2010 = vrot.lane.b32.xlu0 %v1994, 127
        %v2011 = vpop.permute.xlu0 %2010
        %2012 = vrot.lane.b32.xlu0 %v1995, 127
        %v2013 = vpop.permute.xlu0 %2012
        %2020 = vrot.lane.b32.xlu0 %v1990, 126
        %v2021 = vpop.permute.xlu0 %2020
        %2022 = vrot.lane.b32.xlu0 %v1991, 126
        %v2023 = vpop.permute.xlu0 %2022
        %2024 = vrot.lane.b32.xlu0 %v1992, 126
        %v2025 = vpop.permute.xlu0 %2024
        %2026 = vrot.lane.b32.xlu0 %v1993, 126
        %v2027 = vpop.permute.xlu0 %2026
        %2028 = vrot.lane.b32.xlu0 %v1994, 126
        %v2029 = vpop.permute.xlu0 %2028
        %2030 = vrot.lane.b32.xlu0 %v1995, 126
        %v2031 = vpop.permute.xlu0 %2030
        %2038 = vrot.lane.b32.xlu0 %v1990, 125
        %v2039 = vpop.permute.xlu0 %2038
        %2040 = vrot.lane.b32.xlu0 %v1991, 125
        %v2041 = vpop.permute.xlu0 %2040
        %2042 = vrot.lane.b32.xlu0 %v1992, 125
        %v2043 = vpop.permute.xlu0 %2042
        %2044 = vrot.lane.b32.xlu0 %v1993, 125
        %v2045 = vpop.permute.xlu0 %2044
        %2046 = vrot.lane.b32.xlu0 %v1994, 125
        %v2047 = vpop.permute.xlu0 %2046
        %2048 = vrot.lane.b32.xlu0 %v1995, 125
        %v2049 = vpop.permute.xlu0 %2048
        %2056 = vrot.lane.b32.xlu0 %v1990, 124
        %v2057 = vpop.permute.xlu0 %2056
        %2058 = vrot.lane.b32.xlu0 %v1991, 124
        %v2059 = vpop.permute.xlu0 %2058
        %2060 = vrot.lane.b32.xlu0 %v1992, 124
        %v2061 = vpop.permute.xlu0 %2060
        %2062 = vrot.lane.b32.xlu0 %v1993, 124
        %v2063 = vpop.permute.xlu0 %2062
        %2064 = vrot.lane.b32.xlu0 %v1994, 124
        %v2065 = vpop.permute.xlu0 %2064
        %2066 = vrot.lane.b32.xlu0 %v1995, 124
        %v2067 = vpop.permute.xlu0 %2066
        %s2074 = scalar_lea.vmem [#allocation5], 1344
        %v2075 = vld [vmem:[%s2074] sm:$0xff]
        %v2076 = vld [vmem:[%s2074 + $0x8] sm:$0xff]
        %v2077 = vld [vmem:[%s2074 + $0x18] sm:$0xff]
        %v2078 = vld [vmem:[%s2074 + $0x20] sm:$0xff]
        %v2079 = vld [vmem:[%s2074 + $0x30] sm:$0xff]
        %v2080 = vld [vmem:[%s2074 + $0x38] sm:$0xff]
        %v2081 = vld [vmem:[%s2074 + $0x48] sm:$0xff]
        %v2082 = vld [vmem:[%s2074 + $0x50] sm:$0xff]
        %v2083 = vld [vmem:[%s2074 + $0x60] sm:$0xff]
        %v2084 = vld [vmem:[%s2074 + $0x68] sm:$0xff]
        %v2085 = vld [vmem:[%s2074 + $0x78] sm:$0xff]
        %v2086 = vld [vmem:[%s2074 + $0x80] sm:$0xff]
        %v2088 = vsel %vm463, %v2076, 0
        %v2091 = vsel %vm463, %v2078, 0
        %v2094 = vsel %vm463, %v2080, 0
        %v2097 = vsel %vm463, %v2082, 0
        %v2100 = vsel %vm463, %v2084, 0
        %v2103 = vsel %vm463, %v2086, 0
        %2105 = vmatprep.subr.mxu0 0.0
        %2106 = vmatpush1.msra.mxu0 %v2027
        %2107 = vmatprep.subr.mxu0 0.0
        %2108 = vmatpush1.msra.mxu0 %v2025
        %2109 = vmatprep.subr.mxu0 0.0
        %2110 = vmatpush1.msra.mxu0 %v2023
        %2111 = vmatprep.subr.mxu0 0.0
        %2112 = vmatpush1.msra.mxu0 %v2021
        %2113 = vmatprep.subr.mxu0 0.0
        %2114 = vmatpush1.msra.mxu0 %v2013
        %2115 = vmatprep.subr.mxu0 0.0
        %2116 = vmatpush1.msra.mxu0 %v2011
        %2117 = vmatprep.subr.mxu0 0.0
        %2118 = vmatpush1.msra.mxu0 %v2009
        %2119 = vmatprep.subr.mxu0 0.0
        %2120 = vmatpush1.msra.mxu0 %v2007
        %2121 = vmatprep.subr.mxu0 0.0
        %2122 = vmatpush1.msra.mxu0 %v2005
        %2123 = vmatprep.subr.mxu0 0.0
        %2124 = vmatpush1.msra.mxu0 %v2003
        %2125 = vmatprep.subr.mxu0 0.0
        %2126 = vmatpush1.msra.mxu0 %v1995
        %2127 = vmatprep.subr.mxu0 0.0
        %2128 = vmatpush1.msra.mxu0 %v1994
        %2129 = vmatprep.subr.mxu0 0.0
        %2130 = vmatpush1.msra.mxu0 %v1993
        %2131 = vmatprep.subr.mxu0 0.0
        %2132 = vmatpush1.msra.mxu0 %v1992
        %2133 = vmatprep.subr.mxu0 0.0
        %2134 = vmatpush1.msra.mxu0 %v1991
        %2135 = vmatprep.subr.mxu0 0.0
        %2136 = vmatpush1.msra.mxu0 %v1990
        %2137 = vmatprep.subr.mxu0 0.0
        %2138 = vmatpush2.msra.mxu0 0.0
        %2139 = vmatprep.subr.mxu0 0.0
        %2140 = vmatpush2.msra.mxu0 %v475
        %2141 = vmatprep.subr.mxu0 0.0
        %2142 = vmatpush2.msra.mxu0 %v2067
        %2143 = vmatprep.subr.mxu0 0.0
        %2144 = vmatpush2.msra.mxu0 %v2065
        %2145 = vmatprep.subr.mxu0 0.0
        %2146 = vmatpush2.msra.mxu0 %v2063
        %2147 = vmatprep.subr.mxu0 0.0
        %2148 = vmatpush2.msra.mxu0 %v2061
        %2149 = vmatprep.subr.mxu0 0.0
        %2150 = vmatpush2.msra.mxu0 %v2059
        %2151 = vmatprep.subr.mxu0 0.0
        %2152 = vmatpush2.msra.mxu0 %v2057
        %2153 = vmatprep.subr.mxu0 0.0
        %2154 = vmatpush2.msra.mxu0 %v2049
        %2155 = vmatprep.subr.mxu0 0.0
        %2156 = vmatpush2.msra.mxu0 %v2047
        %2157 = vmatprep.subr.mxu0 0.0
        %2158 = vmatpush2.msra.mxu0 %v2045
        %2159 = vmatprep.subr.mxu0 0.0
        %2160 = vmatpush2.msra.mxu0 %v2043
        %2161 = vmatprep.subr.mxu0 0.0
        %2162 = vmatpush2.msra.mxu0 %v2041
        %2163 = vmatprep.subr.mxu0 0.0
        %2164 = vmatpush2.msra.mxu0 %v2039
        %2165 = vmatprep.subr.mxu0 0.0
        %2166 = vmatpush2.msra.mxu0 %v2031
        %2167 = vmatprep.subr.mxu0 0.0
        %2168 = vmatpush2.msra.mxu0 %v2029
        %2169 = vmatprep.mubr.f32.mxu0 %v2088
        %2170 = vmatmul.mubr.f32.gmra.mxu0 %v2075
        %v2171 = vpop.f32.mrf.mxu0
        %v2172 = vadd.f32 0.0, %v2171
        %v2173 = vpop.f32.mrf.mxu0
        %2174 = vmatprep.mubr.f32.mxu0 %v2091
        %2175 = vmatmul.mubr.f32.gmra.mxu0 %v2077
        %v2176 = vpop.f32.mrf.mxu0
        %v2177 = vadd.f32 0.0, %v2176
        %v2178 = vpop.f32.mrf.mxu0
        %2179 = vmatprep.mubr.f32.mxu0 %v2094
        %2180 = vmatmul.mubr.f32.gmra.mxu0 %v2079
        %v2181 = vpop.f32.mrf.mxu0
        %v2182 = vadd.f32 0.0, %v2181
        %v2183 = vpop.f32.mrf.mxu0
        %2184 = vmatprep.mubr.f32.mxu0 %v2097
        %2185 = vmatmul.mubr.f32.gmra.mxu0 %v2081
        %v2186 = vpop.f32.mrf.mxu0
        %v2187 = vadd.f32 0.0, %v2186
        %v2188 = vpop.f32.mrf.mxu0
        %2189 = vmatprep.mubr.f32.mxu0 %v2100
        %2190 = vmatmul.mubr.f32.gmra.mxu0 %v2083
        %v2191 = vpop.f32.mrf.mxu0
        %v2192 = vadd.f32 0.0, %v2191
        %v2193 = vpop.f32.mrf.mxu0
        %2194 = vmatprep.mubr.f32.mxu0 %v2103
        %2195 = vmatmul.mubr.f32.gmra.mxu0 %v2085
        %v2196 = vpop.f32.mrf.mxu0
        %v2197 = vadd.f32 0.0, %v2196
        %v2198 = vpop.f32.mrf.mxu0
        %2199 = vdwg.mxu0
        %v2200 = vmax.f32 %v2172, 0.0
        %v2201 = vmax.f32 %v2177, 0.0
        %v2202 = vmax.f32 %v2182, 0.0
        %v2203 = vmax.f32 %v2187, 0.0
        %v2204 = vmax.f32 %v2192, 0.0
        %v2205 = vmax.f32 %v2197, 0.0
        %2212 = vrot.lane.b32.xlu0 %v2200, 127
        %v2213 = vpop.permute.xlu0 %2212
        %2214 = vrot.lane.b32.xlu0 %v2201, 127
        %v2215 = vpop.permute.xlu0 %2214
        %2216 = vrot.lane.b32.xlu0 %v2202, 127
        %v2217 = vpop.permute.xlu0 %2216
        %2218 = vrot.lane.b32.xlu0 %v2203, 127
        %v2219 = vpop.permute.xlu0 %2218
        %2220 = vrot.lane.b32.xlu0 %v2204, 127
        %v2221 = vpop.permute.xlu0 %2220
        %2222 = vrot.lane.b32.xlu0 %v2205, 127
        %v2223 = vpop.permute.xlu0 %2222
        %vm2230 = vcmask 252928
        %v2231 = vsel %vm2230, %v2213, %v2200
        %v2232 = vsel %vm2230, %v2215, %v2201
        %v2233 = vsel %vm2230, %v2217, %v2202
        %v2234 = vsel %vm2230, %v2219, %v2203
        %v2235 = vsel %vm2230, %v2221, %v2204
        %v2236 = vsel %vm2230, %v2223, %v2205
        %v2237 = vmax.f32 %v2200, %v2231
        %v2238 = vmax.f32 %v2201, %v2232
        %v2239 = vmax.f32 %v2202, %v2233
        %v2240 = vmax.f32 %v2203, %v2234
        %v2241 = vmax.f32 %v2204, %v2235
        %v2242 = vmax.f32 %v2205, %v2236
        %vm2243 = vcmask 261120
        %v2245 = vsel %vm2243, %v2237, 0
        %v2248 = vsel %vm2243, %v2238, 0
        %v2251 = vsel %vm2243, %v2239, 0
        %v2254 = vsel %vm2243, %v2240, 0
        %v2257 = vsel %vm2243, %v2241, 0
        %v2260 = vsel %vm2243, %v2242, 0
        %2262 = vmatprep.subr.mxu0 0.0
        %2263 = vmatpush1.msra.mxu0 0.0
        %2264 = vmatprep.subr.mxu0 0.0
        %2265 = vmatpush1.msra.mxu0 0.0
        %2266 = vmatprep.subr.mxu0 0.0
        %2267 = vmatpush1.msra.mxu0 0.0
        %2268 = vmatprep.subr.mxu0 0.0
        %2269 = vmatpush1.msra.mxu0 0.0
        %2270 = vmatprep.subr.mxu0 0.0
        %2271 = vmatpush1.msra.mxu0 0.0
        %2272 = vmatprep.subr.mxu0 0.0
        %2273 = vmatpush1.msra.mxu0 0.0
        %2274 = vmatprep.subr.mxu0 0.0
        %2275 = vmatpush1.msra.mxu0 0.0
        %2276 = vmatprep.subr.mxu0 0.0
        %2277 = vmatpush1.msra.mxu0 0.0
        %2278 = vmatprep.subr.mxu0 0.0
        %2279 = vmatpush1.msra.mxu0 0.0
        %2280 = vmatprep.subr.mxu0 0.0
        %2281 = vmatpush1.msra.mxu0 0.0
        %2282 = vmatprep.subr.mxu0 0.0
        %2283 = vmatpush1.msra.mxu0 0.0
        %2284 = vmatprep.subr.mxu0 0.0
        %2285 = vmatpush1.msra.mxu0 0.0
        %2286 = vmatprep.subr.mxu0 0.0
        %2287 = vmatpush1.msra.mxu0 %v1082
        %2288 = vmatprep.subr.mxu0 0.0
        %2289 = vmatpush1.msra.mxu0 %v1081
        %2290 = vmatprep.subr.mxu0 0.0
        %2291 = vmatpush1.msra.mxu0 %v1080
        %2292 = vmatprep.subr.mxu0 0.0
        %2293 = vmatpush1.msra.mxu0 %v1079
        %2294 = vmatprep.subr.mxu0 0.0
        %2295 = vmatpush2.msra.mxu0 0.0
        %2296 = vmatprep.subr.mxu0 0.0
        %2297 = vmatpush2.msra.mxu0 0.0
        %2298 = vmatprep.subr.mxu0 0.0
        %2299 = vmatpush2.msra.mxu0 0.0
        %2300 = vmatprep.subr.mxu0 0.0
        %2301 = vmatpush2.msra.mxu0 0.0
        %2302 = vmatprep.subr.mxu0 0.0
        %2303 = vmatpush2.msra.mxu0 0.0
        %2304 = vmatprep.subr.mxu0 0.0
        %2305 = vmatpush2.msra.mxu0 0.0
        %2306 = vmatprep.subr.mxu0 0.0
        %2307 = vmatpush2.msra.mxu0 0.0
        %2308 = vmatprep.subr.mxu0 0.0
        %2309 = vmatpush2.msra.mxu0 0.0
        %2310 = vmatprep.subr.mxu0 0.0
        %2311 = vmatpush2.msra.mxu0 0.0
        %2312 = vmatprep.subr.mxu0 0.0
        %2313 = vmatpush2.msra.mxu0 0.0
        %2314 = vmatprep.subr.mxu0 0.0
        %2315 = vmatpush2.msra.mxu0 0.0
        %2316 = vmatprep.subr.mxu0 0.0
        %2317 = vmatpush2.msra.mxu0 0.0
        %2318 = vmatprep.subr.mxu0 0.0
        %2319 = vmatpush2.msra.mxu0 0.0
        %2320 = vmatprep.subr.mxu0 0.0
        %2321 = vmatpush2.msra.mxu0 0.0
        %2322 = vmatprep.subr.mxu0 0.0
        %2323 = vmatpush2.msra.mxu0 0.0
        %2324 = vmatprep.subr.mxu0 0.0
        %2325 = vmatpush2.msra.mxu0 0.0
        %2326 = vmatprep.mubr.f32.mxu0 0.0
        %2327 = vmatmul.mubr.f32.gmra.mxu0 %v2245
        %v2328 = vpop.f32.mrf.mxu0
        %v2329 = vadd.f32 0.0, %v2328
        %v2330 = vpop.f32.mrf.mxu0
        %2331 = vmatprep.mubr.f32.mxu0 0.0
        %2332 = vmatmul.mubr.f32.gmra.mxu0 %v2248
        %v2333 = vpop.f32.mrf.mxu0
        %v2334 = vadd.f32 0.0, %v2333
        %v2335 = vpop.f32.mrf.mxu0
        %2336 = vmatprep.mubr.f32.mxu0 0.0
        %2337 = vmatmul.mubr.f32.gmra.mxu0 %v2251
        %v2338 = vpop.f32.mrf.mxu0
        %v2339 = vadd.f32 0.0, %v2338
        %v2340 = vpop.f32.mrf.mxu0
        %2341 = vmatprep.mubr.f32.mxu0 0.0
        %2342 = vmatmul.mubr.f32.gmra.mxu0 %v2254
        %v2343 = vpop.f32.mrf.mxu0
        %v2344 = vadd.f32 0.0, %v2343
        %v2345 = vpop.f32.mrf.mxu0
        %2346 = vmatprep.mubr.f32.mxu0 0.0
        %2347 = vmatmul.mubr.f32.gmra.mxu0 %v2257
        %v2348 = vpop.f32.mrf.mxu0
        %v2349 = vadd.f32 0.0, %v2348
        %v2350 = vpop.f32.mrf.mxu0
        %2351 = vmatprep.mubr.f32.mxu0 0.0
        %2352 = vmatmul.mubr.f32.gmra.mxu0 %v2260
        %v2353 = vpop.f32.mrf.mxu0
        %v2354 = vadd.f32 0.0, %v2353
        %v2355 = vpop.f32.mrf.mxu0
        %2356 = vdwg.mxu0
        %2363 = vrot.lane.b32.xlu0 %v2329, 1
        %v2364 = vpop.permute.xlu0 %2363
        %2365 = vrot.lane.b32.xlu0 %v2334, 1
        %v2366 = vpop.permute.xlu0 %2365
        %2367 = vrot.lane.b32.xlu0 %v2339, 1
        %v2368 = vpop.permute.xlu0 %2367
        %2369 = vrot.lane.b32.xlu0 %v2344, 1
        %v2370 = vpop.permute.xlu0 %2369
        %2371 = vrot.lane.b32.xlu0 %v2349, 1
        %v2372 = vpop.permute.xlu0 %2371
        %2373 = vrot.lane.b32.xlu0 %v2354, 1
        %v2374 = vpop.permute.xlu0 %2373
        %vm2381 = vcmask 7168
        %v2382 = vsel %vm2381, 0.0, %v2364
        %v2383 = vsel %vm2381, 0.0, %v2366
        %v2384 = vsel %vm2381, 0.0, %v2368
        %v2385 = vsel %vm2381, 0.0, %v2370
        %v2386 = vsel %vm2381, 0.0, %v2372
        %v2387 = vsel %vm2381, 0.0, %v2374
        %vm2388 = vcmask 138240
        %v2389 = vsel %vm2388, %v2382, 0.0
        %v2390 = vsel %vm2388, %v2383, 0.0
        %v2391 = vsel %vm2388, %v2384, 0.0
        %v2392 = vsel %vm2388, %v2385, 0.0
        %v2393 = vsel %vm2388, %v2386, 0.0
        %v2394 = vsel %vm2388, %v2387, 0.0
        %2401 = vrot.lane.b32.xlu0 %v2389, 127
        %v2402 = vpop.permute.xlu0 %2401
        %2403 = vrot.lane.b32.xlu0 %v2390, 127
        %v2404 = vpop.permute.xlu0 %2403
        %2405 = vrot.lane.b32.xlu0 %v2391, 127
        %v2406 = vpop.permute.xlu0 %2405
        %2407 = vrot.lane.b32.xlu0 %v2392, 127
        %v2408 = vpop.permute.xlu0 %2407
        %2409 = vrot.lane.b32.xlu0 %v2393, 127
        %v2410 = vpop.permute.xlu0 %2409
        %2411 = vrot.lane.b32.xlu0 %v2394, 127
        %v2412 = vpop.permute.xlu0 %2411
        %2419 = vrot.lane.b32.xlu0 %v2389, 126
        %v2420 = vpop.permute.xlu0 %2419
        %2421 = vrot.lane.b32.xlu0 %v2390, 126
        %v2422 = vpop.permute.xlu0 %2421
        %2423 = vrot.lane.b32.xlu0 %v2391, 126
        %v2424 = vpop.permute.xlu0 %2423
        %2425 = vrot.lane.b32.xlu0 %v2392, 126
        %v2426 = vpop.permute.xlu0 %2425
        %2427 = vrot.lane.b32.xlu0 %v2393, 126
        %v2428 = vpop.permute.xlu0 %2427
        %2429 = vrot.lane.b32.xlu0 %v2394, 126
        %v2430 = vpop.permute.xlu0 %2429
        %s2437 = scalar_lea.vmem [#allocation5], 1536
        %v2438 = vld [vmem:[%s2437] sm:$0xff]
        %v2439 = vld [vmem:[%s2437 + $0x8] sm:$0xff]
        %v2440 = vld [vmem:[%s2437 + $0x18] sm:$0xff]
        %v2441 = vld [vmem:[%s2437 + $0x20] sm:$0xff]
        %v2442 = vld [vmem:[%s2437 + $0x30] sm:$0xff]
        %v2443 = vld [vmem:[%s2437 + $0x38] sm:$0xff]
        %v2444 = vld [vmem:[%s2437 + $0x48] sm:$0xff]
        %v2445 = vld [vmem:[%s2437 + $0x50] sm:$0xff]
        %v2446 = vld [vmem:[%s2437 + $0x60] sm:$0xff]
        %v2447 = vld [vmem:[%s2437 + $0x68] sm:$0xff]
        %v2448 = vld [vmem:[%s2437 + $0x78] sm:$0xff]
        %v2449 = vld [vmem:[%s2437 + $0x80] sm:$0xff]
        %v2450 = vld [vmem:[%s2437 + $0x90] sm:$0xff]
        %v2451 = vld [vmem:[%s2437 + $0x98] sm:$0xff]
        %v2453 = vsel %vm2388, %v2439, 0
        %v2456 = vsel %vm2388, %v2441, 0
        %v2459 = vsel %vm2388, %v2443, 0
        %v2462 = vsel %vm2388, %v2445, 0
        %v2465 = vsel %vm2388, %v2447, 0
        %v2468 = vsel %vm2388, %v2449, 0
        %v2471 = vsel %vm2388, %v2451, 0
        %2473 = vmatprep.subr.mxu0 0.0
        %2474 = vmatpush1.msra.mxu0 %v2426
        %2475 = vmatprep.subr.mxu0 0.0
        %2476 = vmatpush1.msra.mxu0 %v2424
        %2477 = vmatprep.subr.mxu0 0.0
        %2478 = vmatpush1.msra.mxu0 %v2422
        %2479 = vmatprep.subr.mxu0 0.0
        %2480 = vmatpush1.msra.mxu0 %v2420
        %2481 = vmatprep.subr.mxu0 0.0
        %2482 = vmatpush1.msra.mxu0 %v2412
        %2483 = vmatprep.subr.mxu0 0.0
        %2484 = vmatpush1.msra.mxu0 %v2410
        %2485 = vmatprep.subr.mxu0 0.0
        %2486 = vmatpush1.msra.mxu0 %v2408
        %2487 = vmatprep.subr.mxu0 0.0
        %2488 = vmatpush1.msra.mxu0 %v2406
        %2489 = vmatprep.subr.mxu0 0.0
        %2490 = vmatpush1.msra.mxu0 %v2404
        %2491 = vmatprep.subr.mxu0 0.0
        %2492 = vmatpush1.msra.mxu0 %v2402
        %2493 = vmatprep.subr.mxu0 0.0
        %2494 = vmatpush1.msra.mxu0 %v2394
        %2495 = vmatprep.subr.mxu0 0.0
        %2496 = vmatpush1.msra.mxu0 %v2393
        %2497 = vmatprep.subr.mxu0 0.0
        %2498 = vmatpush1.msra.mxu0 %v2392
        %2499 = vmatprep.subr.mxu0 0.0
        %2500 = vmatpush1.msra.mxu0 %v2391
        %2501 = vmatprep.subr.mxu0 0.0
        %2502 = vmatpush1.msra.mxu0 %v2390
        %2503 = vmatprep.subr.mxu0 0.0
        %2504 = vmatpush1.msra.mxu0 %v2389
        %2505 = vmatprep.subr.mxu0 0.0
        %2506 = vmatpush2.msra.mxu0 0.0
        %2507 = vmatprep.subr.mxu0 0.0
        %2508 = vmatpush2.msra.mxu0 0.0
        %2509 = vmatprep.subr.mxu0 0.0
        %2510 = vmatpush2.msra.mxu0 0.0
        %2511 = vmatprep.subr.mxu0 0.0
        %2512 = vmatpush2.msra.mxu0 0.0
        %2513 = vmatprep.subr.mxu0 0.0
        %2514 = vmatpush2.msra.mxu0 0.0
        %2515 = vmatprep.subr.mxu0 0.0
        %2516 = vmatpush2.msra.mxu0 0.0
        %2517 = vmatprep.subr.mxu0 0.0
        %2518 = vmatpush2.msra.mxu0 0.0
        %2519 = vmatprep.subr.mxu0 0.0
        %2520 = vmatpush2.msra.mxu0 0.0
        %2521 = vmatprep.subr.mxu0 0.0
        %2522 = vmatpush2.msra.mxu0 0.0
        %2523 = vmatprep.subr.mxu0 0.0
        %2524 = vmatpush2.msra.mxu0 0.0
        %2525 = vmatprep.subr.mxu0 0.0
        %2526 = vmatpush2.msra.mxu0 0.0
        %2527 = vmatprep.subr.mxu0 0.0
        %2528 = vmatpush2.msra.mxu0 0.0
        %2529 = vmatprep.subr.mxu0 0.0
        %2530 = vmatpush2.msra.mxu0 0.0
        %2531 = vmatprep.subr.mxu0 0.0
        %2532 = vmatpush2.msra.mxu0 %v475
        %2533 = vmatprep.subr.mxu0 0.0
        %2534 = vmatpush2.msra.mxu0 %v2430
        %2535 = vmatprep.subr.mxu0 0.0
        %2536 = vmatpush2.msra.mxu0 %v2428
        %2537 = vmatprep.mubr.f32.mxu0 %v2453
        %2538 = vmatmul.mubr.f32.gmra.mxu0 %v2438
        %v2539 = vpop.f32.mrf.mxu0
        %v2540 = vadd.f32 0.0, %v2539
        %v2541 = vpop.f32.mrf.mxu0
        %2542 = vmatprep.mubr.f32.mxu0 %v2456
        %2543 = vmatmul.mubr.f32.gmra.mxu0 %v2440
        %v2544 = vpop.f32.mrf.mxu0
        %v2545 = vadd.f32 0.0, %v2544
        %v2546 = vpop.f32.mrf.mxu0
        %2547 = vmatprep.mubr.f32.mxu0 %v2459
        %2548 = vmatmul.mubr.f32.gmra.mxu0 %v2442
        %v2549 = vpop.f32.mrf.mxu0
        %v2550 = vadd.f32 0.0, %v2549
        %v2551 = vpop.f32.mrf.mxu0
        %2552 = vmatprep.mubr.f32.mxu0 %v2462
        %2553 = vmatmul.mubr.f32.gmra.mxu0 %v2444
        %v2554 = vpop.f32.mrf.mxu0
        %v2555 = vadd.f32 0.0, %v2554
        %v2556 = vpop.f32.mrf.mxu0
        %2557 = vmatprep.mubr.f32.mxu0 %v2465
        %2558 = vmatmul.mubr.f32.gmra.mxu0 %v2446
        %v2559 = vpop.f32.mrf.mxu0
        %v2560 = vadd.f32 0.0, %v2559
        %v2561 = vpop.f32.mrf.mxu0
        %2562 = vmatprep.mubr.f32.mxu0 %v2468
        %2563 = vmatmul.mubr.f32.gmra.mxu0 %v2448
        %v2564 = vpop.f32.mrf.mxu0
        %v2565 = vadd.f32 0.0, %v2564
        %v2566 = vpop.f32.mrf.mxu0
        %2567 = vmatprep.mubr.f32.mxu0 %v2471
        %2568 = vmatmul.mubr.f32.gmra.mxu0 %v2450
        %v2569 = vpop.f32.mrf.mxu0
        %v2570 = vadd.f32 0.0, %v2569
        %v2571 = vpop.f32.mrf.mxu0
        %2572 = vdwg.mxu0
        %v2573 = vmax.f32 %v2540, 0.0
        %v2574 = vmax.f32 %v2545, 0.0
        %v2575 = vmax.f32 %v2550, 0.0
        %v2576 = vmax.f32 %v2555, 0.0
        %v2577 = vmax.f32 %v2560, 0.0
        %v2578 = vmax.f32 %v2565, 0.0
        %v2579 = vmax.f32 %v2570, 0.0
        %2587 = vrot.lane.b32.xlu0 %v2573, 1
        %v2588 = vpop.permute.xlu0 %2587
        %2589 = vrot.lane.b32.xlu0 %v2574, 1
        %v2590 = vpop.permute.xlu0 %2589
        %2591 = vrot.lane.b32.xlu0 %v2575, 1
        %v2592 = vpop.permute.xlu0 %2591
        %2593 = vrot.lane.b32.xlu0 %v2576, 1
        %v2594 = vpop.permute.xlu0 %2593
        %2595 = vrot.lane.b32.xlu0 %v2577, 1
        %v2596 = vpop.permute.xlu0 %2595
        %2597 = vrot.lane.b32.xlu0 %v2578, 1
        %v2598 = vpop.permute.xlu0 %2597
        %2599 = vrot.lane.b32.xlu0 %v2579, 1
        %v2600 = vpop.permute.xlu0 %2599
        %v2608 = vsel %vm2381, 0.0, %v2588
        %v2609 = vsel %vm2381, 0.0, %v2590
        %v2610 = vsel %vm2381, 0.0, %v2592
        %v2611 = vsel %vm2381, 0.0, %v2594
        %v2612 = vsel %vm2381, 0.0, %v2596
        %v2613 = vsel %vm2381, 0.0, %v2598
        %v2614 = vsel %vm2381, 0.0, %v2600
        %v2615 = vsel %vm2388, %v2608, 0.0
        %v2616 = vsel %vm2388, %v2609, 0.0
        %v2617 = vsel %vm2388, %v2610, 0.0
        %v2618 = vsel %vm2388, %v2611, 0.0
        %v2619 = vsel %vm2388, %v2612, 0.0
        %v2620 = vsel %vm2388, %v2613, 0.0
        %v2621 = vsel %vm2388, %v2614, 0.0
        %2629 = vrot.lane.b32.xlu0 %v2615, 127
        %v2630 = vpop.permute.xlu0 %2629
        %2631 = vrot.lane.b32.xlu0 %v2616, 127
        %v2632 = vpop.permute.xlu0 %2631
        %2633 = vrot.lane.b32.xlu0 %v2617, 127
        %v2634 = vpop.permute.xlu0 %2633
        %2635 = vrot.lane.b32.xlu0 %v2618, 127
        %v2636 = vpop.permute.xlu0 %2635
        %2637 = vrot.lane.b32.xlu0 %v2619, 127
        %v2638 = vpop.permute.xlu0 %2637
        %2639 = vrot.lane.b32.xlu0 %v2620, 127
        %v2640 = vpop.permute.xlu0 %2639
        %2641 = vrot.lane.b32.xlu0 %v2621, 127
        %v2642 = vpop.permute.xlu0 %2641
        %2650 = vrot.lane.b32.xlu0 %v2615, 126
        %v2651 = vpop.permute.xlu0 %2650
        %2652 = vrot.lane.b32.xlu0 %v2616, 126
        %v2653 = vpop.permute.xlu0 %2652
        %2654 = vrot.lane.b32.xlu0 %v2617, 126
        %v2655 = vpop.permute.xlu0 %2654
        %2656 = vrot.lane.b32.xlu0 %v2618, 126
        %v2657 = vpop.permute.xlu0 %2656
        %2658 = vrot.lane.b32.xlu0 %v2619, 126
        %v2659 = vpop.permute.xlu0 %2658
        %2660 = vrot.lane.b32.xlu0 %v2620, 126
        %v2661 = vpop.permute.xlu0 %2660
        %2662 = vrot.lane.b32.xlu0 %v2621, 126
        %v2663 = vpop.permute.xlu0 %2662
        %s2671 = scalar_lea.vmem [#allocation5], 1728
        %v2672 = vld [vmem:[%s2671] sm:$0xff]
        %v2673 = vld [vmem:[%s2671 + $0x8] sm:$0xff]
        %v2674 = vld [vmem:[%s2671 + $0x18] sm:$0xff]
        %v2675 = vld [vmem:[%s2671 + $0x20] sm:$0xff]
        %v2676 = vld [vmem:[%s2671 + $0x30] sm:$0xff]
        %v2677 = vld [vmem:[%s2671 + $0x38] sm:$0xff]
        %v2678 = vld [vmem:[%s2671 + $0x48] sm:$0xff]
        %v2679 = vld [vmem:[%s2671 + $0x50] sm:$0xff]
        %v2680 = vld [vmem:[%s2671 + $0x60] sm:$0xff]
        %v2681 = vld [vmem:[%s2671 + $0x68] sm:$0xff]
        %v2682 = vld [vmem:[%s2671 + $0x78] sm:$0xff]
        %v2683 = vld [vmem:[%s2671 + $0x80] sm:$0xff]
        %v2684 = vld [vmem:[%s2671 + $0x90] sm:$0xff]
        %v2685 = vld [vmem:[%s2671 + $0x98] sm:$0xff]
        %vm2686 = vcmask 334848
        %v2688 = vsel %vm2686, %v2673, 0
        %v2691 = vsel %vm2686, %v2675, 0
        %v2694 = vsel %vm2686, %v2677, 0
        %v2697 = vsel %vm2686, %v2679, 0
        %v2700 = vsel %vm2686, %v2681, 0
        %v2703 = vsel %vm2686, %v2683, 0
        %v2706 = vsel %vm2686, %v2685, 0
        %2708 = vmatprep.subr.mxu0 0.0
        %2709 = vmatpush1.msra.mxu0 %v2653
        %2710 = vmatprep.subr.mxu0 0.0
        %2711 = vmatpush1.msra.mxu0 %v2651
        %2712 = vmatprep.subr.mxu0 0.0
        %2713 = vmatpush1.msra.mxu0 %v2642
        %2714 = vmatprep.subr.mxu0 0.0
        %2715 = vmatpush1.msra.mxu0 %v2640
        %2716 = vmatprep.subr.mxu0 0.0
        %2717 = vmatpush1.msra.mxu0 %v2638
        %2718 = vmatprep.subr.mxu0 0.0
        %2719 = vmatpush1.msra.mxu0 %v2636
        %2720 = vmatprep.subr.mxu0 0.0
        %2721 = vmatpush1.msra.mxu0 %v2634
        %2722 = vmatprep.subr.mxu0 0.0
        %2723 = vmatpush1.msra.mxu0 %v2632
        %2724 = vmatprep.subr.mxu0 0.0
        %2725 = vmatpush1.msra.mxu0 %v2630
        %2726 = vmatprep.subr.mxu0 0.0
        %2727 = vmatpush1.msra.mxu0 %v2621
        %2728 = vmatprep.subr.mxu0 0.0
        %2729 = vmatpush1.msra.mxu0 %v2620
        %2730 = vmatprep.subr.mxu0 0.0
        %2731 = vmatpush1.msra.mxu0 %v2619
        %2732 = vmatprep.subr.mxu0 0.0
        %2733 = vmatpush1.msra.mxu0 %v2618
        %2734 = vmatprep.subr.mxu0 0.0
        %2735 = vmatpush1.msra.mxu0 %v2617
        %2736 = vmatprep.subr.mxu0 0.0
        %2737 = vmatpush1.msra.mxu0 %v2616
        %2738 = vmatprep.subr.mxu0 0.0
        %2739 = vmatpush1.msra.mxu0 %v2615
        %2740 = vmatprep.subr.mxu0 0.0
        %2741 = vmatpush2.msra.mxu0 0.0
        %2742 = vmatprep.subr.mxu0 0.0
        %2743 = vmatpush2.msra.mxu0 0.0
        %2744 = vmatprep.subr.mxu0 0.0
        %2745 = vmatpush2.msra.mxu0 0.0
        %2746 = vmatprep.subr.mxu0 0.0
        %2747 = vmatpush2.msra.mxu0 0.0
        %2748 = vmatprep.subr.mxu0 0.0
        %2749 = vmatpush2.msra.mxu0 0.0
        %2750 = vmatprep.subr.mxu0 0.0
        %2751 = vmatpush2.msra.mxu0 0.0
        %2752 = vmatprep.subr.mxu0 0.0
        %2753 = vmatpush2.msra.mxu0 0.0
        %2754 = vmatprep.subr.mxu0 0.0
        %2755 = vmatpush2.msra.mxu0 0.0
        %2756 = vmatprep.subr.mxu0 0.0
        %2757 = vmatpush2.msra.mxu0 0.0
        %2758 = vmatprep.subr.mxu0 0.0
        %2759 = vmatpush2.msra.mxu0 0.0
        %2760 = vmatprep.subr.mxu0 0.0
        %2761 = vmatpush2.msra.mxu0 %v475
        %2762 = vmatprep.subr.mxu0 0.0
        %2763 = vmatpush2.msra.mxu0 %v2663
        %2764 = vmatprep.subr.mxu0 0.0
        %2765 = vmatpush2.msra.mxu0 %v2661
        %2766 = vmatprep.subr.mxu0 0.0
        %2767 = vmatpush2.msra.mxu0 %v2659
        %2768 = vmatprep.subr.mxu0 0.0
        %2769 = vmatpush2.msra.mxu0 %v2657
        %2770 = vmatprep.subr.mxu0 0.0
        %2771 = vmatpush2.msra.mxu0 %v2655
        %2772 = vmatprep.mubr.f32.mxu0 %v2688
        %2773 = vmatmul.mubr.f32.gmra.mxu0 %v2672
        %v2774 = vpop.f32.mrf.mxu0
        %v2775 = vadd.f32 0.0, %v2774
        %v2776 = vpop.f32.mrf.mxu0
        %2777 = vmatprep.mubr.f32.mxu0 %v2691
        %2778 = vmatmul.mubr.f32.gmra.mxu0 %v2674
        %v2779 = vpop.f32.mrf.mxu0
        %v2780 = vadd.f32 0.0, %v2779
        %v2781 = vpop.f32.mrf.mxu0
        %2782 = vmatprep.mubr.f32.mxu0 %v2694
        %2783 = vmatmul.mubr.f32.gmra.mxu0 %v2676
        %v2784 = vpop.f32.mrf.mxu0
        %v2785 = vadd.f32 0.0, %v2784
        %v2786 = vpop.f32.mrf.mxu0
        %2787 = vmatprep.mubr.f32.mxu0 %v2697
        %2788 = vmatmul.mubr.f32.gmra.mxu0 %v2678
        %v2789 = vpop.f32.mrf.mxu0
        %v2790 = vadd.f32 0.0, %v2789
        %v2791 = vpop.f32.mrf.mxu0
        %2792 = vmatprep.mubr.f32.mxu0 %v2700
        %2793 = vmatmul.mubr.f32.gmra.mxu0 %v2680
        %v2794 = vpop.f32.mrf.mxu0
        %v2795 = vadd.f32 0.0, %v2794
        %v2796 = vpop.f32.mrf.mxu0
        %2797 = vmatprep.mubr.f32.mxu0 %v2703
        %2798 = vmatmul.mubr.f32.gmra.mxu0 %v2682
        %v2799 = vpop.f32.mrf.mxu0
        %v2800 = vadd.f32 0.0, %v2799
        %v2801 = vpop.f32.mrf.mxu0
        %2802 = vmatprep.mubr.f32.mxu0 %v2706
        %2803 = vmatmul.mubr.f32.gmra.mxu0 %v2684
        %v2804 = vpop.f32.mrf.mxu0
        %v2805 = vadd.f32 0.0, %v2804
        %v2806 = vpop.f32.mrf.mxu0
        %2807 = vdwg.mxu0
        %v2808 = vmax.f32 %v2775, 0.0
        %v2809 = vmax.f32 %v2780, 0.0
        %v2810 = vmax.f32 %v2785, 0.0
        %v2811 = vmax.f32 %v2790, 0.0
        %v2812 = vmax.f32 %v2795, 0.0
        %v2813 = vmax.f32 %v2800, 0.0
        %v2814 = vmax.f32 %v2805, 0.0
        %2822 = vrot.lane.b32.xlu0 %v2808, 127
        %v2823 = vpop.permute.xlu0 %2822
        %2824 = vrot.lane.b32.xlu0 %v2809, 127
        %v2825 = vpop.permute.xlu0 %2824
        %2826 = vrot.lane.b32.xlu0 %v2810, 127
        %v2827 = vpop.permute.xlu0 %2826
        %2828 = vrot.lane.b32.xlu0 %v2811, 127
        %v2829 = vpop.permute.xlu0 %2828
        %2830 = vrot.lane.b32.xlu0 %v2812, 127
        %v2831 = vpop.permute.xlu0 %2830
        %2832 = vrot.lane.b32.xlu0 %v2813, 127
        %v2833 = vpop.permute.xlu0 %2832
        %2834 = vrot.lane.b32.xlu0 %v2814, 127
        %v2835 = vpop.permute.xlu0 %2834
        %v2843 = vsel %vm283, %v2823, %v2808
        %v2844 = vsel %vm283, %v2825, %v2809
        %v2845 = vsel %vm283, %v2827, %v2810
        %v2846 = vsel %vm283, %v2829, %v2811
        %v2847 = vsel %vm283, %v2831, %v2812
        %v2848 = vsel %vm283, %v2833, %v2813
        %v2849 = vsel %vm283, %v2835, %v2814
        %v2850 = vmax.f32 %v2808, %v2843
        %v2851 = vmax.f32 %v2809, %v2844
        %v2852 = vmax.f32 %v2810, %v2845
        %v2853 = vmax.f32 %v2811, %v2846
        %v2854 = vmax.f32 %v2812, %v2847
        %v2855 = vmax.f32 %v2813, %v2848
        %v2856 = vmax.f32 %v2814, %v2849
        %vm2857 = vcmask 130048
        %v2859 = vsel %vm2857, %v2850, 0
        %v2862 = vsel %vm2857, %v2851, 0
        %v2865 = vsel %vm2857, %v2852, 0
        %v2868 = vsel %vm2857, %v2853, 0
        %v2871 = vsel %vm2857, %v2854, 0
        %v2874 = vsel %vm2857, %v2855, 0
        %v2877 = vsel %vm2857, %v2856, 0
        %2879 = vmatprep.subr.mxu0 0.0
        %2880 = vmatpush1.msra.mxu0 0.0
        %2881 = vmatprep.subr.mxu0 0.0
        %2882 = vmatpush1.msra.mxu0 0.0
        %2883 = vmatprep.subr.mxu0 0.0
        %2884 = vmatpush1.msra.mxu0 0.0
        %2885 = vmatprep.subr.mxu0 0.0
        %2886 = vmatpush1.msra.mxu0 0.0
        %2887 = vmatprep.subr.mxu0 0.0
        %2888 = vmatpush1.msra.mxu0 0.0
        %2889 = vmatprep.subr.mxu0 0.0
        %2890 = vmatpush1.msra.mxu0 0.0
        %2891 = vmatprep.subr.mxu0 0.0
        %2892 = vmatpush1.msra.mxu0 0.0
        %2893 = vmatprep.subr.mxu0 0.0
        %2894 = vmatpush1.msra.mxu0 0.0
        %2895 = vmatprep.subr.mxu0 0.0
        %2896 = vmatpush1.msra.mxu0 0.0
        %2897 = vmatprep.subr.mxu0 0.0
        %2898 = vmatpush1.msra.mxu0 0.0
        %2899 = vmatprep.subr.mxu0 0.0
        %2900 = vmatpush1.msra.mxu0 0.0
        %2901 = vmatprep.subr.mxu0 0.0
        %2902 = vmatpush1.msra.mxu0 0.0
        %2903 = vmatprep.subr.mxu0 0.0
        %2904 = vmatpush1.msra.mxu0 0.0
        %2905 = vmatprep.subr.mxu0 0.0
        %2906 = vmatpush1.msra.mxu0 0.0
        %2907 = vmatprep.subr.mxu0 0.0
        %2908 = vmatpush1.msra.mxu0 %v1080
        %2909 = vmatprep.subr.mxu0 0.0
        %2910 = vmatpush1.msra.mxu0 %v1079
        %2911 = vmatprep.subr.mxu0 0.0
        %2912 = vmatpush2.msra.mxu0 0.0
        %2913 = vmatprep.subr.mxu0 0.0
        %2914 = vmatpush2.msra.mxu0 0.0
        %2915 = vmatprep.subr.mxu0 0.0
        %2916 = vmatpush2.msra.mxu0 0.0
        %2917 = vmatprep.subr.mxu0 0.0
        %2918 = vmatpush2.msra.mxu0 0.0
        %2919 = vmatprep.subr.mxu0 0.0
        %2920 = vmatpush2.msra.mxu0 0.0
        %2921 = vmatprep.subr.mxu0 0.0
        %2922 = vmatpush2.msra.mxu0 0.0
        %2923 = vmatprep.subr.mxu0 0.0
        %2924 = vmatpush2.msra.mxu0 0.0
        %2925 = vmatprep.subr.mxu0 0.0
        %2926 = vmatpush2.msra.mxu0 0.0
        %2927 = vmatprep.subr.mxu0 0.0
        %2928 = vmatpush2.msra.mxu0 0.0
        %2929 = vmatprep.subr.mxu0 0.0
        %2930 = vmatpush2.msra.mxu0 0.0
        %2931 = vmatprep.subr.mxu0 0.0
        %2932 = vmatpush2.msra.mxu0 0.0
        %2933 = vmatprep.subr.mxu0 0.0
        %2934 = vmatpush2.msra.mxu0 0.0
        %2935 = vmatprep.subr.mxu0 0.0
        %2936 = vmatpush2.msra.mxu0 0.0
        %2937 = vmatprep.subr.mxu0 0.0
        %2938 = vmatpush2.msra.mxu0 0.0
        %2939 = vmatprep.subr.mxu0 0.0
        %2940 = vmatpush2.msra.mxu0 0.0
        %2941 = vmatprep.subr.mxu0 0.0
        %2942 = vmatpush2.msra.mxu0 0.0
        %2943 = vmatprep.mubr.f32.mxu0 0.0
        %2944 = vmatmul.mubr.f32.gmra.mxu0 %v2859
        %v2945 = vpop.f32.mrf.mxu0
        %v2946 = vadd.f32 0.0, %v2945
        %v2947 = vpop.f32.mrf.mxu0
        %2948 = vmatprep.mubr.f32.mxu0 0.0
        %2949 = vmatmul.mubr.f32.gmra.mxu0 %v2862
        %v2950 = vpop.f32.mrf.mxu0
        %v2951 = vadd.f32 0.0, %v2950
        %v2952 = vpop.f32.mrf.mxu0
        %2953 = vmatprep.mubr.f32.mxu0 0.0
        %2954 = vmatmul.mubr.f32.gmra.mxu0 %v2865
        %v2955 = vpop.f32.mrf.mxu0
        %v2956 = vadd.f32 0.0, %v2955
        %v2957 = vpop.f32.mrf.mxu0
        %2958 = vmatprep.mubr.f32.mxu0 0.0
        %2959 = vmatmul.mubr.f32.gmra.mxu0 %v2868
        %v2960 = vpop.f32.mrf.mxu0
        %v2961 = vadd.f32 0.0, %v2960
        %v2962 = vpop.f32.mrf.mxu0
        %2963 = vmatprep.mubr.f32.mxu0 0.0
        %2964 = vmatmul.mubr.f32.gmra.mxu0 %v2871
        %v2965 = vpop.f32.mrf.mxu0
        %v2966 = vadd.f32 0.0, %v2965
        %v2967 = vpop.f32.mrf.mxu0
        %2968 = vmatprep.mubr.f32.mxu0 0.0
        %2969 = vmatmul.mubr.f32.gmra.mxu0 %v2874
        %v2970 = vpop.f32.mrf.mxu0
        %v2971 = vadd.f32 0.0, %v2970
        %v2972 = vpop.f32.mrf.mxu0
        %2973 = vmatprep.mubr.f32.mxu0 0.0
        %2974 = vmatmul.mubr.f32.gmra.mxu0 %v2877
        %v2975 = vpop.f32.mrf.mxu0
        %v2976 = vadd.f32 0.0, %v2975
        %v2977 = vpop.f32.mrf.mxu0
        %2978 = vdwg.mxu0
        %2986 = vrot.lane.b32.xlu0 %v2946, 1
        %v2987 = vpop.permute.xlu0 %2986
        %2988 = vrot.lane.b32.xlu0 %v2951, 1
        %v2989 = vpop.permute.xlu0 %2988
        %2990 = vrot.lane.b32.xlu0 %v2956, 1
        %v2991 = vpop.permute.xlu0 %2990
        %2992 = vrot.lane.b32.xlu0 %v2961, 1
        %v2993 = vpop.permute.xlu0 %2992
        %2994 = vrot.lane.b32.xlu0 %v2966, 1
        %v2995 = vpop.permute.xlu0 %2994
        %2996 = vrot.lane.b32.xlu0 %v2971, 1
        %v2997 = vpop.permute.xlu0 %2996
        %2998 = vrot.lane.b32.xlu0 %v2976, 1
        %v2999 = vpop.permute.xlu0 %2998
        %v3007 = vsel %vm2381, 0.0, %v2987
        %v3008 = vsel %vm2381, 0.0, %v2989
        %v3009 = vsel %vm2381, 0.0, %v2991
        %v3010 = vsel %vm2381, 0.0, %v2993
        %v3011 = vsel %vm2381, 0.0, %v2995
        %v3012 = vsel %vm2381, 0.0, %v2997
        %v3013 = vsel %vm2381, 0.0, %v2999
        %vm3014 = vcmask 72704
        %v3015 = vsel %vm3014, %v3007, 0.0
        %v3016 = vsel %vm3014, %v3008, 0.0
        %v3017 = vsel %vm3014, %v3009, 0.0
        %v3018 = vsel %vm3014, %v3010, 0.0
        %v3019 = vsel %vm3014, %v3011, 0.0
        %v3020 = vsel %vm3014, %v3012, 0.0
        %v3021 = vsel %vm3014, %v3013, 0.0
        %3029 = vrot.lane.b32.xlu0 %v3015, 127
        %v3030 = vpop.permute.xlu0 %3029
        %3031 = vrot.lane.b32.xlu0 %v3016, 127
        %v3032 = vpop.permute.xlu0 %3031
        %3033 = vrot.lane.b32.xlu0 %v3017, 127
        %v3034 = vpop.permute.xlu0 %3033
        %3035 = vrot.lane.b32.xlu0 %v3018, 127
        %v3036 = vpop.permute.xlu0 %3035
        %3037 = vrot.lane.b32.xlu0 %v3019, 127
        %v3038 = vpop.permute.xlu0 %3037
        %3039 = vrot.lane.b32.xlu0 %v3020, 127
        %v3040 = vpop.permute.xlu0 %3039
        %3041 = vrot.lane.b32.xlu0 %v3021, 127
        %v3042 = vpop.permute.xlu0 %3041
        %3050 = vrot.lane.b32.xlu0 %v3015, 126
        %v3051 = vpop.permute.xlu0 %3050
        %3052 = vrot.lane.b32.xlu0 %v3016, 126
        %v3053 = vpop.permute.xlu0 %3052
        %3054 = vrot.lane.b32.xlu0 %v3017, 126
        %v3055 = vpop.permute.xlu0 %3054
        %3056 = vrot.lane.b32.xlu0 %v3018, 126
        %v3057 = vpop.permute.xlu0 %3056
        %3058 = vrot.lane.b32.xlu0 %v3019, 126
        %v3059 = vpop.permute.xlu0 %3058
        %3060 = vrot.lane.b32.xlu0 %v3020, 126
        %v3061 = vpop.permute.xlu0 %3060
        %3062 = vrot.lane.b32.xlu0 %v3021, 126
        %v3063 = vpop.permute.xlu0 %3062
        %s3071 = scalar_lea.vmem [#allocation5], 1920
        %v3072 = vld [vmem:[%s3071] sm:$0xff]
        %v3073 = vld [vmem:[%s3071 + $0x8] sm:$0xff]
        %v3074 = vld [vmem:[%s3071 + $0x18] sm:$0xff]
        %v3075 = vld [vmem:[%s3071 + $0x20] sm:$0xff]
        %v3076 = vld [vmem:[%s3071 + $0x30] sm:$0xff]
        %v3077 = vld [vmem:[%s3071 + $0x38] sm:$0xff]
        %v3078 = vld [vmem:[%s3071 + $0x48] sm:$0xff]
        %v3079 = vld [vmem:[%s3071 + $0x50] sm:$0xff]
        %v3080 = vld [vmem:[%s3071 + $0x60] sm:$0xff]
        %v3081 = vld [vmem:[%s3071 + $0x68] sm:$0xff]
        %v3082 = vld [vmem:[%s3071 + $0x78] sm:$0xff]
        %v3083 = vld [vmem:[%s3071 + $0x80] sm:$0xff]
        %v3084 = vld [vmem:[%s3071 + $0x90] sm:$0xff]
        %v3085 = vld [vmem:[%s3071 + $0x98] sm:$0xff]
        %v3086 = vld [vmem:[%s3071 + $0xa8] sm:$0xff]
        %v3087 = vld [vmem:[%s3071 + $0xb0] sm:$0xff]
        %v3089 = vsel %vm2686, %v3073, 0
        %v3092 = vsel %vm2686, %v3075, 0
        %v3095 = vsel %vm2686, %v3077, 0
        %v3098 = vsel %vm2686, %v3079, 0
        %v3101 = vsel %vm2686, %v3081, 0
        %v3104 = vsel %vm2686, %v3083, 0
        %v3107 = vsel %vm2686, %v3085, 0
        %v3110 = vsel %vm2686, %v3087, 0
        %3112 = vmatprep.subr.mxu0 0.0
        %3113 = vmatpush1.msra.mxu0 %v3053
        %3114 = vmatprep.subr.mxu0 0.0
        %3115 = vmatpush1.msra.mxu0 %v3051
        %3116 = vmatprep.subr.mxu0 0.0
        %3117 = vmatpush1.msra.mxu0 %v3042
        %3118 = vmatprep.subr.mxu0 0.0
        %3119 = vmatpush1.msra.mxu0 %v3040
        %3120 = vmatprep.subr.mxu0 0.0
        %3121 = vmatpush1.msra.mxu0 %v3038
        %3122 = vmatprep.subr.mxu0 0.0
        %3123 = vmatpush1.msra.mxu0 %v3036
        %3124 = vmatprep.subr.mxu0 0.0
        %3125 = vmatpush1.msra.mxu0 %v3034
        %3126 = vmatprep.subr.mxu0 0.0
        %3127 = vmatpush1.msra.mxu0 %v3032
        %3128 = vmatprep.subr.mxu0 0.0
        %3129 = vmatpush1.msra.mxu0 %v3030
        %3130 = vmatprep.subr.mxu0 0.0
        %3131 = vmatpush1.msra.mxu0 %v3021
        %3132 = vmatprep.subr.mxu0 0.0
        %3133 = vmatpush1.msra.mxu0 %v3020
        %3134 = vmatprep.subr.mxu0 0.0
        %3135 = vmatpush1.msra.mxu0 %v3019
        %3136 = vmatprep.subr.mxu0 0.0
        %3137 = vmatpush1.msra.mxu0 %v3018
        %3138 = vmatprep.subr.mxu0 0.0
        %3139 = vmatpush1.msra.mxu0 %v3017
        %3140 = vmatprep.subr.mxu0 0.0
        %3141 = vmatpush1.msra.mxu0 %v3016
        %3142 = vmatprep.subr.mxu0 0.0
        %3143 = vmatpush1.msra.mxu0 %v3015
        %3144 = vmatprep.subr.mxu0 0.0
        %3145 = vmatpush2.msra.mxu0 0.0
        %3146 = vmatprep.subr.mxu0 0.0
        %3147 = vmatpush2.msra.mxu0 0.0
        %3148 = vmatprep.subr.mxu0 0.0
        %3149 = vmatpush2.msra.mxu0 0.0
        %3150 = vmatprep.subr.mxu0 0.0
        %3151 = vmatpush2.msra.mxu0 0.0
        %3152 = vmatprep.subr.mxu0 0.0
        %3153 = vmatpush2.msra.mxu0 0.0
        %3154 = vmatprep.subr.mxu0 0.0
        %3155 = vmatpush2.msra.mxu0 0.0
        %3156 = vmatprep.subr.mxu0 0.0
        %3157 = vmatpush2.msra.mxu0 0.0
        %3158 = vmatprep.subr.mxu0 0.0
        %3159 = vmatpush2.msra.mxu0 0.0
        %3160 = vmatprep.subr.mxu0 0.0
        %3161 = vmatpush2.msra.mxu0 0.0
        %3162 = vmatprep.subr.mxu0 0.0
        %3163 = vmatpush2.msra.mxu0 0.0
        %3164 = vmatprep.subr.mxu0 0.0
        %3165 = vmatpush2.msra.mxu0 %v475
        %3166 = vmatprep.subr.mxu0 0.0
        %3167 = vmatpush2.msra.mxu0 %v3063
        %3168 = vmatprep.subr.mxu0 0.0
        %3169 = vmatpush2.msra.mxu0 %v3061
        %3170 = vmatprep.subr.mxu0 0.0
        %3171 = vmatpush2.msra.mxu0 %v3059
        %3172 = vmatprep.subr.mxu0 0.0
        %3173 = vmatpush2.msra.mxu0 %v3057
        %3174 = vmatprep.subr.mxu0 0.0
        %3175 = vmatpush2.msra.mxu0 %v3055
        %3176 = vmatprep.mubr.f32.mxu0 %v3089
        %3177 = vmatmul.mubr.f32.gmra.mxu0 %v3072
        %v3178 = vpop.f32.mrf.mxu0
        %v3179 = vadd.f32 0.0, %v3178
        %v3180 = vpop.f32.mrf.mxu0
        %3181 = vmatprep.mubr.f32.mxu0 %v3092
        %3182 = vmatmul.mubr.f32.gmra.mxu0 %v3074
        %v3183 = vpop.f32.mrf.mxu0
        %v3184 = vadd.f32 0.0, %v3183
        %v3185 = vpop.f32.mrf.mxu0
        %3186 = vmatprep.mubr.f32.mxu0 %v3095
        %3187 = vmatmul.mubr.f32.gmra.mxu0 %v3076
        %v3188 = vpop.f32.mrf.mxu0
        %v3189 = vadd.f32 0.0, %v3188
        %v3190 = vpop.f32.mrf.mxu0
        %3191 = vmatprep.mubr.f32.mxu0 %v3098
        %3192 = vmatmul.mubr.f32.gmra.mxu0 %v3078
        %v3193 = vpop.f32.mrf.mxu0
        %v3194 = vadd.f32 0.0, %v3193
        %v3195 = vpop.f32.mrf.mxu0
        %3196 = vmatprep.mubr.f32.mxu0 %v3101
        %3197 = vmatmul.mubr.f32.gmra.mxu0 %v3080
        %v3198 = vpop.f32.mrf.mxu0
        %v3199 = vadd.f32 0.0, %v3198
        %v3200 = vpop.f32.mrf.mxu0
        %3201 = vmatprep.mubr.f32.mxu0 %v3104
        %3202 = vmatmul.mubr.f32.gmra.mxu0 %v3082
        %v3203 = vpop.f32.mrf.mxu0
        %v3204 = vadd.f32 0.0, %v3203
        %v3205 = vpop.f32.mrf.mxu0
        %3206 = vmatprep.mubr.f32.mxu0 %v3107
        %3207 = vmatmul.mubr.f32.gmra.mxu0 %v3084
        %v3208 = vpop.f32.mrf.mxu0
        %v3209 = vadd.f32 0.0, %v3208
        %v3210 = vpop.f32.mrf.mxu0
        %3211 = vmatprep.mubr.f32.mxu0 %v3110
        %3212 = vmatmul.mubr.f32.gmra.mxu0 %v3086
        %v3213 = vpop.f32.mrf.mxu0
        %v3214 = vadd.f32 0.0, %v3213
        %v3215 = vpop.f32.mrf.mxu0
        %3216 = vdwg.mxu0
        %v3217 = vmax.f32 %v3179, 0.0
        %v3218 = vmax.f32 %v3184, 0.0
        %v3219 = vmax.f32 %v3189, 0.0
        %v3220 = vmax.f32 %v3194, 0.0
        %v3221 = vmax.f32 %v3199, 0.0
        %v3222 = vmax.f32 %v3204, 0.0
        %v3223 = vmax.f32 %v3209, 0.0
        %v3224 = vmax.f32 %v3214, 0.0
        %3233 = vrot.lane.b32.xlu0 %v3217, 1
        %v3234 = vpop.permute.xlu0 %3233
        %3235 = vrot.lane.b32.xlu0 %v3218, 1
        %v3236 = vpop.permute.xlu0 %3235
        %3237 = vrot.lane.b32.xlu0 %v3219, 1
        %v3238 = vpop.permute.xlu0 %3237
        %3239 = vrot.lane.b32.xlu0 %v3220, 1
        %v3240 = vpop.permute.xlu0 %3239
        %3241 = vrot.lane.b32.xlu0 %v3221, 1
        %v3242 = vpop.permute.xlu0 %3241
        %3243 = vrot.lane.b32.xlu0 %v3222, 1
        %v3244 = vpop.permute.xlu0 %3243
        %3245 = vrot.lane.b32.xlu0 %v3223, 1
        %v3246 = vpop.permute.xlu0 %3245
        %3247 = vrot.lane.b32.xlu0 %v3224, 1
        %v3248 = vpop.permute.xlu0 %3247
        %v3257 = vsel %vm2381, 0.0, %v3234
        %v3258 = vsel %vm2381, 0.0, %v3236
        %v3259 = vsel %vm2381, 0.0, %v3238
        %v3260 = vsel %vm2381, 0.0, %v3240
        %v3261 = vsel %vm2381, 0.0, %v3242
        %v3262 = vsel %vm2381, 0.0, %v3244
        %v3263 = vsel %vm2381, 0.0, %v3246
        %v3264 = vsel %vm2381, 0.0, %v3248
        %v3265 = vsel %vm3014, %v3257, 0.0
        %v3266 = vsel %vm3014, %v3258, 0.0
        %v3267 = vsel %vm3014, %v3259, 0.0
        %v3268 = vsel %vm3014, %v3260, 0.0
        %v3269 = vsel %vm3014, %v3261, 0.0
        %v3270 = vsel %vm3014, %v3262, 0.0
        %v3271 = vsel %vm3014, %v3263, 0.0
        %v3272 = vsel %vm3014, %v3264, 0.0
        %3281 = vrot.lane.b32.xlu0 %v3265, 127
        %v3282 = vpop.permute.xlu0 %3281
        %3283 = vrot.lane.b32.xlu0 %v3266, 127
        %v3284 = vpop.permute.xlu0 %3283
        %3285 = vrot.lane.b32.xlu0 %v3267, 127
        %v3286 = vpop.permute.xlu0 %3285
        %3287 = vrot.lane.b32.xlu0 %v3268, 127
        %v3288 = vpop.permute.xlu0 %3287
        %3289 = vrot.lane.b32.xlu0 %v3269, 127
        %v3290 = vpop.permute.xlu0 %3289
        %3291 = vrot.lane.b32.xlu0 %v3270, 127
        %v3292 = vpop.permute.xlu0 %3291
        %3293 = vrot.lane.b32.xlu0 %v3271, 127
        %v3294 = vpop.permute.xlu0 %3293
        %3295 = vrot.lane.b32.xlu0 %v3272, 127
        %v3296 = vpop.permute.xlu0 %3295
        %3305 = vrot.lane.b32.xlu0 %v3265, 126
        %v3306 = vpop.permute.xlu0 %3305
        %3307 = vrot.lane.b32.xlu0 %v3266, 126
        %v3308 = vpop.permute.xlu0 %3307
        %3309 = vrot.lane.b32.xlu0 %v3267, 126
        %v3310 = vpop.permute.xlu0 %3309
        %3311 = vrot.lane.b32.xlu0 %v3268, 126
        %v3312 = vpop.permute.xlu0 %3311
        %3313 = vrot.lane.b32.xlu0 %v3269, 126
        %v3314 = vpop.permute.xlu0 %3313
        %3315 = vrot.lane.b32.xlu0 %v3270, 126
        %v3316 = vpop.permute.xlu0 %3315
        %3317 = vrot.lane.b32.xlu0 %v3271, 126
        %v3318 = vpop.permute.xlu0 %3317
        %3319 = vrot.lane.b32.xlu0 %v3272, 126
        %v3320 = vpop.permute.xlu0 %3319
        %s3329 = scalar_lea.vmem [#allocation5], 2112
        %v3330 = vld [vmem:[%s3329] sm:$0xff]
        %v3331 = vld [vmem:[%s3329 + $0x8] sm:$0xff]
        %v3332 = vld [vmem:[%s3329 + $0x18] sm:$0xff]
        %v3333 = vld [vmem:[%s3329 + $0x20] sm:$0xff]
        %v3334 = vld [vmem:[%s3329 + $0x30] sm:$0xff]
        %v3335 = vld [vmem:[%s3329 + $0x38] sm:$0xff]
        %v3336 = vld [vmem:[%s3329 + $0x48] sm:$0xff]
        %v3337 = vld [vmem:[%s3329 + $0x50] sm:$0xff]
        %v3338 = vld [vmem:[%s3329 + $0x60] sm:$0xff]
        %v3339 = vld [vmem:[%s3329 + $0x68] sm:$0xff]
        %v3340 = vld [vmem:[%s3329 + $0x78] sm:$0xff]
        %v3341 = vld [vmem:[%s3329 + $0x80] sm:$0xff]
        %v3342 = vld [vmem:[%s3329 + $0x90] sm:$0xff]
        %v3343 = vld [vmem:[%s3329 + $0x98] sm:$0xff]
        %v3344 = vld [vmem:[%s3329 + $0xa8] sm:$0xff]
        %v3345 = vld [vmem:[%s3329 + $0xb0] sm:$0xff]
        %vm3346 = vcmask 531456
        %v3348 = vsel %vm3346, %v3331, 0
        %v3351 = vsel %vm3346, %v3333, 0
        %v3354 = vsel %vm3346, %v3335, 0
        %v3357 = vsel %vm3346, %v3337, 0
        %v3360 = vsel %vm3346, %v3339, 0
        %v3363 = vsel %vm3346, %v3341, 0
        %v3366 = vsel %vm3346, %v3343, 0
        %v3369 = vsel %vm3346, %v3345, 0
        %3371 = vmatprep.subr.mxu0 0.0
        %3372 = vmatpush1.msra.mxu0 %v3296
        %3373 = vmatprep.subr.mxu0 0.0
        %3374 = vmatpush1.msra.mxu0 %v3294
        %3375 = vmatprep.subr.mxu0 0.0
        %3376 = vmatpush1.msra.mxu0 %v3292
        %3377 = vmatprep.subr.mxu0 0.0
        %3378 = vmatpush1.msra.mxu0 %v3290
        %3379 = vmatprep.subr.mxu0 0.0
        %3380 = vmatpush1.msra.mxu0 %v3288
        %3381 = vmatprep.subr.mxu0 0.0
        %3382 = vmatpush1.msra.mxu0 %v3286
        %3383 = vmatprep.subr.mxu0 0.0
        %3384 = vmatpush1.msra.mxu0 %v3284
        %3385 = vmatprep.subr.mxu0 0.0
        %3386 = vmatpush1.msra.mxu0 %v3282
        %3387 = vmatprep.subr.mxu0 0.0
        %3388 = vmatpush1.msra.mxu0 %v3272
        %3389 = vmatprep.subr.mxu0 0.0
        %3390 = vmatpush1.msra.mxu0 %v3271
        %3391 = vmatprep.subr.mxu0 0.0
        %3392 = vmatpush1.msra.mxu0 %v3270
        %3393 = vmatprep.subr.mxu0 0.0
        %3394 = vmatpush1.msra.mxu0 %v3269
        %3395 = vmatprep.subr.mxu0 0.0
        %3396 = vmatpush1.msra.mxu0 %v3268
        %3397 = vmatprep.subr.mxu0 0.0
        %3398 = vmatpush1.msra.mxu0 %v3267
        %3399 = vmatprep.subr.mxu0 0.0
        %3400 = vmatpush1.msra.mxu0 %v3266
        %3401 = vmatprep.subr.mxu0 0.0
        %3402 = vmatpush1.msra.mxu0 %v3265
        %3403 = vmatprep.subr.mxu0 0.0
        %3404 = vmatpush2.msra.mxu0 0.0
        %3405 = vmatprep.subr.mxu0 0.0
        %3406 = vmatpush2.msra.mxu0 0.0
        %3407 = vmatprep.subr.mxu0 0.0
        %3408 = vmatpush2.msra.mxu0 0.0
        %3409 = vmatprep.subr.mxu0 0.0
        %3410 = vmatpush2.msra.mxu0 0.0
        %3411 = vmatprep.subr.mxu0 0.0
        %3412 = vmatpush2.msra.mxu0 0.0
        %3413 = vmatprep.subr.mxu0 0.0
        %3414 = vmatpush2.msra.mxu0 0.0
        %3415 = vmatprep.subr.mxu0 0.0
        %3416 = vmatpush2.msra.mxu0 0.0
        %3417 = vmatprep.subr.mxu0 0.0
        %3418 = vmatpush2.msra.mxu0 %v475
        %3419 = vmatprep.subr.mxu0 0.0
        %3420 = vmatpush2.msra.mxu0 %v3320
        %3421 = vmatprep.subr.mxu0 0.0
        %3422 = vmatpush2.msra.mxu0 %v3318
        %3423 = vmatprep.subr.mxu0 0.0
        %3424 = vmatpush2.msra.mxu0 %v3316
        %3425 = vmatprep.subr.mxu0 0.0
        %3426 = vmatpush2.msra.mxu0 %v3314
        %3427 = vmatprep.subr.mxu0 0.0
        %3428 = vmatpush2.msra.mxu0 %v3312
        %3429 = vmatprep.subr.mxu0 0.0
        %3430 = vmatpush2.msra.mxu0 %v3310
        %3431 = vmatprep.subr.mxu0 0.0
        %3432 = vmatpush2.msra.mxu0 %v3308
        %3433 = vmatprep.subr.mxu0 0.0
        %3434 = vmatpush2.msra.mxu0 %v3306
        %3435 = vmatprep.mubr.f32.mxu0 %v3348
        %3436 = vmatmul.mubr.f32.gmra.mxu0 %v3330
        %v3437 = vpop.f32.mrf.mxu0
        %v3438 = vadd.f32 0.0, %v3437
        %v3439 = vpop.f32.mrf.mxu0
        %3440 = vmatprep.mubr.f32.mxu0 %v3351
        %3441 = vmatmul.mubr.f32.gmra.mxu0 %v3332
        %v3442 = vpop.f32.mrf.mxu0
        %v3443 = vadd.f32 0.0, %v3442
        %v3444 = vpop.f32.mrf.mxu0
        %3445 = vmatprep.mubr.f32.mxu0 %v3354
        %3446 = vmatmul.mubr.f32.gmra.mxu0 %v3334
        %v3447 = vpop.f32.mrf.mxu0
        %v3448 = vadd.f32 0.0, %v3447
        %v3449 = vpop.f32.mrf.mxu0
        %3450 = vmatprep.mubr.f32.mxu0 %v3357
        %3451 = vmatmul.mubr.f32.gmra.mxu0 %v3336
        %v3452 = vpop.f32.mrf.mxu0
        %v3453 = vadd.f32 0.0, %v3452
        %v3454 = vpop.f32.mrf.mxu0
        %3455 = vmatprep.mubr.f32.mxu0 %v3360
        %3456 = vmatmul.mubr.f32.gmra.mxu0 %v3338
        %v3457 = vpop.f32.mrf.mxu0
        %v3458 = vadd.f32 0.0, %v3457
        %v3459 = vpop.f32.mrf.mxu0
        %3460 = vmatprep.mubr.f32.mxu0 %v3363
        %3461 = vmatmul.mubr.f32.gmra.mxu0 %v3340
        %v3462 = vpop.f32.mrf.mxu0
        %v3463 = vadd.f32 0.0, %v3462
        %v3464 = vpop.f32.mrf.mxu0
        %3465 = vmatprep.mubr.f32.mxu0 %v3366
        %3466 = vmatmul.mubr.f32.gmra.mxu0 %v3342
        %v3467 = vpop.f32.mrf.mxu0
        %v3468 = vadd.f32 0.0, %v3467
        %v3469 = vpop.f32.mrf.mxu0
        %3470 = vmatprep.mubr.f32.mxu0 %v3369
        %3471 = vmatmul.mubr.f32.gmra.mxu0 %v3344
        %v3472 = vpop.f32.mrf.mxu0
        %v3473 = vadd.f32 0.0, %v3472
        %v3474 = vpop.f32.mrf.mxu0
        %3475 = vdwg.mxu0
        %v3476 = vmax.f32 %v3438, 0.0
        %v3477 = vmax.f32 %v3443, 0.0
        %v3478 = vmax.f32 %v3448, 0.0
        %v3479 = vmax.f32 %v3453, 0.0
        %v3480 = vmax.f32 %v3458, 0.0
        %v3481 = vmax.f32 %v3463, 0.0
        %v3482 = vmax.f32 %v3468, 0.0
        %v3483 = vmax.f32 %v3473, 0.0
        %3492 = vrot.lane.b32.xlu0 %v3476, 127
        %v3493 = vpop.permute.xlu0 %3492
        %3494 = vrot.lane.b32.xlu0 %v3477, 127
        %v3495 = vpop.permute.xlu0 %3494
        %3496 = vrot.lane.b32.xlu0 %v3478, 127
        %v3497 = vpop.permute.xlu0 %3496
        %3498 = vrot.lane.b32.xlu0 %v3479, 127
        %v3499 = vpop.permute.xlu0 %3498
        %3500 = vrot.lane.b32.xlu0 %v3480, 127
        %v3501 = vpop.permute.xlu0 %3500
        %3502 = vrot.lane.b32.xlu0 %v3481, 127
        %v3503 = vpop.permute.xlu0 %3502
        %3504 = vrot.lane.b32.xlu0 %v3482, 127
        %v3505 = vpop.permute.xlu0 %3504
        %3506 = vrot.lane.b32.xlu0 %v3483, 127
        %v3507 = vpop.permute.xlu0 %3506
        %vm3516 = vcmask 56320
        %v3517 = vsel %vm3516, %v3493, %v3476
        %v3518 = vsel %vm3516, %v3495, %v3477
        %v3519 = vsel %vm3516, %v3497, %v3478
        %v3520 = vsel %vm3516, %v3499, %v3479
        %v3521 = vsel %vm3516, %v3501, %v3480
        %v3522 = vsel %vm3516, %v3503, %v3481
        %v3523 = vsel %vm3516, %v3505, %v3482
        %v3524 = vsel %vm3516, %v3507, %v3483
        %v3525 = vmax.f32 %v3476, %v3517
        %v3526 = vmax.f32 %v3477, %v3518
        %v3527 = vmax.f32 %v3478, %v3519
        %v3528 = vmax.f32 %v3479, %v3520
        %v3529 = vmax.f32 %v3480, %v3521
        %v3530 = vmax.f32 %v3481, %v3522
        %v3531 = vmax.f32 %v3482, %v3523
        %v3532 = vmax.f32 %v3483, %v3524
        %vm3533 = vcmask 64512
        %v3535 = vsel %vm3533, %v3525, 0
        %v3538 = vsel %vm3533, %v3526, 0
        %v3541 = vsel %vm3533, %v3527, 0
        %v3544 = vsel %vm3533, %v3528, 0
        %v3547 = vsel %vm3533, %v3529, 0
        %v3550 = vsel %vm3533, %v3530, 0
        %v3553 = vsel %vm3533, %v3531, 0
        %v3556 = vsel %vm3533, %v3532, 0
        %3558 = vmatprep.subr.mxu0 0.0
        %3559 = vmatpush1.msra.mxu0 0.0
        %3560 = vmatprep.subr.mxu0 0.0
        %3561 = vmatpush1.msra.mxu0 0.0
        %3562 = vmatprep.subr.mxu0 0.0
        %3563 = vmatpush1.msra.mxu0 0.0
        %3564 = vmatprep.subr.mxu0 0.0
        %3565 = vmatpush1.msra.mxu0 0.0
        %3566 = vmatprep.subr.mxu0 0.0
        %3567 = vmatpush1.msra.mxu0 0.0
        %3568 = vmatprep.subr.mxu0 0.0
        %3569 = vmatpush1.msra.mxu0 0.0
        %3570 = vmatprep.subr.mxu0 0.0
        %3571 = vmatpush1.msra.mxu0 0.0
        %3572 = vmatprep.subr.mxu0 0.0
        %3573 = vmatpush1.msra.mxu0 0.0
        %3574 = vmatprep.subr.mxu0 0.0
        %3575 = vmatpush1.msra.mxu0 0.0
        %3576 = vmatprep.subr.mxu0 0.0
        %3577 = vmatpush1.msra.mxu0 0.0
        %3578 = vmatprep.subr.mxu0 0.0
        %3579 = vmatpush1.msra.mxu0 0.0
        %3580 = vmatprep.subr.mxu0 0.0
        %3581 = vmatpush1.msra.mxu0 0.0
        %3582 = vmatprep.subr.mxu0 0.0
        %3583 = vmatpush1.msra.mxu0 0.0
        %3584 = vmatprep.subr.mxu0 0.0
        %3585 = vmatpush1.msra.mxu0 0.0
        %3586 = vmatprep.subr.mxu0 0.0
        %3587 = vmatpush1.msra.mxu0 0.0
        %3588 = vmatprep.subr.mxu0 0.0
        %3589 = vmatpush1.msra.mxu0 %v1079
        %3590 = vmatprep.subr.mxu0 0.0
        %3591 = vmatpush2.msra.mxu0 0.0
        %3592 = vmatprep.subr.mxu0 0.0
        %3593 = vmatpush2.msra.mxu0 0.0
        %3594 = vmatprep.subr.mxu0 0.0
        %3595 = vmatpush2.msra.mxu0 0.0
        %3596 = vmatprep.subr.mxu0 0.0
        %3597 = vmatpush2.msra.mxu0 0.0
        %3598 = vmatprep.subr.mxu0 0.0
        %3599 = vmatpush2.msra.mxu0 0.0
        %3600 = vmatprep.subr.mxu0 0.0
        %3601 = vmatpush2.msra.mxu0 0.0
        %3602 = vmatprep.subr.mxu0 0.0
        %3603 = vmatpush2.msra.mxu0 0.0
        %3604 = vmatprep.subr.mxu0 0.0
        %3605 = vmatpush2.msra.mxu0 0.0
        %3606 = vmatprep.subr.mxu0 0.0
        %3607 = vmatpush2.msra.mxu0 0.0
        %3608 = vmatprep.subr.mxu0 0.0
        %3609 = vmatpush2.msra.mxu0 0.0
        %3610 = vmatprep.subr.mxu0 0.0
        %3611 = vmatpush2.msra.mxu0 0.0
        %3612 = vmatprep.subr.mxu0 0.0
        %3613 = vmatpush2.msra.mxu0 0.0
        %3614 = vmatprep.subr.mxu0 0.0
        %3615 = vmatpush2.msra.mxu0 0.0
        %3616 = vmatprep.subr.mxu0 0.0
        %3617 = vmatpush2.msra.mxu0 0.0
        %3618 = vmatprep.subr.mxu0 0.0
        %3619 = vmatpush2.msra.mxu0 0.0
        %3620 = vmatprep.subr.mxu0 0.0
        %3621 = vmatpush2.msra.mxu0 0.0
        %3622 = vmatprep.mubr.f32.mxu0 0.0
        %3623 = vmatmul.mubr.f32.gmra.mxu0 %v3535
        %v3624 = vpop.f32.mrf.mxu0
        %v3625 = vadd.f32 0.0, %v3624
        %v3626 = vpop.f32.mrf.mxu0
        %3627 = vmatprep.mubr.f32.mxu0 0.0
        %3628 = vmatmul.mubr.f32.gmra.mxu0 %v3538
        %v3629 = vpop.f32.mrf.mxu0
        %v3630 = vadd.f32 0.0, %v3629
        %v3631 = vpop.f32.mrf.mxu0
        %3632 = vmatprep.mubr.f32.mxu0 0.0
        %3633 = vmatmul.mubr.f32.gmra.mxu0 %v3541
        %v3634 = vpop.f32.mrf.mxu0
        %v3635 = vadd.f32 0.0, %v3634
        %v3636 = vpop.f32.mrf.mxu0
        %3637 = vmatprep.mubr.f32.mxu0 0.0
        %3638 = vmatmul.mubr.f32.gmra.mxu0 %v3544
        %v3639 = vpop.f32.mrf.mxu0
        %v3640 = vadd.f32 0.0, %v3639
        %v3641 = vpop.f32.mrf.mxu0
        %3642 = vmatprep.mubr.f32.mxu0 0.0
        %3643 = vmatmul.mubr.f32.gmra.mxu0 %v3547
        %v3644 = vpop.f32.mrf.mxu0
        %v3645 = vadd.f32 0.0, %v3644
        %v3646 = vpop.f32.mrf.mxu0
        %3647 = vmatprep.mubr.f32.mxu0 0.0
        %3648 = vmatmul.mubr.f32.gmra.mxu0 %v3550
        %v3649 = vpop.f32.mrf.mxu0
        %v3650 = vadd.f32 0.0, %v3649
        %v3651 = vpop.f32.mrf.mxu0
        %3652 = vmatprep.mubr.f32.mxu0 0.0
        %3653 = vmatmul.mubr.f32.gmra.mxu0 %v3553
        %v3654 = vpop.f32.mrf.mxu0
        %v3655 = vadd.f32 0.0, %v3654
        %v3656 = vpop.f32.mrf.mxu0
        %3657 = vmatprep.mubr.f32.mxu0 0.0
        %3658 = vmatmul.mubr.f32.gmra.mxu0 %v3556
        %v3659 = vpop.f32.mrf.mxu0
        %v3660 = vadd.f32 0.0, %v3659
        %v3661 = vpop.f32.mrf.mxu0
        %3662 = vdwg.mxu0
        %3671 = vrot.lane.b32.xlu0 %v3625, 1
        %v3672 = vpop.permute.xlu0 %3671
        %3673 = vrot.lane.b32.xlu0 %v3630, 1
        %v3674 = vpop.permute.xlu0 %3673
        %3675 = vrot.lane.b32.xlu0 %v3635, 1
        %v3676 = vpop.permute.xlu0 %3675
        %3677 = vrot.lane.b32.xlu0 %v3640, 1
        %v3678 = vpop.permute.xlu0 %3677
        %3679 = vrot.lane.b32.xlu0 %v3645, 1
        %v3680 = vpop.permute.xlu0 %3679
        %3681 = vrot.lane.b32.xlu0 %v3650, 1
        %v3682 = vpop.permute.xlu0 %3681
        %3683 = vrot.lane.b32.xlu0 %v3655, 1
        %v3684 = vpop.permute.xlu0 %3683
        %3685 = vrot.lane.b32.xlu0 %v3660, 1
        %v3686 = vpop.permute.xlu0 %3685
        %v3695 = vsel %vm2381, 0.0, %v3672
        %v3696 = vsel %vm2381, 0.0, %v3674
        %v3697 = vsel %vm2381, 0.0, %v3676
        %v3698 = vsel %vm2381, 0.0, %v3678
        %v3699 = vsel %vm2381, 0.0, %v3680
        %v3700 = vsel %vm2381, 0.0, %v3682
        %v3701 = vsel %vm2381, 0.0, %v3684
        %v3702 = vsel %vm2381, 0.0, %v3686
        %vm3703 = vcmask 39936
        %v3704 = vsel %vm3703, %v3695, 0.0
        %v3705 = vsel %vm3703, %v3696, 0.0
        %v3706 = vsel %vm3703, %v3697, 0.0
        %v3707 = vsel %vm3703, %v3698, 0.0
        %v3708 = vsel %vm3703, %v3699, 0.0
        %v3709 = vsel %vm3703, %v3700, 0.0
        %v3710 = vsel %vm3703, %v3701, 0.0
        %v3711 = vsel %vm3703, %v3702, 0.0
        %3720 = vrot.lane.b32.xlu0 %v3704, 127
        %v3721 = vpop.permute.xlu0 %3720
        %3722 = vrot.lane.b32.xlu0 %v3705, 127
        %v3723 = vpop.permute.xlu0 %3722
        %3724 = vrot.lane.b32.xlu0 %v3706, 127
        %v3725 = vpop.permute.xlu0 %3724
        %3726 = vrot.lane.b32.xlu0 %v3707, 127
        %v3727 = vpop.permute.xlu0 %3726
        %3728 = vrot.lane.b32.xlu0 %v3708, 127
        %v3729 = vpop.permute.xlu0 %3728
        %3730 = vrot.lane.b32.xlu0 %v3709, 127
        %v3731 = vpop.permute.xlu0 %3730
        %3732 = vrot.lane.b32.xlu0 %v3710, 127
        %v3733 = vpop.permute.xlu0 %3732
        %3734 = vrot.lane.b32.xlu0 %v3711, 127
        %v3735 = vpop.permute.xlu0 %3734
        %3744 = vrot.lane.b32.xlu0 %v3704, 126
        %v3745 = vpop.permute.xlu0 %3744
        %3746 = vrot.lane.b32.xlu0 %v3705, 126
        %v3747 = vpop.permute.xlu0 %3746
        %3748 = vrot.lane.b32.xlu0 %v3706, 126
        %v3749 = vpop.permute.xlu0 %3748
        %3750 = vrot.lane.b32.xlu0 %v3707, 126
        %v3751 = vpop.permute.xlu0 %3750
        %3752 = vrot.lane.b32.xlu0 %v3708, 126
        %v3753 = vpop.permute.xlu0 %3752
        %3754 = vrot.lane.b32.xlu0 %v3709, 126
        %v3755 = vpop.permute.xlu0 %3754
        %3756 = vrot.lane.b32.xlu0 %v3710, 126
        %v3757 = vpop.permute.xlu0 %3756
        %3758 = vrot.lane.b32.xlu0 %v3711, 126
        %v3759 = vpop.permute.xlu0 %3758
        %s3768 = scalar_lea.vmem [#allocation5], 2304
        %v3769 = vld [vmem:[%s3768] sm:$0xff]
        %v3770 = vld [vmem:[%s3768 + $0x8] sm:$0xff]
        %v3771 = vld [vmem:[%s3768 + $0x18] sm:$0xff]
        %v3772 = vld [vmem:[%s3768 + $0x20] sm:$0xff]
        %v3773 = vld [vmem:[%s3768 + $0x30] sm:$0xff]
        %v3774 = vld [vmem:[%s3768 + $0x38] sm:$0xff]
        %v3775 = vld [vmem:[%s3768 + $0x48] sm:$0xff]
        %v3776 = vld [vmem:[%s3768 + $0x50] sm:$0xff]
        %v3777 = vld [vmem:[%s3768 + $0x60] sm:$0xff]
        %v3778 = vld [vmem:[%s3768 + $0x68] sm:$0xff]
        %v3779 = vld [vmem:[%s3768 + $0x78] sm:$0xff]
        %v3780 = vld [vmem:[%s3768 + $0x80] sm:$0xff]
        %v3781 = vld [vmem:[%s3768 + $0x90] sm:$0xff]
        %v3782 = vld [vmem:[%s3768 + $0x98] sm:$0xff]
        %v3783 = vld [vmem:[%s3768 + $0xa8] sm:$0xff]
        %v3784 = vld [vmem:[%s3768 + $0xb0] sm:$0xff]
        %v3786 = vsel %vm3346, %v3770, 0
        %v3789 = vsel %vm3346, %v3772, 0
        %v3792 = vsel %vm3346, %v3774, 0
        %v3795 = vsel %vm3346, %v3776, 0
        %v3798 = vsel %vm3346, %v3778, 0
        %v3801 = vsel %vm3346, %v3780, 0
        %v3804 = vsel %vm3346, %v3782, 0
        %v3807 = vsel %vm3346, %v3784, 0
        %3809 = vmatprep.subr.mxu0 0.0
        %3810 = vmatpush1.msra.mxu0 %v3735
        %3811 = vmatprep.subr.mxu0 0.0
        %3812 = vmatpush1.msra.mxu0 %v3733
        %3813 = vmatprep.subr.mxu0 0.0
        %3814 = vmatpush1.msra.mxu0 %v3731
        %3815 = vmatprep.subr.mxu0 0.0
        %3816 = vmatpush1.msra.mxu0 %v3729
        %3817 = vmatprep.subr.mxu0 0.0
        %3818 = vmatpush1.msra.mxu0 %v3727
        %3819 = vmatprep.subr.mxu0 0.0
        %3820 = vmatpush1.msra.mxu0 %v3725
        %3821 = vmatprep.subr.mxu0 0.0
        %3822 = vmatpush1.msra.mxu0 %v3723
        %3823 = vmatprep.subr.mxu0 0.0
        %3824 = vmatpush1.msra.mxu0 %v3721
        %3825 = vmatprep.subr.mxu0 0.0
        %3826 = vmatpush1.msra.mxu0 %v3711
        %3827 = vmatprep.subr.mxu0 0.0
        %3828 = vmatpush1.msra.mxu0 %v3710
        %3829 = vmatprep.subr.mxu0 0.0
        %3830 = vmatpush1.msra.mxu0 %v3709
        %3831 = vmatprep.subr.mxu0 0.0
        %3832 = vmatpush1.msra.mxu0 %v3708
        %3833 = vmatprep.subr.mxu0 0.0
        %3834 = vmatpush1.msra.mxu0 %v3707
        %3835 = vmatprep.subr.mxu0 0.0
        %3836 = vmatpush1.msra.mxu0 %v3706
        %3837 = vmatprep.subr.mxu0 0.0
        %3838 = vmatpush1.msra.mxu0 %v3705
        %3839 = vmatprep.subr.mxu0 0.0
        %3840 = vmatpush1.msra.mxu0 %v3704
        %3841 = vmatprep.subr.mxu0 0.0
        %3842 = vmatpush2.msra.mxu0 0.0
        %3843 = vmatprep.subr.mxu0 0.0
        %3844 = vmatpush2.msra.mxu0 0.0
        %3845 = vmatprep.subr.mxu0 0.0
        %3846 = vmatpush2.msra.mxu0 0.0
        %3847 = vmatprep.subr.mxu0 0.0
        %3848 = vmatpush2.msra.mxu0 0.0
        %3849 = vmatprep.subr.mxu0 0.0
        %3850 = vmatpush2.msra.mxu0 0.0
        %3851 = vmatprep.subr.mxu0 0.0
        %3852 = vmatpush2.msra.mxu0 0.0
        %3853 = vmatprep.subr.mxu0 0.0
        %3854 = vmatpush2.msra.mxu0 0.0
        %3855 = vmatprep.subr.mxu0 0.0
        %3856 = vmatpush2.msra.mxu0 %v475
        %3857 = vmatprep.subr.mxu0 0.0
        %3858 = vmatpush2.msra.mxu0 %v3759
        %3859 = vmatprep.subr.mxu0 0.0
        %3860 = vmatpush2.msra.mxu0 %v3757
        %3861 = vmatprep.subr.mxu0 0.0
        %3862 = vmatpush2.msra.mxu0 %v3755
        %3863 = vmatprep.subr.mxu0 0.0
        %3864 = vmatpush2.msra.mxu0 %v3753
        %3865 = vmatprep.subr.mxu0 0.0
        %3866 = vmatpush2.msra.mxu0 %v3751
        %3867 = vmatprep.subr.mxu0 0.0
        %3868 = vmatpush2.msra.mxu0 %v3749
        %3869 = vmatprep.subr.mxu0 0.0
        %3870 = vmatpush2.msra.mxu0 %v3747
        %3871 = vmatprep.subr.mxu0 0.0
        %3872 = vmatpush2.msra.mxu0 %v3745
        %3873 = vmatprep.mubr.f32.mxu0 %v3786
        %3874 = vmatmul.mubr.f32.gmra.mxu0 %v3769
        %v3875 = vpop.f32.mrf.mxu0
        %v3876 = vadd.f32 0.0, %v3875
        %v3877 = vpop.f32.mrf.mxu0
        %3878 = vmatprep.mubr.f32.mxu0 %v3789
        %3879 = vmatmul.mubr.f32.gmra.mxu0 %v3771
        %v3880 = vpop.f32.mrf.mxu0
        %v3881 = vadd.f32 0.0, %v3880
        %v3882 = vpop.f32.mrf.mxu0
        %3883 = vmatprep.mubr.f32.mxu0 %v3792
        %3884 = vmatmul.mubr.f32.gmra.mxu0 %v3773
        %v3885 = vpop.f32.mrf.mxu0
        %v3886 = vadd.f32 0.0, %v3885
        %v3887 = vpop.f32.mrf.mxu0
        %3888 = vmatprep.mubr.f32.mxu0 %v3795
        %3889 = vmatmul.mubr.f32.gmra.mxu0 %v3775
        %v3890 = vpop.f32.mrf.mxu0
        %v3891 = vadd.f32 0.0, %v3890
        %v3892 = vpop.f32.mrf.mxu0
        %3893 = vmatprep.mubr.f32.mxu0 %v3798
        %3894 = vmatmul.mubr.f32.gmra.mxu0 %v3777
        %v3895 = vpop.f32.mrf.mxu0
        %v3896 = vadd.f32 0.0, %v3895
        %v3897 = vpop.f32.mrf.mxu0
        %3898 = vmatprep.mubr.f32.mxu0 %v3801
        %3899 = vmatmul.mubr.f32.gmra.mxu0 %v3779
        %v3900 = vpop.f32.mrf.mxu0
        %v3901 = vadd.f32 0.0, %v3900
        %v3902 = vpop.f32.mrf.mxu0
        %3903 = vmatprep.mubr.f32.mxu0 %v3804
        %3904 = vmatmul.mubr.f32.gmra.mxu0 %v3781
        %v3905 = vpop.f32.mrf.mxu0
        %v3906 = vadd.f32 0.0, %v3905
        %v3907 = vpop.f32.mrf.mxu0
        %3908 = vmatprep.mubr.f32.mxu0 %v3807
        %3909 = vmatmul.mubr.f32.gmra.mxu0 %v3783
        %v3910 = vpop.f32.mrf.mxu0
        %v3911 = vadd.f32 0.0, %v3910
        %v3912 = vpop.f32.mrf.mxu0
        %3913 = vdwg.mxu0
        %v3914 = vmax.f32 %v3876, 0.0
        %v3915 = vmax.f32 %v3881, 0.0
        %v3916 = vmax.f32 %v3886, 0.0
        %v3917 = vmax.f32 %v3891, 0.0
        %v3918 = vmax.f32 %v3896, 0.0
        %v3919 = vmax.f32 %v3901, 0.0
        %v3920 = vmax.f32 %v3906, 0.0
        %v3921 = vmax.f32 %v3911, 0.0
        %3930 = vrot.lane.b32.xlu0 %v3914, 1
        %v3931 = vpop.permute.xlu0 %3930
        %3932 = vrot.lane.b32.xlu0 %v3915, 1
        %v3933 = vpop.permute.xlu0 %3932
        %3934 = vrot.lane.b32.xlu0 %v3916, 1
        %v3935 = vpop.permute.xlu0 %3934
        %3936 = vrot.lane.b32.xlu0 %v3917, 1
        %v3937 = vpop.permute.xlu0 %3936
        %3938 = vrot.lane.b32.xlu0 %v3918, 1
        %v3939 = vpop.permute.xlu0 %3938
        %3940 = vrot.lane.b32.xlu0 %v3919, 1
        %v3941 = vpop.permute.xlu0 %3940
        %3942 = vrot.lane.b32.xlu0 %v3920, 1
        %v3943 = vpop.permute.xlu0 %3942
        %3944 = vrot.lane.b32.xlu0 %v3921, 1
        %v3945 = vpop.permute.xlu0 %3944
        %v3954 = vsel %vm2381, 0.0, %v3931
        %v3955 = vsel %vm2381, 0.0, %v3933
        %v3956 = vsel %vm2381, 0.0, %v3935
        %v3957 = vsel %vm2381, 0.0, %v3937
        %v3958 = vsel %vm2381, 0.0, %v3939
        %v3959 = vsel %vm2381, 0.0, %v3941
        %v3960 = vsel %vm2381, 0.0, %v3943
        %v3961 = vsel %vm2381, 0.0, %v3945
        %v3962 = vsel %vm3703, %v3954, 0.0
        %v3963 = vsel %vm3703, %v3955, 0.0
        %v3964 = vsel %vm3703, %v3956, 0.0
        %v3965 = vsel %vm3703, %v3957, 0.0
        %v3966 = vsel %vm3703, %v3958, 0.0
        %v3967 = vsel %vm3703, %v3959, 0.0
        %v3968 = vsel %vm3703, %v3960, 0.0
        %v3969 = vsel %vm3703, %v3961, 0.0
        %3978 = vrot.lane.b32.xlu0 %v3962, 127
        %v3979 = vpop.permute.xlu0 %3978
        %3980 = vrot.lane.b32.xlu0 %v3963, 127
        %v3981 = vpop.permute.xlu0 %3980
        %3982 = vrot.lane.b32.xlu0 %v3964, 127
        %v3983 = vpop.permute.xlu0 %3982
        %3984 = vrot.lane.b32.xlu0 %v3965, 127
        %v3985 = vpop.permute.xlu0 %3984
        %3986 = vrot.lane.b32.xlu0 %v3966, 127
        %v3987 = vpop.permute.xlu0 %3986
        %3988 = vrot.lane.b32.xlu0 %v3967, 127
        %v3989 = vpop.permute.xlu0 %3988
        %3990 = vrot.lane.b32.xlu0 %v3968, 127
        %v3991 = vpop.permute.xlu0 %3990
        %3992 = vrot.lane.b32.xlu0 %v3969, 127
        %v3993 = vpop.permute.xlu0 %3992
        %4002 = vrot.lane.b32.xlu0 %v3962, 126
        %v4003 = vpop.permute.xlu0 %4002
        %4004 = vrot.lane.b32.xlu0 %v3963, 126
        %v4005 = vpop.permute.xlu0 %4004
        %4006 = vrot.lane.b32.xlu0 %v3964, 126
        %v4007 = vpop.permute.xlu0 %4006
        %4008 = vrot.lane.b32.xlu0 %v3965, 126
        %v4009 = vpop.permute.xlu0 %4008
        %4010 = vrot.lane.b32.xlu0 %v3966, 126
        %v4011 = vpop.permute.xlu0 %4010
        %4012 = vrot.lane.b32.xlu0 %v3967, 126
        %v4013 = vpop.permute.xlu0 %4012
        %4014 = vrot.lane.b32.xlu0 %v3968, 126
        %v4015 = vpop.permute.xlu0 %4014
        %4016 = vrot.lane.b32.xlu0 %v3969, 126
        %v4017 = vpop.permute.xlu0 %4016
        %s4026 = scalar_lea.vmem [#allocation5], 2496
        %v4027 = vld [vmem:[%s4026] sm:$0xff]
        %v4028 = vld [vmem:[%s4026 + $0x8] sm:$0xff]
        %v4029 = vld [vmem:[%s4026 + $0x18] sm:$0xff]
        %v4030 = vld [vmem:[%s4026 + $0x20] sm:$0xff]
        %v4031 = vld [vmem:[%s4026 + $0x30] sm:$0xff]
        %v4032 = vld [vmem:[%s4026 + $0x38] sm:$0xff]
        %v4033 = vld [vmem:[%s4026 + $0x48] sm:$0xff]
        %v4034 = vld [vmem:[%s4026 + $0x50] sm:$0xff]
        %v4035 = vld [vmem:[%s4026 + $0x60] sm:$0xff]
        %v4036 = vld [vmem:[%s4026 + $0x68] sm:$0xff]
        %v4037 = vld [vmem:[%s4026 + $0x78] sm:$0xff]
        %v4038 = vld [vmem:[%s4026 + $0x80] sm:$0xff]
        %v4039 = vld [vmem:[%s4026 + $0x90] sm:$0xff]
        %v4040 = vld [vmem:[%s4026 + $0x98] sm:$0xff]
        %v4041 = vld [vmem:[%s4026 + $0xa8] sm:$0xff]
        %v4042 = vld [vmem:[%s4026 + $0xb0] sm:$0xff]
        %v4044 = vsel %vm3346, %v4028, 0
        %v4047 = vsel %vm3346, %v4030, 0
        %v4050 = vsel %vm3346, %v4032, 0
        %v4053 = vsel %vm3346, %v4034, 0
        %v4056 = vsel %vm3346, %v4036, 0
        %v4059 = vsel %vm3346, %v4038, 0
        %v4062 = vsel %vm3346, %v4040, 0
        %v4065 = vsel %vm3346, %v4042, 0
        %4067 = vmatprep.subr.mxu0 0.0
        %4068 = vmatpush1.msra.mxu0 %v3993
        %4069 = vmatprep.subr.mxu0 0.0
        %4070 = vmatpush1.msra.mxu0 %v3991
        %4071 = vmatprep.subr.mxu0 0.0
        %4072 = vmatpush1.msra.mxu0 %v3989
        %4073 = vmatprep.subr.mxu0 0.0
        %4074 = vmatpush1.msra.mxu0 %v3987
        %4075 = vmatprep.subr.mxu0 0.0
        %4076 = vmatpush1.msra.mxu0 %v3985
        %4077 = vmatprep.subr.mxu0 0.0
        %4078 = vmatpush1.msra.mxu0 %v3983
        %4079 = vmatprep.subr.mxu0 0.0
        %4080 = vmatpush1.msra.mxu0 %v3981
        %4081 = vmatprep.subr.mxu0 0.0
        %4082 = vmatpush1.msra.mxu0 %v3979
        %4083 = vmatprep.subr.mxu0 0.0
        %4084 = vmatpush1.msra.mxu0 %v3969
        %4085 = vmatprep.subr.mxu0 0.0
        %4086 = vmatpush1.msra.mxu0 %v3968
        %4087 = vmatprep.subr.mxu0 0.0
        %4088 = vmatpush1.msra.mxu0 %v3967
        %4089 = vmatprep.subr.mxu0 0.0
        %4090 = vmatpush1.msra.mxu0 %v3966
        %4091 = vmatprep.subr.mxu0 0.0
        %4092 = vmatpush1.msra.mxu0 %v3965
        %4093 = vmatprep.subr.mxu0 0.0
        %4094 = vmatpush1.msra.mxu0 %v3964
        %4095 = vmatprep.subr.mxu0 0.0
        %4096 = vmatpush1.msra.mxu0 %v3963
        %4097 = vmatprep.subr.mxu0 0.0
        %4098 = vmatpush1.msra.mxu0 %v3962
        %4099 = vmatprep.subr.mxu0 0.0
        %4100 = vmatpush2.msra.mxu0 0.0
        %4101 = vmatprep.subr.mxu0 0.0
        %4102 = vmatpush2.msra.mxu0 0.0
        %4103 = vmatprep.subr.mxu0 0.0
        %4104 = vmatpush2.msra.mxu0 0.0
        %4105 = vmatprep.subr.mxu0 0.0
        %4106 = vmatpush2.msra.mxu0 0.0
        %4107 = vmatprep.subr.mxu0 0.0
        %4108 = vmatpush2.msra.mxu0 0.0
        %4109 = vmatprep.subr.mxu0 0.0
        %4110 = vmatpush2.msra.mxu0 0.0
        %4111 = vmatprep.subr.mxu0 0.0
        %4112 = vmatpush2.msra.mxu0 0.0
        %4113 = vmatprep.subr.mxu0 0.0
        %4114 = vmatpush2.msra.mxu0 %v475
        %4115 = vmatprep.subr.mxu0 0.0
        %4116 = vmatpush2.msra.mxu0 %v4017
        %4117 = vmatprep.subr.mxu0 0.0
        %4118 = vmatpush2.msra.mxu0 %v4015
        %4119 = vmatprep.subr.mxu0 0.0
        %4120 = vmatpush2.msra.mxu0 %v4013
        %4121 = vmatprep.subr.mxu0 0.0
        %4122 = vmatpush2.msra.mxu0 %v4011
        %4123 = vmatprep.subr.mxu0 0.0
        %4124 = vmatpush2.msra.mxu0 %v4009
        %4125 = vmatprep.subr.mxu0 0.0
        %4126 = vmatpush2.msra.mxu0 %v4007
        %4127 = vmatprep.subr.mxu0 0.0
        %4128 = vmatpush2.msra.mxu0 %v4005
        %4129 = vmatprep.subr.mxu0 0.0
        %4130 = vmatpush2.msra.mxu0 %v4003
        %4131 = vmatprep.mubr.f32.mxu0 %v4044
        %4132 = vmatmul.mubr.f32.gmra.mxu0 %v4027
        %v4133 = vpop.f32.mrf.mxu0
        %v4134 = vadd.f32 0.0, %v4133
        %v4135 = vpop.f32.mrf.mxu0
        %4136 = vmatprep.mubr.f32.mxu0 %v4047
        %4137 = vmatmul.mubr.f32.gmra.mxu0 %v4029
        %v4138 = vpop.f32.mrf.mxu0
        %v4139 = vadd.f32 0.0, %v4138
        %v4140 = vpop.f32.mrf.mxu0
        %4141 = vmatprep.mubr.f32.mxu0 %v4050
        %4142 = vmatmul.mubr.f32.gmra.mxu0 %v4031
        %v4143 = vpop.f32.mrf.mxu0
        %v4144 = vadd.f32 0.0, %v4143
        %v4145 = vpop.f32.mrf.mxu0
        %4146 = vmatprep.mubr.f32.mxu0 %v4053
        %4147 = vmatmul.mubr.f32.gmra.mxu0 %v4033
        %v4148 = vpop.f32.mrf.mxu0
        %v4149 = vadd.f32 0.0, %v4148
        %v4150 = vpop.f32.mrf.mxu0
        %4151 = vmatprep.mubr.f32.mxu0 %v4056
        %4152 = vmatmul.mubr.f32.gmra.mxu0 %v4035
        %v4153 = vpop.f32.mrf.mxu0
        %v4154 = vadd.f32 0.0, %v4153
        %v4155 = vpop.f32.mrf.mxu0
        %4156 = vmatprep.mubr.f32.mxu0 %v4059
        %4157 = vmatmul.mubr.f32.gmra.mxu0 %v4037
        %v4158 = vpop.f32.mrf.mxu0
        %v4159 = vadd.f32 0.0, %v4158
        %v4160 = vpop.f32.mrf.mxu0
        %4161 = vmatprep.mubr.f32.mxu0 %v4062
        %4162 = vmatmul.mubr.f32.gmra.mxu0 %v4039
        %v4163 = vpop.f32.mrf.mxu0
        %v4164 = vadd.f32 0.0, %v4163
        %v4165 = vpop.f32.mrf.mxu0
        %4166 = vmatprep.mubr.f32.mxu0 %v4065
        %4167 = vmatmul.mubr.f32.gmra.mxu0 %v4041
        %v4168 = vpop.f32.mrf.mxu0
        %v4169 = vadd.f32 0.0, %v4168
        %v4170 = vpop.f32.mrf.mxu0
        %4171 = vdwg.mxu0
        %v4172 = vmax.f32 %v4134, 0.0
        %v4173 = vmax.f32 %v4139, 0.0
        %v4174 = vmax.f32 %v4144, 0.0
        %v4175 = vmax.f32 %v4149, 0.0
        %v4176 = vmax.f32 %v4154, 0.0
        %v4177 = vmax.f32 %v4159, 0.0
        %v4178 = vmax.f32 %v4164, 0.0
        %v4179 = vmax.f32 %v4169, 0.0
        %4188 = vrot.lane.b32.xlu0 %v4172, 127
        %v4189 = vpop.permute.xlu0 %4188
        %4190 = vrot.lane.b32.xlu0 %v4173, 127
        %v4191 = vpop.permute.xlu0 %4190
        %4192 = vrot.lane.b32.xlu0 %v4174, 127
        %v4193 = vpop.permute.xlu0 %4192
        %4194 = vrot.lane.b32.xlu0 %v4175, 127
        %v4195 = vpop.permute.xlu0 %4194
        %4196 = vrot.lane.b32.xlu0 %v4176, 127
        %v4197 = vpop.permute.xlu0 %4196
        %4198 = vrot.lane.b32.xlu0 %v4177, 127
        %v4199 = vpop.permute.xlu0 %4198
        %4200 = vrot.lane.b32.xlu0 %v4178, 127
        %v4201 = vpop.permute.xlu0 %4200
        %4202 = vrot.lane.b32.xlu0 %v4179, 127
        %v4203 = vpop.permute.xlu0 %4202
        %4212 = vrot.lane.b32.xlu0 %v4172, 126
        %v4213 = vpop.permute.xlu0 %4212
        %4214 = vrot.lane.b32.xlu0 %v4173, 126
        %v4215 = vpop.permute.xlu0 %4214
        %4216 = vrot.lane.b32.xlu0 %v4174, 126
        %v4217 = vpop.permute.xlu0 %4216
        %4218 = vrot.lane.b32.xlu0 %v4175, 126
        %v4219 = vpop.permute.xlu0 %4218
        %4220 = vrot.lane.b32.xlu0 %v4176, 126
        %v4221 = vpop.permute.xlu0 %4220
        %4222 = vrot.lane.b32.xlu0 %v4177, 126
        %v4223 = vpop.permute.xlu0 %4222
        %4224 = vrot.lane.b32.xlu0 %v4178, 126
        %v4225 = vpop.permute.xlu0 %4224
        %4226 = vrot.lane.b32.xlu0 %v4179, 126
        %v4227 = vpop.permute.xlu0 %4226
        %4236 = vrot.lane.b32.xlu0 %v4172, 125
        %v4237 = vpop.permute.xlu0 %4236
        %4238 = vrot.lane.b32.xlu0 %v4173, 125
        %v4239 = vpop.permute.xlu0 %4238
        %4240 = vrot.lane.b32.xlu0 %v4174, 125
        %v4241 = vpop.permute.xlu0 %4240
        %4242 = vrot.lane.b32.xlu0 %v4175, 125
        %v4243 = vpop.permute.xlu0 %4242
        %4244 = vrot.lane.b32.xlu0 %v4176, 125
        %v4245 = vpop.permute.xlu0 %4244
        %4246 = vrot.lane.b32.xlu0 %v4177, 125
        %v4247 = vpop.permute.xlu0 %4246
        %4248 = vrot.lane.b32.xlu0 %v4178, 125
        %v4249 = vpop.permute.xlu0 %4248
        %4250 = vrot.lane.b32.xlu0 %v4179, 125
        %v4251 = vpop.permute.xlu0 %4250
        %s4260 = scalar_lea.vmem [#allocation5], 2688
        %v4261 = vld [vmem:[%s4260] sm:$0xff]
        %v4262 = vld [vmem:[%s4260 + $0x8] sm:$0xff]
        %v4263 = vld [vmem:[%s4260 + $0x10] sm:$0xff]
        %v4264 = vld [vmem:[%s4260 + $0x18] sm:$0xff]
        %v4265 = vld [vmem:[%s4260 + $0x20] sm:$0xff]
        %v4266 = vld [vmem:[%s4260 + $0x28] sm:$0xff]
        %v4268 = vsel %vm2381, %v4263, 0
        %v4271 = vsel %vm2381, %v4266, 0
        %4273 = vmatprep.subr.mxu0 0.0
        %4274 = vmatpush1.msra.mxu0 %v4203
        %4275 = vmatprep.subr.mxu0 0.0
        %4276 = vmatpush1.msra.mxu0 %v4201
        %4277 = vmatprep.subr.mxu0 0.0
        %4278 = vmatpush1.msra.mxu0 %v4199
        %4279 = vmatprep.subr.mxu0 0.0
        %4280 = vmatpush1.msra.mxu0 %v4197
        %4281 = vmatprep.subr.mxu0 0.0
        %4282 = vmatpush1.msra.mxu0 %v4195
        %4283 = vmatprep.subr.mxu0 0.0
        %4284 = vmatpush1.msra.mxu0 %v4193
        %4285 = vmatprep.subr.mxu0 0.0
        %4286 = vmatpush1.msra.mxu0 %v4191
        %4287 = vmatprep.subr.mxu0 0.0
        %4288 = vmatpush1.msra.mxu0 %v4189
        %4289 = vmatprep.subr.mxu0 0.0
        %4290 = vmatpush1.msra.mxu0 %v4179
        %4291 = vmatprep.subr.mxu0 0.0
        %4292 = vmatpush1.msra.mxu0 %v4178
        %4293 = vmatprep.subr.mxu0 0.0
        %4294 = vmatpush1.msra.mxu0 %v4177
        %4295 = vmatprep.subr.mxu0 0.0
        %4296 = vmatpush1.msra.mxu0 %v4176
        %4297 = vmatprep.subr.mxu0 0.0
        %4298 = vmatpush1.msra.mxu0 %v4175
        %4299 = vmatprep.subr.mxu0 0.0
        %4300 = vmatpush1.msra.mxu0 %v4174
        %4301 = vmatprep.subr.mxu0 0.0
        %4302 = vmatpush1.msra.mxu0 %v4173
        %4303 = vmatprep.subr.mxu0 0.0
        %4304 = vmatpush1.msra.mxu0 %v4172
        %4305 = vmatprep.subr.mxu0 0.0
        %4306 = vmatpush2.msra.mxu0 %v4251
        %4307 = vmatprep.subr.mxu0 0.0
        %4308 = vmatpush2.msra.mxu0 %v4249
        %4309 = vmatprep.subr.mxu0 0.0
        %4310 = vmatpush2.msra.mxu0 %v4247
        %4311 = vmatprep.subr.mxu0 0.0
        %4312 = vmatpush2.msra.mxu0 %v4245
        %4313 = vmatprep.subr.mxu0 0.0
        %4314 = vmatpush2.msra.mxu0 %v4243
        %4315 = vmatprep.subr.mxu0 0.0
        %4316 = vmatpush2.msra.mxu0 %v4241
        %4317 = vmatprep.subr.mxu0 0.0
        %4318 = vmatpush2.msra.mxu0 %v4239
        %4319 = vmatprep.subr.mxu0 0.0
        %4320 = vmatpush2.msra.mxu0 %v4237
        %4321 = vmatprep.subr.mxu0 0.0
        %4322 = vmatpush2.msra.mxu0 %v4227
        %4323 = vmatprep.subr.mxu0 0.0
        %4324 = vmatpush2.msra.mxu0 %v4225
        %4325 = vmatprep.subr.mxu0 0.0
        %4326 = vmatpush2.msra.mxu0 %v4223
        %4327 = vmatprep.subr.mxu0 0.0
        %4328 = vmatpush2.msra.mxu0 %v4221
        %4329 = vmatprep.subr.mxu0 0.0
        %4330 = vmatpush2.msra.mxu0 %v4219
        %4331 = vmatprep.subr.mxu0 0.0
        %4332 = vmatpush2.msra.mxu0 %v4217
        %4333 = vmatprep.subr.mxu0 0.0
        %4334 = vmatpush2.msra.mxu0 %v4215
        %4335 = vmatprep.subr.mxu0 0.0
        %4336 = vmatpush2.msra.mxu0 %v4213
        %4337 = vmatprep.mubr.f32.mxu0 %v4262
        %4338 = vmatmul.mubr.f32.gmra.mxu0 %v4261
        %v4339 = vpop.f32.mrf.mxu0
        %v4340 = vadd.f32 0.0, %v4339
        %v4341 = vpop.f32.mrf.mxu0
        %4342 = vmatprep.mubr.f32.mxu0 %v4265
        %4343 = vmatmul.mubr.f32.gmra.mxu0 %v4264
        %v4344 = vpop.f32.mrf.mxu0
        %v4345 = vadd.f32 0.0, %v4344
        %v4346 = vpop.f32.mrf.mxu0
        %4347 = vdwg.mxu0
        %4348 = vmatprep.subr.mxu0 0.0
        %4349 = vmatpush1.msra.mxu0 0.0
        %4350 = vmatprep.subr.mxu0 0.0
        %4351 = vmatpush1.msra.mxu0 0.0
        %4352 = vmatprep.subr.mxu0 0.0
        %4353 = vmatpush1.msra.mxu0 0.0
        %4354 = vmatprep.subr.mxu0 0.0
        %4355 = vmatpush1.msra.mxu0 0.0
        %4356 = vmatprep.subr.mxu0 0.0
        %4357 = vmatpush1.msra.mxu0 0.0
        %4358 = vmatprep.subr.mxu0 0.0
        %4359 = vmatpush1.msra.mxu0 0.0
        %4360 = vmatprep.subr.mxu0 0.0
        %4361 = vmatpush1.msra.mxu0 0.0
        %4362 = vmatprep.subr.mxu0 0.0
        %4363 = vmatpush1.msra.mxu0 0.0
        %4364 = vmatprep.subr.mxu0 0.0
        %4365 = vmatpush1.msra.mxu0 0.0
        %4366 = vmatprep.subr.mxu0 0.0
        %4367 = vmatpush1.msra.mxu0 0.0
        %4368 = vmatprep.subr.mxu0 0.0
        %4369 = vmatpush1.msra.mxu0 0.0
        %4370 = vmatprep.subr.mxu0 0.0
        %4371 = vmatpush1.msra.mxu0 0.0
        %4372 = vmatprep.subr.mxu0 0.0
        %4373 = vmatpush1.msra.mxu0 0.0
        %4374 = vmatprep.subr.mxu0 0.0
        %4375 = vmatpush1.msra.mxu0 0.0
        %4376 = vmatprep.subr.mxu0 0.0
        %4377 = vmatpush1.msra.mxu0 0.0
        %4378 = vmatprep.subr.mxu0 0.0
        %4379 = vmatpush1.msra.mxu0 %v475
        %4380 = vmatprep.subr.mxu0 0.0
        %4381 = vmatpush2.msra.mxu0 0.0
        %4382 = vmatprep.subr.mxu0 0.0
        %4383 = vmatpush2.msra.mxu0 0.0
        %4384 = vmatprep.subr.mxu0 0.0
        %4385 = vmatpush2.msra.mxu0 0.0
        %4386 = vmatprep.subr.mxu0 0.0
        %4387 = vmatpush2.msra.mxu0 0.0
        %4388 = vmatprep.subr.mxu0 0.0
        %4389 = vmatpush2.msra.mxu0 0.0
        %4390 = vmatprep.subr.mxu0 0.0
        %4391 = vmatpush2.msra.mxu0 0.0
        %4392 = vmatprep.subr.mxu0 0.0
        %4393 = vmatpush2.msra.mxu0 0.0
        %4394 = vmatprep.subr.mxu0 0.0
        %4395 = vmatpush2.msra.mxu0 0.0
        %4396 = vmatprep.subr.mxu0 0.0
        %4397 = vmatpush2.msra.mxu0 0.0
        %4398 = vmatprep.subr.mxu0 0.0
        %4399 = vmatpush2.msra.mxu0 0.0
        %4400 = vmatprep.subr.mxu0 0.0
        %4401 = vmatpush2.msra.mxu0 0.0
        %4402 = vmatprep.subr.mxu0 0.0
        %4403 = vmatpush2.msra.mxu0 0.0
        %4404 = vmatprep.subr.mxu0 0.0
        %4405 = vmatpush2.msra.mxu0 0.0
        %4406 = vmatprep.subr.mxu0 0.0
        %4407 = vmatpush2.msra.mxu0 0.0
        %4408 = vmatprep.subr.mxu0 0.0
        %4409 = vmatpush2.msra.mxu0 0.0
        %4410 = vmatprep.subr.mxu0 0.0
        %4411 = vmatpush2.msra.mxu0 0.0
        %4412 = vmatprep.mubr.f32.mxu0 0.0
        %4413 = vmatmul.mubr.f32.gmra.mxu0 %v4268
        %v4414 = vpop.f32.mrf.mxu0
        %v4415 = vadd.f32 %v4340, %v4414
        %v4416 = vpop.f32.mrf.mxu0
        %4417 = vmatprep.mubr.f32.mxu0 0.0
        %4418 = vmatmul.mubr.f32.gmra.mxu0 %v4271
        %v4419 = vpop.f32.mrf.mxu0
        %v4420 = vadd.f32 %v4345, %v4419
        %v4421 = vpop.f32.mrf.mxu0
        %4422 = vdwg.mxu0
        %v4423 = vtanh.pop %v4415
        %v4424 = vtanh.pop %v4420
        %4425 = vst.msk [vmem:[%s213] sm:$0xff] %vm2381, %v4423
        %4426 = vst.msk [vmem:[%s213 + $0x8] sm:$0xff] %vm2381, %v4424
        %s4427 = scalar_lea.vmem [#allocation5], 2880
        %v4428 = vld [vmem:[%s4427] sm:$0xff]
        %v4429 = vld [vmem:[%s4427 + $0x18] sm:$0xff]
        %v4430 = vld [vmem:[%s4427 + $0x30] sm:$0xff]
        %v4431 = vld [vmem:[%s4427 + $0x48] sm:$0xff]
        %v4432 = vld [vmem:[%s4427 + $0x60] sm:$0xff]
        %v4433 = vld [vmem:[%s4427 + $0x78] sm:$0xff]
        %v4434 = vld [vmem:[%s4427 + $0x90] sm:$0xff]
        %v4435 = vld [vmem:[%s4427 + $0xa8] sm:$0xff]
        %v4437 = vsel %vm2388, %v4428, 0
        %v4440 = vsel %vm2388, %v4429, 0
        %v4443 = vsel %vm2388, %v4430, 0
        %v4446 = vsel %vm2388, %v4431, 0
        %v4449 = vsel %vm2388, %v4432, 0
        %v4452 = vsel %vm2388, %v4433, 0
        %v4455 = vsel %vm2388, %v4434, 0
        %v4458 = vsel %vm2388, %v4435, 0
        %4460 = vmatprep.subr.mxu0 0.0
        %4461 = vmatpush1.msra.mxu0 0.0
        %4462 = vmatprep.subr.mxu0 0.0
        %4463 = vmatpush1.msra.mxu0 0.0
        %4464 = vmatprep.subr.mxu0 0.0
        %4465 = vmatpush1.msra.mxu0 0.0
        %4466 = vmatprep.subr.mxu0 0.0
        %4467 = vmatpush1.msra.mxu0 0.0
        %4468 = vmatprep.subr.mxu0 0.0
        %4469 = vmatpush1.msra.mxu0 0.0
        %4470 = vmatprep.subr.mxu0 0.0
        %4471 = vmatpush1.msra.mxu0 0.0
        %4472 = vmatprep.subr.mxu0 0.0
        %4473 = vmatpush1.msra.mxu0 0.0
        %4474 = vmatprep.subr.mxu0 0.0
        %4475 = vmatpush1.msra.mxu0 0.0
        %4476 = vmatprep.subr.mxu0 0.0
        %4477 = vmatpush1.msra.mxu0 0.0
        %4478 = vmatprep.subr.mxu0 0.0
        %4479 = vmatpush1.msra.mxu0 0.0
        %4480 = vmatprep.subr.mxu0 0.0
        %4481 = vmatpush1.msra.mxu0 0.0
        %4482 = vmatprep.subr.mxu0 0.0
        %4483 = vmatpush1.msra.mxu0 0.0
        %4484 = vmatprep.subr.mxu0 0.0
        %4485 = vmatpush1.msra.mxu0 0.0
        %4486 = vmatprep.subr.mxu0 0.0
        %4487 = vmatpush1.msra.mxu0 %v475
        %4488 = vmatprep.subr.mxu0 0.0
        %4489 = vmatpush1.msra.mxu0 %v4424
        %4490 = vmatprep.subr.mxu0 0.0
        %4491 = vmatpush1.msra.mxu0 %v4423
        %4492 = vmatprep.subr.mxu0 0.0
        %4493 = vmatpush2.msra.mxu0 0.0
        %4494 = vmatprep.subr.mxu0 0.0
        %4495 = vmatpush2.msra.mxu0 0.0
        %4496 = vmatprep.subr.mxu0 0.0
        %4497 = vmatpush2.msra.mxu0 0.0
        %4498 = vmatprep.subr.mxu0 0.0
        %4499 = vmatpush2.msra.mxu0 0.0
        %4500 = vmatprep.subr.mxu0 0.0
        %4501 = vmatpush2.msra.mxu0 0.0
        %4502 = vmatprep.subr.mxu0 0.0
        %4503 = vmatpush2.msra.mxu0 0.0
        %4504 = vmatprep.subr.mxu0 0.0
        %4505 = vmatpush2.msra.mxu0 0.0
        %4506 = vmatprep.subr.mxu0 0.0
        %4507 = vmatpush2.msra.mxu0 0.0
        %4508 = vmatprep.subr.mxu0 0.0
        %4509 = vmatpush2.msra.mxu0 0.0
        %4510 = vmatprep.subr.mxu0 0.0
        %4511 = vmatpush2.msra.mxu0 0.0
        %4512 = vmatprep.subr.mxu0 0.0
        %4513 = vmatpush2.msra.mxu0 0.0
        %4514 = vmatprep.subr.mxu0 0.0
        %4515 = vmatpush2.msra.mxu0 0.0
        %4516 = vmatprep.subr.mxu0 0.0
        %4517 = vmatpush2.msra.mxu0 0.0
        %4518 = vmatprep.subr.mxu0 0.0
        %4519 = vmatpush2.msra.mxu0 0.0
        %4520 = vmatprep.subr.mxu0 0.0
        %4521 = vmatpush2.msra.mxu0 0.0
        %4522 = vmatprep.subr.mxu0 0.0
        %4523 = vmatpush2.msra.mxu0 0.0
        %4524 = vmatprep.mubr.f32.mxu0 0.0
        %4525 = vmatmul.mubr.f32.gmra.mxu0 %v4437
        %v4526 = vpop.f32.mrf.mxu0
        %v4527 = vadd.f32 0.0, %v4526
        %v4528 = vpop.f32.mrf.mxu0
        %4529 = vmatprep.mubr.f32.mxu0 0.0
        %4530 = vmatmul.mubr.f32.gmra.mxu0 %v4440
        %v4531 = vpop.f32.mrf.mxu0
        %v4532 = vadd.f32 0.0, %v4531
        %v4533 = vpop.f32.mrf.mxu0
        %4534 = vmatprep.mubr.f32.mxu0 0.0
        %4535 = vmatmul.mubr.f32.gmra.mxu0 %v4443
        %v4536 = vpop.f32.mrf.mxu0
        %v4537 = vadd.f32 0.0, %v4536
        %v4538 = vpop.f32.mrf.mxu0
        %4539 = vmatprep.mubr.f32.mxu0 0.0
        %4540 = vmatmul.mubr.f32.gmra.mxu0 %v4446
        %v4541 = vpop.f32.mrf.mxu0
        %v4542 = vadd.f32 0.0, %v4541
        %v4543 = vpop.f32.mrf.mxu0
        %4544 = vmatprep.mubr.f32.mxu0 0.0
        %4545 = vmatmul.mubr.f32.gmra.mxu0 %v4449
        %v4546 = vpop.f32.mrf.mxu0
        %v4547 = vadd.f32 0.0, %v4546
        %v4548 = vpop.f32.mrf.mxu0
        %4549 = vmatprep.mubr.f32.mxu0 0.0
        %4550 = vmatmul.mubr.f32.gmra.mxu0 %v4452
        %v4551 = vpop.f32.mrf.mxu0
        %v4552 = vadd.f32 0.0, %v4551
        %v4553 = vpop.f32.mrf.mxu0
        %4554 = vmatprep.mubr.f32.mxu0 0.0
        %4555 = vmatmul.mubr.f32.gmra.mxu0 %v4455
        %v4556 = vpop.f32.mrf.mxu0
        %v4557 = vadd.f32 0.0, %v4556
        %v4558 = vpop.f32.mrf.mxu0
        %4559 = vmatprep.mubr.f32.mxu0 0.0
        %4560 = vmatmul.mubr.f32.gmra.mxu0 %v4458
        %v4561 = vpop.f32.mrf.mxu0
        %v4562 = vadd.f32 0.0, %v4561
        %v4563 = vpop.f32.mrf.mxu0
        %4564 = vdwg.mxu0
        %v4565 = vmax.f32 %v4527, 0.0
        %v4566 = vmax.f32 %v4532, 0.0
        %v4567 = vmax.f32 %v4537, 0.0
        %v4568 = vmax.f32 %v4542, 0.0
        %v4569 = vmax.f32 %v4547, 0.0
        %v4570 = vmax.f32 %v4552, 0.0
        %v4571 = vmax.f32 %v4557, 0.0
        %v4572 = vmax.f32 %v4562, 0.0
        %v4573 = vcvt.s32.f32 %v1028
        %v4574 = vcvt.s32.f32 %v1045
        %v4575 = vmul.f32 %v4574, 0.5
        %v4576 = vsub.f32 %v4575, 0.25
        %v4577 = vmax.f32 %v4576, 0.0
        %v4578 = vfloor.f32 %v4577
        %v4579 = vadd.f32 %v4578, 1.0
        %v4580 = vmin.f32 %v4579, 0.0
        %v4581 = vsub.f32 %v4577, %v4578
        %vm4582 = vcmp.eq.f32.partialorder %v4573, %v4578
        %v4583 = vsub.f32 1.0, %v4581
        %v4584 = vsel %vm4582, %v4583, 0.0
        %vm4585 = vcmp.eq.f32.partialorder %v4573, %v4580
        %v4586 = vsel %vm4585, %v4581, 0.0
        %v4587 = vadd.f32 %v4584, %v4586
        %v4589 = vsel %vm2381, %v4565, 0
        %v4592 = vsel %vm2381, %v4566, 0
        %v4595 = vsel %vm2381, %v4567, 0
        %v4598 = vsel %vm2381, %v4568, 0
        %v4601 = vsel %vm2381, %v4569, 0
        %v4604 = vsel %vm2381, %v4570, 0
        %v4607 = vsel %vm2381, %v4571, 0
        %v4610 = vsel %vm2381, %v4572, 0
        %v4613 = vsel %vm473, %v4587, 0
        %4615 = vmatprep.subr.mxu0 0.0
        %4616 = vmatpush1.msra.mxu0 0.0
        %4617 = vmatprep.subr.mxu0 0.0
        %4618 = vmatpush1.msra.mxu0 0.0
        %4619 = vmatprep.subr.mxu0 0.0
        %4620 = vmatpush1.msra.mxu0 0.0
        %4621 = vmatprep.subr.mxu0 0.0
        %4622 = vmatpush1.msra.mxu0 0.0
        %4623 = vmatprep.subr.mxu0 0.0
        %4624 = vmatpush1.msra.mxu0 0.0
        %4625 = vmatprep.subr.mxu0 0.0
        %4626 = vmatpush1.msra.mxu0 0.0
        %4627 = vmatprep.subr.mxu0 0.0
        %4628 = vmatpush1.msra.mxu0 0.0
        %4629 = vmatprep.subr.mxu0 0.0
        %4630 = vmatpush1.msra.mxu0 0.0
        %4631 = vmatprep.subr.mxu0 0.0
        %4632 = vmatpush1.msra.mxu0 0.0
        %4633 = vmatprep.subr.mxu0 0.0
        %4634 = vmatpush1.msra.mxu0 0.0
        %4635 = vmatprep.subr.mxu0 0.0
        %4636 = vmatpush1.msra.mxu0 0.0
        %4637 = vmatprep.subr.mxu0 0.0
        %4638 = vmatpush1.msra.mxu0 0.0
        %4639 = vmatprep.subr.mxu0 0.0
        %4640 = vmatpush1.msra.mxu0 0.0
        %4641 = vmatprep.subr.mxu0 0.0
        %4642 = vmatpush1.msra.mxu0 0.0
        %4643 = vmatprep.subr.mxu0 0.0
        %4644 = vmatpush1.msra.mxu0 0.0
        %4645 = vmatprep.subr.mxu0 0.0
        %4646 = vmatpush1.msra.mxu0 %v4613
        %4647 = vmatprep.subr.mxu0 0.0
        %4648 = vmatpush2.msra.mxu0 0.0
        %4649 = vmatprep.subr.mxu0 0.0
        %4650 = vmatpush2.msra.mxu0 0.0
        %4651 = vmatprep.subr.mxu0 0.0
        %4652 = vmatpush2.msra.mxu0 0.0
        %4653 = vmatprep.subr.mxu0 0.0
        %4654 = vmatpush2.msra.mxu0 0.0
        %4655 = vmatprep.subr.mxu0 0.0
        %4656 = vmatpush2.msra.mxu0 0.0
        %4657 = vmatprep.subr.mxu0 0.0
        %4658 = vmatpush2.msra.mxu0 0.0
        %4659 = vmatprep.subr.mxu0 0.0
        %4660 = vmatpush2.msra.mxu0 0.0
        %4661 = vmatprep.subr.mxu0 0.0
        %4662 = vmatpush2.msra.mxu0 0.0
        %4663 = vmatprep.subr.mxu0 0.0
        %4664 = vmatpush2.msra.mxu0 0.0
        %4665 = vmatprep.subr.mxu0 0.0
        %4666 = vmatpush2.msra.mxu0 0.0
        %4667 = vmatprep.subr.mxu0 0.0
        %4668 = vmatpush2.msra.mxu0 0.0
        %4669 = vmatprep.subr.mxu0 0.0
        %4670 = vmatpush2.msra.mxu0 0.0
        %4671 = vmatprep.subr.mxu0 0.0
        %4672 = vmatpush2.msra.mxu0 0.0
        %4673 = vmatprep.subr.mxu0 0.0
        %4674 = vmatpush2.msra.mxu0 0.0
        %4675 = vmatprep.subr.mxu0 0.0
        %4676 = vmatpush2.msra.mxu0 0.0
        %4677 = vmatprep.subr.mxu0 0.0
        %4678 = vmatpush2.msra.mxu0 0.0
        %4679 = vmatprep.mubr.f32.mxu0 0.0
        %4680 = vmatmul.mubr.f32.gmra.mxu0 %v4589
        %v4681 = vpop.f32.mrf.mxu0
        %v4682 = vadd.f32 0.0, %v4681
        %v4683 = vpop.f32.mrf.mxu0
        %4684 = vmatprep.mubr.f32.mxu0 0.0
        %4685 = vmatmul.mubr.f32.gmra.mxu0 %v4592
        %v4686 = vpop.f32.mrf.mxu0
        %v4687 = vadd.f32 0.0, %v4686
        %v4688 = vpop.f32.mrf.mxu0
        %4689 = vmatprep.mubr.f32.mxu0 0.0
        %4690 = vmatmul.mubr.f32.gmra.mxu0 %v4595
        %v4691 = vpop.f32.mrf.mxu0
        %v4692 = vadd.f32 0.0, %v4691
        %v4693 = vpop.f32.mrf.mxu0
        %4694 = vmatprep.mubr.f32.mxu0 0.0
        %4695 = vmatmul.mubr.f32.gmra.mxu0 %v4598
        %v4696 = vpop.f32.mrf.mxu0
        %v4697 = vadd.f32 0.0, %v4696
        %v4698 = vpop.f32.mrf.mxu0
        %4699 = vmatprep.mubr.f32.mxu0 0.0
        %4700 = vmatmul.mubr.f32.gmra.mxu0 %v4601
        %v4701 = vpop.f32.mrf.mxu0
        %v4702 = vadd.f32 0.0, %v4701
        %v4703 = vpop.f32.mrf.mxu0
        %4704 = vmatprep.mubr.f32.mxu0 0.0
        %4705 = vmatmul.mubr.f32.gmra.mxu0 %v4604
        %v4706 = vpop.f32.mrf.mxu0
        %v4707 = vadd.f32 0.0, %v4706
        %v4708 = vpop.f32.mrf.mxu0
        %4709 = vmatprep.mubr.f32.mxu0 0.0
        %4710 = vmatmul.mubr.f32.gmra.mxu0 %v4607
        %v4711 = vpop.f32.mrf.mxu0
        %v4712 = vadd.f32 0.0, %v4711
        %v4713 = vpop.f32.mrf.mxu0
        %4714 = vmatprep.mubr.f32.mxu0 0.0
        %4715 = vmatmul.mubr.f32.gmra.mxu0 %v4610
        %v4716 = vpop.f32.mrf.mxu0
        %v4717 = vadd.f32 0.0, %v4716
        %v4718 = vpop.f32.mrf.mxu0
        %4719 = vdwg.mxu0
        %4728 = vrot.lane.b32.xlu0 %v4682, 1
        %v4729 = vpop.permute.xlu0 %4728
        %4730 = vrot.lane.b32.xlu0 %v4687, 1
        %v4731 = vpop.permute.xlu0 %4730
        %4732 = vrot.lane.b32.xlu0 %v4692, 1
        %v4733 = vpop.permute.xlu0 %4732
        %4734 = vrot.lane.b32.xlu0 %v4697, 1
        %v4735 = vpop.permute.xlu0 %4734
        %4736 = vrot.lane.b32.xlu0 %v4702, 1
        %v4737 = vpop.permute.xlu0 %4736
        %4738 = vrot.lane.b32.xlu0 %v4707, 1
        %v4739 = vpop.permute.xlu0 %4738
        %4740 = vrot.lane.b32.xlu0 %v4712, 1
        %v4741 = vpop.permute.xlu0 %4740
        %4742 = vrot.lane.b32.xlu0 %v4717, 1
        %v4743 = vpop.permute.xlu0 %4742
        %v4752 = vsel %vm2381, 0.0, %v4729
        %v4753 = vsel %vm2381, 0.0, %v4731
        %v4754 = vsel %vm2381, 0.0, %v4733
        %v4755 = vsel %vm2381, 0.0, %v4735
        %v4756 = vsel %vm2381, 0.0, %v4737
        %v4757 = vsel %vm2381, 0.0, %v4739
        %v4758 = vsel %vm2381, 0.0, %v4741
        %v4759 = vsel %vm2381, 0.0, %v4743
        %v4760 = vsel %vm219, %v4752, 0.0
        %v4761 = vsel %vm219, %v4753, 0.0
        %v4762 = vsel %vm219, %v4754, 0.0
        %v4763 = vsel %vm219, %v4755, 0.0
        %v4764 = vsel %vm219, %v4756, 0.0
        %v4765 = vsel %vm219, %v4757, 0.0
        %v4766 = vsel %vm219, %v4758, 0.0
        %v4767 = vsel %vm219, %v4759, 0.0
        %4776 = vrot.lane.b32.xlu0 %v4760, 127
        %v4777 = vpop.permute.xlu0 %4776
        %4778 = vrot.lane.b32.xlu0 %v4761, 127
        %v4779 = vpop.permute.xlu0 %4778
        %4780 = vrot.lane.b32.xlu0 %v4762, 127
        %v4781 = vpop.permute.xlu0 %4780
        %4782 = vrot.lane.b32.xlu0 %v4763, 127
        %v4783 = vpop.permute.xlu0 %4782
        %4784 = vrot.lane.b32.xlu0 %v4764, 127
        %v4785 = vpop.permute.xlu0 %4784
        %4786 = vrot.lane.b32.xlu0 %v4765, 127
        %v4787 = vpop.permute.xlu0 %4786
        %4788 = vrot.lane.b32.xlu0 %v4766, 127
        %v4789 = vpop.permute.xlu0 %4788
        %4790 = vrot.lane.b32.xlu0 %v4767, 127
        %v4791 = vpop.permute.xlu0 %4790
        %4800 = vrot.lane.b32.xlu0 %v4760, 126
        %v4801 = vpop.permute.xlu0 %4800
        %4802 = vrot.lane.b32.xlu0 %v4761, 126
        %v4803 = vpop.permute.xlu0 %4802
        %4804 = vrot.lane.b32.xlu0 %v4762, 126
        %v4805 = vpop.permute.xlu0 %4804
        %4806 = vrot.lane.b32.xlu0 %v4763, 126
        %v4807 = vpop.permute.xlu0 %4806
        %4808 = vrot.lane.b32.xlu0 %v4764, 126
        %v4809 = vpop.permute.xlu0 %4808
        %4810 = vrot.lane.b32.xlu0 %v4765, 126
        %v4811 = vpop.permute.xlu0 %4810
        %4812 = vrot.lane.b32.xlu0 %v4766, 126
        %v4813 = vpop.permute.xlu0 %4812
        %4814 = vrot.lane.b32.xlu0 %v4767, 126
        %v4815 = vpop.permute.xlu0 %4814
        %s4824 = scalar_lea.vmem [#allocation5], 3072
        %v4825 = vld [vmem:[%s4824] sm:$0xff]
        %v4826 = vld [vmem:[%s4824 + $0x8] sm:$0xff]
        %v4827 = vld [vmem:[%s4824 + $0x18] sm:$0xff]
        %v4828 = vld [vmem:[%s4824 + $0x20] sm:$0xff]
        %v4829 = vld [vmem:[%s4824 + $0x30] sm:$0xff]
        %v4830 = vld [vmem:[%s4824 + $0x38] sm:$0xff]
        %v4831 = vld [vmem:[%s4824 + $0x48] sm:$0xff]
        %v4832 = vld [vmem:[%s4824 + $0x50] sm:$0xff]
        %v4833 = vld [vmem:[%s4824 + $0x60] sm:$0xff]
        %v4834 = vld [vmem:[%s4824 + $0x68] sm:$0xff]
        %v4835 = vld [vmem:[%s4824 + $0x78] sm:$0xff]
        %v4836 = vld [vmem:[%s4824 + $0x80] sm:$0xff]
        %v4837 = vld [vmem:[%s4824 + $0x90] sm:$0xff]
        %v4838 = vld [vmem:[%s4824 + $0x98] sm:$0xff]
        %v4839 = vld [vmem:[%s4824 + $0xa8] sm:$0xff]
        %v4840 = vld [vmem:[%s4824 + $0xb0] sm:$0xff]
        %v4842 = vsel %vm3346, %v4826, 0
        %v4845 = vsel %vm3346, %v4828, 0
        %v4848 = vsel %vm3346, %v4830, 0
        %v4851 = vsel %vm3346, %v4832, 0
        %v4854 = vsel %vm3346, %v4834, 0
        %v4857 = vsel %vm3346, %v4836, 0
        %v4860 = vsel %vm3346, %v4838, 0
        %v4863 = vsel %vm3346, %v4840, 0
        %4865 = vmatprep.subr.mxu0 0.0
        %4866 = vmatpush1.msra.mxu0 %v4791
        %4867 = vmatprep.subr.mxu0 0.0
        %4868 = vmatpush1.msra.mxu0 %v4789
        %4869 = vmatprep.subr.mxu0 0.0
        %4870 = vmatpush1.msra.mxu0 %v4787
        %4871 = vmatprep.subr.mxu0 0.0
        %4872 = vmatpush1.msra.mxu0 %v4785
        %4873 = vmatprep.subr.mxu0 0.0
        %4874 = vmatpush1.msra.mxu0 %v4783
        %4875 = vmatprep.subr.mxu0 0.0
        %4876 = vmatpush1.msra.mxu0 %v4781
        %4877 = vmatprep.subr.mxu0 0.0
        %4878 = vmatpush1.msra.mxu0 %v4779
        %4879 = vmatprep.subr.mxu0 0.0
        %4880 = vmatpush1.msra.mxu0 %v4777
        %4881 = vmatprep.subr.mxu0 0.0
        %4882 = vmatpush1.msra.mxu0 %v4767
        %4883 = vmatprep.subr.mxu0 0.0
        %4884 = vmatpush1.msra.mxu0 %v4766
        %4885 = vmatprep.subr.mxu0 0.0
        %4886 = vmatpush1.msra.mxu0 %v4765
        %4887 = vmatprep.subr.mxu0 0.0
        %4888 = vmatpush1.msra.mxu0 %v4764
        %4889 = vmatprep.subr.mxu0 0.0
        %4890 = vmatpush1.msra.mxu0 %v4763
        %4891 = vmatprep.subr.mxu0 0.0
        %4892 = vmatpush1.msra.mxu0 %v4762
        %4893 = vmatprep.subr.mxu0 0.0
        %4894 = vmatpush1.msra.mxu0 %v4761
        %4895 = vmatprep.subr.mxu0 0.0
        %4896 = vmatpush1.msra.mxu0 %v4760
        %4897 = vmatprep.subr.mxu0 0.0
        %4898 = vmatpush2.msra.mxu0 0.0
        %4899 = vmatprep.subr.mxu0 0.0
        %4900 = vmatpush2.msra.mxu0 0.0
        %4901 = vmatprep.subr.mxu0 0.0
        %4902 = vmatpush2.msra.mxu0 0.0
        %4903 = vmatprep.subr.mxu0 0.0
        %4904 = vmatpush2.msra.mxu0 0.0
        %4905 = vmatprep.subr.mxu0 0.0
        %4906 = vmatpush2.msra.mxu0 0.0
        %4907 = vmatprep.subr.mxu0 0.0
        %4908 = vmatpush2.msra.mxu0 0.0
        %4909 = vmatprep.subr.mxu0 0.0
        %4910 = vmatpush2.msra.mxu0 0.0
        %4911 = vmatprep.subr.mxu0 0.0
        %4912 = vmatpush2.msra.mxu0 %v475
        %4913 = vmatprep.subr.mxu0 0.0
        %4914 = vmatpush2.msra.mxu0 %v4815
        %4915 = vmatprep.subr.mxu0 0.0
        %4916 = vmatpush2.msra.mxu0 %v4813
        %4917 = vmatprep.subr.mxu0 0.0
        %4918 = vmatpush2.msra.mxu0 %v4811
        %4919 = vmatprep.subr.mxu0 0.0
        %4920 = vmatpush2.msra.mxu0 %v4809
        %4921 = vmatprep.subr.mxu0 0.0
        %4922 = vmatpush2.msra.mxu0 %v4807
        %4923 = vmatprep.subr.mxu0 0.0
        %4924 = vmatpush2.msra.mxu0 %v4805
        %4925 = vmatprep.subr.mxu0 0.0
        %4926 = vmatpush2.msra.mxu0 %v4803
        %4927 = vmatprep.subr.mxu0 0.0
        %4928 = vmatpush2.msra.mxu0 %v4801
        %4929 = vmatprep.mubr.f32.mxu0 %v4842
        %4930 = vmatmul.mubr.f32.gmra.mxu0 %v4825
        %v4931 = vpop.f32.mrf.mxu0
        %v4932 = vadd.f32 0.0, %v4931
        %v4933 = vpop.f32.mrf.mxu0
        %4934 = vmatprep.mubr.f32.mxu0 %v4845
        %4935 = vmatmul.mubr.f32.gmra.mxu0 %v4827
        %v4936 = vpop.f32.mrf.mxu0
        %v4937 = vadd.f32 0.0, %v4936
        %v4938 = vpop.f32.mrf.mxu0
        %4939 = vmatprep.mubr.f32.mxu0 %v4848
        %4940 = vmatmul.mubr.f32.gmra.mxu0 %v4829
        %v4941 = vpop.f32.mrf.mxu0
        %v4942 = vadd.f32 0.0, %v4941
        %v4943 = vpop.f32.mrf.mxu0
        %4944 = vmatprep.mubr.f32.mxu0 %v4851
        %4945 = vmatmul.mubr.f32.gmra.mxu0 %v4831
        %v4946 = vpop.f32.mrf.mxu0
        %v4947 = vadd.f32 0.0, %v4946
        %v4948 = vpop.f32.mrf.mxu0
        %4949 = vmatprep.mubr.f32.mxu0 %v4854
        %4950 = vmatmul.mubr.f32.gmra.mxu0 %v4833
        %v4951 = vpop.f32.mrf.mxu0
        %v4952 = vadd.f32 0.0, %v4951
        %v4953 = vpop.f32.mrf.mxu0
        %4954 = vmatprep.mubr.f32.mxu0 %v4857
        %4955 = vmatmul.mubr.f32.gmra.mxu0 %v4835
        %v4956 = vpop.f32.mrf.mxu0
        %v4957 = vadd.f32 0.0, %v4956
        %v4958 = vpop.f32.mrf.mxu0
        %4959 = vmatprep.mubr.f32.mxu0 %v4860
        %4960 = vmatmul.mubr.f32.gmra.mxu0 %v4837
        %v4961 = vpop.f32.mrf.mxu0
        %v4962 = vadd.f32 0.0, %v4961
        %v4963 = vpop.f32.mrf.mxu0
        %4964 = vmatprep.mubr.f32.mxu0 %v4863
        %4965 = vmatmul.mubr.f32.gmra.mxu0 %v4839
        %v4966 = vpop.f32.mrf.mxu0
        %v4967 = vadd.f32 0.0, %v4966
        %v4968 = vpop.f32.mrf.mxu0
        %4969 = vdwg.mxu0
        %v4970 = vmax.f32 %v4932, 0.0
        %v4971 = vmax.f32 %v4937, 0.0
        %v4972 = vmax.f32 %v4942, 0.0
        %v4973 = vmax.f32 %v4947, 0.0
        %v4974 = vmax.f32 %v4952, 0.0
        %v4975 = vmax.f32 %v4957, 0.0
        %v4976 = vmax.f32 %v4962, 0.0
        %v4977 = vmax.f32 %v4967, 0.0
        %4986 = vrot.lane.b32.xlu0 %v4970, 1
        %v4987 = vpop.permute.xlu0 %4986
        %4988 = vrot.lane.b32.xlu0 %v4971, 1
        %v4989 = vpop.permute.xlu0 %4988
        %4990 = vrot.lane.b32.xlu0 %v4972, 1
        %v4991 = vpop.permute.xlu0 %4990
        %4992 = vrot.lane.b32.xlu0 %v4973, 1
        %v4993 = vpop.permute.xlu0 %4992
        %4994 = vrot.lane.b32.xlu0 %v4974, 1
        %v4995 = vpop.permute.xlu0 %4994
        %4996 = vrot.lane.b32.xlu0 %v4975, 1
        %v4997 = vpop.permute.xlu0 %4996
        %4998 = vrot.lane.b32.xlu0 %v4976, 1
        %v4999 = vpop.permute.xlu0 %4998
        %5000 = vrot.lane.b32.xlu0 %v4977, 1
        %v5001 = vpop.permute.xlu0 %5000
        %v5010 = vsel %vm2381, 0.0, %v4987
        %v5011 = vsel %vm2381, 0.0, %v4989
        %v5012 = vsel %vm2381, 0.0, %v4991
        %v5013 = vsel %vm2381, 0.0, %v4993
        %v5014 = vsel %vm2381, 0.0, %v4995
        %v5015 = vsel %vm2381, 0.0, %v4997
        %v5016 = vsel %vm2381, 0.0, %v4999
        %v5017 = vsel %vm2381, 0.0, %v5001
        %v5018 = vsel %vm219, %v5010, 0.0
        %v5019 = vsel %vm219, %v5011, 0.0
        %v5020 = vsel %vm219, %v5012, 0.0
        %v5021 = vsel %vm219, %v5013, 0.0
        %v5022 = vsel %vm219, %v5014, 0.0
        %v5023 = vsel %vm219, %v5015, 0.0
        %v5024 = vsel %vm219, %v5016, 0.0
        %v5025 = vsel %vm219, %v5017, 0.0
        %5034 = vrot.lane.b32.xlu0 %v5018, 127
        %v5035 = vpop.permute.xlu0 %5034
        %5036 = vrot.lane.b32.xlu0 %v5019, 127
        %v5037 = vpop.permute.xlu0 %5036
        %5038 = vrot.lane.b32.xlu0 %v5020, 127
        %v5039 = vpop.permute.xlu0 %5038
        %5040 = vrot.lane.b32.xlu0 %v5021, 127
        %v5041 = vpop.permute.xlu0 %5040
        %5042 = vrot.lane.b32.xlu0 %v5022, 127
        %v5043 = vpop.permute.xlu0 %5042
        %5044 = vrot.lane.b32.xlu0 %v5023, 127
        %v5045 = vpop.permute.xlu0 %5044
        %5046 = vrot.lane.b32.xlu0 %v5024, 127
        %v5047 = vpop.permute.xlu0 %5046
        %5048 = vrot.lane.b32.xlu0 %v5025, 127
        %v5049 = vpop.permute.xlu0 %5048
        %5058 = vrot.lane.b32.xlu0 %v5018, 126
        %v5059 = vpop.permute.xlu0 %5058
        %5060 = vrot.lane.b32.xlu0 %v5019, 126
        %v5061 = vpop.permute.xlu0 %5060
        %5062 = vrot.lane.b32.xlu0 %v5020, 126
        %v5063 = vpop.permute.xlu0 %5062
        %5064 = vrot.lane.b32.xlu0 %v5021, 126
        %v5065 = vpop.permute.xlu0 %5064
        %5066 = vrot.lane.b32.xlu0 %v5022, 126
        %v5067 = vpop.permute.xlu0 %5066
        %5068 = vrot.lane.b32.xlu0 %v5023, 126
        %v5069 = vpop.permute.xlu0 %5068
        %5070 = vrot.lane.b32.xlu0 %v5024, 126
        %v5071 = vpop.permute.xlu0 %5070
        %5072 = vrot.lane.b32.xlu0 %v5025, 126
        %v5073 = vpop.permute.xlu0 %5072
        %s5082 = scalar_lea.vmem [#allocation5], 3264
        %v5083 = vld [vmem:[%s5082] sm:$0xff]
        %v5084 = vld [vmem:[%s5082 + $0x8] sm:$0xff]
        %v5085 = vld [vmem:[%s5082 + $0x18] sm:$0xff]
        %v5086 = vld [vmem:[%s5082 + $0x20] sm:$0xff]
        %v5087 = vld [vmem:[%s5082 + $0x30] sm:$0xff]
        %v5088 = vld [vmem:[%s5082 + $0x38] sm:$0xff]
        %v5089 = vld [vmem:[%s5082 + $0x48] sm:$0xff]
        %v5090 = vld [vmem:[%s5082 + $0x50] sm:$0xff]
        %v5091 = vld [vmem:[%s5082 + $0x60] sm:$0xff]
        %v5092 = vld [vmem:[%s5082 + $0x68] sm:$0xff]
        %v5093 = vld [vmem:[%s5082 + $0x78] sm:$0xff]
        %v5094 = vld [vmem:[%s5082 + $0x80] sm:$0xff]
        %v5095 = vld [vmem:[%s5082 + $0x90] sm:$0xff]
        %v5096 = vld [vmem:[%s5082 + $0x98] sm:$0xff]
        %v5097 = vld [vmem:[%s5082 + $0xa8] sm:$0xff]
        %v5098 = vld [vmem:[%s5082 + $0xb0] sm:$0xff]
        %v5100 = vsel %vm3346, %v5084, 0
        %v5103 = vsel %vm3346, %v5086, 0
        %v5106 = vsel %vm3346, %v5088, 0
        %v5109 = vsel %vm3346, %v5090, 0
        %v5112 = vsel %vm3346, %v5092, 0
        %v5115 = vsel %vm3346, %v5094, 0
        %v5118 = vsel %vm3346, %v5096, 0
        %v5121 = vsel %vm3346, %v5098, 0
        %5123 = vmatprep.subr.mxu0 0.0
        %5124 = vmatpush1.msra.mxu0 %v5049
        %5125 = vmatprep.subr.mxu0 0.0
        %5126 = vmatpush1.msra.mxu0 %v5047
        %5127 = vmatprep.subr.mxu0 0.0
        %5128 = vmatpush1.msra.mxu0 %v5045
        %5129 = vmatprep.subr.mxu0 0.0
        %5130 = vmatpush1.msra.mxu0 %v5043
        %5131 = vmatprep.subr.mxu0 0.0
        %5132 = vmatpush1.msra.mxu0 %v5041
        %5133 = vmatprep.subr.mxu0 0.0
        %5134 = vmatpush1.msra.mxu0 %v5039
        %5135 = vmatprep.subr.mxu0 0.0
        %5136 = vmatpush1.msra.mxu0 %v5037
        %5137 = vmatprep.subr.mxu0 0.0
        %5138 = vmatpush1.msra.mxu0 %v5035
        %5139 = vmatprep.subr.mxu0 0.0
        %5140 = vmatpush1.msra.mxu0 %v5025
        %5141 = vmatprep.subr.mxu0 0.0
        %5142 = vmatpush1.msra.mxu0 %v5024
        %5143 = vmatprep.subr.mxu0 0.0
        %5144 = vmatpush1.msra.mxu0 %v5023
        %5145 = vmatprep.subr.mxu0 0.0
        %5146 = vmatpush1.msra.mxu0 %v5022
        %5147 = vmatprep.subr.mxu0 0.0
        %5148 = vmatpush1.msra.mxu0 %v5021
        %5149 = vmatprep.subr.mxu0 0.0
        %5150 = vmatpush1.msra.mxu0 %v5020
        %5151 = vmatprep.subr.mxu0 0.0
        %5152 = vmatpush1.msra.mxu0 %v5019
        %5153 = vmatprep.subr.mxu0 0.0
        %5154 = vmatpush1.msra.mxu0 %v5018
        %5155 = vmatprep.subr.mxu0 0.0
        %5156 = vmatpush2.msra.mxu0 0.0
        %5157 = vmatprep.subr.mxu0 0.0
        %5158 = vmatpush2.msra.mxu0 0.0
        %5159 = vmatprep.subr.mxu0 0.0
        %5160 = vmatpush2.msra.mxu0 0.0
        %5161 = vmatprep.subr.mxu0 0.0
        %5162 = vmatpush2.msra.mxu0 0.0
        %5163 = vmatprep.subr.mxu0 0.0
        %5164 = vmatpush2.msra.mxu0 0.0
        %5165 = vmatprep.subr.mxu0 0.0
        %5166 = vmatpush2.msra.mxu0 0.0
        %5167 = vmatprep.subr.mxu0 0.0
        %5168 = vmatpush2.msra.mxu0 0.0
        %5169 = vmatprep.subr.mxu0 0.0
        %5170 = vmatpush2.msra.mxu0 %v475
        %5171 = vmatprep.subr.mxu0 0.0
        %5172 = vmatpush2.msra.mxu0 %v5073
        %5173 = vmatprep.subr.mxu0 0.0
        %5174 = vmatpush2.msra.mxu0 %v5071
        %5175 = vmatprep.subr.mxu0 0.0
        %5176 = vmatpush2.msra.mxu0 %v5069
        %5177 = vmatprep.subr.mxu0 0.0
        %5178 = vmatpush2.msra.mxu0 %v5067
        %5179 = vmatprep.subr.mxu0 0.0
        %5180 = vmatpush2.msra.mxu0 %v5065
        %5181 = vmatprep.subr.mxu0 0.0
        %5182 = vmatpush2.msra.mxu0 %v5063
        %5183 = vmatprep.subr.mxu0 0.0
        %5184 = vmatpush2.msra.mxu0 %v5061
        %5185 = vmatprep.subr.mxu0 0.0
        %5186 = vmatpush2.msra.mxu0 %v5059
        %5187 = vmatprep.mubr.f32.mxu0 %v5100
        %5188 = vmatmul.mubr.f32.gmra.mxu0 %v5083
        %v5189 = vpop.f32.mrf.mxu0
        %v5190 = vadd.f32 0.0, %v5189
        %v5191 = vpop.f32.mrf.mxu0
        %5192 = vmatprep.mubr.f32.mxu0 %v5103
        %5193 = vmatmul.mubr.f32.gmra.mxu0 %v5085
        %v5194 = vpop.f32.mrf.mxu0
        %v5195 = vadd.f32 0.0, %v5194
        %v5196 = vpop.f32.mrf.mxu0
        %5197 = vmatprep.mubr.f32.mxu0 %v5106
        %5198 = vmatmul.mubr.f32.gmra.mxu0 %v5087
        %v5199 = vpop.f32.mrf.mxu0
        %v5200 = vadd.f32 0.0, %v5199
        %v5201 = vpop.f32.mrf.mxu0
        %5202 = vmatprep.mubr.f32.mxu0 %v5109
        %5203 = vmatmul.mubr.f32.gmra.mxu0 %v5089
        %v5204 = vpop.f32.mrf.mxu0
        %v5205 = vadd.f32 0.0, %v5204
        %v5206 = vpop.f32.mrf.mxu0
        %5207 = vmatprep.mubr.f32.mxu0 %v5112
        %5208 = vmatmul.mubr.f32.gmra.mxu0 %v5091
        %v5209 = vpop.f32.mrf.mxu0
        %v5210 = vadd.f32 0.0, %v5209
        %v5211 = vpop.f32.mrf.mxu0
        %5212 = vmatprep.mubr.f32.mxu0 %v5115
        %5213 = vmatmul.mubr.f32.gmra.mxu0 %v5093
        %v5214 = vpop.f32.mrf.mxu0
        %v5215 = vadd.f32 0.0, %v5214
        %v5216 = vpop.f32.mrf.mxu0
        %5217 = vmatprep.mubr.f32.mxu0 %v5118
        %5218 = vmatmul.mubr.f32.gmra.mxu0 %v5095
        %v5219 = vpop.f32.mrf.mxu0
        %v5220 = vadd.f32 0.0, %v5219
        %v5221 = vpop.f32.mrf.mxu0
        %5222 = vmatprep.mubr.f32.mxu0 %v5121
        %5223 = vmatmul.mubr.f32.gmra.mxu0 %v5097
        %v5224 = vpop.f32.mrf.mxu0
        %v5225 = vadd.f32 0.0, %v5224
        %v5226 = vpop.f32.mrf.mxu0
        %5227 = vdwg.mxu0
        %v5228 = vmax.f32 %v5190, 0.0
        %v5229 = vmax.f32 %v5195, 0.0
        %v5230 = vmax.f32 %v5200, 0.0
        %v5231 = vmax.f32 %v5205, 0.0
        %v5232 = vmax.f32 %v5210, 0.0
        %v5233 = vmax.f32 %v5215, 0.0
        %v5234 = vmax.f32 %v5220, 0.0
        %v5235 = vmax.f32 %v5225, 0.0
        %v5236 = vmin.f32 %v4579, 1.0
        %vm5237 = vcmp.eq.f32.partialorder %v4573, %v5236
        %v5238 = vsel %vm5237, %v4581, 0.0
        %v5239 = vadd.f32 %v4584, %v5238
        %v5241 = vsel %vm572, %v5228, 0
        %v5244 = vsel %vm572, %v5229, 0
        %v5247 = vsel %vm572, %v5230, 0
        %v5250 = vsel %vm572, %v5231, 0
        %v5253 = vsel %vm572, %v5232, 0
        %v5256 = vsel %vm572, %v5233, 0
        %v5259 = vsel %vm572, %v5234, 0
        %v5262 = vsel %vm572, %v5235, 0
        %v5265 = vsel %vm272, %v5239, 0
        %5267 = vmatprep.subr.mxu0 0.0
        %5268 = vmatpush1.msra.mxu0 0.0
        %5269 = vmatprep.subr.mxu0 0.0
        %5270 = vmatpush1.msra.mxu0 0.0
        %5271 = vmatprep.subr.mxu0 0.0
        %5272 = vmatpush1.msra.mxu0 0.0
        %5273 = vmatprep.subr.mxu0 0.0
        %5274 = vmatpush1.msra.mxu0 0.0
        %5275 = vmatprep.subr.mxu0 0.0
        %5276 = vmatpush1.msra.mxu0 0.0
        %5277 = vmatprep.subr.mxu0 0.0
        %5278 = vmatpush1.msra.mxu0 0.0
        %5279 = vmatprep.subr.mxu0 0.0
        %5280 = vmatpush1.msra.mxu0 0.0
        %5281 = vmatprep.subr.mxu0 0.0
        %5282 = vmatpush1.msra.mxu0 0.0
        %5283 = vmatprep.subr.mxu0 0.0
        %5284 = vmatpush1.msra.mxu0 0.0
        %5285 = vmatprep.subr.mxu0 0.0
        %5286 = vmatpush1.msra.mxu0 0.0
        %5287 = vmatprep.subr.mxu0 0.0
        %5288 = vmatpush1.msra.mxu0 0.0
        %5289 = vmatprep.subr.mxu0 0.0
        %5290 = vmatpush1.msra.mxu0 0.0
        %5291 = vmatprep.subr.mxu0 0.0
        %5292 = vmatpush1.msra.mxu0 0.0
        %5293 = vmatprep.subr.mxu0 0.0
        %5294 = vmatpush1.msra.mxu0 0.0
        %5295 = vmatprep.subr.mxu0 0.0
        %5296 = vmatpush1.msra.mxu0 0.0
        %5297 = vmatprep.subr.mxu0 0.0
        %5298 = vmatpush1.msra.mxu0 %v5265
        %5299 = vmatprep.subr.mxu0 0.0
        %5300 = vmatpush2.msra.mxu0 0.0
        %5301 = vmatprep.subr.mxu0 0.0
        %5302 = vmatpush2.msra.mxu0 0.0
        %5303 = vmatprep.subr.mxu0 0.0
        %5304 = vmatpush2.msra.mxu0 0.0
        %5305 = vmatprep.subr.mxu0 0.0
        %5306 = vmatpush2.msra.mxu0 0.0
        %5307 = vmatprep.subr.mxu0 0.0
        %5308 = vmatpush2.msra.mxu0 0.0
        %5309 = vmatprep.subr.mxu0 0.0
        %5310 = vmatpush2.msra.mxu0 0.0
        %5311 = vmatprep.subr.mxu0 0.0
        %5312 = vmatpush2.msra.mxu0 0.0
        %5313 = vmatprep.subr.mxu0 0.0
        %5314 = vmatpush2.msra.mxu0 0.0
        %5315 = vmatprep.subr.mxu0 0.0
        %5316 = vmatpush2.msra.mxu0 0.0
        %5317 = vmatprep.subr.mxu0 0.0
        %5318 = vmatpush2.msra.mxu0 0.0
        %5319 = vmatprep.subr.mxu0 0.0
        %5320 = vmatpush2.msra.mxu0 0.0
        %5321 = vmatprep.subr.mxu0 0.0
        %5322 = vmatpush2.msra.mxu0 0.0
        %5323 = vmatprep.subr.mxu0 0.0
        %5324 = vmatpush2.msra.mxu0 0.0
        %5325 = vmatprep.subr.mxu0 0.0
        %5326 = vmatpush2.msra.mxu0 0.0
        %5327 = vmatprep.subr.mxu0 0.0
        %5328 = vmatpush2.msra.mxu0 0.0
        %5329 = vmatprep.subr.mxu0 0.0
        %5330 = vmatpush2.msra.mxu0 0.0
        %5331 = vmatprep.mubr.f32.mxu0 0.0
        %5332 = vmatmul.mubr.f32.gmra.mxu0 %v5241
        %v5333 = vpop.f32.mrf.mxu0
        %v5334 = vadd.f32 0.0, %v5333
        %v5335 = vpop.f32.mrf.mxu0
        %5336 = vmatprep.mubr.f32.mxu0 0.0
        %5337 = vmatmul.mubr.f32.gmra.mxu0 %v5244
        %v5338 = vpop.f32.mrf.mxu0
        %v5339 = vadd.f32 0.0, %v5338
        %v5340 = vpop.f32.mrf.mxu0
        %5341 = vmatprep.mubr.f32.mxu0 0.0
        %5342 = vmatmul.mubr.f32.gmra.mxu0 %v5247
        %v5343 = vpop.f32.mrf.mxu0
        %v5344 = vadd.f32 0.0, %v5343
        %v5345 = vpop.f32.mrf.mxu0
        %5346 = vmatprep.mubr.f32.mxu0 0.0
        %5347 = vmatmul.mubr.f32.gmra.mxu0 %v5250
        %v5348 = vpop.f32.mrf.mxu0
        %v5349 = vadd.f32 0.0, %v5348
        %v5350 = vpop.f32.mrf.mxu0
        %5351 = vmatprep.mubr.f32.mxu0 0.0
        %5352 = vmatmul.mubr.f32.gmra.mxu0 %v5253
        %v5353 = vpop.f32.mrf.mxu0
        %v5354 = vadd.f32 0.0, %v5353
        %v5355 = vpop.f32.mrf.mxu0
        %5356 = vmatprep.mubr.f32.mxu0 0.0
        %5357 = vmatmul.mubr.f32.gmra.mxu0 %v5256
        %v5358 = vpop.f32.mrf.mxu0
        %v5359 = vadd.f32 0.0, %v5358
        %v5360 = vpop.f32.mrf.mxu0
        %5361 = vmatprep.mubr.f32.mxu0 0.0
        %5362 = vmatmul.mubr.f32.gmra.mxu0 %v5259
        %v5363 = vpop.f32.mrf.mxu0
        %v5364 = vadd.f32 0.0, %v5363
        %v5365 = vpop.f32.mrf.mxu0
        %5366 = vmatprep.mubr.f32.mxu0 0.0
        %5367 = vmatmul.mubr.f32.gmra.mxu0 %v5262
        %v5368 = vpop.f32.mrf.mxu0
        %v5369 = vadd.f32 0.0, %v5368
        %v5370 = vpop.f32.mrf.mxu0
        %5371 = vdwg.mxu0
        %5380 = vrot.lane.b32.xlu0 %v5334, 1
        %v5381 = vpop.permute.xlu0 %5380
        %5382 = vrot.lane.b32.xlu0 %v5339, 1
        %v5383 = vpop.permute.xlu0 %5382
        %5384 = vrot.lane.b32.xlu0 %v5344, 1
        %v5385 = vpop.permute.xlu0 %5384
        %5386 = vrot.lane.b32.xlu0 %v5349, 1
        %v5387 = vpop.permute.xlu0 %5386
        %5388 = vrot.lane.b32.xlu0 %v5354, 1
        %v5389 = vpop.permute.xlu0 %5388
        %5390 = vrot.lane.b32.xlu0 %v5359, 1
        %v5391 = vpop.permute.xlu0 %5390
        %5392 = vrot.lane.b32.xlu0 %v5364, 1
        %v5393 = vpop.permute.xlu0 %5392
        %5394 = vrot.lane.b32.xlu0 %v5369, 1
        %v5395 = vpop.permute.xlu0 %5394
        %v5404 = vsel %vm2381, 0.0, %v5381
        %v5405 = vsel %vm2381, 0.0, %v5383
        %v5406 = vsel %vm2381, 0.0, %v5385
        %v5407 = vsel %vm2381, 0.0, %v5387
        %v5408 = vsel %vm2381, 0.0, %v5389
        %v5409 = vsel %vm2381, 0.0, %v5391
        %v5410 = vsel %vm2381, 0.0, %v5393
        %v5411 = vsel %vm2381, 0.0, %v5395
        %v5412 = vsel %vm3703, %v5404, 0.0
        %v5413 = vsel %vm3703, %v5405, 0.0
        %v5414 = vsel %vm3703, %v5406, 0.0
        %v5415 = vsel %vm3703, %v5407, 0.0
        %v5416 = vsel %vm3703, %v5408, 0.0
        %v5417 = vsel %vm3703, %v5409, 0.0
        %v5418 = vsel %vm3703, %v5410, 0.0
        %v5419 = vsel %vm3703, %v5411, 0.0
        %5428 = vrot.lane.b32.xlu0 %v5412, 127
        %v5429 = vpop.permute.xlu0 %5428
        %5430 = vrot.lane.b32.xlu0 %v5413, 127
        %v5431 = vpop.permute.xlu0 %5430
        %5432 = vrot.lane.b32.xlu0 %v5414, 127
        %v5433 = vpop.permute.xlu0 %5432
        %5434 = vrot.lane.b32.xlu0 %v5415, 127
        %v5435 = vpop.permute.xlu0 %5434
        %5436 = vrot.lane.b32.xlu0 %v5416, 127
        %v5437 = vpop.permute.xlu0 %5436
        %5438 = vrot.lane.b32.xlu0 %v5417, 127
        %v5439 = vpop.permute.xlu0 %5438
        %5440 = vrot.lane.b32.xlu0 %v5418, 127
        %v5441 = vpop.permute.xlu0 %5440
        %5442 = vrot.lane.b32.xlu0 %v5419, 127
        %v5443 = vpop.permute.xlu0 %5442
        %5452 = vrot.lane.b32.xlu0 %v5412, 126
        %v5453 = vpop.permute.xlu0 %5452
        %5454 = vrot.lane.b32.xlu0 %v5413, 126
        %v5455 = vpop.permute.xlu0 %5454
        %5456 = vrot.lane.b32.xlu0 %v5414, 126
        %v5457 = vpop.permute.xlu0 %5456
        %5458 = vrot.lane.b32.xlu0 %v5415, 126
        %v5459 = vpop.permute.xlu0 %5458
        %5460 = vrot.lane.b32.xlu0 %v5416, 126
        %v5461 = vpop.permute.xlu0 %5460
        %5462 = vrot.lane.b32.xlu0 %v5417, 126
        %v5463 = vpop.permute.xlu0 %5462
        %5464 = vrot.lane.b32.xlu0 %v5418, 126
        %v5465 = vpop.permute.xlu0 %5464
        %5466 = vrot.lane.b32.xlu0 %v5419, 126
        %v5467 = vpop.permute.xlu0 %5466
        %s5476 = scalar_lea.vmem [#allocation5], 3456
        %v5477 = vld [vmem:[%s5476] sm:$0xff]
        %v5478 = vld [vmem:[%s5476 + $0x8] sm:$0xff]
        %v5479 = vld [vmem:[%s5476 + $0x18] sm:$0xff]
        %v5480 = vld [vmem:[%s5476 + $0x20] sm:$0xff]
        %v5481 = vld [vmem:[%s5476 + $0x30] sm:$0xff]
        %v5482 = vld [vmem:[%s5476 + $0x38] sm:$0xff]
        %v5483 = vld [vmem:[%s5476 + $0x48] sm:$0xff]
        %v5484 = vld [vmem:[%s5476 + $0x50] sm:$0xff]
        %v5485 = vld [vmem:[%s5476 + $0x60] sm:$0xff]
        %v5486 = vld [vmem:[%s5476 + $0x68] sm:$0xff]
        %v5487 = vld [vmem:[%s5476 + $0x78] sm:$0xff]
        %v5488 = vld [vmem:[%s5476 + $0x80] sm:$0xff]
        %v5489 = vld [vmem:[%s5476 + $0x90] sm:$0xff]
        %v5490 = vld [vmem:[%s5476 + $0x98] sm:$0xff]
        %v5492 = vsel %vm3346, %v5478, 0
        %v5495 = vsel %vm3346, %v5480, 0
        %v5498 = vsel %vm3346, %v5482, 0
        %v5501 = vsel %vm3346, %v5484, 0
        %v5504 = vsel %vm3346, %v5486, 0
        %v5507 = vsel %vm3346, %v5488, 0
        %v5510 = vsel %vm3346, %v5490, 0
        %5512 = vmatprep.subr.mxu0 0.0
        %5513 = vmatpush1.msra.mxu0 %v5443
        %5514 = vmatprep.subr.mxu0 0.0
        %5515 = vmatpush1.msra.mxu0 %v5441
        %5516 = vmatprep.subr.mxu0 0.0
        %5517 = vmatpush1.msra.mxu0 %v5439
        %5518 = vmatprep.subr.mxu0 0.0
        %5519 = vmatpush1.msra.mxu0 %v5437
        %5520 = vmatprep.subr.mxu0 0.0
        %5521 = vmatpush1.msra.mxu0 %v5435
        %5522 = vmatprep.subr.mxu0 0.0
        %5523 = vmatpush1.msra.mxu0 %v5433
        %5524 = vmatprep.subr.mxu0 0.0
        %5525 = vmatpush1.msra.mxu0 %v5431
        %5526 = vmatprep.subr.mxu0 0.0
        %5527 = vmatpush1.msra.mxu0 %v5429
        %5528 = vmatprep.subr.mxu0 0.0
        %5529 = vmatpush1.msra.mxu0 %v5419
        %5530 = vmatprep.subr.mxu0 0.0
        %5531 = vmatpush1.msra.mxu0 %v5418
        %5532 = vmatprep.subr.mxu0 0.0
        %5533 = vmatpush1.msra.mxu0 %v5417
        %5534 = vmatprep.subr.mxu0 0.0
        %5535 = vmatpush1.msra.mxu0 %v5416
        %5536 = vmatprep.subr.mxu0 0.0
        %5537 = vmatpush1.msra.mxu0 %v5415
        %5538 = vmatprep.subr.mxu0 0.0
        %5539 = vmatpush1.msra.mxu0 %v5414
        %5540 = vmatprep.subr.mxu0 0.0
        %5541 = vmatpush1.msra.mxu0 %v5413
        %5542 = vmatprep.subr.mxu0 0.0
        %5543 = vmatpush1.msra.mxu0 %v5412
        %5544 = vmatprep.subr.mxu0 0.0
        %5545 = vmatpush2.msra.mxu0 0.0
        %5546 = vmatprep.subr.mxu0 0.0
        %5547 = vmatpush2.msra.mxu0 0.0
        %5548 = vmatprep.subr.mxu0 0.0
        %5549 = vmatpush2.msra.mxu0 0.0
        %5550 = vmatprep.subr.mxu0 0.0
        %5551 = vmatpush2.msra.mxu0 0.0
        %5552 = vmatprep.subr.mxu0 0.0
        %5553 = vmatpush2.msra.mxu0 0.0
        %5554 = vmatprep.subr.mxu0 0.0
        %5555 = vmatpush2.msra.mxu0 0.0
        %5556 = vmatprep.subr.mxu0 0.0
        %5557 = vmatpush2.msra.mxu0 0.0
        %5558 = vmatprep.subr.mxu0 0.0
        %5559 = vmatpush2.msra.mxu0 %v475
        %5560 = vmatprep.subr.mxu0 0.0
        %5561 = vmatpush2.msra.mxu0 %v5467
        %5562 = vmatprep.subr.mxu0 0.0
        %5563 = vmatpush2.msra.mxu0 %v5465
        %5564 = vmatprep.subr.mxu0 0.0
        %5565 = vmatpush2.msra.mxu0 %v5463
        %5566 = vmatprep.subr.mxu0 0.0
        %5567 = vmatpush2.msra.mxu0 %v5461
        %5568 = vmatprep.subr.mxu0 0.0
        %5569 = vmatpush2.msra.mxu0 %v5459
        %5570 = vmatprep.subr.mxu0 0.0
        %5571 = vmatpush2.msra.mxu0 %v5457
        %5572 = vmatprep.subr.mxu0 0.0
        %5573 = vmatpush2.msra.mxu0 %v5455
        %5574 = vmatprep.subr.mxu0 0.0
        %5575 = vmatpush2.msra.mxu0 %v5453
        %5576 = vmatprep.mubr.f32.mxu0 %v5492
        %5577 = vmatmul.mubr.f32.gmra.mxu0 %v5477
        %v5578 = vpop.f32.mrf.mxu0
        %v5579 = vadd.f32 0.0, %v5578
        %v5580 = vpop.f32.mrf.mxu0
        %5581 = vmatprep.mubr.f32.mxu0 %v5495
        %5582 = vmatmul.mubr.f32.gmra.mxu0 %v5479
        %v5583 = vpop.f32.mrf.mxu0
        %v5584 = vadd.f32 0.0, %v5583
        %v5585 = vpop.f32.mrf.mxu0
        %5586 = vmatprep.mubr.f32.mxu0 %v5498
        %5587 = vmatmul.mubr.f32.gmra.mxu0 %v5481
        %v5588 = vpop.f32.mrf.mxu0
        %v5589 = vadd.f32 0.0, %v5588
        %v5590 = vpop.f32.mrf.mxu0
        %5591 = vmatprep.mubr.f32.mxu0 %v5501
        %5592 = vmatmul.mubr.f32.gmra.mxu0 %v5483
        %v5593 = vpop.f32.mrf.mxu0
        %v5594 = vadd.f32 0.0, %v5593
        %v5595 = vpop.f32.mrf.mxu0
        %5596 = vmatprep.mubr.f32.mxu0 %v5504
        %5597 = vmatmul.mubr.f32.gmra.mxu0 %v5485
        %v5598 = vpop.f32.mrf.mxu0
        %v5599 = vadd.f32 0.0, %v5598
        %v5600 = vpop.f32.mrf.mxu0
        %5601 = vmatprep.mubr.f32.mxu0 %v5507
        %5602 = vmatmul.mubr.f32.gmra.mxu0 %v5487
        %v5603 = vpop.f32.mrf.mxu0
        %v5604 = vadd.f32 0.0, %v5603
        %v5605 = vpop.f32.mrf.mxu0
        %5606 = vmatprep.mubr.f32.mxu0 %v5510
        %5607 = vmatmul.mubr.f32.gmra.mxu0 %v5489
        %v5608 = vpop.f32.mrf.mxu0
        %v5609 = vadd.f32 0.0, %v5608
        %v5610 = vpop.f32.mrf.mxu0
        %5611 = vdwg.mxu0
        %v5612 = vmax.f32 %v5579, 0.0
        %v5613 = vmax.f32 %v5584, 0.0
        %v5614 = vmax.f32 %v5589, 0.0
        %v5615 = vmax.f32 %v5594, 0.0
        %v5616 = vmax.f32 %v5599, 0.0
        %v5617 = vmax.f32 %v5604, 0.0
        %v5618 = vmax.f32 %v5609, 0.0
        %5626 = vrot.lane.b32.xlu0 %v5612, 1
        %v5627 = vpop.permute.xlu0 %5626
        %5628 = vrot.lane.b32.xlu0 %v5613, 1
        %v5629 = vpop.permute.xlu0 %5628
        %5630 = vrot.lane.b32.xlu0 %v5614, 1
        %v5631 = vpop.permute.xlu0 %5630
        %5632 = vrot.lane.b32.xlu0 %v5615, 1
        %v5633 = vpop.permute.xlu0 %5632
        %5634 = vrot.lane.b32.xlu0 %v5616, 1
        %v5635 = vpop.permute.xlu0 %5634
        %5636 = vrot.lane.b32.xlu0 %v5617, 1
        %v5637 = vpop.permute.xlu0 %5636
        %5638 = vrot.lane.b32.xlu0 %v5618, 1
        %v5639 = vpop.permute.xlu0 %5638
        %v5647 = vsel %vm2381, 0.0, %v5627
        %v5648 = vsel %vm2381, 0.0, %v5629
        %v5649 = vsel %vm2381, 0.0, %v5631
        %v5650 = vsel %vm2381, 0.0, %v5633
        %v5651 = vsel %vm2381, 0.0, %v5635
        %v5652 = vsel %vm2381, 0.0, %v5637
        %v5653 = vsel %vm2381, 0.0, %v5639
        %v5654 = vsel %vm3703, %v5647, 0.0
        %v5655 = vsel %vm3703, %v5648, 0.0
        %v5656 = vsel %vm3703, %v5649, 0.0
        %v5657 = vsel %vm3703, %v5650, 0.0
        %v5658 = vsel %vm3703, %v5651, 0.0
        %v5659 = vsel %vm3703, %v5652, 0.0
        %v5660 = vsel %vm3703, %v5653, 0.0
        %5668 = vrot.lane.b32.xlu0 %v5654, 127
        %v5669 = vpop.permute.xlu0 %5668
        %5670 = vrot.lane.b32.xlu0 %v5655, 127
        %v5671 = vpop.permute.xlu0 %5670
        %5672 = vrot.lane.b32.xlu0 %v5656, 127
        %v5673 = vpop.permute.xlu0 %5672
        %5674 = vrot.lane.b32.xlu0 %v5657, 127
        %v5675 = vpop.permute.xlu0 %5674
        %5676 = vrot.lane.b32.xlu0 %v5658, 127
        %v5677 = vpop.permute.xlu0 %5676
        %5678 = vrot.lane.b32.xlu0 %v5659, 127
        %v5679 = vpop.permute.xlu0 %5678
        %5680 = vrot.lane.b32.xlu0 %v5660, 127
        %v5681 = vpop.permute.xlu0 %5680
        %5689 = vrot.lane.b32.xlu0 %v5654, 126
        %v5690 = vpop.permute.xlu0 %5689
        %5691 = vrot.lane.b32.xlu0 %v5655, 126
        %v5692 = vpop.permute.xlu0 %5691
        %5693 = vrot.lane.b32.xlu0 %v5656, 126
        %v5694 = vpop.permute.xlu0 %5693
        %5695 = vrot.lane.b32.xlu0 %v5657, 126
        %v5696 = vpop.permute.xlu0 %5695
        %5697 = vrot.lane.b32.xlu0 %v5658, 126
        %v5698 = vpop.permute.xlu0 %5697
        %5699 = vrot.lane.b32.xlu0 %v5659, 126
        %v5700 = vpop.permute.xlu0 %5699
        %5701 = vrot.lane.b32.xlu0 %v5660, 126
        %v5702 = vpop.permute.xlu0 %5701
        %s5710 = scalar_lea.vmem [#allocation5], 3648
        %v5711 = vld [vmem:[%s5710] sm:$0xff]
        %v5712 = vld [vmem:[%s5710 + $0x8] sm:$0xff]
        %v5713 = vld [vmem:[%s5710 + $0x18] sm:$0xff]
        %v5714 = vld [vmem:[%s5710 + $0x20] sm:$0xff]
        %v5715 = vld [vmem:[%s5710 + $0x30] sm:$0xff]
        %v5716 = vld [vmem:[%s5710 + $0x38] sm:$0xff]
        %v5717 = vld [vmem:[%s5710 + $0x48] sm:$0xff]
        %v5718 = vld [vmem:[%s5710 + $0x50] sm:$0xff]
        %v5719 = vld [vmem:[%s5710 + $0x60] sm:$0xff]
        %v5720 = vld [vmem:[%s5710 + $0x68] sm:$0xff]
        %v5721 = vld [vmem:[%s5710 + $0x78] sm:$0xff]
        %v5722 = vld [vmem:[%s5710 + $0x80] sm:$0xff]
        %v5723 = vld [vmem:[%s5710 + $0x90] sm:$0xff]
        %v5724 = vld [vmem:[%s5710 + $0x98] sm:$0xff]
        %v5726 = vsel %vm2686, %v5712, 0
        %v5729 = vsel %vm2686, %v5714, 0
        %v5732 = vsel %vm2686, %v5716, 0
        %v5735 = vsel %vm2686, %v5718, 0
        %v5738 = vsel %vm2686, %v5720, 0
        %v5741 = vsel %vm2686, %v5722, 0
        %v5744 = vsel %vm2686, %v5724, 0
        %5746 = vmatprep.subr.mxu0 0.0
        %5747 = vmatpush1.msra.mxu0 %v5692
        %5748 = vmatprep.subr.mxu0 0.0
        %5749 = vmatpush1.msra.mxu0 %v5690
        %5750 = vmatprep.subr.mxu0 0.0
        %5751 = vmatpush1.msra.mxu0 %v5681
        %5752 = vmatprep.subr.mxu0 0.0
        %5753 = vmatpush1.msra.mxu0 %v5679
        %5754 = vmatprep.subr.mxu0 0.0
        %5755 = vmatpush1.msra.mxu0 %v5677
        %5756 = vmatprep.subr.mxu0 0.0
        %5757 = vmatpush1.msra.mxu0 %v5675
        %5758 = vmatprep.subr.mxu0 0.0
        %5759 = vmatpush1.msra.mxu0 %v5673
        %5760 = vmatprep.subr.mxu0 0.0
        %5761 = vmatpush1.msra.mxu0 %v5671
        %5762 = vmatprep.subr.mxu0 0.0
        %5763 = vmatpush1.msra.mxu0 %v5669
        %5764 = vmatprep.subr.mxu0 0.0
        %5765 = vmatpush1.msra.mxu0 %v5660
        %5766 = vmatprep.subr.mxu0 0.0
        %5767 = vmatpush1.msra.mxu0 %v5659
        %5768 = vmatprep.subr.mxu0 0.0
        %5769 = vmatpush1.msra.mxu0 %v5658
        %5770 = vmatprep.subr.mxu0 0.0
        %5771 = vmatpush1.msra.mxu0 %v5657
        %5772 = vmatprep.subr.mxu0 0.0
        %5773 = vmatpush1.msra.mxu0 %v5656
        %5774 = vmatprep.subr.mxu0 0.0
        %5775 = vmatpush1.msra.mxu0 %v5655
        %5776 = vmatprep.subr.mxu0 0.0
        %5777 = vmatpush1.msra.mxu0 %v5654
        %5778 = vmatprep.subr.mxu0 0.0
        %5779 = vmatpush2.msra.mxu0 0.0
        %5780 = vmatprep.subr.mxu0 0.0
        %5781 = vmatpush2.msra.mxu0 0.0
        %5782 = vmatprep.subr.mxu0 0.0
        %5783 = vmatpush2.msra.mxu0 0.0
        %5784 = vmatprep.subr.mxu0 0.0
        %5785 = vmatpush2.msra.mxu0 0.0
        %5786 = vmatprep.subr.mxu0 0.0
        %5787 = vmatpush2.msra.mxu0 0.0
        %5788 = vmatprep.subr.mxu0 0.0
        %5789 = vmatpush2.msra.mxu0 0.0
        %5790 = vmatprep.subr.mxu0 0.0
        %5791 = vmatpush2.msra.mxu0 0.0
        %5792 = vmatprep.subr.mxu0 0.0
        %5793 = vmatpush2.msra.mxu0 0.0
        %5794 = vmatprep.subr.mxu0 0.0
        %5795 = vmatpush2.msra.mxu0 0.0
        %5796 = vmatprep.subr.mxu0 0.0
        %5797 = vmatpush2.msra.mxu0 0.0
        %5798 = vmatprep.subr.mxu0 0.0
        %5799 = vmatpush2.msra.mxu0 %v475
        %5800 = vmatprep.subr.mxu0 0.0
        %5801 = vmatpush2.msra.mxu0 %v5702
        %5802 = vmatprep.subr.mxu0 0.0
        %5803 = vmatpush2.msra.mxu0 %v5700
        %5804 = vmatprep.subr.mxu0 0.0
        %5805 = vmatpush2.msra.mxu0 %v5698
        %5806 = vmatprep.subr.mxu0 0.0
        %5807 = vmatpush2.msra.mxu0 %v5696
        %5808 = vmatprep.subr.mxu0 0.0
        %5809 = vmatpush2.msra.mxu0 %v5694
        %5810 = vmatprep.mubr.f32.mxu0 %v5726
        %5811 = vmatmul.mubr.f32.gmra.mxu0 %v5711
        %v5812 = vpop.f32.mrf.mxu0
        %v5813 = vadd.f32 0.0, %v5812
        %v5814 = vpop.f32.mrf.mxu0
        %5815 = vmatprep.mubr.f32.mxu0 %v5729
        %5816 = vmatmul.mubr.f32.gmra.mxu0 %v5713
        %v5817 = vpop.f32.mrf.mxu0
        %v5818 = vadd.f32 0.0, %v5817
        %v5819 = vpop.f32.mrf.mxu0
        %5820 = vmatprep.mubr.f32.mxu0 %v5732
        %5821 = vmatmul.mubr.f32.gmra.mxu0 %v5715
        %v5822 = vpop.f32.mrf.mxu0
        %v5823 = vadd.f32 0.0, %v5822
        %v5824 = vpop.f32.mrf.mxu0
        %5825 = vmatprep.mubr.f32.mxu0 %v5735
        %5826 = vmatmul.mubr.f32.gmra.mxu0 %v5717
        %v5827 = vpop.f32.mrf.mxu0
        %v5828 = vadd.f32 0.0, %v5827
        %v5829 = vpop.f32.mrf.mxu0
        %5830 = vmatprep.mubr.f32.mxu0 %v5738
        %5831 = vmatmul.mubr.f32.gmra.mxu0 %v5719
        %v5832 = vpop.f32.mrf.mxu0
        %v5833 = vadd.f32 0.0, %v5832
        %v5834 = vpop.f32.mrf.mxu0
        %5835 = vmatprep.mubr.f32.mxu0 %v5741
        %5836 = vmatmul.mubr.f32.gmra.mxu0 %v5721
        %v5837 = vpop.f32.mrf.mxu0
        %v5838 = vadd.f32 0.0, %v5837
        %v5839 = vpop.f32.mrf.mxu0
        %5840 = vmatprep.mubr.f32.mxu0 %v5744
        %5841 = vmatmul.mubr.f32.gmra.mxu0 %v5723
        %v5842 = vpop.f32.mrf.mxu0
        %v5843 = vadd.f32 0.0, %v5842
        %v5844 = vpop.f32.mrf.mxu0
        %5845 = vdwg.mxu0
        %v5846 = vmax.f32 %v5813, 0.0
        %v5847 = vmax.f32 %v5818, 0.0
        %v5848 = vmax.f32 %v5823, 0.0
        %v5849 = vmax.f32 %v5828, 0.0
        %v5850 = vmax.f32 %v5833, 0.0
        %v5851 = vmax.f32 %v5838, 0.0
        %v5852 = vmax.f32 %v5843, 0.0
        %v5853 = vmin.f32 %v4579, 3.0
        %vm5854 = vcmp.eq.f32.partialorder %v4573, %v5853
        %v5855 = vsel %vm5854, %v4581, 0.0
        %v5856 = vadd.f32 %v4584, %v5855
        %vm5857 = vcmask 31744
        %v5859 = vsel %vm5857, %v5846, 0
        %v5862 = vsel %vm5857, %v5847, 0
        %v5865 = vsel %vm5857, %v5848, 0
        %v5868 = vsel %vm5857, %v5849, 0
        %v5871 = vsel %vm5857, %v5850, 0
        %v5874 = vsel %vm5857, %v5851, 0
        %v5877 = vsel %vm5857, %v5852, 0
        %v5880 = vsel %vm274, %v5856, 0
        %5882 = vmatprep.subr.mxu0 0.0
        %5883 = vmatpush1.msra.mxu0 0.0
        %5884 = vmatprep.subr.mxu0 0.0
        %5885 = vmatpush1.msra.mxu0 0.0
        %5886 = vmatprep.subr.mxu0 0.0
        %5887 = vmatpush1.msra.mxu0 0.0
        %5888 = vmatprep.subr.mxu0 0.0
        %5889 = vmatpush1.msra.mxu0 0.0
        %5890 = vmatprep.subr.mxu0 0.0
        %5891 = vmatpush1.msra.mxu0 0.0
        %5892 = vmatprep.subr.mxu0 0.0
        %5893 = vmatpush1.msra.mxu0 0.0
        %5894 = vmatprep.subr.mxu0 0.0
        %5895 = vmatpush1.msra.mxu0 0.0
        %5896 = vmatprep.subr.mxu0 0.0
        %5897 = vmatpush1.msra.mxu0 0.0
        %5898 = vmatprep.subr.mxu0 0.0
        %5899 = vmatpush1.msra.mxu0 0.0
        %5900 = vmatprep.subr.mxu0 0.0
        %5901 = vmatpush1.msra.mxu0 0.0
        %5902 = vmatprep.subr.mxu0 0.0
        %5903 = vmatpush1.msra.mxu0 0.0
        %5904 = vmatprep.subr.mxu0 0.0
        %5905 = vmatpush1.msra.mxu0 0.0
        %5906 = vmatprep.subr.mxu0 0.0
        %5907 = vmatpush1.msra.mxu0 0.0
        %5908 = vmatprep.subr.mxu0 0.0
        %5909 = vmatpush1.msra.mxu0 0.0
        %5910 = vmatprep.subr.mxu0 0.0
        %5911 = vmatpush1.msra.mxu0 0.0
        %5912 = vmatprep.subr.mxu0 0.0
        %5913 = vmatpush1.msra.mxu0 %v5880
        %5914 = vmatprep.subr.mxu0 0.0
        %5915 = vmatpush2.msra.mxu0 0.0
        %5916 = vmatprep.subr.mxu0 0.0
        %5917 = vmatpush2.msra.mxu0 0.0
        %5918 = vmatprep.subr.mxu0 0.0
        %5919 = vmatpush2.msra.mxu0 0.0
        %5920 = vmatprep.subr.mxu0 0.0
        %5921 = vmatpush2.msra.mxu0 0.0
        %5922 = vmatprep.subr.mxu0 0.0
        %5923 = vmatpush2.msra.mxu0 0.0
        %5924 = vmatprep.subr.mxu0 0.0
        %5925 = vmatpush2.msra.mxu0 0.0
        %5926 = vmatprep.subr.mxu0 0.0
        %5927 = vmatpush2.msra.mxu0 0.0
        %5928 = vmatprep.subr.mxu0 0.0
        %5929 = vmatpush2.msra.mxu0 0.0
        %5930 = vmatprep.subr.mxu0 0.0
        %5931 = vmatpush2.msra.mxu0 0.0
        %5932 = vmatprep.subr.mxu0 0.0
        %5933 = vmatpush2.msra.mxu0 0.0
        %5934 = vmatprep.subr.mxu0 0.0
        %5935 = vmatpush2.msra.mxu0 0.0
        %5936 = vmatprep.subr.mxu0 0.0
        %5937 = vmatpush2.msra.mxu0 0.0
        %5938 = vmatprep.subr.mxu0 0.0
        %5939 = vmatpush2.msra.mxu0 0.0
        %5940 = vmatprep.subr.mxu0 0.0
        %5941 = vmatpush2.msra.mxu0 0.0
        %5942 = vmatprep.subr.mxu0 0.0
        %5943 = vmatpush2.msra.mxu0 0.0
        %5944 = vmatprep.subr.mxu0 0.0
        %5945 = vmatpush2.msra.mxu0 0.0
        %5946 = vmatprep.mubr.f32.mxu0 0.0
        %5947 = vmatmul.mubr.f32.gmra.mxu0 %v5859
        %v5948 = vpop.f32.mrf.mxu0
        %v5949 = vadd.f32 0.0, %v5948
        %v5950 = vpop.f32.mrf.mxu0
        %5951 = vmatprep.mubr.f32.mxu0 0.0
        %5952 = vmatmul.mubr.f32.gmra.mxu0 %v5862
        %v5953 = vpop.f32.mrf.mxu0
        %v5954 = vadd.f32 0.0, %v5953
        %v5955 = vpop.f32.mrf.mxu0
        %5956 = vmatprep.mubr.f32.mxu0 0.0
        %5957 = vmatmul.mubr.f32.gmra.mxu0 %v5865
        %v5958 = vpop.f32.mrf.mxu0
        %v5959 = vadd.f32 0.0, %v5958
        %v5960 = vpop.f32.mrf.mxu0
        %5961 = vmatprep.mubr.f32.mxu0 0.0
        %5962 = vmatmul.mubr.f32.gmra.mxu0 %v5868
        %v5963 = vpop.f32.mrf.mxu0
        %v5964 = vadd.f32 0.0, %v5963
        %v5965 = vpop.f32.mrf.mxu0
        %5966 = vmatprep.mubr.f32.mxu0 0.0
        %5967 = vmatmul.mubr.f32.gmra.mxu0 %v5871
        %v5968 = vpop.f32.mrf.mxu0
        %v5969 = vadd.f32 0.0, %v5968
        %v5970 = vpop.f32.mrf.mxu0
        %5971 = vmatprep.mubr.f32.mxu0 0.0
        %5972 = vmatmul.mubr.f32.gmra.mxu0 %v5874
        %v5973 = vpop.f32.mrf.mxu0
        %v5974 = vadd.f32 0.0, %v5973
        %v5975 = vpop.f32.mrf.mxu0
        %5976 = vmatprep.mubr.f32.mxu0 0.0
        %5977 = vmatmul.mubr.f32.gmra.mxu0 %v5877
        %v5978 = vpop.f32.mrf.mxu0
        %v5979 = vadd.f32 0.0, %v5978
        %v5980 = vpop.f32.mrf.mxu0
        %5981 = vdwg.mxu0
        %5989 = vrot.lane.b32.xlu0 %v5949, 1
        %v5990 = vpop.permute.xlu0 %5989
        %5991 = vrot.lane.b32.xlu0 %v5954, 1
        %v5992 = vpop.permute.xlu0 %5991
        %5993 = vrot.lane.b32.xlu0 %v5959, 1
        %v5994 = vpop.permute.xlu0 %5993
        %5995 = vrot.lane.b32.xlu0 %v5964, 1
        %v5996 = vpop.permute.xlu0 %5995
        %5997 = vrot.lane.b32.xlu0 %v5969, 1
        %v5998 = vpop.permute.xlu0 %5997
        %5999 = vrot.lane.b32.xlu0 %v5974, 1
        %v6000 = vpop.permute.xlu0 %5999
        %6001 = vrot.lane.b32.xlu0 %v5979, 1
        %v6002 = vpop.permute.xlu0 %6001
        %v6010 = vsel %vm2381, 0.0, %v5990
        %v6011 = vsel %vm2381, 0.0, %v5992
        %v6012 = vsel %vm2381, 0.0, %v5994
        %v6013 = vsel %vm2381, 0.0, %v5996
        %v6014 = vsel %vm2381, 0.0, %v5998
        %v6015 = vsel %vm2381, 0.0, %v6000
        %v6016 = vsel %vm2381, 0.0, %v6002
        %v6017 = vsel %vm3014, %v6010, 0.0
        %v6018 = vsel %vm3014, %v6011, 0.0
        %v6019 = vsel %vm3014, %v6012, 0.0
        %v6020 = vsel %vm3014, %v6013, 0.0
        %v6021 = vsel %vm3014, %v6014, 0.0
        %v6022 = vsel %vm3014, %v6015, 0.0
        %v6023 = vsel %vm3014, %v6016, 0.0
        %6031 = vrot.lane.b32.xlu0 %v6017, 127
        %v6032 = vpop.permute.xlu0 %6031
        %6033 = vrot.lane.b32.xlu0 %v6018, 127
        %v6034 = vpop.permute.xlu0 %6033
        %6035 = vrot.lane.b32.xlu0 %v6019, 127
        %v6036 = vpop.permute.xlu0 %6035
        %6037 = vrot.lane.b32.xlu0 %v6020, 127
        %v6038 = vpop.permute.xlu0 %6037
        %6039 = vrot.lane.b32.xlu0 %v6021, 127
        %v6040 = vpop.permute.xlu0 %6039
        %6041 = vrot.lane.b32.xlu0 %v6022, 127
        %v6042 = vpop.permute.xlu0 %6041
        %6043 = vrot.lane.b32.xlu0 %v6023, 127
        %v6044 = vpop.permute.xlu0 %6043
        %6052 = vrot.lane.b32.xlu0 %v6017, 126
        %v6053 = vpop.permute.xlu0 %6052
        %6054 = vrot.lane.b32.xlu0 %v6018, 126
        %v6055 = vpop.permute.xlu0 %6054
        %6056 = vrot.lane.b32.xlu0 %v6019, 126
        %v6057 = vpop.permute.xlu0 %6056
        %6058 = vrot.lane.b32.xlu0 %v6020, 126
        %v6059 = vpop.permute.xlu0 %6058
        %6060 = vrot.lane.b32.xlu0 %v6021, 126
        %v6061 = vpop.permute.xlu0 %6060
        %6062 = vrot.lane.b32.xlu0 %v6022, 126
        %v6063 = vpop.permute.xlu0 %6062
        %6064 = vrot.lane.b32.xlu0 %v6023, 126
        %v6065 = vpop.permute.xlu0 %6064
        %s6073 = scalar_lea.vmem [#allocation5], 3840
        %v6074 = vld [vmem:[%s6073] sm:$0xff]
        %v6075 = vld [vmem:[%s6073 + $0x8] sm:$0xff]
        %v6076 = vld [vmem:[%s6073 + $0x18] sm:$0xff]
        %v6077 = vld [vmem:[%s6073 + $0x20] sm:$0xff]
        %v6078 = vld [vmem:[%s6073 + $0x30] sm:$0xff]
        %v6079 = vld [vmem:[%s6073 + $0x38] sm:$0xff]
        %v6080 = vld [vmem:[%s6073 + $0x48] sm:$0xff]
        %v6081 = vld [vmem:[%s6073 + $0x50] sm:$0xff]
        %v6082 = vld [vmem:[%s6073 + $0x60] sm:$0xff]
        %v6083 = vld [vmem:[%s6073 + $0x68] sm:$0xff]
        %v6084 = vld [vmem:[%s6073 + $0x78] sm:$0xff]
        %v6085 = vld [vmem:[%s6073 + $0x80] sm:$0xff]
        %v6087 = vsel %vm2686, %v6075, 0
        %v6090 = vsel %vm2686, %v6077, 0
        %v6093 = vsel %vm2686, %v6079, 0
        %v6096 = vsel %vm2686, %v6081, 0
        %v6099 = vsel %vm2686, %v6083, 0
        %v6102 = vsel %vm2686, %v6085, 0
        %6104 = vmatprep.subr.mxu0 0.0
        %6105 = vmatpush1.msra.mxu0 %v6055
        %6106 = vmatprep.subr.mxu0 0.0
        %6107 = vmatpush1.msra.mxu0 %v6053
        %6108 = vmatprep.subr.mxu0 0.0
        %6109 = vmatpush1.msra.mxu0 %v6044
        %6110 = vmatprep.subr.mxu0 0.0
        %6111 = vmatpush1.msra.mxu0 %v6042
        %6112 = vmatprep.subr.mxu0 0.0
        %6113 = vmatpush1.msra.mxu0 %v6040
        %6114 = vmatprep.subr.mxu0 0.0
        %6115 = vmatpush1.msra.mxu0 %v6038
        %6116 = vmatprep.subr.mxu0 0.0
        %6117 = vmatpush1.msra.mxu0 %v6036
        %6118 = vmatprep.subr.mxu0 0.0
        %6119 = vmatpush1.msra.mxu0 %v6034
        %6120 = vmatprep.subr.mxu0 0.0
        %6121 = vmatpush1.msra.mxu0 %v6032
        %6122 = vmatprep.subr.mxu0 0.0
        %6123 = vmatpush1.msra.mxu0 %v6023
        %6124 = vmatprep.subr.mxu0 0.0
        %6125 = vmatpush1.msra.mxu0 %v6022
        %6126 = vmatprep.subr.mxu0 0.0
        %6127 = vmatpush1.msra.mxu0 %v6021
        %6128 = vmatprep.subr.mxu0 0.0
        %6129 = vmatpush1.msra.mxu0 %v6020
        %6130 = vmatprep.subr.mxu0 0.0
        %6131 = vmatpush1.msra.mxu0 %v6019
        %6132 = vmatprep.subr.mxu0 0.0
        %6133 = vmatpush1.msra.mxu0 %v6018
        %6134 = vmatprep.subr.mxu0 0.0
        %6135 = vmatpush1.msra.mxu0 %v6017
        %6136 = vmatprep.subr.mxu0 0.0
        %6137 = vmatpush2.msra.mxu0 0.0
        %6138 = vmatprep.subr.mxu0 0.0
        %6139 = vmatpush2.msra.mxu0 0.0
        %6140 = vmatprep.subr.mxu0 0.0
        %6141 = vmatpush2.msra.mxu0 0.0
        %6142 = vmatprep.subr.mxu0 0.0
        %6143 = vmatpush2.msra.mxu0 0.0
        %6144 = vmatprep.subr.mxu0 0.0
        %6145 = vmatpush2.msra.mxu0 0.0
        %6146 = vmatprep.subr.mxu0 0.0
        %6147 = vmatpush2.msra.mxu0 0.0
        %6148 = vmatprep.subr.mxu0 0.0
        %6149 = vmatpush2.msra.mxu0 0.0
        %6150 = vmatprep.subr.mxu0 0.0
        %6151 = vmatpush2.msra.mxu0 0.0
        %6152 = vmatprep.subr.mxu0 0.0
        %6153 = vmatpush2.msra.mxu0 0.0
        %6154 = vmatprep.subr.mxu0 0.0
        %6155 = vmatpush2.msra.mxu0 0.0
        %6156 = vmatprep.subr.mxu0 0.0
        %6157 = vmatpush2.msra.mxu0 %v475
        %6158 = vmatprep.subr.mxu0 0.0
        %6159 = vmatpush2.msra.mxu0 %v6065
        %6160 = vmatprep.subr.mxu0 0.0
        %6161 = vmatpush2.msra.mxu0 %v6063
        %6162 = vmatprep.subr.mxu0 0.0
        %6163 = vmatpush2.msra.mxu0 %v6061
        %6164 = vmatprep.subr.mxu0 0.0
        %6165 = vmatpush2.msra.mxu0 %v6059
        %6166 = vmatprep.subr.mxu0 0.0
        %6167 = vmatpush2.msra.mxu0 %v6057
        %6168 = vmatprep.mubr.f32.mxu0 %v6087
        %6169 = vmatmul.mubr.f32.gmra.mxu0 %v6074
        %v6170 = vpop.f32.mrf.mxu0
        %v6171 = vadd.f32 0.0, %v6170
        %v6172 = vpop.f32.mrf.mxu0
        %6173 = vmatprep.mubr.f32.mxu0 %v6090
        %6174 = vmatmul.mubr.f32.gmra.mxu0 %v6076
        %v6175 = vpop.f32.mrf.mxu0
        %v6176 = vadd.f32 0.0, %v6175
        %v6177 = vpop.f32.mrf.mxu0
        %6178 = vmatprep.mubr.f32.mxu0 %v6093
        %6179 = vmatmul.mubr.f32.gmra.mxu0 %v6078
        %v6180 = vpop.f32.mrf.mxu0
        %v6181 = vadd.f32 0.0, %v6180
        %v6182 = vpop.f32.mrf.mxu0
        %6183 = vmatprep.mubr.f32.mxu0 %v6096
        %6184 = vmatmul.mubr.f32.gmra.mxu0 %v6080
        %v6185 = vpop.f32.mrf.mxu0
        %v6186 = vadd.f32 0.0, %v6185
        %v6187 = vpop.f32.mrf.mxu0
        %6188 = vmatprep.mubr.f32.mxu0 %v6099
        %6189 = vmatmul.mubr.f32.gmra.mxu0 %v6082
        %v6190 = vpop.f32.mrf.mxu0
        %v6191 = vadd.f32 0.0, %v6190
        %v6192 = vpop.f32.mrf.mxu0
        %6193 = vmatprep.mubr.f32.mxu0 %v6102
        %6194 = vmatmul.mubr.f32.gmra.mxu0 %v6084
        %v6195 = vpop.f32.mrf.mxu0
        %v6196 = vadd.f32 0.0, %v6195
        %v6197 = vpop.f32.mrf.mxu0
        %6198 = vdwg.mxu0
        %v6199 = vmax.f32 %v6171, 0.0
        %v6200 = vmax.f32 %v6176, 0.0
        %v6201 = vmax.f32 %v6181, 0.0
        %v6202 = vmax.f32 %v6186, 0.0
        %v6203 = vmax.f32 %v6191, 0.0
        %v6204 = vmax.f32 %v6196, 0.0
        %6211 = vrot.lane.b32.xlu0 %v6199, 1
        %v6212 = vpop.permute.xlu0 %6211
        %6213 = vrot.lane.b32.xlu0 %v6200, 1
        %v6214 = vpop.permute.xlu0 %6213
        %6215 = vrot.lane.b32.xlu0 %v6201, 1
        %v6216 = vpop.permute.xlu0 %6215
        %6217 = vrot.lane.b32.xlu0 %v6202, 1
        %v6218 = vpop.permute.xlu0 %6217
        %6219 = vrot.lane.b32.xlu0 %v6203, 1
        %v6220 = vpop.permute.xlu0 %6219
        %6221 = vrot.lane.b32.xlu0 %v6204, 1
        %v6222 = vpop.permute.xlu0 %6221
        %v6229 = vsel %vm2381, 0.0, %v6212
        %v6230 = vsel %vm2381, 0.0, %v6214
        %v6231 = vsel %vm2381, 0.0, %v6216
        %v6232 = vsel %vm2381, 0.0, %v6218
        %v6233 = vsel %vm2381, 0.0, %v6220
        %v6234 = vsel %vm2381, 0.0, %v6222
        %v6235 = vsel %vm3014, %v6229, 0.0
        %v6236 = vsel %vm3014, %v6230, 0.0
        %v6237 = vsel %vm3014, %v6231, 0.0
        %v6238 = vsel %vm3014, %v6232, 0.0
        %v6239 = vsel %vm3014, %v6233, 0.0
        %v6240 = vsel %vm3014, %v6234, 0.0
        %6247 = vrot.lane.b32.xlu0 %v6235, 127
        %v6248 = vpop.permute.xlu0 %6247
        %6249 = vrot.lane.b32.xlu0 %v6236, 127
        %v6250 = vpop.permute.xlu0 %6249
        %6251 = vrot.lane.b32.xlu0 %v6237, 127
        %v6252 = vpop.permute.xlu0 %6251
        %6253 = vrot.lane.b32.xlu0 %v6238, 127
        %v6254 = vpop.permute.xlu0 %6253
        %6255 = vrot.lane.b32.xlu0 %v6239, 127
        %v6256 = vpop.permute.xlu0 %6255
        %6257 = vrot.lane.b32.xlu0 %v6240, 127
        %v6258 = vpop.permute.xlu0 %6257
        %6265 = vrot.lane.b32.xlu0 %v6235, 126
        %v6266 = vpop.permute.xlu0 %6265
        %6267 = vrot.lane.b32.xlu0 %v6236, 126
        %v6268 = vpop.permute.xlu0 %6267
        %6269 = vrot.lane.b32.xlu0 %v6237, 126
        %v6270 = vpop.permute.xlu0 %6269
        %6271 = vrot.lane.b32.xlu0 %v6238, 126
        %v6272 = vpop.permute.xlu0 %6271
        %6273 = vrot.lane.b32.xlu0 %v6239, 126
        %v6274 = vpop.permute.xlu0 %6273
        %6275 = vrot.lane.b32.xlu0 %v6240, 126
        %v6276 = vpop.permute.xlu0 %6275
        %s6283 = scalar_lea.vmem [#allocation5], 4032
        %v6284 = vld [vmem:[%s6283] sm:$0xff]
        %v6285 = vld [vmem:[%s6283 + $0x8] sm:$0xff]
        %v6286 = vld [vmem:[%s6283 + $0x18] sm:$0xff]
        %v6287 = vld [vmem:[%s6283 + $0x20] sm:$0xff]
        %v6288 = vld [vmem:[%s6283 + $0x30] sm:$0xff]
        %v6289 = vld [vmem:[%s6283 + $0x38] sm:$0xff]
        %v6290 = vld [vmem:[%s6283 + $0x48] sm:$0xff]
        %v6291 = vld [vmem:[%s6283 + $0x50] sm:$0xff]
        %v6292 = vld [vmem:[%s6283 + $0x60] sm:$0xff]
        %v6293 = vld [vmem:[%s6283 + $0x68] sm:$0xff]
        %v6294 = vld [vmem:[%s6283 + $0x78] sm:$0xff]
        %v6295 = vld [vmem:[%s6283 + $0x80] sm:$0xff]
        %v6297 = vsel %vm2388, %v6285, 0
        %v6300 = vsel %vm2388, %v6287, 0
        %v6303 = vsel %vm2388, %v6289, 0
        %v6306 = vsel %vm2388, %v6291, 0
        %v6309 = vsel %vm2388, %v6293, 0
        %v6312 = vsel %vm2388, %v6295, 0
        %6314 = vmatprep.subr.mxu0 0.0
        %6315 = vmatpush1.msra.mxu0 %v6272
        %6316 = vmatprep.subr.mxu0 0.0
        %6317 = vmatpush1.msra.mxu0 %v6270
        %6318 = vmatprep.subr.mxu0 0.0
        %6319 = vmatpush1.msra.mxu0 %v6268
        %6320 = vmatprep.subr.mxu0 0.0
        %6321 = vmatpush1.msra.mxu0 %v6266
        %6322 = vmatprep.subr.mxu0 0.0
        %6323 = vmatpush1.msra.mxu0 %v6258
        %6324 = vmatprep.subr.mxu0 0.0
        %6325 = vmatpush1.msra.mxu0 %v6256
        %6326 = vmatprep.subr.mxu0 0.0
        %6327 = vmatpush1.msra.mxu0 %v6254
        %6328 = vmatprep.subr.mxu0 0.0
        %6329 = vmatpush1.msra.mxu0 %v6252
        %6330 = vmatprep.subr.mxu0 0.0
        %6331 = vmatpush1.msra.mxu0 %v6250
        %6332 = vmatprep.subr.mxu0 0.0
        %6333 = vmatpush1.msra.mxu0 %v6248
        %6334 = vmatprep.subr.mxu0 0.0
        %6335 = vmatpush1.msra.mxu0 %v6240
        %6336 = vmatprep.subr.mxu0 0.0
        %6337 = vmatpush1.msra.mxu0 %v6239
        %6338 = vmatprep.subr.mxu0 0.0
        %6339 = vmatpush1.msra.mxu0 %v6238
        %6340 = vmatprep.subr.mxu0 0.0
        %6341 = vmatpush1.msra.mxu0 %v6237
        %6342 = vmatprep.subr.mxu0 0.0
        %6343 = vmatpush1.msra.mxu0 %v6236
        %6344 = vmatprep.subr.mxu0 0.0
        %6345 = vmatpush1.msra.mxu0 %v6235
        %6346 = vmatprep.subr.mxu0 0.0
        %6347 = vmatpush2.msra.mxu0 0.0
        %6348 = vmatprep.subr.mxu0 0.0
        %6349 = vmatpush2.msra.mxu0 0.0
        %6350 = vmatprep.subr.mxu0 0.0
        %6351 = vmatpush2.msra.mxu0 0.0
        %6352 = vmatprep.subr.mxu0 0.0
        %6353 = vmatpush2.msra.mxu0 0.0
        %6354 = vmatprep.subr.mxu0 0.0
        %6355 = vmatpush2.msra.mxu0 0.0
        %6356 = vmatprep.subr.mxu0 0.0
        %6357 = vmatpush2.msra.mxu0 0.0
        %6358 = vmatprep.subr.mxu0 0.0
        %6359 = vmatpush2.msra.mxu0 0.0
        %6360 = vmatprep.subr.mxu0 0.0
        %6361 = vmatpush2.msra.mxu0 0.0
        %6362 = vmatprep.subr.mxu0 0.0
        %6363 = vmatpush2.msra.mxu0 0.0
        %6364 = vmatprep.subr.mxu0 0.0
        %6365 = vmatpush2.msra.mxu0 0.0
        %6366 = vmatprep.subr.mxu0 0.0
        %6367 = vmatpush2.msra.mxu0 0.0
        %6368 = vmatprep.subr.mxu0 0.0
        %6369 = vmatpush2.msra.mxu0 0.0
        %6370 = vmatprep.subr.mxu0 0.0
        %6371 = vmatpush2.msra.mxu0 0.0
        %6372 = vmatprep.subr.mxu0 0.0
        %6373 = vmatpush2.msra.mxu0 %v475
        %6374 = vmatprep.subr.mxu0 0.0
        %6375 = vmatpush2.msra.mxu0 %v6276
        %6376 = vmatprep.subr.mxu0 0.0
        %6377 = vmatpush2.msra.mxu0 %v6274
        %6378 = vmatprep.mubr.f32.mxu0 %v6297
        %6379 = vmatmul.mubr.f32.gmra.mxu0 %v6284
        %v6380 = vpop.f32.mrf.mxu0
        %v6381 = vadd.f32 0.0, %v6380
        %v6382 = vpop.f32.mrf.mxu0
        %6383 = vmatprep.mubr.f32.mxu0 %v6300
        %6384 = vmatmul.mubr.f32.gmra.mxu0 %v6286
        %v6385 = vpop.f32.mrf.mxu0
        %v6386 = vadd.f32 0.0, %v6385
        %v6387 = vpop.f32.mrf.mxu0
        %6388 = vmatprep.mubr.f32.mxu0 %v6303
        %6389 = vmatmul.mubr.f32.gmra.mxu0 %v6288
        %v6390 = vpop.f32.mrf.mxu0
        %v6391 = vadd.f32 0.0, %v6390
        %v6392 = vpop.f32.mrf.mxu0
        %6393 = vmatprep.mubr.f32.mxu0 %v6306
        %6394 = vmatmul.mubr.f32.gmra.mxu0 %v6290
        %v6395 = vpop.f32.mrf.mxu0
        %v6396 = vadd.f32 0.0, %v6395
        %v6397 = vpop.f32.mrf.mxu0
        %6398 = vmatprep.mubr.f32.mxu0 %v6309
        %6399 = vmatmul.mubr.f32.gmra.mxu0 %v6292
        %v6400 = vpop.f32.mrf.mxu0
        %v6401 = vadd.f32 0.0, %v6400
        %v6402 = vpop.f32.mrf.mxu0
        %6403 = vmatprep.mubr.f32.mxu0 %v6312
        %6404 = vmatmul.mubr.f32.gmra.mxu0 %v6294
        %v6405 = vpop.f32.mrf.mxu0
        %v6406 = vadd.f32 0.0, %v6405
        %v6407 = vpop.f32.mrf.mxu0
        %6408 = vdwg.mxu0
        %v6409 = vmax.f32 %v6381, 0.0
        %v6410 = vmax.f32 %v6386, 0.0
        %v6411 = vmax.f32 %v6391, 0.0
        %v6412 = vmax.f32 %v6396, 0.0
        %v6413 = vmax.f32 %v6401, 0.0
        %v6414 = vmax.f32 %v6406, 0.0
        %6421 = vrot.lane.b32.xlu0 %v6409, 1
        %v6422 = vpop.permute.xlu0 %6421
        %6423 = vrot.lane.b32.xlu0 %v6410, 1
        %v6424 = vpop.permute.xlu0 %6423
        %6425 = vrot.lane.b32.xlu0 %v6411, 1
        %v6426 = vpop.permute.xlu0 %6425
        %6427 = vrot.lane.b32.xlu0 %v6412, 1
        %v6428 = vpop.permute.xlu0 %6427
        %6429 = vrot.lane.b32.xlu0 %v6413, 1
        %v6430 = vpop.permute.xlu0 %6429
        %6431 = vrot.lane.b32.xlu0 %v6414, 1
        %v6432 = vpop.permute.xlu0 %6431
        %v6439 = vsel %vm2381, 0.0, %v6422
        %v6440 = vsel %vm2381, 0.0, %v6424
        %v6441 = vsel %vm2381, 0.0, %v6426
        %v6442 = vsel %vm2381, 0.0, %v6428
        %v6443 = vsel %vm2381, 0.0, %v6430
        %v6444 = vsel %vm2381, 0.0, %v6432
        %v6445 = vsel %vm3014, %v6439, 0.0
        %v6446 = vsel %vm3014, %v6440, 0.0
        %v6447 = vsel %vm3014, %v6441, 0.0
        %v6448 = vsel %vm3014, %v6442, 0.0
        %v6449 = vsel %vm3014, %v6443, 0.0
        %v6450 = vsel %vm3014, %v6444, 0.0
        %6457 = vrot.lane.b32.xlu0 %v6445, 127
        %v6458 = vpop.permute.xlu0 %6457
        %6459 = vrot.lane.b32.xlu0 %v6446, 127
        %v6460 = vpop.permute.xlu0 %6459
        %6461 = vrot.lane.b32.xlu0 %v6447, 127
        %v6462 = vpop.permute.xlu0 %6461
        %6463 = vrot.lane.b32.xlu0 %v6448, 127
        %v6464 = vpop.permute.xlu0 %6463
        %6465 = vrot.lane.b32.xlu0 %v6449, 127
        %v6466 = vpop.permute.xlu0 %6465
        %6467 = vrot.lane.b32.xlu0 %v6450, 127
        %v6468 = vpop.permute.xlu0 %6467
        %6475 = vrot.lane.b32.xlu0 %v6445, 126
        %v6476 = vpop.permute.xlu0 %6475
        %6477 = vrot.lane.b32.xlu0 %v6446, 126
        %v6478 = vpop.permute.xlu0 %6477
        %6479 = vrot.lane.b32.xlu0 %v6447, 126
        %v6480 = vpop.permute.xlu0 %6479
        %6481 = vrot.lane.b32.xlu0 %v6448, 126
        %v6482 = vpop.permute.xlu0 %6481
        %6483 = vrot.lane.b32.xlu0 %v6449, 126
        %v6484 = vpop.permute.xlu0 %6483
        %6485 = vrot.lane.b32.xlu0 %v6450, 126
        %v6486 = vpop.permute.xlu0 %6485
        %s6493 = scalar_lea.vmem [#allocation5], 4224
        %v6494 = vld [vmem:[%s6493] sm:$0xff]
        %v6495 = vld [vmem:[%s6493 + $0x8] sm:$0xff]
        %v6496 = vld [vmem:[%s6493 + $0x18] sm:$0xff]
        %v6497 = vld [vmem:[%s6493 + $0x20] sm:$0xff]
        %v6498 = vld [vmem:[%s6493 + $0x30] sm:$0xff]
        %v6499 = vld [vmem:[%s6493 + $0x38] sm:$0xff]
        %v6500 = vld [vmem:[%s6493 + $0x48] sm:$0xff]
        %v6501 = vld [vmem:[%s6493 + $0x50] sm:$0xff]
        %v6502 = vld [vmem:[%s6493 + $0x60] sm:$0xff]
        %v6503 = vld [vmem:[%s6493 + $0x68] sm:$0xff]
        %v6504 = vld [vmem:[%s6493 + $0x78] sm:$0xff]
        %v6505 = vld [vmem:[%s6493 + $0x80] sm:$0xff]
        %v6507 = vsel %vm2388, %v6495, 0
        %v6510 = vsel %vm2388, %v6497, 0
        %v6513 = vsel %vm2388, %v6499, 0
        %v6516 = vsel %vm2388, %v6501, 0
        %v6519 = vsel %vm2388, %v6503, 0
        %v6522 = vsel %vm2388, %v6505, 0
        %6524 = vmatprep.subr.mxu0 0.0
        %6525 = vmatpush1.msra.mxu0 %v6482
        %6526 = vmatprep.subr.mxu0 0.0
        %6527 = vmatpush1.msra.mxu0 %v6480
        %6528 = vmatprep.subr.mxu0 0.0
        %6529 = vmatpush1.msra.mxu0 %v6478
        %6530 = vmatprep.subr.mxu0 0.0
        %6531 = vmatpush1.msra.mxu0 %v6476
        %6532 = vmatprep.subr.mxu0 0.0
        %6533 = vmatpush1.msra.mxu0 %v6468
        %6534 = vmatprep.subr.mxu0 0.0
        %6535 = vmatpush1.msra.mxu0 %v6466
        %6536 = vmatprep.subr.mxu0 0.0
        %6537 = vmatpush1.msra.mxu0 %v6464
        %6538 = vmatprep.subr.mxu0 0.0
        %6539 = vmatpush1.msra.mxu0 %v6462
        %6540 = vmatprep.subr.mxu0 0.0
        %6541 = vmatpush1.msra.mxu0 %v6460
        %6542 = vmatprep.subr.mxu0 0.0
        %6543 = vmatpush1.msra.mxu0 %v6458
        %6544 = vmatprep.subr.mxu0 0.0
        %6545 = vmatpush1.msra.mxu0 %v6450
        %6546 = vmatprep.subr.mxu0 0.0
        %6547 = vmatpush1.msra.mxu0 %v6449
        %6548 = vmatprep.subr.mxu0 0.0
        %6549 = vmatpush1.msra.mxu0 %v6448
        %6550 = vmatprep.subr.mxu0 0.0
        %6551 = vmatpush1.msra.mxu0 %v6447
        %6552 = vmatprep.subr.mxu0 0.0
        %6553 = vmatpush1.msra.mxu0 %v6446
        %6554 = vmatprep.subr.mxu0 0.0
        %6555 = vmatpush1.msra.mxu0 %v6445
        %6556 = vmatprep.subr.mxu0 0.0
        %6557 = vmatpush2.msra.mxu0 0.0
        %6558 = vmatprep.subr.mxu0 0.0
        %6559 = vmatpush2.msra.mxu0 0.0
        %6560 = vmatprep.subr.mxu0 0.0
        %6561 = vmatpush2.msra.mxu0 0.0
        %6562 = vmatprep.subr.mxu0 0.0
        %6563 = vmatpush2.msra.mxu0 0.0
        %6564 = vmatprep.subr.mxu0 0.0
        %6565 = vmatpush2.msra.mxu0 0.0
        %6566 = vmatprep.subr.mxu0 0.0
        %6567 = vmatpush2.msra.mxu0 0.0
        %6568 = vmatprep.subr.mxu0 0.0
        %6569 = vmatpush2.msra.mxu0 0.0
        %6570 = vmatprep.subr.mxu0 0.0
        %6571 = vmatpush2.msra.mxu0 0.0
        %6572 = vmatprep.subr.mxu0 0.0
        %6573 = vmatpush2.msra.mxu0 0.0
        %6574 = vmatprep.subr.mxu0 0.0
        %6575 = vmatpush2.msra.mxu0 0.0
        %6576 = vmatprep.subr.mxu0 0.0
        %6577 = vmatpush2.msra.mxu0 0.0
        %6578 = vmatprep.subr.mxu0 0.0
        %6579 = vmatpush2.msra.mxu0 0.0
        %6580 = vmatprep.subr.mxu0 0.0
        %6581 = vmatpush2.msra.mxu0 0.0
        %6582 = vmatprep.subr.mxu0 0.0
        %6583 = vmatpush2.msra.mxu0 %v475
        %6584 = vmatprep.subr.mxu0 0.0
        %6585 = vmatpush2.msra.mxu0 %v6486
        %6586 = vmatprep.subr.mxu0 0.0
        %6587 = vmatpush2.msra.mxu0 %v6484
        %6588 = vmatprep.mubr.f32.mxu0 %v6507
        %6589 = vmatmul.mubr.f32.gmra.mxu0 %v6494
        %v6590 = vpop.f32.mrf.mxu0
        %v6591 = vadd.f32 0.0, %v6590
        %v6592 = vpop.f32.mrf.mxu0
        %6593 = vmatprep.mubr.f32.mxu0 %v6510
        %6594 = vmatmul.mubr.f32.gmra.mxu0 %v6496
        %v6595 = vpop.f32.mrf.mxu0
        %v6596 = vadd.f32 0.0, %v6595
        %v6597 = vpop.f32.mrf.mxu0
        %6598 = vmatprep.mubr.f32.mxu0 %v6513
        %6599 = vmatmul.mubr.f32.gmra.mxu0 %v6498
        %v6600 = vpop.f32.mrf.mxu0
        %v6601 = vadd.f32 0.0, %v6600
        %v6602 = vpop.f32.mrf.mxu0
        %6603 = vmatprep.mubr.f32.mxu0 %v6516
        %6604 = vmatmul.mubr.f32.gmra.mxu0 %v6500
        %v6605 = vpop.f32.mrf.mxu0
        %v6606 = vadd.f32 0.0, %v6605
        %v6607 = vpop.f32.mrf.mxu0
        %6608 = vmatprep.mubr.f32.mxu0 %v6519
        %6609 = vmatmul.mubr.f32.gmra.mxu0 %v6502
        %v6610 = vpop.f32.mrf.mxu0
        %v6611 = vadd.f32 0.0, %v6610
        %v6612 = vpop.f32.mrf.mxu0
        %6613 = vmatprep.mubr.f32.mxu0 %v6522
        %6614 = vmatmul.mubr.f32.gmra.mxu0 %v6504
        %v6615 = vpop.f32.mrf.mxu0
        %v6616 = vadd.f32 0.0, %v6615
        %v6617 = vpop.f32.mrf.mxu0
        %6618 = vdwg.mxu0
        %v6619 = vmax.f32 %v6591, 0.0
        %v6620 = vmax.f32 %v6596, 0.0
        %v6621 = vmax.f32 %v6601, 0.0
        %v6622 = vmax.f32 %v6606, 0.0
        %v6623 = vmax.f32 %v6611, 0.0
        %v6624 = vmax.f32 %v6616, 0.0
        %6631 = vrot.lane.b32.xlu0 %v6619, 1
        %v6632 = vpop.permute.xlu0 %6631
        %6633 = vrot.lane.b32.xlu0 %v6620, 1
        %v6634 = vpop.permute.xlu0 %6633
        %6635 = vrot.lane.b32.xlu0 %v6621, 1
        %v6636 = vpop.permute.xlu0 %6635
        %6637 = vrot.lane.b32.xlu0 %v6622, 1
        %v6638 = vpop.permute.xlu0 %6637
        %6639 = vrot.lane.b32.xlu0 %v6623, 1
        %v6640 = vpop.permute.xlu0 %6639
        %6641 = vrot.lane.b32.xlu0 %v6624, 1
        %v6642 = vpop.permute.xlu0 %6641
        %v6649 = vsel %vm2381, 0.0, %v6632
        %v6650 = vsel %vm2381, 0.0, %v6634
        %v6651 = vsel %vm2381, 0.0, %v6636
        %v6652 = vsel %vm2381, 0.0, %v6638
        %v6653 = vsel %vm2381, 0.0, %v6640
        %v6654 = vsel %vm2381, 0.0, %v6642
        %v6655 = vsel %vm3014, %v6649, 0.0
        %v6656 = vsel %vm3014, %v6650, 0.0
        %v6657 = vsel %vm3014, %v6651, 0.0
        %v6658 = vsel %vm3014, %v6652, 0.0
        %v6659 = vsel %vm3014, %v6653, 0.0
        %v6660 = vsel %vm3014, %v6654, 0.0
        %6667 = vrot.lane.b32.xlu0 %v6655, 127
        %v6668 = vpop.permute.xlu0 %6667
        %6669 = vrot.lane.b32.xlu0 %v6656, 127
        %v6670 = vpop.permute.xlu0 %6669
        %6671 = vrot.lane.b32.xlu0 %v6657, 127
        %v6672 = vpop.permute.xlu0 %6671
        %6673 = vrot.lane.b32.xlu0 %v6658, 127
        %v6674 = vpop.permute.xlu0 %6673
        %6675 = vrot.lane.b32.xlu0 %v6659, 127
        %v6676 = vpop.permute.xlu0 %6675
        %6677 = vrot.lane.b32.xlu0 %v6660, 127
        %v6678 = vpop.permute.xlu0 %6677
        %6685 = vrot.lane.b32.xlu0 %v6655, 126
        %v6686 = vpop.permute.xlu0 %6685
        %6687 = vrot.lane.b32.xlu0 %v6656, 126
        %v6688 = vpop.permute.xlu0 %6687
        %6689 = vrot.lane.b32.xlu0 %v6657, 126
        %v6690 = vpop.permute.xlu0 %6689
        %6691 = vrot.lane.b32.xlu0 %v6658, 126
        %v6692 = vpop.permute.xlu0 %6691
        %6693 = vrot.lane.b32.xlu0 %v6659, 126
        %v6694 = vpop.permute.xlu0 %6693
        %6695 = vrot.lane.b32.xlu0 %v6660, 126
        %v6696 = vpop.permute.xlu0 %6695
        %s6703 = scalar_lea.vmem [#allocation5], 4416
        %v6704 = vld [vmem:[%s6703] sm:$0xff]
        %v6705 = vld [vmem:[%s6703 + $0x8] sm:$0xff]
        %v6706 = vld [vmem:[%s6703 + $0x18] sm:$0xff]
        %v6707 = vld [vmem:[%s6703 + $0x20] sm:$0xff]
        %v6708 = vld [vmem:[%s6703 + $0x30] sm:$0xff]
        %v6709 = vld [vmem:[%s6703 + $0x38] sm:$0xff]
        %v6710 = vld [vmem:[%s6703 + $0x48] sm:$0xff]
        %v6711 = vld [vmem:[%s6703 + $0x50] sm:$0xff]
        %v6712 = vld [vmem:[%s6703 + $0x60] sm:$0xff]
        %v6713 = vld [vmem:[%s6703 + $0x68] sm:$0xff]
        %v6714 = vld [vmem:[%s6703 + $0x78] sm:$0xff]
        %v6715 = vld [vmem:[%s6703 + $0x80] sm:$0xff]
        %v6717 = vsel %vm2388, %v6705, 0
        %v6720 = vsel %vm2388, %v6707, 0
        %v6723 = vsel %vm2388, %v6709, 0
        %v6726 = vsel %vm2388, %v6711, 0
        %v6729 = vsel %vm2388, %v6713, 0
        %v6732 = vsel %vm2388, %v6715, 0
        %6734 = vmatprep.subr.mxu0 0.0
        %6735 = vmatpush1.msra.mxu0 %v6692
        %6736 = vmatprep.subr.mxu0 0.0
        %6737 = vmatpush1.msra.mxu0 %v6690
        %6738 = vmatprep.subr.mxu0 0.0
        %6739 = vmatpush1.msra.mxu0 %v6688
        %6740 = vmatprep.subr.mxu0 0.0
        %6741 = vmatpush1.msra.mxu0 %v6686
        %6742 = vmatprep.subr.mxu0 0.0
        %6743 = vmatpush1.msra.mxu0 %v6678
        %6744 = vmatprep.subr.mxu0 0.0
        %6745 = vmatpush1.msra.mxu0 %v6676
        %6746 = vmatprep.subr.mxu0 0.0
        %6747 = vmatpush1.msra.mxu0 %v6674
        %6748 = vmatprep.subr.mxu0 0.0
        %6749 = vmatpush1.msra.mxu0 %v6672
        %6750 = vmatprep.subr.mxu0 0.0
        %6751 = vmatpush1.msra.mxu0 %v6670
        %6752 = vmatprep.subr.mxu0 0.0
        %6753 = vmatpush1.msra.mxu0 %v6668
        %6754 = vmatprep.subr.mxu0 0.0
        %6755 = vmatpush1.msra.mxu0 %v6660
        %6756 = vmatprep.subr.mxu0 0.0
        %6757 = vmatpush1.msra.mxu0 %v6659
        %6758 = vmatprep.subr.mxu0 0.0
        %6759 = vmatpush1.msra.mxu0 %v6658
        %6760 = vmatprep.subr.mxu0 0.0
        %6761 = vmatpush1.msra.mxu0 %v6657
        %6762 = vmatprep.subr.mxu0 0.0
        %6763 = vmatpush1.msra.mxu0 %v6656
        %6764 = vmatprep.subr.mxu0 0.0
        %6765 = vmatpush1.msra.mxu0 %v6655
        %6766 = vmatprep.subr.mxu0 0.0
        %6767 = vmatpush2.msra.mxu0 0.0
        %6768 = vmatprep.subr.mxu0 0.0
        %6769 = vmatpush2.msra.mxu0 0.0
        %6770 = vmatprep.subr.mxu0 0.0
        %6771 = vmatpush2.msra.mxu0 0.0
        %6772 = vmatprep.subr.mxu0 0.0
        %6773 = vmatpush2.msra.mxu0 0.0
        %6774 = vmatprep.subr.mxu0 0.0
        %6775 = vmatpush2.msra.mxu0 0.0
        %6776 = vmatprep.subr.mxu0 0.0
        %6777 = vmatpush2.msra.mxu0 0.0
        %6778 = vmatprep.subr.mxu0 0.0
        %6779 = vmatpush2.msra.mxu0 0.0
        %6780 = vmatprep.subr.mxu0 0.0
        %6781 = vmatpush2.msra.mxu0 0.0
        %6782 = vmatprep.subr.mxu0 0.0
        %6783 = vmatpush2.msra.mxu0 0.0
        %6784 = vmatprep.subr.mxu0 0.0
        %6785 = vmatpush2.msra.mxu0 0.0
        %6786 = vmatprep.subr.mxu0 0.0
        %6787 = vmatpush2.msra.mxu0 0.0
        %6788 = vmatprep.subr.mxu0 0.0
        %6789 = vmatpush2.msra.mxu0 0.0
        %6790 = vmatprep.subr.mxu0 0.0
        %6791 = vmatpush2.msra.mxu0 0.0
        %6792 = vmatprep.subr.mxu0 0.0
        %6793 = vmatpush2.msra.mxu0 %v475
        %6794 = vmatprep.subr.mxu0 0.0
        %6795 = vmatpush2.msra.mxu0 %v6696
        %6796 = vmatprep.subr.mxu0 0.0
        %6797 = vmatpush2.msra.mxu0 %v6694
        %6798 = vmatprep.mubr.f32.mxu0 %v6717
        %6799 = vmatmul.mubr.f32.gmra.mxu0 %v6704
        %v6800 = vpop.f32.mrf.mxu0
        %v6801 = vadd.f32 0.0, %v6800
        %v6802 = vpop.f32.mrf.mxu0
        %6803 = vmatprep.mubr.f32.mxu0 %v6720
        %6804 = vmatmul.mubr.f32.gmra.mxu0 %v6706
        %v6805 = vpop.f32.mrf.mxu0
        %v6806 = vadd.f32 0.0, %v6805
        %v6807 = vpop.f32.mrf.mxu0
        %6808 = vmatprep.mubr.f32.mxu0 %v6723
        %6809 = vmatmul.mubr.f32.gmra.mxu0 %v6708
        %v6810 = vpop.f32.mrf.mxu0
        %v6811 = vadd.f32 0.0, %v6810
        %v6812 = vpop.f32.mrf.mxu0
        %6813 = vmatprep.mubr.f32.mxu0 %v6726
        %6814 = vmatmul.mubr.f32.gmra.mxu0 %v6710
        %v6815 = vpop.f32.mrf.mxu0
        %v6816 = vadd.f32 0.0, %v6815
        %v6817 = vpop.f32.mrf.mxu0
        %6818 = vmatprep.mubr.f32.mxu0 %v6729
        %6819 = vmatmul.mubr.f32.gmra.mxu0 %v6712
        %v6820 = vpop.f32.mrf.mxu0
        %v6821 = vadd.f32 0.0, %v6820
        %v6822 = vpop.f32.mrf.mxu0
        %6823 = vmatprep.mubr.f32.mxu0 %v6732
        %6824 = vmatmul.mubr.f32.gmra.mxu0 %v6714
        %v6825 = vpop.f32.mrf.mxu0
        %v6826 = vadd.f32 0.0, %v6825
        %v6827 = vpop.f32.mrf.mxu0
        %6828 = vdwg.mxu0
        %v6829 = vmax.f32 %v6801, 0.0
        %v6830 = vmax.f32 %v6806, 0.0
        %v6831 = vmax.f32 %v6811, 0.0
        %v6832 = vmax.f32 %v6816, 0.0
        %v6833 = vmax.f32 %v6821, 0.0
        %v6834 = vmax.f32 %v6826, 0.0
        %v6835 = vmin.f32 %v4579, 7.0
        %vm6836 = vcmp.eq.f32.partialorder %v4573, %v6835
        %v6837 = vsel %vm6836, %v4581, 0.0
        %v6838 = vadd.f32 %v4584, %v6837
        %v6840 = vsel %vm3533, %v6829, 0
        %v6843 = vsel %vm3533, %v6830, 0
        %v6846 = vsel %vm3533, %v6831, 0
        %v6849 = vsel %vm3533, %v6832, 0
        %v6852 = vsel %vm3533, %v6833, 0
        %v6855 = vsel %vm3533, %v6834, 0
        %6857 = vmatprep.subr.mxu0 0.0
        %6858 = vmatpush1.msra.mxu0 0.0
        %6859 = vmatprep.subr.mxu0 0.0
        %6860 = vmatpush1.msra.mxu0 0.0
        %6861 = vmatprep.subr.mxu0 0.0
        %6862 = vmatpush1.msra.mxu0 0.0
        %6863 = vmatprep.subr.mxu0 0.0
        %6864 = vmatpush1.msra.mxu0 0.0
        %6865 = vmatprep.subr.mxu0 0.0
        %6866 = vmatpush1.msra.mxu0 0.0
        %6867 = vmatprep.subr.mxu0 0.0
        %6868 = vmatpush1.msra.mxu0 0.0
        %6869 = vmatprep.subr.mxu0 0.0
        %6870 = vmatpush1.msra.mxu0 0.0
        %6871 = vmatprep.subr.mxu0 0.0
        %6872 = vmatpush1.msra.mxu0 0.0
        %6873 = vmatprep.subr.mxu0 0.0
        %6874 = vmatpush1.msra.mxu0 0.0
        %6875 = vmatprep.subr.mxu0 0.0
        %6876 = vmatpush1.msra.mxu0 0.0
        %6877 = vmatprep.subr.mxu0 0.0
        %6878 = vmatpush1.msra.mxu0 0.0
        %6879 = vmatprep.subr.mxu0 0.0
        %6880 = vmatpush1.msra.mxu0 0.0
        %6881 = vmatprep.subr.mxu0 0.0
        %6882 = vmatpush1.msra.mxu0 0.0
        %6883 = vmatprep.subr.mxu0 0.0
        %6884 = vmatpush1.msra.mxu0 0.0
        %6885 = vmatprep.subr.mxu0 0.0
        %6886 = vmatpush1.msra.mxu0 0.0
        %6887 = vmatprep.subr.mxu0 0.0
        %6888 = vmatpush1.msra.mxu0 %v6838
        %6889 = vmatprep.subr.mxu0 0.0
        %6890 = vmatpush2.msra.mxu0 0.0
        %6891 = vmatprep.subr.mxu0 0.0
        %6892 = vmatpush2.msra.mxu0 0.0
        %6893 = vmatprep.subr.mxu0 0.0
        %6894 = vmatpush2.msra.mxu0 0.0
        %6895 = vmatprep.subr.mxu0 0.0
        %6896 = vmatpush2.msra.mxu0 0.0
        %6897 = vmatprep.subr.mxu0 0.0
        %6898 = vmatpush2.msra.mxu0 0.0
        %6899 = vmatprep.subr.mxu0 0.0
        %6900 = vmatpush2.msra.mxu0 0.0
        %6901 = vmatprep.subr.mxu0 0.0
        %6902 = vmatpush2.msra.mxu0 0.0
        %6903 = vmatprep.subr.mxu0 0.0
        %6904 = vmatpush2.msra.mxu0 0.0
        %6905 = vmatprep.subr.mxu0 0.0
        %6906 = vmatpush2.msra.mxu0 0.0
        %6907 = vmatprep.subr.mxu0 0.0
        %6908 = vmatpush2.msra.mxu0 0.0
        %6909 = vmatprep.subr.mxu0 0.0
        %6910 = vmatpush2.msra.mxu0 0.0
        %6911 = vmatprep.subr.mxu0 0.0
        %6912 = vmatpush2.msra.mxu0 0.0
        %6913 = vmatprep.subr.mxu0 0.0
        %6914 = vmatpush2.msra.mxu0 0.0
        %6915 = vmatprep.subr.mxu0 0.0
        %6916 = vmatpush2.msra.mxu0 0.0
        %6917 = vmatprep.subr.mxu0 0.0
        %6918 = vmatpush2.msra.mxu0 0.0
        %6919 = vmatprep.subr.mxu0 0.0
        %6920 = vmatpush2.msra.mxu0 0.0
        %6921 = vmatprep.mubr.f32.mxu0 0.0
        %6922 = vmatmul.mubr.f32.gmra.mxu0 %v6840
        %v6923 = vpop.f32.mrf.mxu0
        %v6924 = vadd.f32 0.0, %v6923
        %v6925 = vpop.f32.mrf.mxu0
        %6926 = vmatprep.mubr.f32.mxu0 0.0
        %6927 = vmatmul.mubr.f32.gmra.mxu0 %v6843
        %v6928 = vpop.f32.mrf.mxu0
        %v6929 = vadd.f32 0.0, %v6928
        %v6930 = vpop.f32.mrf.mxu0
        %6931 = vmatprep.mubr.f32.mxu0 0.0
        %6932 = vmatmul.mubr.f32.gmra.mxu0 %v6846
        %v6933 = vpop.f32.mrf.mxu0
        %v6934 = vadd.f32 0.0, %v6933
        %v6935 = vpop.f32.mrf.mxu0
        %6936 = vmatprep.mubr.f32.mxu0 0.0
        %6937 = vmatmul.mubr.f32.gmra.mxu0 %v6849
        %v6938 = vpop.f32.mrf.mxu0
        %v6939 = vadd.f32 0.0, %v6938
        %v6940 = vpop.f32.mrf.mxu0
        %6941 = vmatprep.mubr.f32.mxu0 0.0
        %6942 = vmatmul.mubr.f32.gmra.mxu0 %v6852
        %v6943 = vpop.f32.mrf.mxu0
        %v6944 = vadd.f32 0.0, %v6943
        %v6945 = vpop.f32.mrf.mxu0
        %6946 = vmatprep.mubr.f32.mxu0 0.0
        %6947 = vmatmul.mubr.f32.gmra.mxu0 %v6855
        %v6948 = vpop.f32.mrf.mxu0
        %v6949 = vadd.f32 0.0, %v6948
        %v6950 = vpop.f32.mrf.mxu0
        %6951 = vdwg.mxu0
        %6958 = vrot.lane.b32.xlu0 %v6924, 2
        %v6959 = vpop.permute.xlu0 %6958
        %6960 = vrot.lane.b32.xlu0 %v6929, 2
        %v6961 = vpop.permute.xlu0 %6960
        %6962 = vrot.lane.b32.xlu0 %v6934, 2
        %v6963 = vpop.permute.xlu0 %6962
        %6964 = vrot.lane.b32.xlu0 %v6939, 2
        %v6965 = vpop.permute.xlu0 %6964
        %6966 = vrot.lane.b32.xlu0 %v6944, 2
        %v6967 = vpop.permute.xlu0 %6966
        %6968 = vrot.lane.b32.xlu0 %v6949, 2
        %v6969 = vpop.permute.xlu0 %6968
        %v6976 = vsel %vm572, 0.0, %v6959
        %v6977 = vsel %vm572, 0.0, %v6961
        %v6978 = vsel %vm572, 0.0, %v6963
        %v6979 = vsel %vm572, 0.0, %v6965
        %v6980 = vsel %vm572, 0.0, %v6967
        %v6981 = vsel %vm572, 0.0, %v6969
        %vm6982 = vcmask 146432
        %v6983 = vsel %vm6982, %v6976, 0.0
        %v6984 = vsel %vm6982, %v6977, 0.0
        %v6985 = vsel %vm6982, %v6978, 0.0
        %v6986 = vsel %vm6982, %v6979, 0.0
        %v6987 = vsel %vm6982, %v6980, 0.0
        %v6988 = vsel %vm6982, %v6981, 0.0
        %6995 = vrot.lane.b32.xlu0 %v6983, 127
        %v6996 = vpop.permute.xlu0 %6995
        %6997 = vrot.lane.b32.xlu0 %v6984, 127
        %v6998 = vpop.permute.xlu0 %6997
        %6999 = vrot.lane.b32.xlu0 %v6985, 127
        %v7000 = vpop.permute.xlu0 %6999
        %7001 = vrot.lane.b32.xlu0 %v6986, 127
        %v7002 = vpop.permute.xlu0 %7001
        %7003 = vrot.lane.b32.xlu0 %v6987, 127
        %v7004 = vpop.permute.xlu0 %7003
        %7005 = vrot.lane.b32.xlu0 %v6988, 127
        %v7006 = vpop.permute.xlu0 %7005
        %7013 = vrot.lane.b32.xlu0 %v6983, 126
        %v7014 = vpop.permute.xlu0 %7013
        %7015 = vrot.lane.b32.xlu0 %v6984, 126
        %v7016 = vpop.permute.xlu0 %7015
        %7017 = vrot.lane.b32.xlu0 %v6985, 126
        %v7018 = vpop.permute.xlu0 %7017
        %7019 = vrot.lane.b32.xlu0 %v6986, 126
        %v7020 = vpop.permute.xlu0 %7019
        %7021 = vrot.lane.b32.xlu0 %v6987, 126
        %v7022 = vpop.permute.xlu0 %7021
        %7023 = vrot.lane.b32.xlu0 %v6988, 126
        %v7024 = vpop.permute.xlu0 %7023
        %7031 = vrot.lane.b32.xlu0 %v6983, 125
        %v7032 = vpop.permute.xlu0 %7031
        %7033 = vrot.lane.b32.xlu0 %v6984, 125
        %v7034 = vpop.permute.xlu0 %7033
        %7035 = vrot.lane.b32.xlu0 %v6985, 125
        %v7036 = vpop.permute.xlu0 %7035
        %7037 = vrot.lane.b32.xlu0 %v6986, 125
        %v7038 = vpop.permute.xlu0 %7037
        %7039 = vrot.lane.b32.xlu0 %v6987, 125
        %v7040 = vpop.permute.xlu0 %7039
        %7041 = vrot.lane.b32.xlu0 %v6988, 125
        %v7042 = vpop.permute.xlu0 %7041
        %7049 = vrot.lane.b32.xlu0 %v6983, 124
        %v7050 = vpop.permute.xlu0 %7049
        %7051 = vrot.lane.b32.xlu0 %v6984, 124
        %v7052 = vpop.permute.xlu0 %7051
        %7053 = vrot.lane.b32.xlu0 %v6985, 124
        %v7054 = vpop.permute.xlu0 %7053
        %7055 = vrot.lane.b32.xlu0 %v6986, 124
        %v7056 = vpop.permute.xlu0 %7055
        %7057 = vrot.lane.b32.xlu0 %v6987, 124
        %v7058 = vpop.permute.xlu0 %7057
        %7059 = vrot.lane.b32.xlu0 %v6988, 124
        %v7060 = vpop.permute.xlu0 %7059
        %s7067 = scalar_lea.vmem [#allocation5], 4608
        %v7068 = vld [vmem:[%s7067] sm:$0xff]
        %v7069 = vld [vmem:[%s7067 + $0x8] sm:$0xff]
        %v7070 = vld [vmem:[%s7067 + $0x18] sm:$0xff]
        %v7071 = vld [vmem:[%s7067 + $0x20] sm:$0xff]
        %v7072 = vld [vmem:[%s7067 + $0x30] sm:$0xff]
        %v7073 = vld [vmem:[%s7067 + $0x38] sm:$0xff]
        %v7074 = vld [vmem:[%s7067 + $0x48] sm:$0xff]
        %v7075 = vld [vmem:[%s7067 + $0x50] sm:$0xff]
        %v7076 = vld [vmem:[%s7067 + $0x60] sm:$0xff]
        %v7077 = vld [vmem:[%s7067 + $0x68] sm:$0xff]
        %v7079 = vsel %vm463, %v7069, 0
        %v7082 = vsel %vm463, %v7071, 0
        %v7085 = vsel %vm463, %v7073, 0
        %v7088 = vsel %vm463, %v7075, 0
        %v7091 = vsel %vm463, %v7077, 0
        %7093 = vmatprep.subr.mxu0 0.0
        %7094 = vmatpush1.msra.mxu0 %v7020
        %7095 = vmatprep.subr.mxu0 0.0
        %7096 = vmatpush1.msra.mxu0 %v7018
        %7097 = vmatprep.subr.mxu0 0.0
        %7098 = vmatpush1.msra.mxu0 %v7016
        %7099 = vmatprep.subr.mxu0 0.0
        %7100 = vmatpush1.msra.mxu0 %v7014
        %7101 = vmatprep.subr.mxu0 0.0
        %7102 = vmatpush1.msra.mxu0 %v7006
        %7103 = vmatprep.subr.mxu0 0.0
        %7104 = vmatpush1.msra.mxu0 %v7004
        %7105 = vmatprep.subr.mxu0 0.0
        %7106 = vmatpush1.msra.mxu0 %v7002
        %7107 = vmatprep.subr.mxu0 0.0
        %7108 = vmatpush1.msra.mxu0 %v7000
        %7109 = vmatprep.subr.mxu0 0.0
        %7110 = vmatpush1.msra.mxu0 %v6998
        %7111 = vmatprep.subr.mxu0 0.0
        %7112 = vmatpush1.msra.mxu0 %v6996
        %7113 = vmatprep.subr.mxu0 0.0
        %7114 = vmatpush1.msra.mxu0 %v6988
        %7115 = vmatprep.subr.mxu0 0.0
        %7116 = vmatpush1.msra.mxu0 %v6987
        %7117 = vmatprep.subr.mxu0 0.0
        %7118 = vmatpush1.msra.mxu0 %v6986
        %7119 = vmatprep.subr.mxu0 0.0
        %7120 = vmatpush1.msra.mxu0 %v6985
        %7121 = vmatprep.subr.mxu0 0.0
        %7122 = vmatpush1.msra.mxu0 %v6984
        %7123 = vmatprep.subr.mxu0 0.0
        %7124 = vmatpush1.msra.mxu0 %v6983
        %7125 = vmatprep.subr.mxu0 0.0
        %7126 = vmatpush2.msra.mxu0 0.0
        %7127 = vmatprep.subr.mxu0 0.0
        %7128 = vmatpush2.msra.mxu0 %v475
        %7129 = vmatprep.subr.mxu0 0.0
        %7130 = vmatpush2.msra.mxu0 %v7060
        %7131 = vmatprep.subr.mxu0 0.0
        %7132 = vmatpush2.msra.mxu0 %v7058
        %7133 = vmatprep.subr.mxu0 0.0
        %7134 = vmatpush2.msra.mxu0 %v7056
        %7135 = vmatprep.subr.mxu0 0.0
        %7136 = vmatpush2.msra.mxu0 %v7054
        %7137 = vmatprep.subr.mxu0 0.0
        %7138 = vmatpush2.msra.mxu0 %v7052
        %7139 = vmatprep.subr.mxu0 0.0
        %7140 = vmatpush2.msra.mxu0 %v7050
        %7141 = vmatprep.subr.mxu0 0.0
        %7142 = vmatpush2.msra.mxu0 %v7042
        %7143 = vmatprep.subr.mxu0 0.0
        %7144 = vmatpush2.msra.mxu0 %v7040
        %7145 = vmatprep.subr.mxu0 0.0
        %7146 = vmatpush2.msra.mxu0 %v7038
        %7147 = vmatprep.subr.mxu0 0.0
        %7148 = vmatpush2.msra.mxu0 %v7036
        %7149 = vmatprep.subr.mxu0 0.0
        %7150 = vmatpush2.msra.mxu0 %v7034
        %7151 = vmatprep.subr.mxu0 0.0
        %7152 = vmatpush2.msra.mxu0 %v7032
        %7153 = vmatprep.subr.mxu0 0.0
        %7154 = vmatpush2.msra.mxu0 %v7024
        %7155 = vmatprep.subr.mxu0 0.0
        %7156 = vmatpush2.msra.mxu0 %v7022
        %7157 = vmatprep.mubr.f32.mxu0 %v7079
        %7158 = vmatmul.mubr.f32.gmra.mxu0 %v7068
        %v7159 = vpop.f32.mrf.mxu0
        %v7160 = vadd.f32 0.0, %v7159
        %v7161 = vpop.f32.mrf.mxu0
        %7162 = vmatprep.mubr.f32.mxu0 %v7082
        %7163 = vmatmul.mubr.f32.gmra.mxu0 %v7070
        %v7164 = vpop.f32.mrf.mxu0
        %v7165 = vadd.f32 0.0, %v7164
        %v7166 = vpop.f32.mrf.mxu0
        %7167 = vmatprep.mubr.f32.mxu0 %v7085
        %7168 = vmatmul.mubr.f32.gmra.mxu0 %v7072
        %v7169 = vpop.f32.mrf.mxu0
        %v7170 = vadd.f32 0.0, %v7169
        %v7171 = vpop.f32.mrf.mxu0
        %7172 = vmatprep.mubr.f32.mxu0 %v7088
        %7173 = vmatmul.mubr.f32.gmra.mxu0 %v7074
        %v7174 = vpop.f32.mrf.mxu0
        %v7175 = vadd.f32 0.0, %v7174
        %v7176 = vpop.f32.mrf.mxu0
        %7177 = vmatprep.mubr.f32.mxu0 %v7091
        %7178 = vmatmul.mubr.f32.gmra.mxu0 %v7076
        %v7179 = vpop.f32.mrf.mxu0
        %v7180 = vadd.f32 0.0, %v7179
        %v7181 = vpop.f32.mrf.mxu0
        %7182 = vdwg.mxu0
        %v7183 = vmax.f32 %v7160, 0.0
        %v7184 = vmax.f32 %v7165, 0.0
        %v7185 = vmax.f32 %v7170, 0.0
        %v7186 = vmax.f32 %v7175, 0.0
        %v7187 = vmax.f32 %v7180, 0.0
        %7193 = vrot.lane.b32.xlu0 %v7183, 2
        %v7194 = vpop.permute.xlu0 %7193
        %7195 = vrot.lane.b32.xlu0 %v7184, 2
        %v7196 = vpop.permute.xlu0 %7195
        %7197 = vrot.lane.b32.xlu0 %v7185, 2
        %v7198 = vpop.permute.xlu0 %7197
        %7199 = vrot.lane.b32.xlu0 %v7186, 2
        %v7200 = vpop.permute.xlu0 %7199
        %7201 = vrot.lane.b32.xlu0 %v7187, 2
        %v7202 = vpop.permute.xlu0 %7201
        %v7208 = vsel %vm572, 0.0, %v7194
        %v7209 = vsel %vm572, 0.0, %v7196
        %v7210 = vsel %vm572, 0.0, %v7198
        %v7211 = vsel %vm572, 0.0, %v7200
        %v7212 = vsel %vm572, 0.0, %v7202
        %v7213 = vsel %vm6982, %v7208, 0.0
        %v7214 = vsel %vm6982, %v7209, 0.0
        %v7215 = vsel %vm6982, %v7210, 0.0
        %v7216 = vsel %vm6982, %v7211, 0.0
        %v7217 = vsel %vm6982, %v7212, 0.0
        %7223 = vrot.lane.b32.xlu0 %v7213, 127
        %v7224 = vpop.permute.xlu0 %7223
        %7225 = vrot.lane.b32.xlu0 %v7214, 127
        %v7226 = vpop.permute.xlu0 %7225
        %7227 = vrot.lane.b32.xlu0 %v7215, 127
        %v7228 = vpop.permute.xlu0 %7227
        %7229 = vrot.lane.b32.xlu0 %v7216, 127
        %v7230 = vpop.permute.xlu0 %7229
        %7231 = vrot.lane.b32.xlu0 %v7217, 127
        %v7232 = vpop.permute.xlu0 %7231
        %7238 = vrot.lane.b32.xlu0 %v7213, 126
        %v7239 = vpop.permute.xlu0 %7238
        %7240 = vrot.lane.b32.xlu0 %v7214, 126
        %v7241 = vpop.permute.xlu0 %7240
        %7242 = vrot.lane.b32.xlu0 %v7215, 126
        %v7243 = vpop.permute.xlu0 %7242
        %7244 = vrot.lane.b32.xlu0 %v7216, 126
        %v7245 = vpop.permute.xlu0 %7244
        %7246 = vrot.lane.b32.xlu0 %v7217, 126
        %v7247 = vpop.permute.xlu0 %7246
        %7253 = vrot.lane.b32.xlu0 %v7213, 125
        %v7254 = vpop.permute.xlu0 %7253
        %7255 = vrot.lane.b32.xlu0 %v7214, 125
        %v7256 = vpop.permute.xlu0 %7255
        %7257 = vrot.lane.b32.xlu0 %v7215, 125
        %v7258 = vpop.permute.xlu0 %7257
        %7259 = vrot.lane.b32.xlu0 %v7216, 125
        %v7260 = vpop.permute.xlu0 %7259
        %7261 = vrot.lane.b32.xlu0 %v7217, 125
        %v7262 = vpop.permute.xlu0 %7261
        %7268 = vrot.lane.b32.xlu0 %v7213, 124
        %v7269 = vpop.permute.xlu0 %7268
        %7270 = vrot.lane.b32.xlu0 %v7214, 124
        %v7271 = vpop.permute.xlu0 %7270
        %7272 = vrot.lane.b32.xlu0 %v7215, 124
        %v7273 = vpop.permute.xlu0 %7272
        %7274 = vrot.lane.b32.xlu0 %v7216, 124
        %v7275 = vpop.permute.xlu0 %7274
        %7276 = vrot.lane.b32.xlu0 %v7217, 124
        %v7277 = vpop.permute.xlu0 %7276
        %s7283 = scalar_lea.vmem [#allocation5], 4800
        %v7284 = vld [vmem:[%s7283] sm:$0xff]
        %v7285 = vld [vmem:[%s7283 + $0x8] sm:$0xff]
        %v7286 = vld [vmem:[%s7283 + $0x18] sm:$0xff]
        %v7287 = vld [vmem:[%s7283 + $0x20] sm:$0xff]
        %v7288 = vld [vmem:[%s7283 + $0x30] sm:$0xff]
        %v7289 = vld [vmem:[%s7283 + $0x38] sm:$0xff]
        %v7290 = vld [vmem:[%s7283 + $0x48] sm:$0xff]
        %v7291 = vld [vmem:[%s7283 + $0x50] sm:$0xff]
        %v7292 = vld [vmem:[%s7283 + $0x60] sm:$0xff]
        %v7293 = vld [vmem:[%s7283 + $0x68] sm:$0xff]
        %v7295 = vsel %vm1484, %v7285, 0
        %v7298 = vsel %vm1484, %v7287, 0
        %v7301 = vsel %vm1484, %v7289, 0
        %v7304 = vsel %vm1484, %v7291, 0
        %v7307 = vsel %vm1484, %v7293, 0
        %7309 = vmatprep.subr.mxu0 0.0
        %7310 = vmatpush1.msra.mxu0 %v7254
        %7311 = vmatprep.subr.mxu0 0.0
        %7312 = vmatpush1.msra.mxu0 %v7247
        %7313 = vmatprep.subr.mxu0 0.0
        %7314 = vmatpush1.msra.mxu0 %v7245
        %7315 = vmatprep.subr.mxu0 0.0
        %7316 = vmatpush1.msra.mxu0 %v7243
        %7317 = vmatprep.subr.mxu0 0.0
        %7318 = vmatpush1.msra.mxu0 %v7241
        %7319 = vmatprep.subr.mxu0 0.0
        %7320 = vmatpush1.msra.mxu0 %v7239
        %7321 = vmatprep.subr.mxu0 0.0
        %7322 = vmatpush1.msra.mxu0 %v7232
        %7323 = vmatprep.subr.mxu0 0.0
        %7324 = vmatpush1.msra.mxu0 %v7230
        %7325 = vmatprep.subr.mxu0 0.0
        %7326 = vmatpush1.msra.mxu0 %v7228
        %7327 = vmatprep.subr.mxu0 0.0
        %7328 = vmatpush1.msra.mxu0 %v7226
        %7329 = vmatprep.subr.mxu0 0.0
        %7330 = vmatpush1.msra.mxu0 %v7224
        %7331 = vmatprep.subr.mxu0 0.0
        %7332 = vmatpush1.msra.mxu0 %v7217
        %7333 = vmatprep.subr.mxu0 0.0
        %7334 = vmatpush1.msra.mxu0 %v7216
        %7335 = vmatprep.subr.mxu0 0.0
        %7336 = vmatpush1.msra.mxu0 %v7215
        %7337 = vmatprep.subr.mxu0 0.0
        %7338 = vmatpush1.msra.mxu0 %v7214
        %7339 = vmatprep.subr.mxu0 0.0
        %7340 = vmatpush1.msra.mxu0 %v7213
        %7341 = vmatprep.subr.mxu0 0.0
        %7342 = vmatpush2.msra.mxu0 0.0
        %7343 = vmatprep.subr.mxu0 0.0
        %7344 = vmatpush2.msra.mxu0 0.0
        %7345 = vmatprep.subr.mxu0 0.0
        %7346 = vmatpush2.msra.mxu0 0.0
        %7347 = vmatprep.subr.mxu0 0.0
        %7348 = vmatpush2.msra.mxu0 0.0
        %7349 = vmatprep.subr.mxu0 0.0
        %7350 = vmatpush2.msra.mxu0 0.0
        %7351 = vmatprep.subr.mxu0 0.0
        %7352 = vmatpush2.msra.mxu0 0.0
        %7353 = vmatprep.subr.mxu0 0.0
        %7354 = vmatpush2.msra.mxu0 %v475
        %7355 = vmatprep.subr.mxu0 0.0
        %7356 = vmatpush2.msra.mxu0 %v7277
        %7357 = vmatprep.subr.mxu0 0.0
        %7358 = vmatpush2.msra.mxu0 %v7275
        %7359 = vmatprep.subr.mxu0 0.0
        %7360 = vmatpush2.msra.mxu0 %v7273
        %7361 = vmatprep.subr.mxu0 0.0
        %7362 = vmatpush2.msra.mxu0 %v7271
        %7363 = vmatprep.subr.mxu0 0.0
        %7364 = vmatpush2.msra.mxu0 %v7269
        %7365 = vmatprep.subr.mxu0 0.0
        %7366 = vmatpush2.msra.mxu0 %v7262
        %7367 = vmatprep.subr.mxu0 0.0
        %7368 = vmatpush2.msra.mxu0 %v7260
        %7369 = vmatprep.subr.mxu0 0.0
        %7370 = vmatpush2.msra.mxu0 %v7258
        %7371 = vmatprep.subr.mxu0 0.0
        %7372 = vmatpush2.msra.mxu0 %v7256
        %7373 = vmatprep.mubr.f32.mxu0 %v7295
        %7374 = vmatmul.mubr.f32.gmra.mxu0 %v7284
        %v7375 = vpop.f32.mrf.mxu0
        %v7376 = vadd.f32 0.0, %v7375
        %v7377 = vpop.f32.mrf.mxu0
        %7378 = vmatprep.mubr.f32.mxu0 %v7298
        %7379 = vmatmul.mubr.f32.gmra.mxu0 %v7286
        %v7380 = vpop.f32.mrf.mxu0
        %v7381 = vadd.f32 0.0, %v7380
        %v7382 = vpop.f32.mrf.mxu0
        %7383 = vmatprep.mubr.f32.mxu0 %v7301
        %7384 = vmatmul.mubr.f32.gmra.mxu0 %v7288
        %v7385 = vpop.f32.mrf.mxu0
        %v7386 = vadd.f32 0.0, %v7385
        %v7387 = vpop.f32.mrf.mxu0
        %7388 = vmatprep.mubr.f32.mxu0 %v7304
        %7389 = vmatmul.mubr.f32.gmra.mxu0 %v7290
        %v7390 = vpop.f32.mrf.mxu0
        %v7391 = vadd.f32 0.0, %v7390
        %v7392 = vpop.f32.mrf.mxu0
        %7393 = vmatprep.mubr.f32.mxu0 %v7307
        %7394 = vmatmul.mubr.f32.gmra.mxu0 %v7292
        %v7395 = vpop.f32.mrf.mxu0
        %v7396 = vadd.f32 0.0, %v7395
        %v7397 = vpop.f32.mrf.mxu0
        %7398 = vdwg.mxu0
        %v7399 = vmax.f32 %v7376, 0.0
        %v7400 = vmax.f32 %v7381, 0.0
        %v7401 = vmax.f32 %v7386, 0.0
        %v7402 = vmax.f32 %v7391, 0.0
        %v7403 = vmax.f32 %v7396, 0.0
        %v7404 = vcvt.s32.f32 %v1029
        %v7405 = vmin.f32 %v4579, 15.0
        %vm7406 = vcmp.eq.f32.partialorder %v7404, %v4578
        %v7407 = vsel %vm7406, %v4583, 0.0
        %vm7408 = vcmp.eq.f32.partialorder %v4573, %v7405
        %vm7409 = vcmp.eq.f32.partialorder %v7404, %v7405
        %v7410 = vsel %vm7408, %v4581, 0.0
        %v7411 = vsel %vm7409, %v4581, 0.0
        %v7412 = vadd.f32 %v4584, %v7410
        %v7413 = vadd.f32 %v7407, %v7411
        %v7415 = vsel %vm2857, %v7399, 0
        %v7418 = vsel %vm2857, %v7400, 0
        %v7421 = vsel %vm2857, %v7401, 0
        %v7424 = vsel %vm2857, %v7402, 0
        %v7427 = vsel %vm2857, %v7403, 0
        %7429 = vmatprep.subr.mxu0 0.0
        %7430 = vmatpush1.msra.mxu0 0.0
        %7431 = vmatprep.subr.mxu0 0.0
        %7432 = vmatpush1.msra.mxu0 0.0
        %7433 = vmatprep.subr.mxu0 0.0
        %7434 = vmatpush1.msra.mxu0 0.0
        %7435 = vmatprep.subr.mxu0 0.0
        %7436 = vmatpush1.msra.mxu0 0.0
        %7437 = vmatprep.subr.mxu0 0.0
        %7438 = vmatpush1.msra.mxu0 0.0
        %7439 = vmatprep.subr.mxu0 0.0
        %7440 = vmatpush1.msra.mxu0 0.0
        %7441 = vmatprep.subr.mxu0 0.0
        %7442 = vmatpush1.msra.mxu0 0.0
        %7443 = vmatprep.subr.mxu0 0.0
        %7444 = vmatpush1.msra.mxu0 0.0
        %7445 = vmatprep.subr.mxu0 0.0
        %7446 = vmatpush1.msra.mxu0 0.0
        %7447 = vmatprep.subr.mxu0 0.0
        %7448 = vmatpush1.msra.mxu0 0.0
        %7449 = vmatprep.subr.mxu0 0.0
        %7450 = vmatpush1.msra.mxu0 0.0
        %7451 = vmatprep.subr.mxu0 0.0
        %7452 = vmatpush1.msra.mxu0 0.0
        %7453 = vmatprep.subr.mxu0 0.0
        %7454 = vmatpush1.msra.mxu0 0.0
        %7455 = vmatprep.subr.mxu0 0.0
        %7456 = vmatpush1.msra.mxu0 0.0
        %7457 = vmatprep.subr.mxu0 0.0
        %7458 = vmatpush1.msra.mxu0 %v7413
        %7459 = vmatprep.subr.mxu0 0.0
        %7460 = vmatpush1.msra.mxu0 %v7412
        %7461 = vmatprep.subr.mxu0 0.0
        %7462 = vmatpush2.msra.mxu0 0.0
        %7463 = vmatprep.subr.mxu0 0.0
        %7464 = vmatpush2.msra.mxu0 0.0
        %7465 = vmatprep.subr.mxu0 0.0
        %7466 = vmatpush2.msra.mxu0 0.0
        %7467 = vmatprep.subr.mxu0 0.0
        %7468 = vmatpush2.msra.mxu0 0.0
        %7469 = vmatprep.subr.mxu0 0.0
        %7470 = vmatpush2.msra.mxu0 0.0
        %7471 = vmatprep.subr.mxu0 0.0
        %7472 = vmatpush2.msra.mxu0 0.0
        %7473 = vmatprep.subr.mxu0 0.0
        %7474 = vmatpush2.msra.mxu0 0.0
        %7475 = vmatprep.subr.mxu0 0.0
        %7476 = vmatpush2.msra.mxu0 0.0
        %7477 = vmatprep.subr.mxu0 0.0
        %7478 = vmatpush2.msra.mxu0 0.0
        %7479 = vmatprep.subr.mxu0 0.0
        %7480 = vmatpush2.msra.mxu0 0.0
        %7481 = vmatprep.subr.mxu0 0.0
        %7482 = vmatpush2.msra.mxu0 0.0
        %7483 = vmatprep.subr.mxu0 0.0
        %7484 = vmatpush2.msra.mxu0 0.0
        %7485 = vmatprep.subr.mxu0 0.0
        %7486 = vmatpush2.msra.mxu0 0.0
        %7487 = vmatprep.subr.mxu0 0.0
        %7488 = vmatpush2.msra.mxu0 0.0
        %7489 = vmatprep.subr.mxu0 0.0
        %7490 = vmatpush2.msra.mxu0 0.0
        %7491 = vmatprep.subr.mxu0 0.0
        %7492 = vmatpush2.msra.mxu0 0.0
        %7493 = vmatprep.mubr.f32.mxu0 0.0
        %7494 = vmatmul.mubr.f32.gmra.mxu0 %v7415
        %v7495 = vpop.f32.mrf.mxu0
        %v7496 = vadd.f32 0.0, %v7495
        %v7497 = vpop.f32.mrf.mxu0
        %7498 = vmatprep.mubr.f32.mxu0 0.0
        %7499 = vmatmul.mubr.f32.gmra.mxu0 %v7418
        %v7500 = vpop.f32.mrf.mxu0
        %v7501 = vadd.f32 0.0, %v7500
        %v7502 = vpop.f32.mrf.mxu0
        %7503 = vmatprep.mubr.f32.mxu0 0.0
        %7504 = vmatmul.mubr.f32.gmra.mxu0 %v7421
        %v7505 = vpop.f32.mrf.mxu0
        %v7506 = vadd.f32 0.0, %v7505
        %v7507 = vpop.f32.mrf.mxu0
        %7508 = vmatprep.mubr.f32.mxu0 0.0
        %7509 = vmatmul.mubr.f32.gmra.mxu0 %v7424
        %v7510 = vpop.f32.mrf.mxu0
        %v7511 = vadd.f32 0.0, %v7510
        %v7512 = vpop.f32.mrf.mxu0
        %7513 = vmatprep.mubr.f32.mxu0 0.0
        %7514 = vmatmul.mubr.f32.gmra.mxu0 %v7427
        %v7515 = vpop.f32.mrf.mxu0
        %v7516 = vadd.f32 0.0, %v7515
        %v7517 = vpop.f32.mrf.mxu0
        %7518 = vdwg.mxu0
        %7524 = vrot.lane.b32.xlu0 %v7496, 2
        %v7525 = vpop.permute.xlu0 %7524
        %7526 = vrot.lane.b32.xlu0 %v7501, 2
        %v7527 = vpop.permute.xlu0 %7526
        %7528 = vrot.lane.b32.xlu0 %v7506, 2
        %v7529 = vpop.permute.xlu0 %7528
        %7530 = vrot.lane.b32.xlu0 %v7511, 2
        %v7531 = vpop.permute.xlu0 %7530
        %7532 = vrot.lane.b32.xlu0 %v7516, 2
        %v7533 = vpop.permute.xlu0 %7532
        %v7539 = vsel %vm572, 0.0, %v7525
        %v7540 = vsel %vm572, 0.0, %v7527
        %v7541 = vsel %vm572, 0.0, %v7529
        %v7542 = vsel %vm572, 0.0, %v7531
        %v7543 = vsel %vm572, 0.0, %v7533
        %v7544 = vsel %vm1757, %v7539, 0.0
        %v7545 = vsel %vm1757, %v7540, 0.0
        %v7546 = vsel %vm1757, %v7541, 0.0
        %v7547 = vsel %vm1757, %v7542, 0.0
        %v7548 = vsel %vm1757, %v7543, 0.0
        %7554 = vrot.lane.b32.xlu0 %v7544, 127
        %v7555 = vpop.permute.xlu0 %7554
        %7556 = vrot.lane.b32.xlu0 %v7545, 127
        %v7557 = vpop.permute.xlu0 %7556
        %7558 = vrot.lane.b32.xlu0 %v7546, 127
        %v7559 = vpop.permute.xlu0 %7558
        %7560 = vrot.lane.b32.xlu0 %v7547, 127
        %v7561 = vpop.permute.xlu0 %7560
        %7562 = vrot.lane.b32.xlu0 %v7548, 127
        %v7563 = vpop.permute.xlu0 %7562
        %7569 = vrot.lane.b32.xlu0 %v7544, 126
        %v7570 = vpop.permute.xlu0 %7569
        %7571 = vrot.lane.b32.xlu0 %v7545, 126
        %v7572 = vpop.permute.xlu0 %7571
        %7573 = vrot.lane.b32.xlu0 %v7546, 126
        %v7574 = vpop.permute.xlu0 %7573
        %7575 = vrot.lane.b32.xlu0 %v7547, 126
        %v7576 = vpop.permute.xlu0 %7575
        %7577 = vrot.lane.b32.xlu0 %v7548, 126
        %v7578 = vpop.permute.xlu0 %7577
        %7584 = vrot.lane.b32.xlu0 %v7544, 125
        %v7585 = vpop.permute.xlu0 %7584
        %7586 = vrot.lane.b32.xlu0 %v7545, 125
        %v7587 = vpop.permute.xlu0 %7586
        %7588 = vrot.lane.b32.xlu0 %v7546, 125
        %v7589 = vpop.permute.xlu0 %7588
        %7590 = vrot.lane.b32.xlu0 %v7547, 125
        %v7591 = vpop.permute.xlu0 %7590
        %7592 = vrot.lane.b32.xlu0 %v7548, 125
        %v7593 = vpop.permute.xlu0 %7592
        %7599 = vrot.lane.b32.xlu0 %v7544, 124
        %v7600 = vpop.permute.xlu0 %7599
        %7601 = vrot.lane.b32.xlu0 %v7545, 124
        %v7602 = vpop.permute.xlu0 %7601
        %7603 = vrot.lane.b32.xlu0 %v7546, 124
        %v7604 = vpop.permute.xlu0 %7603
        %7605 = vrot.lane.b32.xlu0 %v7547, 124
        %v7606 = vpop.permute.xlu0 %7605
        %7607 = vrot.lane.b32.xlu0 %v7548, 124
        %v7608 = vpop.permute.xlu0 %7607
        %s7614 = scalar_lea.vmem [#allocation5], 4992
        %v7615 = vld [vmem:[%s7614] sm:$0xff]
        %v7616 = vld [vmem:[%s7614 + $0x8] sm:$0xff]
        %v7617 = vld [vmem:[%s7614 + $0x18] sm:$0xff]
        %v7618 = vld [vmem:[%s7614 + $0x20] sm:$0xff]
        %v7619 = vld [vmem:[%s7614 + $0x30] sm:$0xff]
        %v7620 = vld [vmem:[%s7614 + $0x38] sm:$0xff]
        %v7621 = vld [vmem:[%s7614 + $0x48] sm:$0xff]
        %v7622 = vld [vmem:[%s7614 + $0x50] sm:$0xff]
        %v7624 = vsel %vm1484, %v7616, 0
        %v7627 = vsel %vm1484, %v7618, 0
        %v7630 = vsel %vm1484, %v7620, 0
        %v7633 = vsel %vm1484, %v7622, 0
        %7635 = vmatprep.subr.mxu0 0.0
        %7636 = vmatpush1.msra.mxu0 %v7585
        %7637 = vmatprep.subr.mxu0 0.0
        %7638 = vmatpush1.msra.mxu0 %v7578
        %7639 = vmatprep.subr.mxu0 0.0
        %7640 = vmatpush1.msra.mxu0 %v7576
        %7641 = vmatprep.subr.mxu0 0.0
        %7642 = vmatpush1.msra.mxu0 %v7574
        %7643 = vmatprep.subr.mxu0 0.0
        %7644 = vmatpush1.msra.mxu0 %v7572
        %7645 = vmatprep.subr.mxu0 0.0
        %7646 = vmatpush1.msra.mxu0 %v7570
        %7647 = vmatprep.subr.mxu0 0.0
        %7648 = vmatpush1.msra.mxu0 %v7563
        %7649 = vmatprep.subr.mxu0 0.0
        %7650 = vmatpush1.msra.mxu0 %v7561
        %7651 = vmatprep.subr.mxu0 0.0
        %7652 = vmatpush1.msra.mxu0 %v7559
        %7653 = vmatprep.subr.mxu0 0.0
        %7654 = vmatpush1.msra.mxu0 %v7557
        %7655 = vmatprep.subr.mxu0 0.0
        %7656 = vmatpush1.msra.mxu0 %v7555
        %7657 = vmatprep.subr.mxu0 0.0
        %7658 = vmatpush1.msra.mxu0 %v7548
        %7659 = vmatprep.subr.mxu0 0.0
        %7660 = vmatpush1.msra.mxu0 %v7547
        %7661 = vmatprep.subr.mxu0 0.0
        %7662 = vmatpush1.msra.mxu0 %v7546
        %7663 = vmatprep.subr.mxu0 0.0
        %7664 = vmatpush1.msra.mxu0 %v7545
        %7665 = vmatprep.subr.mxu0 0.0
        %7666 = vmatpush1.msra.mxu0 %v7544
        %7667 = vmatprep.subr.mxu0 0.0
        %7668 = vmatpush2.msra.mxu0 0.0
        %7669 = vmatprep.subr.mxu0 0.0
        %7670 = vmatpush2.msra.mxu0 0.0
        %7671 = vmatprep.subr.mxu0 0.0
        %7672 = vmatpush2.msra.mxu0 0.0
        %7673 = vmatprep.subr.mxu0 0.0
        %7674 = vmatpush2.msra.mxu0 0.0
        %7675 = vmatprep.subr.mxu0 0.0
        %7676 = vmatpush2.msra.mxu0 0.0
        %7677 = vmatprep.subr.mxu0 0.0
        %7678 = vmatpush2.msra.mxu0 0.0
        %7679 = vmatprep.subr.mxu0 0.0
        %7680 = vmatpush2.msra.mxu0 %v475
        %7681 = vmatprep.subr.mxu0 0.0
        %7682 = vmatpush2.msra.mxu0 %v7608
        %7683 = vmatprep.subr.mxu0 0.0
        %7684 = vmatpush2.msra.mxu0 %v7606
        %7685 = vmatprep.subr.mxu0 0.0
        %7686 = vmatpush2.msra.mxu0 %v7604
        %7687 = vmatprep.subr.mxu0 0.0
        %7688 = vmatpush2.msra.mxu0 %v7602
        %7689 = vmatprep.subr.mxu0 0.0
        %7690 = vmatpush2.msra.mxu0 %v7600
        %7691 = vmatprep.subr.mxu0 0.0
        %7692 = vmatpush2.msra.mxu0 %v7593
        %7693 = vmatprep.subr.mxu0 0.0
        %7694 = vmatpush2.msra.mxu0 %v7591
        %7695 = vmatprep.subr.mxu0 0.0
        %7696 = vmatpush2.msra.mxu0 %v7589
        %7697 = vmatprep.subr.mxu0 0.0
        %7698 = vmatpush2.msra.mxu0 %v7587
        %7699 = vmatprep.mubr.f32.mxu0 %v7624
        %7700 = vmatmul.mubr.f32.gmra.mxu0 %v7615
        %v7701 = vpop.f32.mrf.mxu0
        %v7702 = vadd.f32 0.0, %v7701
        %v7703 = vpop.f32.mrf.mxu0
        %7704 = vmatprep.mubr.f32.mxu0 %v7627
        %7705 = vmatmul.mubr.f32.gmra.mxu0 %v7617
        %v7706 = vpop.f32.mrf.mxu0
        %v7707 = vadd.f32 0.0, %v7706
        %v7708 = vpop.f32.mrf.mxu0
        %7709 = vmatprep.mubr.f32.mxu0 %v7630
        %7710 = vmatmul.mubr.f32.gmra.mxu0 %v7619
        %v7711 = vpop.f32.mrf.mxu0
        %v7712 = vadd.f32 0.0, %v7711
        %v7713 = vpop.f32.mrf.mxu0
        %7714 = vmatprep.mubr.f32.mxu0 %v7633
        %7715 = vmatmul.mubr.f32.gmra.mxu0 %v7621
        %v7716 = vpop.f32.mrf.mxu0
        %v7717 = vadd.f32 0.0, %v7716
        %v7718 = vpop.f32.mrf.mxu0
        %7719 = vdwg.mxu0
        %v7720 = vmax.f32 %v7702, 0.0
        %v7721 = vmax.f32 %v7707, 0.0
        %v7722 = vmax.f32 %v7712, 0.0
        %v7723 = vmax.f32 %v7717, 0.0
        %7728 = vrot.lane.b32.xlu0 %v7720, 2
        %v7729 = vpop.permute.xlu0 %7728
        %7730 = vrot.lane.b32.xlu0 %v7721, 2
        %v7731 = vpop.permute.xlu0 %7730
        %7732 = vrot.lane.b32.xlu0 %v7722, 2
        %v7733 = vpop.permute.xlu0 %7732
        %7734 = vrot.lane.b32.xlu0 %v7723, 2
        %v7735 = vpop.permute.xlu0 %7734
        %v7740 = vsel %vm572, 0.0, %v7729
        %v7741 = vsel %vm572, 0.0, %v7731
        %v7742 = vsel %vm572, 0.0, %v7733
        %v7743 = vsel %vm572, 0.0, %v7735
        %v7744 = vsel %vm1757, %v7740, 0.0
        %v7745 = vsel %vm1757, %v7741, 0.0
        %v7746 = vsel %vm1757, %v7742, 0.0
        %v7747 = vsel %vm1757, %v7743, 0.0
        %7752 = vrot.lane.b32.xlu0 %v7744, 127
        %v7753 = vpop.permute.xlu0 %7752
        %7754 = vrot.lane.b32.xlu0 %v7745, 127
        %v7755 = vpop.permute.xlu0 %7754
        %7756 = vrot.lane.b32.xlu0 %v7746, 127
        %v7757 = vpop.permute.xlu0 %7756
        %7758 = vrot.lane.b32.xlu0 %v7747, 127
        %v7759 = vpop.permute.xlu0 %7758
        %7764 = vrot.lane.b32.xlu0 %v7744, 126
        %v7765 = vpop.permute.xlu0 %7764
        %7766 = vrot.lane.b32.xlu0 %v7745, 126
        %v7767 = vpop.permute.xlu0 %7766
        %7768 = vrot.lane.b32.xlu0 %v7746, 126
        %v7769 = vpop.permute.xlu0 %7768
        %7770 = vrot.lane.b32.xlu0 %v7747, 126
        %v7771 = vpop.permute.xlu0 %7770
        %7776 = vrot.lane.b32.xlu0 %v7744, 125
        %v7777 = vpop.permute.xlu0 %7776
        %7778 = vrot.lane.b32.xlu0 %v7745, 125
        %v7779 = vpop.permute.xlu0 %7778
        %7780 = vrot.lane.b32.xlu0 %v7746, 125
        %v7781 = vpop.permute.xlu0 %7780
        %7782 = vrot.lane.b32.xlu0 %v7747, 125
        %v7783 = vpop.permute.xlu0 %7782
        %7788 = vrot.lane.b32.xlu0 %v7744, 124
        %v7789 = vpop.permute.xlu0 %7788
        %7790 = vrot.lane.b32.xlu0 %v7745, 124
        %v7791 = vpop.permute.xlu0 %7790
        %7792 = vrot.lane.b32.xlu0 %v7746, 124
        %v7793 = vpop.permute.xlu0 %7792
        %7794 = vrot.lane.b32.xlu0 %v7747, 124
        %v7795 = vpop.permute.xlu0 %7794
        %s7800 = scalar_lea.vmem [#allocation5], 5184
        %v7801 = vld [vmem:[%s7800] sm:$0xff]
        %v7802 = vld [vmem:[%s7800 + $0x8] sm:$0xff]
        %v7803 = vld [vmem:[%s7800 + $0x18] sm:$0xff]
        %v7804 = vld [vmem:[%s7800 + $0x20] sm:$0xff]
        %v7805 = vld [vmem:[%s7800 + $0x30] sm:$0xff]
        %v7806 = vld [vmem:[%s7800 + $0x38] sm:$0xff]
        %v7807 = vld [vmem:[%s7800 + $0x48] sm:$0xff]
        %v7808 = vld [vmem:[%s7800 + $0x50] sm:$0xff]
        %v7810 = vsel %vm901, %v7802, 0
        %v7813 = vsel %vm901, %v7804, 0
        %v7816 = vsel %vm901, %v7806, 0
        %v7819 = vsel %vm901, %v7808, 0
        %7821 = vmatprep.subr.mxu0 0.0
        %7822 = vmatpush1.msra.mxu0 %v7783
        %7823 = vmatprep.subr.mxu0 0.0
        %7824 = vmatpush1.msra.mxu0 %v7781
        %7825 = vmatprep.subr.mxu0 0.0
        %7826 = vmatpush1.msra.mxu0 %v7779
        %7827 = vmatprep.subr.mxu0 0.0
        %7828 = vmatpush1.msra.mxu0 %v7777
        %7829 = vmatprep.subr.mxu0 0.0
        %7830 = vmatpush1.msra.mxu0 %v7771
        %7831 = vmatprep.subr.mxu0 0.0
        %7832 = vmatpush1.msra.mxu0 %v7769
        %7833 = vmatprep.subr.mxu0 0.0
        %7834 = vmatpush1.msra.mxu0 %v7767
        %7835 = vmatprep.subr.mxu0 0.0
        %7836 = vmatpush1.msra.mxu0 %v7765
        %7837 = vmatprep.subr.mxu0 0.0
        %7838 = vmatpush1.msra.mxu0 %v7759
        %7839 = vmatprep.subr.mxu0 0.0
        %7840 = vmatpush1.msra.mxu0 %v7757
        %7841 = vmatprep.subr.mxu0 0.0
        %7842 = vmatpush1.msra.mxu0 %v7755
        %7843 = vmatprep.subr.mxu0 0.0
        %7844 = vmatpush1.msra.mxu0 %v7753
        %7845 = vmatprep.subr.mxu0 0.0
        %7846 = vmatpush1.msra.mxu0 %v7747
        %7847 = vmatprep.subr.mxu0 0.0
        %7848 = vmatpush1.msra.mxu0 %v7746
        %7849 = vmatprep.subr.mxu0 0.0
        %7850 = vmatpush1.msra.mxu0 %v7745
        %7851 = vmatprep.subr.mxu0 0.0
        %7852 = vmatpush1.msra.mxu0 %v7744
        %7853 = vmatprep.subr.mxu0 0.0
        %7854 = vmatpush2.msra.mxu0 0.0
        %7855 = vmatprep.subr.mxu0 0.0
        %7856 = vmatpush2.msra.mxu0 0.0
        %7857 = vmatprep.subr.mxu0 0.0
        %7858 = vmatpush2.msra.mxu0 0.0
        %7859 = vmatprep.subr.mxu0 0.0
        %7860 = vmatpush2.msra.mxu0 0.0
        %7861 = vmatprep.subr.mxu0 0.0
        %7862 = vmatpush2.msra.mxu0 0.0
        %7863 = vmatprep.subr.mxu0 0.0
        %7864 = vmatpush2.msra.mxu0 0.0
        %7865 = vmatprep.subr.mxu0 0.0
        %7866 = vmatpush2.msra.mxu0 0.0
        %7867 = vmatprep.subr.mxu0 0.0
        %7868 = vmatpush2.msra.mxu0 0.0
        %7869 = vmatprep.subr.mxu0 0.0
        %7870 = vmatpush2.msra.mxu0 0.0
        %7871 = vmatprep.subr.mxu0 0.0
        %7872 = vmatpush2.msra.mxu0 0.0
        %7873 = vmatprep.subr.mxu0 0.0
        %7874 = vmatpush2.msra.mxu0 0.0
        %7875 = vmatprep.subr.mxu0 0.0
        %7876 = vmatpush2.msra.mxu0 %v475
        %7877 = vmatprep.subr.mxu0 0.0
        %7878 = vmatpush2.msra.mxu0 %v7795
        %7879 = vmatprep.subr.mxu0 0.0
        %7880 = vmatpush2.msra.mxu0 %v7793
        %7881 = vmatprep.subr.mxu0 0.0
        %7882 = vmatpush2.msra.mxu0 %v7791
        %7883 = vmatprep.subr.mxu0 0.0
        %7884 = vmatpush2.msra.mxu0 %v7789
        %7885 = vmatprep.mubr.f32.mxu0 %v7810
        %7886 = vmatmul.mubr.f32.gmra.mxu0 %v7801
        %v7887 = vpop.f32.mrf.mxu0
        %v7888 = vadd.f32 0.0, %v7887
        %v7889 = vpop.f32.mrf.mxu0
        %7890 = vmatprep.mubr.f32.mxu0 %v7813
        %7891 = vmatmul.mubr.f32.gmra.mxu0 %v7803
        %v7892 = vpop.f32.mrf.mxu0
        %v7893 = vadd.f32 0.0, %v7892
        %v7894 = vpop.f32.mrf.mxu0
        %7895 = vmatprep.mubr.f32.mxu0 %v7816
        %7896 = vmatmul.mubr.f32.gmra.mxu0 %v7805
        %v7897 = vpop.f32.mrf.mxu0
        %v7898 = vadd.f32 0.0, %v7897
        %v7899 = vpop.f32.mrf.mxu0
        %7900 = vmatprep.mubr.f32.mxu0 %v7819
        %7901 = vmatmul.mubr.f32.gmra.mxu0 %v7807
        %v7902 = vpop.f32.mrf.mxu0
        %v7903 = vadd.f32 0.0, %v7902
        %v7904 = vpop.f32.mrf.mxu0
        %7905 = vdwg.mxu0
        %v7906 = vmax.f32 %v7888, 0.0
        %v7907 = vmax.f32 %v7893, 0.0
        %v7908 = vmax.f32 %v7898, 0.0
        %v7909 = vmax.f32 %v7903, 0.0
        %7914 = vrot.lane.b32.xlu0 %v7906, 1
        %v7915 = vpop.permute.xlu0 %7914
        %7916 = vrot.lane.b32.xlu0 %v7907, 1
        %v7917 = vpop.permute.xlu0 %7916
        %7918 = vrot.lane.b32.xlu0 %v7908, 1
        %v7919 = vpop.permute.xlu0 %7918
        %7920 = vrot.lane.b32.xlu0 %v7909, 1
        %v7921 = vpop.permute.xlu0 %7920
        %v7926 = vsel %vm2381, 0.0, %v7915
        %v7927 = vsel %vm2381, 0.0, %v7917
        %v7928 = vsel %vm2381, 0.0, %v7919
        %v7929 = vsel %vm2381, 0.0, %v7921
        %v7930 = vsel %vm901, %v7926, 0.0
        %v7931 = vsel %vm901, %v7927, 0.0
        %v7932 = vsel %vm901, %v7928, 0.0
        %v7933 = vsel %vm901, %v7929, 0.0
        %7938 = vrot.lane.b32.xlu0 %v7930, 127
        %v7939 = vpop.permute.xlu0 %7938
        %7940 = vrot.lane.b32.xlu0 %v7931, 127
        %v7941 = vpop.permute.xlu0 %7940
        %7942 = vrot.lane.b32.xlu0 %v7932, 127
        %v7943 = vpop.permute.xlu0 %7942
        %7944 = vrot.lane.b32.xlu0 %v7933, 127
        %v7945 = vpop.permute.xlu0 %7944
        %7950 = vrot.lane.b32.xlu0 %v7930, 126
        %v7951 = vpop.permute.xlu0 %7950
        %7952 = vrot.lane.b32.xlu0 %v7931, 126
        %v7953 = vpop.permute.xlu0 %7952
        %7954 = vrot.lane.b32.xlu0 %v7932, 126
        %v7955 = vpop.permute.xlu0 %7954
        %7956 = vrot.lane.b32.xlu0 %v7933, 126
        %v7957 = vpop.permute.xlu0 %7956
        %s7962 = scalar_lea.vmem [#allocation5], 5376
        %v7963 = vld [vmem:[%s7962] sm:$0xff]
        %v7964 = vld [vmem:[%s7962 + $0x18] sm:$0xff]
        %v7965 = vld [vmem:[%s7962 + $0x30] sm:$0xff]
        %v7966 = vld [vmem:[%s7962 + $0x48] sm:$0xff]
        %vm7967 = vcmask 793600
        %v7969 = vsel %vm7967, %v7963, 0
        %v7972 = vsel %vm7967, %v7964, 0
        %v7975 = vsel %vm7967, %v7965, 0
        %v7978 = vsel %vm7967, %v7966, 0
        %7980 = vmatprep.subr.mxu0 0.0
        %7981 = vmatpush1.msra.mxu0 0.0
        %7982 = vmatprep.subr.mxu0 0.0
        %7983 = vmatpush1.msra.mxu0 0.0
        %7984 = vmatprep.subr.mxu0 0.0
        %7985 = vmatpush1.msra.mxu0 0.0
        %7986 = vmatprep.subr.mxu0 0.0
        %7987 = vmatpush1.msra.mxu0 %v475
        %7988 = vmatprep.subr.mxu0 0.0
        %7989 = vmatpush1.msra.mxu0 %v7957
        %7990 = vmatprep.subr.mxu0 0.0
        %7991 = vmatpush1.msra.mxu0 %v7955
        %7992 = vmatprep.subr.mxu0 0.0
        %7993 = vmatpush1.msra.mxu0 %v7953
        %7994 = vmatprep.subr.mxu0 0.0
        %7995 = vmatpush1.msra.mxu0 %v7951
        %7996 = vmatprep.subr.mxu0 0.0
        %7997 = vmatpush1.msra.mxu0 %v7945
        %7998 = vmatprep.subr.mxu0 0.0
        %7999 = vmatpush1.msra.mxu0 %v7943
        %8000 = vmatprep.subr.mxu0 0.0
        %8001 = vmatpush1.msra.mxu0 %v7941
        %8002 = vmatprep.subr.mxu0 0.0
        %8003 = vmatpush1.msra.mxu0 %v7939
        %8004 = vmatprep.subr.mxu0 0.0
        %8005 = vmatpush1.msra.mxu0 %v7933
        %8006 = vmatprep.subr.mxu0 0.0
        %8007 = vmatpush1.msra.mxu0 %v7932
        %8008 = vmatprep.subr.mxu0 0.0
        %8009 = vmatpush1.msra.mxu0 %v7931
        %8010 = vmatprep.subr.mxu0 0.0
        %8011 = vmatpush1.msra.mxu0 %v7930
        %8012 = vmatprep.subr.mxu0 0.0
        %8013 = vmatpush2.msra.mxu0 0.0
        %8014 = vmatprep.subr.mxu0 0.0
        %8015 = vmatpush2.msra.mxu0 0.0
        %8016 = vmatprep.subr.mxu0 0.0
        %8017 = vmatpush2.msra.mxu0 0.0
        %8018 = vmatprep.subr.mxu0 0.0
        %8019 = vmatpush2.msra.mxu0 0.0
        %8020 = vmatprep.subr.mxu0 0.0
        %8021 = vmatpush2.msra.mxu0 0.0
        %8022 = vmatprep.subr.mxu0 0.0
        %8023 = vmatpush2.msra.mxu0 0.0
        %8024 = vmatprep.subr.mxu0 0.0
        %8025 = vmatpush2.msra.mxu0 0.0
        %8026 = vmatprep.subr.mxu0 0.0
        %8027 = vmatpush2.msra.mxu0 0.0
        %8028 = vmatprep.subr.mxu0 0.0
        %8029 = vmatpush2.msra.mxu0 0.0
        %8030 = vmatprep.subr.mxu0 0.0
        %8031 = vmatpush2.msra.mxu0 0.0
        %8032 = vmatprep.subr.mxu0 0.0
        %8033 = vmatpush2.msra.mxu0 0.0
        %8034 = vmatprep.subr.mxu0 0.0
        %8035 = vmatpush2.msra.mxu0 0.0
        %8036 = vmatprep.subr.mxu0 0.0
        %8037 = vmatpush2.msra.mxu0 0.0
        %8038 = vmatprep.subr.mxu0 0.0
        %8039 = vmatpush2.msra.mxu0 0.0
        %8040 = vmatprep.subr.mxu0 0.0
        %8041 = vmatpush2.msra.mxu0 0.0
        %8042 = vmatprep.subr.mxu0 0.0
        %8043 = vmatpush2.msra.mxu0 0.0
        %8044 = vmatprep.mubr.f32.mxu0 0.0
        %8045 = vmatmul.mubr.f32.gmra.mxu0 %v7969
        %v8046 = vpop.f32.mrf.mxu0
        %v8047 = vadd.f32 0.0, %v8046
        %v8048 = vpop.f32.mrf.mxu0
        %8049 = vmatprep.mubr.f32.mxu0 0.0
        %8050 = vmatmul.mubr.f32.gmra.mxu0 %v7972
        %v8051 = vpop.f32.mrf.mxu0
        %v8052 = vadd.f32 0.0, %v8051
        %v8053 = vpop.f32.mrf.mxu0
        %8054 = vmatprep.mubr.f32.mxu0 0.0
        %8055 = vmatmul.mubr.f32.gmra.mxu0 %v7975
        %v8056 = vpop.f32.mrf.mxu0
        %v8057 = vadd.f32 0.0, %v8056
        %v8058 = vpop.f32.mrf.mxu0
        %8059 = vmatprep.mubr.f32.mxu0 0.0
        %8060 = vmatmul.mubr.f32.gmra.mxu0 %v7978
        %v8061 = vpop.f32.mrf.mxu0
        %v8062 = vadd.f32 0.0, %v8061
        %v8063 = vpop.f32.mrf.mxu0
        %8064 = vdwg.mxu0
        %v8065 = vmax.f32 %v8047, 0.0
        %v8066 = vmax.f32 %v8052, 0.0
        %v8067 = vmax.f32 %v8057, 0.0
        %v8068 = vmax.f32 %v8062, 0.0
        %8073 = vrot.lane.b32.xlu0 %v8065, 1
        %v8074 = vpop.permute.xlu0 %8073
        %8075 = vrot.lane.b32.xlu0 %v8066, 1
        %v8076 = vpop.permute.xlu0 %8075
        %8077 = vrot.lane.b32.xlu0 %v8067, 1
        %v8078 = vpop.permute.xlu0 %8077
        %8079 = vrot.lane.b32.xlu0 %v8068, 1
        %v8080 = vpop.permute.xlu0 %8079
        %v8085 = vsel %vm2381, 0.0, %v8074
        %v8086 = vsel %vm2381, 0.0, %v8076
        %v8087 = vsel %vm2381, 0.0, %v8078
        %v8088 = vsel %vm2381, 0.0, %v8080
        %v8089 = vsel %vm901, %v8085, 0.0
        %v8090 = vsel %vm901, %v8086, 0.0
        %v8091 = vsel %vm901, %v8087, 0.0
        %v8092 = vsel %vm901, %v8088, 0.0
        %8097 = vrot.lane.b32.xlu0 %v8089, 127
        %v8098 = vpop.permute.xlu0 %8097
        %8099 = vrot.lane.b32.xlu0 %v8090, 127
        %v8100 = vpop.permute.xlu0 %8099
        %8101 = vrot.lane.b32.xlu0 %v8091, 127
        %v8102 = vpop.permute.xlu0 %8101
        %8103 = vrot.lane.b32.xlu0 %v8092, 127
        %v8104 = vpop.permute.xlu0 %8103
        %8109 = vrot.lane.b32.xlu0 %v8089, 126
        %v8110 = vpop.permute.xlu0 %8109
        %8111 = vrot.lane.b32.xlu0 %v8090, 126
        %v8112 = vpop.permute.xlu0 %8111
        %8113 = vrot.lane.b32.xlu0 %v8091, 126
        %v8114 = vpop.permute.xlu0 %8113
        %8115 = vrot.lane.b32.xlu0 %v8092, 126
        %v8116 = vpop.permute.xlu0 %8115
        %s8121 = scalar_lea.vmem [#allocation5], 5568
        %v8122 = vld [vmem:[%s8121] sm:$0xff]
        %v8123 = vld [vmem:[%s8121 + $0x18] sm:$0xff]
        %v8124 = vld [vmem:[%s8121 + $0x30] sm:$0xff]
        %v8125 = vld [vmem:[%s8121 + $0x48] sm:$0xff]
        %v8127 = vsel %vm7967, %v8122, 0
        %v8130 = vsel %vm7967, %v8123, 0
        %v8133 = vsel %vm7967, %v8124, 0
        %v8136 = vsel %vm7967, %v8125, 0
        %8138 = vmatprep.subr.mxu0 0.0
        %8139 = vmatpush1.msra.mxu0 0.0
        %8140 = vmatprep.subr.mxu0 0.0
        %8141 = vmatpush1.msra.mxu0 0.0
        %8142 = vmatprep.subr.mxu0 0.0
        %8143 = vmatpush1.msra.mxu0 0.0
        %8144 = vmatprep.subr.mxu0 0.0
        %8145 = vmatpush1.msra.mxu0 %v475
        %8146 = vmatprep.subr.mxu0 0.0
        %8147 = vmatpush1.msra.mxu0 %v8116
        %8148 = vmatprep.subr.mxu0 0.0
        %8149 = vmatpush1.msra.mxu0 %v8114
        %8150 = vmatprep.subr.mxu0 0.0
        %8151 = vmatpush1.msra.mxu0 %v8112
        %8152 = vmatprep.subr.mxu0 0.0
        %8153 = vmatpush1.msra.mxu0 %v8110
        %8154 = vmatprep.subr.mxu0 0.0
        %8155 = vmatpush1.msra.mxu0 %v8104
        %8156 = vmatprep.subr.mxu0 0.0
        %8157 = vmatpush1.msra.mxu0 %v8102
        %8158 = vmatprep.subr.mxu0 0.0
        %8159 = vmatpush1.msra.mxu0 %v8100
        %8160 = vmatprep.subr.mxu0 0.0
        %8161 = vmatpush1.msra.mxu0 %v8098
        %8162 = vmatprep.subr.mxu0 0.0
        %8163 = vmatpush1.msra.mxu0 %v8092
        %8164 = vmatprep.subr.mxu0 0.0
        %8165 = vmatpush1.msra.mxu0 %v8091
        %8166 = vmatprep.subr.mxu0 0.0
        %8167 = vmatpush1.msra.mxu0 %v8090
        %8168 = vmatprep.subr.mxu0 0.0
        %8169 = vmatpush1.msra.mxu0 %v8089
        %8170 = vmatprep.subr.mxu0 0.0
        %8171 = vmatpush2.msra.mxu0 0.0
        %8172 = vmatprep.subr.mxu0 0.0
        %8173 = vmatpush2.msra.mxu0 0.0
        %8174 = vmatprep.subr.mxu0 0.0
        %8175 = vmatpush2.msra.mxu0 0.0
        %8176 = vmatprep.subr.mxu0 0.0
        %8177 = vmatpush2.msra.mxu0 0.0
        %8178 = vmatprep.subr.mxu0 0.0
        %8179 = vmatpush2.msra.mxu0 0.0
        %8180 = vmatprep.subr.mxu0 0.0
        %8181 = vmatpush2.msra.mxu0 0.0
        %8182 = vmatprep.subr.mxu0 0.0
        %8183 = vmatpush2.msra.mxu0 0.0
        %8184 = vmatprep.subr.mxu0 0.0
        %8185 = vmatpush2.msra.mxu0 0.0
        %8186 = vmatprep.subr.mxu0 0.0
        %8187 = vmatpush2.msra.mxu0 0.0
        %8188 = vmatprep.subr.mxu0 0.0
        %8189 = vmatpush2.msra.mxu0 0.0
        %8190 = vmatprep.subr.mxu0 0.0
        %8191 = vmatpush2.msra.mxu0 0.0
        %8192 = vmatprep.subr.mxu0 0.0
        %8193 = vmatpush2.msra.mxu0 0.0
        %8194 = vmatprep.subr.mxu0 0.0
        %8195 = vmatpush2.msra.mxu0 0.0
        %8196 = vmatprep.subr.mxu0 0.0
        %8197 = vmatpush2.msra.mxu0 0.0
        %8198 = vmatprep.subr.mxu0 0.0
        %8199 = vmatpush2.msra.mxu0 0.0
        %8200 = vmatprep.subr.mxu0 0.0
        %8201 = vmatpush2.msra.mxu0 0.0
        %8202 = vmatprep.mubr.f32.mxu0 0.0
        %8203 = vmatmul.mubr.f32.gmra.mxu0 %v8127
        %v8204 = vpop.f32.mrf.mxu0
        %v8205 = vadd.f32 0.0, %v8204
        %v8206 = vpop.f32.mrf.mxu0
        %8207 = vmatprep.mubr.f32.mxu0 0.0
        %8208 = vmatmul.mubr.f32.gmra.mxu0 %v8130
        %v8209 = vpop.f32.mrf.mxu0
        %v8210 = vadd.f32 0.0, %v8209
        %v8211 = vpop.f32.mrf.mxu0
        %8212 = vmatprep.mubr.f32.mxu0 0.0
        %8213 = vmatmul.mubr.f32.gmra.mxu0 %v8133
        %v8214 = vpop.f32.mrf.mxu0
        %v8215 = vadd.f32 0.0, %v8214
        %v8216 = vpop.f32.mrf.mxu0
        %8217 = vmatprep.mubr.f32.mxu0 0.0
        %8218 = vmatmul.mubr.f32.gmra.mxu0 %v8136
        %v8219 = vpop.f32.mrf.mxu0
        %v8220 = vadd.f32 0.0, %v8219
        %v8221 = vpop.f32.mrf.mxu0
        %8222 = vdwg.mxu0
        %v8223 = vmax.f32 %v8205, 0.0
        %v8224 = vmax.f32 %v8210, 0.0
        %v8225 = vmax.f32 %v8215, 0.0
        %v8226 = vmax.f32 %v8220, 0.0
        %v8227 = vcvt.s32.f32 %v1030
        %v8228 = vcvt.s32.f32 %v1031
        %v8229 = vmin.f32 %v4579, 31.0
        %vm8230 = vcmp.eq.f32.partialorder %v8227, %v4578
        %vm8231 = vcmp.eq.f32.partialorder %v8228, %v4578
        %v8232 = vsel %vm8230, %v4583, 0.0
        %v8233 = vsel %vm8231, %v4583, 0.0
        %vm8234 = vcmp.eq.f32.partialorder %v4573, %v8229
        %vm8235 = vcmp.eq.f32.partialorder %v7404, %v8229
        %vm8236 = vcmp.eq.f32.partialorder %v8227, %v8229
        %vm8237 = vcmp.eq.f32.partialorder %v8228, %v8229
        %v8238 = vsel %vm8234, %v4581, 0.0
        %v8239 = vsel %vm8235, %v4581, 0.0
        %v8240 = vsel %vm8236, %v4581, 0.0
        %v8241 = vsel %vm8237, %v4581, 0.0
        %v8242 = vadd.f32 %v4584, %v8238
        %v8243 = vadd.f32 %v7407, %v8239
        %v8244 = vadd.f32 %v8232, %v8240
        %v8245 = vadd.f32 %v8233, %v8241
        %v8247 = vsel %vm2243, %v8223, 0
        %v8250 = vsel %vm2243, %v8224, 0
        %v8253 = vsel %vm2243, %v8225, 0
        %v8256 = vsel %vm2243, %v8226, 0
        %8258 = vmatprep.subr.mxu0 0.0
        %8259 = vmatpush1.msra.mxu0 0.0
        %8260 = vmatprep.subr.mxu0 0.0
        %8261 = vmatpush1.msra.mxu0 0.0
        %8262 = vmatprep.subr.mxu0 0.0
        %8263 = vmatpush1.msra.mxu0 0.0
        %8264 = vmatprep.subr.mxu0 0.0
        %8265 = vmatpush1.msra.mxu0 0.0
        %8266 = vmatprep.subr.mxu0 0.0
        %8267 = vmatpush1.msra.mxu0 0.0
        %8268 = vmatprep.subr.mxu0 0.0
        %8269 = vmatpush1.msra.mxu0 0.0
        %8270 = vmatprep.subr.mxu0 0.0
        %8271 = vmatpush1.msra.mxu0 0.0
        %8272 = vmatprep.subr.mxu0 0.0
        %8273 = vmatpush1.msra.mxu0 0.0
        %8274 = vmatprep.subr.mxu0 0.0
        %8275 = vmatpush1.msra.mxu0 0.0
        %8276 = vmatprep.subr.mxu0 0.0
        %8277 = vmatpush1.msra.mxu0 0.0
        %8278 = vmatprep.subr.mxu0 0.0
        %8279 = vmatpush1.msra.mxu0 0.0
        %8280 = vmatprep.subr.mxu0 0.0
        %8281 = vmatpush1.msra.mxu0 0.0
        %8282 = vmatprep.subr.mxu0 0.0
        %8283 = vmatpush1.msra.mxu0 %v8245
        %8284 = vmatprep.subr.mxu0 0.0
        %8285 = vmatpush1.msra.mxu0 %v8244
        %8286 = vmatprep.subr.mxu0 0.0
        %8287 = vmatpush1.msra.mxu0 %v8243
        %8288 = vmatprep.subr.mxu0 0.0
        %8289 = vmatpush1.msra.mxu0 %v8242
        %8290 = vmatprep.subr.mxu0 0.0
        %8291 = vmatpush2.msra.mxu0 0.0
        %8292 = vmatprep.subr.mxu0 0.0
        %8293 = vmatpush2.msra.mxu0 0.0
        %8294 = vmatprep.subr.mxu0 0.0
        %8295 = vmatpush2.msra.mxu0 0.0
        %8296 = vmatprep.subr.mxu0 0.0
        %8297 = vmatpush2.msra.mxu0 0.0
        %8298 = vmatprep.subr.mxu0 0.0
        %8299 = vmatpush2.msra.mxu0 0.0
        %8300 = vmatprep.subr.mxu0 0.0
        %8301 = vmatpush2.msra.mxu0 0.0
        %8302 = vmatprep.subr.mxu0 0.0
        %8303 = vmatpush2.msra.mxu0 0.0
        %8304 = vmatprep.subr.mxu0 0.0
        %8305 = vmatpush2.msra.mxu0 0.0
        %8306 = vmatprep.subr.mxu0 0.0
        %8307 = vmatpush2.msra.mxu0 0.0
        %8308 = vmatprep.subr.mxu0 0.0
        %8309 = vmatpush2.msra.mxu0 0.0
        %8310 = vmatprep.subr.mxu0 0.0
        %8311 = vmatpush2.msra.mxu0 0.0
        %8312 = vmatprep.subr.mxu0 0.0
        %8313 = vmatpush2.msra.mxu0 0.0
        %8314 = vmatprep.subr.mxu0 0.0
        %8315 = vmatpush2.msra.mxu0 0.0
        %8316 = vmatprep.subr.mxu0 0.0
        %8317 = vmatpush2.msra.mxu0 0.0
        %8318 = vmatprep.subr.mxu0 0.0
        %8319 = vmatpush2.msra.mxu0 0.0
        %8320 = vmatprep.subr.mxu0 0.0
        %8321 = vmatpush2.msra.mxu0 0.0
        %8322 = vmatprep.mubr.f32.mxu0 0.0
        %8323 = vmatmul.mubr.f32.gmra.mxu0 %v8247
        %v8324 = vpop.f32.mrf.mxu0
        %v8325 = vadd.f32 0.0, %v8324
        %v8326 = vpop.f32.mrf.mxu0
        %8327 = vmatprep.mubr.f32.mxu0 0.0
        %8328 = vmatmul.mubr.f32.gmra.mxu0 %v8250
        %v8329 = vpop.f32.mrf.mxu0
        %v8330 = vadd.f32 0.0, %v8329
        %v8331 = vpop.f32.mrf.mxu0
        %8332 = vmatprep.mubr.f32.mxu0 0.0
        %8333 = vmatmul.mubr.f32.gmra.mxu0 %v8253
        %v8334 = vpop.f32.mrf.mxu0
        %v8335 = vadd.f32 0.0, %v8334
        %v8336 = vpop.f32.mrf.mxu0
        %8337 = vmatprep.mubr.f32.mxu0 0.0
        %8338 = vmatmul.mubr.f32.gmra.mxu0 %v8256
        %v8339 = vpop.f32.mrf.mxu0
        %v8340 = vadd.f32 0.0, %v8339
        %v8341 = vpop.f32.mrf.mxu0
        %8342 = vdwg.mxu0
        %8347 = vrot.lane.b32.xlu0 %v8325, 3
        %v8348 = vpop.permute.xlu0 %8347
        %8349 = vrot.lane.b32.xlu0 %v8330, 3
        %v8350 = vpop.permute.xlu0 %8349
        %8351 = vrot.lane.b32.xlu0 %v8335, 3
        %v8352 = vpop.permute.xlu0 %8351
        %8353 = vrot.lane.b32.xlu0 %v8340, 3
        %v8354 = vpop.permute.xlu0 %8353
        %v8359 = vsel %vm219, 0.0, %v8348
        %v8360 = vsel %vm219, 0.0, %v8350
        %v8361 = vsel %vm219, 0.0, %v8352
        %v8362 = vsel %vm219, 0.0, %v8354
        %vm8363 = vcmask 547840
        %v8364 = vsel %vm8363, %v8359, 0.0
        %v8365 = vsel %vm8363, %v8360, 0.0
        %v8366 = vsel %vm8363, %v8361, 0.0
        %v8367 = vsel %vm8363, %v8362, 0.0
        %8372 = vrot.lane.b32.xlu0 %v8364, 127
        %v8373 = vpop.permute.xlu0 %8372
        %8374 = vrot.lane.b32.xlu0 %v8365, 127
        %v8375 = vpop.permute.xlu0 %8374
        %8376 = vrot.lane.b32.xlu0 %v8366, 127
        %v8377 = vpop.permute.xlu0 %8376
        %8378 = vrot.lane.b32.xlu0 %v8367, 127
        %v8379 = vpop.permute.xlu0 %8378
        %8384 = vrot.lane.b32.xlu0 %v8364, 126
        %v8385 = vpop.permute.xlu0 %8384
        %8386 = vrot.lane.b32.xlu0 %v8365, 126
        %v8387 = vpop.permute.xlu0 %8386
        %8388 = vrot.lane.b32.xlu0 %v8366, 126
        %v8389 = vpop.permute.xlu0 %8388
        %8390 = vrot.lane.b32.xlu0 %v8367, 126
        %v8391 = vpop.permute.xlu0 %8390
        %8396 = vrot.lane.b32.xlu0 %v8364, 125
        %v8397 = vpop.permute.xlu0 %8396
        %8398 = vrot.lane.b32.xlu0 %v8365, 125
        %v8399 = vpop.permute.xlu0 %8398
        %8400 = vrot.lane.b32.xlu0 %v8366, 125
        %v8401 = vpop.permute.xlu0 %8400
        %8402 = vrot.lane.b32.xlu0 %v8367, 125
        %v8403 = vpop.permute.xlu0 %8402
        %8408 = vrot.lane.b32.xlu0 %v8364, 124
        %v8409 = vpop.permute.xlu0 %8408
        %8410 = vrot.lane.b32.xlu0 %v8365, 124
        %v8411 = vpop.permute.xlu0 %8410
        %8412 = vrot.lane.b32.xlu0 %v8366, 124
        %v8413 = vpop.permute.xlu0 %8412
        %8414 = vrot.lane.b32.xlu0 %v8367, 124
        %v8415 = vpop.permute.xlu0 %8414
        %8420 = vrot.lane.b32.xlu0 %v8364, 123
        %v8421 = vpop.permute.xlu0 %8420
        %8422 = vrot.lane.b32.xlu0 %v8365, 123
        %v8423 = vpop.permute.xlu0 %8422
        %8424 = vrot.lane.b32.xlu0 %v8366, 123
        %v8425 = vpop.permute.xlu0 %8424
        %8426 = vrot.lane.b32.xlu0 %v8367, 123
        %v8427 = vpop.permute.xlu0 %8426
        %8432 = vrot.lane.b32.xlu0 %v8364, 122
        %v8433 = vpop.permute.xlu0 %8432
        %8434 = vrot.lane.b32.xlu0 %v8365, 122
        %v8435 = vpop.permute.xlu0 %8434
        %8436 = vrot.lane.b32.xlu0 %v8366, 122
        %v8437 = vpop.permute.xlu0 %8436
        %8438 = vrot.lane.b32.xlu0 %v8367, 122
        %v8439 = vpop.permute.xlu0 %8438
        %s8444 = scalar_lea.vmem [#allocation5], 5760
        %v8445 = vld [vmem:[%s8444] sm:$0xff]
        %v8446 = vld [vmem:[%s8444 + $0x8] sm:$0xff]
        %v8447 = vld [vmem:[%s8444 + $0x18] sm:$0xff]
        %v8448 = vld [vmem:[%s8444 + $0x20] sm:$0xff]
        %v8449 = vld [vmem:[%s8444 + $0x30] sm:$0xff]
        %v8450 = vld [vmem:[%s8444 + $0x38] sm:$0xff]
        %v8451 = vld [vmem:[%s8444 + $0x48] sm:$0xff]
        %v8452 = vld [vmem:[%s8444 + $0x50] sm:$0xff]
        %v8454 = vsel %vm7967, %v8446, 0
        %v8457 = vsel %vm7967, %v8448, 0
        %v8460 = vsel %vm7967, %v8450, 0
        %v8463 = vsel %vm7967, %v8452, 0
        %8465 = vmatprep.subr.mxu0 0.0
        %8466 = vmatpush1.msra.mxu0 %v8403
        %8467 = vmatprep.subr.mxu0 0.0
        %8468 = vmatpush1.msra.mxu0 %v8401
        %8469 = vmatprep.subr.mxu0 0.0
        %8470 = vmatpush1.msra.mxu0 %v8399
        %8471 = vmatprep.subr.mxu0 0.0
        %8472 = vmatpush1.msra.mxu0 %v8397
        %8473 = vmatprep.subr.mxu0 0.0
        %8474 = vmatpush1.msra.mxu0 %v8391
        %8475 = vmatprep.subr.mxu0 0.0
        %8476 = vmatpush1.msra.mxu0 %v8389
        %8477 = vmatprep.subr.mxu0 0.0
        %8478 = vmatpush1.msra.mxu0 %v8387
        %8479 = vmatprep.subr.mxu0 0.0
        %8480 = vmatpush1.msra.mxu0 %v8385
        %8481 = vmatprep.subr.mxu0 0.0
        %8482 = vmatpush1.msra.mxu0 %v8379
        %8483 = vmatprep.subr.mxu0 0.0
        %8484 = vmatpush1.msra.mxu0 %v8377
        %8485 = vmatprep.subr.mxu0 0.0
        %8486 = vmatpush1.msra.mxu0 %v8375
        %8487 = vmatprep.subr.mxu0 0.0
        %8488 = vmatpush1.msra.mxu0 %v8373
        %8489 = vmatprep.subr.mxu0 0.0
        %8490 = vmatpush1.msra.mxu0 %v8367
        %8491 = vmatprep.subr.mxu0 0.0
        %8492 = vmatpush1.msra.mxu0 %v8366
        %8493 = vmatprep.subr.mxu0 0.0
        %8494 = vmatpush1.msra.mxu0 %v8365
        %8495 = vmatprep.subr.mxu0 0.0
        %8496 = vmatpush1.msra.mxu0 %v8364
        %8497 = vmatprep.subr.mxu0 0.0
        %8498 = vmatpush2.msra.mxu0 0.0
        %8499 = vmatprep.subr.mxu0 0.0
        %8500 = vmatpush2.msra.mxu0 0.0
        %8501 = vmatprep.subr.mxu0 0.0
        %8502 = vmatpush2.msra.mxu0 0.0
        %8503 = vmatprep.subr.mxu0 0.0
        %8504 = vmatpush2.msra.mxu0 %v475
        %8505 = vmatprep.subr.mxu0 0.0
        %8506 = vmatpush2.msra.mxu0 %v8439
        %8507 = vmatprep.subr.mxu0 0.0
        %8508 = vmatpush2.msra.mxu0 %v8437
        %8509 = vmatprep.subr.mxu0 0.0
        %8510 = vmatpush2.msra.mxu0 %v8435
        %8511 = vmatprep.subr.mxu0 0.0
        %8512 = vmatpush2.msra.mxu0 %v8433
        %8513 = vmatprep.subr.mxu0 0.0
        %8514 = vmatpush2.msra.mxu0 %v8427
        %8515 = vmatprep.subr.mxu0 0.0
        %8516 = vmatpush2.msra.mxu0 %v8425
        %8517 = vmatprep.subr.mxu0 0.0
        %8518 = vmatpush2.msra.mxu0 %v8423
        %8519 = vmatprep.subr.mxu0 0.0
        %8520 = vmatpush2.msra.mxu0 %v8421
        %8521 = vmatprep.subr.mxu0 0.0
        %8522 = vmatpush2.msra.mxu0 %v8415
        %8523 = vmatprep.subr.mxu0 0.0
        %8524 = vmatpush2.msra.mxu0 %v8413
        %8525 = vmatprep.subr.mxu0 0.0
        %8526 = vmatpush2.msra.mxu0 %v8411
        %8527 = vmatprep.subr.mxu0 0.0
        %8528 = vmatpush2.msra.mxu0 %v8409
        %8529 = vmatprep.mubr.f32.mxu0 %v8454
        %8530 = vmatmul.mubr.f32.gmra.mxu0 %v8445
        %v8531 = vpop.f32.mrf.mxu0
        %v8532 = vadd.f32 0.0, %v8531
        %v8533 = vpop.f32.mrf.mxu0
        %8534 = vmatprep.mubr.f32.mxu0 %v8457
        %8535 = vmatmul.mubr.f32.gmra.mxu0 %v8447
        %v8536 = vpop.f32.mrf.mxu0
        %v8537 = vadd.f32 0.0, %v8536
        %v8538 = vpop.f32.mrf.mxu0
        %8539 = vmatprep.mubr.f32.mxu0 %v8460
        %8540 = vmatmul.mubr.f32.gmra.mxu0 %v8449
        %v8541 = vpop.f32.mrf.mxu0
        %v8542 = vadd.f32 0.0, %v8541
        %v8543 = vpop.f32.mrf.mxu0
        %8544 = vmatprep.mubr.f32.mxu0 %v8463
        %8545 = vmatmul.mubr.f32.gmra.mxu0 %v8451
        %v8546 = vpop.f32.mrf.mxu0
        %v8547 = vadd.f32 0.0, %v8546
        %v8548 = vpop.f32.mrf.mxu0
        %8549 = vdwg.mxu0
        %v8550 = vmax.f32 %v8532, 0.0
        %v8551 = vmax.f32 %v8537, 0.0
        %v8552 = vmax.f32 %v8542, 0.0
        %v8553 = vmax.f32 %v8547, 0.0
        %8558 = vrot.lane.b32.xlu0 %v8550, 3
        %v8559 = vpop.permute.xlu0 %8558
        %8560 = vrot.lane.b32.xlu0 %v8551, 3
        %v8561 = vpop.permute.xlu0 %8560
        %8562 = vrot.lane.b32.xlu0 %v8552, 3
        %v8563 = vpop.permute.xlu0 %8562
        %8564 = vrot.lane.b32.xlu0 %v8553, 3
        %v8565 = vpop.permute.xlu0 %8564
        %v8570 = vsel %vm219, 0.0, %v8559
        %v8571 = vsel %vm219, 0.0, %v8561
        %v8572 = vsel %vm219, 0.0, %v8563
        %v8573 = vsel %vm219, 0.0, %v8565
        %v8574 = vsel %vm8363, %v8570, 0.0
        %v8575 = vsel %vm8363, %v8571, 0.0
        %v8576 = vsel %vm8363, %v8572, 0.0
        %v8577 = vsel %vm8363, %v8573, 0.0
        %8582 = vrot.lane.b32.xlu0 %v8574, 127
        %v8583 = vpop.permute.xlu0 %8582
        %8584 = vrot.lane.b32.xlu0 %v8575, 127
        %v8585 = vpop.permute.xlu0 %8584
        %8586 = vrot.lane.b32.xlu0 %v8576, 127
        %v8587 = vpop.permute.xlu0 %8586
        %8588 = vrot.lane.b32.xlu0 %v8577, 127
        %v8589 = vpop.permute.xlu0 %8588
        %8594 = vrot.lane.b32.xlu0 %v8574, 126
        %v8595 = vpop.permute.xlu0 %8594
        %8596 = vrot.lane.b32.xlu0 %v8575, 126
        %v8597 = vpop.permute.xlu0 %8596
        %8598 = vrot.lane.b32.xlu0 %v8576, 126
        %v8599 = vpop.permute.xlu0 %8598
        %8600 = vrot.lane.b32.xlu0 %v8577, 126
        %v8601 = vpop.permute.xlu0 %8600
        %8606 = vrot.lane.b32.xlu0 %v8574, 125
        %v8607 = vpop.permute.xlu0 %8606
        %8608 = vrot.lane.b32.xlu0 %v8575, 125
        %v8609 = vpop.permute.xlu0 %8608
        %8610 = vrot.lane.b32.xlu0 %v8576, 125
        %v8611 = vpop.permute.xlu0 %8610
        %8612 = vrot.lane.b32.xlu0 %v8577, 125
        %v8613 = vpop.permute.xlu0 %8612
        %8618 = vrot.lane.b32.xlu0 %v8574, 124
        %v8619 = vpop.permute.xlu0 %8618
        %8620 = vrot.lane.b32.xlu0 %v8575, 124
        %v8621 = vpop.permute.xlu0 %8620
        %8622 = vrot.lane.b32.xlu0 %v8576, 124
        %v8623 = vpop.permute.xlu0 %8622
        %8624 = vrot.lane.b32.xlu0 %v8577, 124
        %v8625 = vpop.permute.xlu0 %8624
        %8630 = vrot.lane.b32.xlu0 %v8574, 123
        %v8631 = vpop.permute.xlu0 %8630
        %8632 = vrot.lane.b32.xlu0 %v8575, 123
        %v8633 = vpop.permute.xlu0 %8632
        %8634 = vrot.lane.b32.xlu0 %v8576, 123
        %v8635 = vpop.permute.xlu0 %8634
        %8636 = vrot.lane.b32.xlu0 %v8577, 123
        %v8637 = vpop.permute.xlu0 %8636
        %8642 = vrot.lane.b32.xlu0 %v8574, 122
        %v8643 = vpop.permute.xlu0 %8642
        %8644 = vrot.lane.b32.xlu0 %v8575, 122
        %v8645 = vpop.permute.xlu0 %8644
        %8646 = vrot.lane.b32.xlu0 %v8576, 122
        %v8647 = vpop.permute.xlu0 %8646
        %8648 = vrot.lane.b32.xlu0 %v8577, 122
        %v8649 = vpop.permute.xlu0 %8648
        %s8654 = scalar_lea.vmem [#allocation5], 5952
        %v8655 = vld [vmem:[%s8654] sm:$0xff]
        %v8656 = vld [vmem:[%s8654 + $0x8] sm:$0xff]
        %v8657 = vld [vmem:[%s8654 + $0x18] sm:$0xff]
        %v8658 = vld [vmem:[%s8654 + $0x20] sm:$0xff]
        %v8659 = vld [vmem:[%s8654 + $0x30] sm:$0xff]
        %v8660 = vld [vmem:[%s8654 + $0x38] sm:$0xff]
        %v8661 = vld [vmem:[%s8654 + $0x48] sm:$0xff]
        %v8662 = vld [vmem:[%s8654 + $0x50] sm:$0xff]
        %v8664 = vsel %vm7967, %v8656, 0
        %v8667 = vsel %vm7967, %v8658, 0
        %v8670 = vsel %vm7967, %v8660, 0
        %v8673 = vsel %vm7967, %v8662, 0
        %8675 = vmatprep.subr.mxu0 0.0
        %8676 = vmatpush1.msra.mxu0 %v8613
        %8677 = vmatprep.subr.mxu0 0.0
        %8678 = vmatpush1.msra.mxu0 %v8611
        %8679 = vmatprep.subr.mxu0 0.0
        %8680 = vmatpush1.msra.mxu0 %v8609
        %8681 = vmatprep.subr.mxu0 0.0
        %8682 = vmatpush1.msra.mxu0 %v8607
        %8683 = vmatprep.subr.mxu0 0.0
        %8684 = vmatpush1.msra.mxu0 %v8601
        %8685 = vmatprep.subr.mxu0 0.0
        %8686 = vmatpush1.msra.mxu0 %v8599
        %8687 = vmatprep.subr.mxu0 0.0
        %8688 = vmatpush1.msra.mxu0 %v8597
        %8689 = vmatprep.subr.mxu0 0.0
        %8690 = vmatpush1.msra.mxu0 %v8595
        %8691 = vmatprep.subr.mxu0 0.0
        %8692 = vmatpush1.msra.mxu0 %v8589
        %8693 = vmatprep.subr.mxu0 0.0
        %8694 = vmatpush1.msra.mxu0 %v8587
        %8695 = vmatprep.subr.mxu0 0.0
        %8696 = vmatpush1.msra.mxu0 %v8585
        %8697 = vmatprep.subr.mxu0 0.0
        %8698 = vmatpush1.msra.mxu0 %v8583
        %8699 = vmatprep.subr.mxu0 0.0
        %8700 = vmatpush1.msra.mxu0 %v8577
        %8701 = vmatprep.subr.mxu0 0.0
        %8702 = vmatpush1.msra.mxu0 %v8576
        %8703 = vmatprep.subr.mxu0 0.0
        %8704 = vmatpush1.msra.mxu0 %v8575
        %8705 = vmatprep.subr.mxu0 0.0
        %8706 = vmatpush1.msra.mxu0 %v8574
        %8707 = vmatprep.subr.mxu0 0.0
        %8708 = vmatpush2.msra.mxu0 0.0
        %8709 = vmatprep.subr.mxu0 0.0
        %8710 = vmatpush2.msra.mxu0 0.0
        %8711 = vmatprep.subr.mxu0 0.0
        %8712 = vmatpush2.msra.mxu0 0.0
        %8713 = vmatprep.subr.mxu0 0.0
        %8714 = vmatpush2.msra.mxu0 %v475
        %8715 = vmatprep.subr.mxu0 0.0
        %8716 = vmatpush2.msra.mxu0 %v8649
        %8717 = vmatprep.subr.mxu0 0.0
        %8718 = vmatpush2.msra.mxu0 %v8647
        %8719 = vmatprep.subr.mxu0 0.0
        %8720 = vmatpush2.msra.mxu0 %v8645
        %8721 = vmatprep.subr.mxu0 0.0
        %8722 = vmatpush2.msra.mxu0 %v8643
        %8723 = vmatprep.subr.mxu0 0.0
        %8724 = vmatpush2.msra.mxu0 %v8637
        %8725 = vmatprep.subr.mxu0 0.0
        %8726 = vmatpush2.msra.mxu0 %v8635
        %8727 = vmatprep.subr.mxu0 0.0
        %8728 = vmatpush2.msra.mxu0 %v8633
        %8729 = vmatprep.subr.mxu0 0.0
        %8730 = vmatpush2.msra.mxu0 %v8631
        %8731 = vmatprep.subr.mxu0 0.0
        %8732 = vmatpush2.msra.mxu0 %v8625
        %8733 = vmatprep.subr.mxu0 0.0
        %8734 = vmatpush2.msra.mxu0 %v8623
        %8735 = vmatprep.subr.mxu0 0.0
        %8736 = vmatpush2.msra.mxu0 %v8621
        %8737 = vmatprep.subr.mxu0 0.0
        %8738 = vmatpush2.msra.mxu0 %v8619
        %8739 = vmatprep.mubr.f32.mxu0 %v8664
        %8740 = vmatmul.mubr.f32.gmra.mxu0 %v8655
        %v8741 = vpop.f32.mrf.mxu0
        %v8742 = vadd.f32 0.0, %v8741
        %v8743 = vpop.f32.mrf.mxu0
        %8744 = vmatprep.mubr.f32.mxu0 %v8667
        %8745 = vmatmul.mubr.f32.gmra.mxu0 %v8657
        %v8746 = vpop.f32.mrf.mxu0
        %v8747 = vadd.f32 0.0, %v8746
        %v8748 = vpop.f32.mrf.mxu0
        %8749 = vmatprep.mubr.f32.mxu0 %v8670
        %8750 = vmatmul.mubr.f32.gmra.mxu0 %v8659
        %v8751 = vpop.f32.mrf.mxu0
        %v8752 = vadd.f32 0.0, %v8751
        %v8753 = vpop.f32.mrf.mxu0
        %8754 = vmatprep.mubr.f32.mxu0 %v8673
        %8755 = vmatmul.mubr.f32.gmra.mxu0 %v8661
        %v8756 = vpop.f32.mrf.mxu0
        %v8757 = vadd.f32 0.0, %v8756
        %v8758 = vpop.f32.mrf.mxu0
        %8759 = vdwg.mxu0
        %v8760 = vmax.f32 %v8742, 0.0
        %v8761 = vmax.f32 %v8747, 0.0
        %v8762 = vmax.f32 %v8752, 0.0
        %v8763 = vmax.f32 %v8757, 0.0
        %v8764 = vcvt.s32.f32 %v1032
        %v8765 = vcvt.s32.f32 %v1033
        %v8766 = vcvt.s32.f32 %v1034
        %v8767 = vcvt.s32.f32 %v1035
        %v8768 = vmin.f32 %v4579, 63.0
        %vm8769 = vcmp.eq.f32.partialorder %v8764, %v4578
        %vm8770 = vcmp.eq.f32.partialorder %v8765, %v4578
        %vm8771 = vcmp.eq.f32.partialorder %v8766, %v4578
        %vm8772 = vcmp.eq.f32.partialorder %v8767, %v4578
        %v8773 = vsel %vm8769, %v4583, 0.0
        %v8774 = vsel %vm8770, %v4583, 0.0
        %v8775 = vsel %vm8771, %v4583, 0.0
        %v8776 = vsel %vm8772, %v4583, 0.0
        %vm8777 = vcmp.eq.f32.partialorder %v4573, %v8768
        %vm8778 = vcmp.eq.f32.partialorder %v7404, %v8768
        %vm8779 = vcmp.eq.f32.partialorder %v8227, %v8768
        %vm8780 = vcmp.eq.f32.partialorder %v8228, %v8768
        %vm8781 = vcmp.eq.f32.partialorder %v8764, %v8768
        %vm8782 = vcmp.eq.f32.partialorder %v8765, %v8768
        %vm8783 = vcmp.eq.f32.partialorder %v8766, %v8768
        %vm8784 = vcmp.eq.f32.partialorder %v8767, %v8768
        %v8785 = vsel %vm8777, %v4581, 0.0
        %v8786 = vsel %vm8778, %v4581, 0.0
        %v8787 = vsel %vm8779, %v4581, 0.0
        %v8788 = vsel %vm8780, %v4581, 0.0
        %v8789 = vsel %vm8781, %v4581, 0.0
        %v8790 = vsel %vm8782, %v4581, 0.0
        %v8791 = vsel %vm8783, %v4581, 0.0
        %v8792 = vsel %vm8784, %v4581, 0.0
        %v8793 = vadd.f32 %v4584, %v8785
        %v8794 = vadd.f32 %v7407, %v8786
        %v8795 = vadd.f32 %v8232, %v8787
        %v8796 = vadd.f32 %v8233, %v8788
        %v8797 = vadd.f32 %v8773, %v8789
        %v8798 = vadd.f32 %v8774, %v8790
        %v8799 = vadd.f32 %v8775, %v8791
        %v8800 = vadd.f32 %v8776, %v8792
        %v8802 = vsel %vm1626, %v8760, 0
        %v8805 = vsel %vm1626, %v8761, 0
        %v8808 = vsel %vm1626, %v8762, 0
        %v8811 = vsel %vm1626, %v8763, 0
        %8813 = vmatprep.subr.mxu0 0.0
        %8814 = vmatpush1.msra.mxu0 0.0
        %8815 = vmatprep.subr.mxu0 0.0
        %8816 = vmatpush1.msra.mxu0 0.0
        %8817 = vmatprep.subr.mxu0 0.0
        %8818 = vmatpush1.msra.mxu0 0.0
        %8819 = vmatprep.subr.mxu0 0.0
        %8820 = vmatpush1.msra.mxu0 0.0
        %8821 = vmatprep.subr.mxu0 0.0
        %8822 = vmatpush1.msra.mxu0 0.0
        %8823 = vmatprep.subr.mxu0 0.0
        %8824 = vmatpush1.msra.mxu0 0.0
        %8825 = vmatprep.subr.mxu0 0.0
        %8826 = vmatpush1.msra.mxu0 0.0
        %8827 = vmatprep.subr.mxu0 0.0
        %8828 = vmatpush1.msra.mxu0 0.0
        %8829 = vmatprep.subr.mxu0 0.0
        %8830 = vmatpush1.msra.mxu0 %v8800
        %8831 = vmatprep.subr.mxu0 0.0
        %8832 = vmatpush1.msra.mxu0 %v8799
        %8833 = vmatprep.subr.mxu0 0.0
        %8834 = vmatpush1.msra.mxu0 %v8798
        %8835 = vmatprep.subr.mxu0 0.0
        %8836 = vmatpush1.msra.mxu0 %v8797
        %8837 = vmatprep.subr.mxu0 0.0
        %8838 = vmatpush1.msra.mxu0 %v8796
        %8839 = vmatprep.subr.mxu0 0.0
        %8840 = vmatpush1.msra.mxu0 %v8795
        %8841 = vmatprep.subr.mxu0 0.0
        %8842 = vmatpush1.msra.mxu0 %v8794
        %8843 = vmatprep.subr.mxu0 0.0
        %8844 = vmatpush1.msra.mxu0 %v8793
        %8845 = vmatprep.subr.mxu0 0.0
        %8846 = vmatpush2.msra.mxu0 0.0
        %8847 = vmatprep.subr.mxu0 0.0
        %8848 = vmatpush2.msra.mxu0 0.0
        %8849 = vmatprep.subr.mxu0 0.0
        %8850 = vmatpush2.msra.mxu0 0.0
        %8851 = vmatprep.subr.mxu0 0.0
        %8852 = vmatpush2.msra.mxu0 0.0
        %8853 = vmatprep.subr.mxu0 0.0
        %8854 = vmatpush2.msra.mxu0 0.0
        %8855 = vmatprep.subr.mxu0 0.0
        %8856 = vmatpush2.msra.mxu0 0.0
        %8857 = vmatprep.subr.mxu0 0.0
        %8858 = vmatpush2.msra.mxu0 0.0
        %8859 = vmatprep.subr.mxu0 0.0
        %8860 = vmatpush2.msra.mxu0 0.0
        %8861 = vmatprep.subr.mxu0 0.0
        %8862 = vmatpush2.msra.mxu0 0.0
        %8863 = vmatprep.subr.mxu0 0.0
        %8864 = vmatpush2.msra.mxu0 0.0
        %8865 = vmatprep.subr.mxu0 0.0
        %8866 = vmatpush2.msra.mxu0 0.0
        %8867 = vmatprep.subr.mxu0 0.0
        %8868 = vmatpush2.msra.mxu0 0.0
        %8869 = vmatprep.subr.mxu0 0.0
        %8870 = vmatpush2.msra.mxu0 0.0
        %8871 = vmatprep.subr.mxu0 0.0
        %8872 = vmatpush2.msra.mxu0 0.0
        %8873 = vmatprep.subr.mxu0 0.0
        %8874 = vmatpush2.msra.mxu0 0.0
        %8875 = vmatprep.subr.mxu0 0.0
        %8876 = vmatpush2.msra.mxu0 0.0
        %8877 = vmatprep.mubr.f32.mxu0 0.0
        %8878 = vmatmul.mubr.f32.gmra.mxu0 %v8802
        %v8879 = vpop.f32.mrf.mxu0
        %v8880 = vadd.f32 0.0, %v8879
        %v8881 = vpop.f32.mrf.mxu0
        %8882 = vmatprep.mubr.f32.mxu0 0.0
        %8883 = vmatmul.mubr.f32.gmra.mxu0 %v8805
        %v8884 = vpop.f32.mrf.mxu0
        %v8885 = vadd.f32 0.0, %v8884
        %v8886 = vpop.f32.mrf.mxu0
        %8887 = vmatprep.mubr.f32.mxu0 0.0
        %8888 = vmatmul.mubr.f32.gmra.mxu0 %v8808
        %v8889 = vpop.f32.mrf.mxu0
        %v8890 = vadd.f32 0.0, %v8889
        %v8891 = vpop.f32.mrf.mxu0
        %8892 = vmatprep.mubr.f32.mxu0 0.0
        %8893 = vmatmul.mubr.f32.gmra.mxu0 %v8811
        %v8894 = vpop.f32.mrf.mxu0
        %v8895 = vadd.f32 0.0, %v8894
        %v8896 = vpop.f32.mrf.mxu0
        %8897 = vdwg.mxu0
        %8902 = vrot.lane.b32.xlu0 %v8880, 3
        %v8903 = vpop.permute.xlu0 %8902
        %8904 = vrot.lane.b32.xlu0 %v8885, 3
        %v8905 = vpop.permute.xlu0 %8904
        %8906 = vrot.lane.b32.xlu0 %v8890, 3
        %v8907 = vpop.permute.xlu0 %8906
        %8908 = vrot.lane.b32.xlu0 %v8895, 3
        %v8909 = vpop.permute.xlu0 %8908
        %v8914 = vsel %vm219, 0.0, %v8903
        %v8915 = vsel %vm219, 0.0, %v8905
        %v8916 = vsel %vm219, 0.0, %v8907
        %v8917 = vsel %vm219, 0.0, %v8909
        %v8918 = vsel %vm219, %v8903, 0.0
        %v8919 = vsel %vm219, %v8905, 0.0
        %v8920 = vsel %vm219, %v8907, 0.0
        %v8921 = vsel %vm219, %v8909, 0.0
        %8930 = vrot.lane.b32.xlu0 %v8914, 127
        %v8931 = vpop.permute.xlu0 %8930
        %8932 = vrot.lane.b32.xlu0 %v8918, 127
        %v8933 = vpop.permute.xlu0 %8932
        %8934 = vrot.lane.b32.xlu0 %v8915, 127
        %v8935 = vpop.permute.xlu0 %8934
        %8936 = vrot.lane.b32.xlu0 %v8919, 127
        %v8937 = vpop.permute.xlu0 %8936
        %8938 = vrot.lane.b32.xlu0 %v8916, 127
        %v8939 = vpop.permute.xlu0 %8938
        %8940 = vrot.lane.b32.xlu0 %v8920, 127
        %v8941 = vpop.permute.xlu0 %8940
        %8942 = vrot.lane.b32.xlu0 %v8917, 127
        %v8943 = vpop.permute.xlu0 %8942
        %8944 = vrot.lane.b32.xlu0 %v8921, 127
        %v8945 = vpop.permute.xlu0 %8944
        %v8946 = vsel %vm230, %v8931, %v8933
        %v8947 = vsel %vm230, %v8935, %v8937
        %v8948 = vsel %vm230, %v8939, %v8941
        %v8949 = vsel %vm230, %v8943, %v8945
        %8954 = vrot.lane.b32.xlu0 %v8914, 126
        %v8955 = vpop.permute.xlu0 %8954
        %8956 = vrot.lane.b32.xlu0 %v8918, 126
        %v8957 = vpop.permute.xlu0 %8956
        %8958 = vrot.lane.b32.xlu0 %v8915, 126
        %v8959 = vpop.permute.xlu0 %8958
        %8960 = vrot.lane.b32.xlu0 %v8919, 126
        %v8961 = vpop.permute.xlu0 %8960
        %8962 = vrot.lane.b32.xlu0 %v8916, 126
        %v8963 = vpop.permute.xlu0 %8962
        %8964 = vrot.lane.b32.xlu0 %v8920, 126
        %v8965 = vpop.permute.xlu0 %8964
        %8966 = vrot.lane.b32.xlu0 %v8917, 126
        %v8967 = vpop.permute.xlu0 %8966
        %8968 = vrot.lane.b32.xlu0 %v8921, 126
        %v8969 = vpop.permute.xlu0 %8968
        %v8970 = vsel %vm239, %v8955, %v8957
        %v8971 = vsel %vm239, %v8959, %v8961
        %v8972 = vsel %vm239, %v8963, %v8965
        %v8973 = vsel %vm239, %v8967, %v8969
        %8978 = vrot.lane.b32.xlu0 %v8914, 125
        %v8979 = vpop.permute.xlu0 %8978
        %8980 = vrot.lane.b32.xlu0 %v8918, 125
        %v8981 = vpop.permute.xlu0 %8980
        %8982 = vrot.lane.b32.xlu0 %v8915, 125
        %v8983 = vpop.permute.xlu0 %8982
        %8984 = vrot.lane.b32.xlu0 %v8919, 125
        %v8985 = vpop.permute.xlu0 %8984
        %8986 = vrot.lane.b32.xlu0 %v8916, 125
        %v8987 = vpop.permute.xlu0 %8986
        %8988 = vrot.lane.b32.xlu0 %v8920, 125
        %v8989 = vpop.permute.xlu0 %8988
        %8990 = vrot.lane.b32.xlu0 %v8917, 125
        %v8991 = vpop.permute.xlu0 %8990
        %8992 = vrot.lane.b32.xlu0 %v8921, 125
        %v8993 = vpop.permute.xlu0 %8992
        %v8994 = vsel %vm248, %v8979, %v8981
        %v8995 = vsel %vm248, %v8983, %v8985
        %v8996 = vsel %vm248, %v8987, %v8989
        %v8997 = vsel %vm248, %v8991, %v8993
        %9002 = vrot.lane.b32.xlu0 %v8914, 124
        %v9003 = vpop.permute.xlu0 %9002
        %9004 = vrot.lane.b32.xlu0 %v8918, 124
        %v9005 = vpop.permute.xlu0 %9004
        %9006 = vrot.lane.b32.xlu0 %v8915, 124
        %v9007 = vpop.permute.xlu0 %9006
        %9008 = vrot.lane.b32.xlu0 %v8919, 124
        %v9009 = vpop.permute.xlu0 %9008
        %9010 = vrot.lane.b32.xlu0 %v8916, 124
        %v9011 = vpop.permute.xlu0 %9010
        %9012 = vrot.lane.b32.xlu0 %v8920, 124
        %v9013 = vpop.permute.xlu0 %9012
        %9014 = vrot.lane.b32.xlu0 %v8917, 124
        %v9015 = vpop.permute.xlu0 %9014
        %9016 = vrot.lane.b32.xlu0 %v8921, 124
        %v9017 = vpop.permute.xlu0 %9016
        %v9018 = vsel %vm255, %v9003, %v9005
        %v9019 = vsel %vm255, %v9007, %v9009
        %v9020 = vsel %vm255, %v9011, %v9013
        %v9021 = vsel %vm255, %v9015, %v9017
        %9026 = vrot.lane.b32.xlu0 %v8914, 123
        %v9027 = vpop.permute.xlu0 %9026
        %9028 = vrot.lane.b32.xlu0 %v8918, 123
        %v9029 = vpop.permute.xlu0 %9028
        %9030 = vrot.lane.b32.xlu0 %v8915, 123
        %v9031 = vpop.permute.xlu0 %9030
        %9032 = vrot.lane.b32.xlu0 %v8919, 123
        %v9033 = vpop.permute.xlu0 %9032
        %9034 = vrot.lane.b32.xlu0 %v8916, 123
        %v9035 = vpop.permute.xlu0 %9034
        %9036 = vrot.lane.b32.xlu0 %v8920, 123
        %v9037 = vpop.permute.xlu0 %9036
        %9038 = vrot.lane.b32.xlu0 %v8917, 123
        %v9039 = vpop.permute.xlu0 %9038
        %9040 = vrot.lane.b32.xlu0 %v8921, 123
        %v9041 = vpop.permute.xlu0 %9040
        %v9042 = vsel %vm262, %v9027, %v9029
        %v9043 = vsel %vm262, %v9031, %v9033
        %v9044 = vsel %vm262, %v9035, %v9037
        %v9045 = vsel %vm262, %v9039, %v9041
        %9050 = vrot.lane.b32.xlu0 %v8914, 122
        %v9051 = vpop.permute.xlu0 %9050
        %9052 = vrot.lane.b32.xlu0 %v8918, 122
        %v9053 = vpop.permute.xlu0 %9052
        %9054 = vrot.lane.b32.xlu0 %v8915, 122
        %v9055 = vpop.permute.xlu0 %9054
        %9056 = vrot.lane.b32.xlu0 %v8919, 122
        %v9057 = vpop.permute.xlu0 %9056
        %9058 = vrot.lane.b32.xlu0 %v8916, 122
        %v9059 = vpop.permute.xlu0 %9058
        %9060 = vrot.lane.b32.xlu0 %v8920, 122
        %v9061 = vpop.permute.xlu0 %9060
        %9062 = vrot.lane.b32.xlu0 %v8917, 122
        %v9063 = vpop.permute.xlu0 %9062
        %9064 = vrot.lane.b32.xlu0 %v8921, 122
        %v9065 = vpop.permute.xlu0 %9064
        %v9066 = vsel %vm269, %v9051, %v9053
        %v9067 = vsel %vm269, %v9055, %v9057
        %v9068 = vsel %vm269, %v9059, %v9061
        %v9069 = vsel %vm269, %v9063, %v9065
        %s9074 = scalar_lea.vmem [#allocation5], 6144
        %v9075 = vld [vmem:[%s9074] sm:$0xff]
        %v9076 = vld [vmem:[%s9074 + $0x8] sm:$0xff]
        %v9077 = vld [vmem:[%s9074 + $0x18] sm:$0xff]
        %v9078 = vld [vmem:[%s9074 + $0x20] sm:$0xff]
        %v9079 = vld [vmem:[%s9074 + $0x30] sm:$0xff]
        %v9080 = vld [vmem:[%s9074 + $0x38] sm:$0xff]
        %v9081 = vld [vmem:[%s9074 + $0x48] sm:$0xff]
        %v9082 = vld [vmem:[%s9074 + $0x50] sm:$0xff]
        %v9084 = vsel %vm7967, %v9076, 0
        %v9087 = vsel %vm7967, %v9078, 0
        %v9090 = vsel %vm7967, %v9080, 0
        %v9093 = vsel %vm7967, %v9082, 0
        %9095 = vmatprep.subr.mxu0 0.0
        %9096 = vmatpush1.msra.mxu0 %v8997
        %9097 = vmatprep.subr.mxu0 0.0
        %9098 = vmatpush1.msra.mxu0 %v8996
        %9099 = vmatprep.subr.mxu0 0.0
        %9100 = vmatpush1.msra.mxu0 %v8995
        %9101 = vmatprep.subr.mxu0 0.0
        %9102 = vmatpush1.msra.mxu0 %v8994
        %9103 = vmatprep.subr.mxu0 0.0
        %9104 = vmatpush1.msra.mxu0 %v8973
        %9105 = vmatprep.subr.mxu0 0.0
        %9106 = vmatpush1.msra.mxu0 %v8972
        %9107 = vmatprep.subr.mxu0 0.0
        %9108 = vmatpush1.msra.mxu0 %v8971
        %9109 = vmatprep.subr.mxu0 0.0
        %9110 = vmatpush1.msra.mxu0 %v8970
        %9111 = vmatprep.subr.mxu0 0.0
        %9112 = vmatpush1.msra.mxu0 %v8949
        %9113 = vmatprep.subr.mxu0 0.0
        %9114 = vmatpush1.msra.mxu0 %v8948
        %9115 = vmatprep.subr.mxu0 0.0
        %9116 = vmatpush1.msra.mxu0 %v8947
        %9117 = vmatprep.subr.mxu0 0.0
        %9118 = vmatpush1.msra.mxu0 %v8946
        %9119 = vmatprep.subr.mxu0 0.0
        %9120 = vmatpush1.msra.mxu0 %v8917
        %9121 = vmatprep.subr.mxu0 0.0
        %9122 = vmatpush1.msra.mxu0 %v8916
        %9123 = vmatprep.subr.mxu0 0.0
        %9124 = vmatpush1.msra.mxu0 %v8915
        %9125 = vmatprep.subr.mxu0 0.0
        %9126 = vmatpush1.msra.mxu0 %v8914
        %9127 = vmatprep.subr.mxu0 0.0
        %9128 = vmatpush2.msra.mxu0 0.0
        %9129 = vmatprep.subr.mxu0 0.0
        %9130 = vmatpush2.msra.mxu0 0.0
        %9131 = vmatprep.subr.mxu0 0.0
        %9132 = vmatpush2.msra.mxu0 0.0
        %9133 = vmatprep.subr.mxu0 0.0
        %9134 = vmatpush2.msra.mxu0 %v475
        %9135 = vmatprep.subr.mxu0 0.0
        %9136 = vmatpush2.msra.mxu0 %v9069
        %9137 = vmatprep.subr.mxu0 0.0
        %9138 = vmatpush2.msra.mxu0 %v9068
        %9139 = vmatprep.subr.mxu0 0.0
        %9140 = vmatpush2.msra.mxu0 %v9067
        %9141 = vmatprep.subr.mxu0 0.0
        %9142 = vmatpush2.msra.mxu0 %v9066
        %9143 = vmatprep.subr.mxu0 0.0
        %9144 = vmatpush2.msra.mxu0 %v9045
        %9145 = vmatprep.subr.mxu0 0.0
        %9146 = vmatpush2.msra.mxu0 %v9044
        %9147 = vmatprep.subr.mxu0 0.0
        %9148 = vmatpush2.msra.mxu0 %v9043
        %9149 = vmatprep.subr.mxu0 0.0
        %9150 = vmatpush2.msra.mxu0 %v9042
        %9151 = vmatprep.subr.mxu0 0.0
        %9152 = vmatpush2.msra.mxu0 %v9021
        %9153 = vmatprep.subr.mxu0 0.0
        %9154 = vmatpush2.msra.mxu0 %v9020
        %9155 = vmatprep.subr.mxu0 0.0
        %9156 = vmatpush2.msra.mxu0 %v9019
        %9157 = vmatprep.subr.mxu0 0.0
        %9158 = vmatpush2.msra.mxu0 %v9018
        %9159 = vmatprep.mubr.f32.mxu0 %v9084
        %9160 = vmatmul.mubr.f32.gmra.mxu0 %v9075
        %v9161 = vpop.f32.mrf.mxu0
        %v9162 = vadd.f32 0.0, %v9161
        %v9163 = vpop.f32.mrf.mxu0
        %9164 = vmatprep.mubr.f32.mxu0 %v9087
        %9165 = vmatmul.mubr.f32.gmra.mxu0 %v9077
        %v9166 = vpop.f32.mrf.mxu0
        %v9167 = vadd.f32 0.0, %v9166
        %v9168 = vpop.f32.mrf.mxu0
        %9169 = vmatprep.mubr.f32.mxu0 %v9090
        %9170 = vmatmul.mubr.f32.gmra.mxu0 %v9079
        %v9171 = vpop.f32.mrf.mxu0
        %v9172 = vadd.f32 0.0, %v9171
        %v9173 = vpop.f32.mrf.mxu0
        %9174 = vmatprep.mubr.f32.mxu0 %v9093
        %9175 = vmatmul.mubr.f32.gmra.mxu0 %v9081
        %v9176 = vpop.f32.mrf.mxu0
        %v9177 = vadd.f32 0.0, %v9176
        %v9178 = vpop.f32.mrf.mxu0
        %9179 = vdwg.mxu0
        %v9180 = vmax.f32 %v9162, 0.0
        %v9181 = vmax.f32 %v9167, 0.0
        %v9182 = vmax.f32 %v9172, 0.0
        %v9183 = vmax.f32 %v9177, 0.0
        %9188 = vrot.lane.b32.xlu0 %v9180, 3
        %v9189 = vpop.permute.xlu0 %9188
        %9190 = vrot.lane.b32.xlu0 %v9181, 3
        %v9191 = vpop.permute.xlu0 %9190
        %9192 = vrot.lane.b32.xlu0 %v9182, 3
        %v9193 = vpop.permute.xlu0 %9192
        %9194 = vrot.lane.b32.xlu0 %v9183, 3
        %v9195 = vpop.permute.xlu0 %9194
        %v9200 = vsel %vm219, 0.0, %v9189
        %v9201 = vsel %vm219, 0.0, %v9191
        %v9202 = vsel %vm219, 0.0, %v9193
        %v9203 = vsel %vm219, 0.0, %v9195
        %v9204 = vsel %vm219, %v9189, 0.0
        %v9205 = vsel %vm219, %v9191, 0.0
        %v9206 = vsel %vm219, %v9193, 0.0
        %v9207 = vsel %vm219, %v9195, 0.0
        %9216 = vrot.lane.b32.xlu0 %v9200, 127
        %v9217 = vpop.permute.xlu0 %9216
        %9218 = vrot.lane.b32.xlu0 %v9204, 127
        %v9219 = vpop.permute.xlu0 %9218
        %9220 = vrot.lane.b32.xlu0 %v9201, 127
        %v9221 = vpop.permute.xlu0 %9220
        %9222 = vrot.lane.b32.xlu0 %v9205, 127
        %v9223 = vpop.permute.xlu0 %9222
        %9224 = vrot.lane.b32.xlu0 %v9202, 127
        %v9225 = vpop.permute.xlu0 %9224
        %9226 = vrot.lane.b32.xlu0 %v9206, 127
        %v9227 = vpop.permute.xlu0 %9226
        %9228 = vrot.lane.b32.xlu0 %v9203, 127
        %v9229 = vpop.permute.xlu0 %9228
        %9230 = vrot.lane.b32.xlu0 %v9207, 127
        %v9231 = vpop.permute.xlu0 %9230
        %v9232 = vsel %vm230, %v9217, %v9219
        %v9233 = vsel %vm230, %v9221, %v9223
        %v9234 = vsel %vm230, %v9225, %v9227
        %v9235 = vsel %vm230, %v9229, %v9231
        %9240 = vrot.lane.b32.xlu0 %v9200, 126
        %v9241 = vpop.permute.xlu0 %9240
        %9242 = vrot.lane.b32.xlu0 %v9204, 126
        %v9243 = vpop.permute.xlu0 %9242
        %9244 = vrot.lane.b32.xlu0 %v9201, 126
        %v9245 = vpop.permute.xlu0 %9244
        %9246 = vrot.lane.b32.xlu0 %v9205, 126
        %v9247 = vpop.permute.xlu0 %9246
        %9248 = vrot.lane.b32.xlu0 %v9202, 126
        %v9249 = vpop.permute.xlu0 %9248
        %9250 = vrot.lane.b32.xlu0 %v9206, 126
        %v9251 = vpop.permute.xlu0 %9250
        %9252 = vrot.lane.b32.xlu0 %v9203, 126
        %v9253 = vpop.permute.xlu0 %9252
        %9254 = vrot.lane.b32.xlu0 %v9207, 126
        %v9255 = vpop.permute.xlu0 %9254
        %v9256 = vsel %vm239, %v9241, %v9243
        %v9257 = vsel %vm239, %v9245, %v9247
        %v9258 = vsel %vm239, %v9249, %v9251
        %v9259 = vsel %vm239, %v9253, %v9255
        %9264 = vrot.lane.b32.xlu0 %v9200, 125
        %v9265 = vpop.permute.xlu0 %9264
        %9266 = vrot.lane.b32.xlu0 %v9204, 125
        %v9267 = vpop.permute.xlu0 %9266
        %9268 = vrot.lane.b32.xlu0 %v9201, 125
        %v9269 = vpop.permute.xlu0 %9268
        %9270 = vrot.lane.b32.xlu0 %v9205, 125
        %v9271 = vpop.permute.xlu0 %9270
        %9272 = vrot.lane.b32.xlu0 %v9202, 125
        %v9273 = vpop.permute.xlu0 %9272
        %9274 = vrot.lane.b32.xlu0 %v9206, 125
        %v9275 = vpop.permute.xlu0 %9274
        %9276 = vrot.lane.b32.xlu0 %v9203, 125
        %v9277 = vpop.permute.xlu0 %9276
        %9278 = vrot.lane.b32.xlu0 %v9207, 125
        %v9279 = vpop.permute.xlu0 %9278
        %v9280 = vsel %vm248, %v9265, %v9267
        %v9281 = vsel %vm248, %v9269, %v9271
        %v9282 = vsel %vm248, %v9273, %v9275
        %v9283 = vsel %vm248, %v9277, %v9279
        %9288 = vrot.lane.b32.xlu0 %v9200, 124
        %v9289 = vpop.permute.xlu0 %9288
        %9290 = vrot.lane.b32.xlu0 %v9204, 124
        %v9291 = vpop.permute.xlu0 %9290
        %9292 = vrot.lane.b32.xlu0 %v9201, 124
        %v9293 = vpop.permute.xlu0 %9292
        %9294 = vrot.lane.b32.xlu0 %v9205, 124
        %v9295 = vpop.permute.xlu0 %9294
        %9296 = vrot.lane.b32.xlu0 %v9202, 124
        %v9297 = vpop.permute.xlu0 %9296
        %9298 = vrot.lane.b32.xlu0 %v9206, 124
        %v9299 = vpop.permute.xlu0 %9298
        %9300 = vrot.lane.b32.xlu0 %v9203, 124
        %v9301 = vpop.permute.xlu0 %9300
        %9302 = vrot.lane.b32.xlu0 %v9207, 124
        %v9303 = vpop.permute.xlu0 %9302
        %v9304 = vsel %vm255, %v9289, %v9291
        %v9305 = vsel %vm255, %v9293, %v9295
        %v9306 = vsel %vm255, %v9297, %v9299
        %v9307 = vsel %vm255, %v9301, %v9303
        %9312 = vrot.lane.b32.xlu0 %v9200, 123
        %v9313 = vpop.permute.xlu0 %9312
        %9314 = vrot.lane.b32.xlu0 %v9204, 123
        %v9315 = vpop.permute.xlu0 %9314
        %9316 = vrot.lane.b32.xlu0 %v9201, 123
        %v9317 = vpop.permute.xlu0 %9316
        %9318 = vrot.lane.b32.xlu0 %v9205, 123
        %v9319 = vpop.permute.xlu0 %9318
        %9320 = vrot.lane.b32.xlu0 %v9202, 123
        %v9321 = vpop.permute.xlu0 %9320
        %9322 = vrot.lane.b32.xlu0 %v9206, 123
        %v9323 = vpop.permute.xlu0 %9322
        %9324 = vrot.lane.b32.xlu0 %v9203, 123
        %v9325 = vpop.permute.xlu0 %9324
        %9326 = vrot.lane.b32.xlu0 %v9207, 123
        %v9327 = vpop.permute.xlu0 %9326
        %v9328 = vsel %vm262, %v9313, %v9315
        %v9329 = vsel %vm262, %v9317, %v9319
        %v9330 = vsel %vm262, %v9321, %v9323
        %v9331 = vsel %vm262, %v9325, %v9327
        %9336 = vrot.lane.b32.xlu0 %v9200, 122
        %v9337 = vpop.permute.xlu0 %9336
        %9338 = vrot.lane.b32.xlu0 %v9204, 122
        %v9339 = vpop.permute.xlu0 %9338
        %9340 = vrot.lane.b32.xlu0 %v9201, 122
        %v9341 = vpop.permute.xlu0 %9340
        %9342 = vrot.lane.b32.xlu0 %v9205, 122
        %v9343 = vpop.permute.xlu0 %9342
        %9344 = vrot.lane.b32.xlu0 %v9202, 122
        %v9345 = vpop.permute.xlu0 %9344
        %9346 = vrot.lane.b32.xlu0 %v9206, 122
        %v9347 = vpop.permute.xlu0 %9346
        %9348 = vrot.lane.b32.xlu0 %v9203, 122
        %v9349 = vpop.permute.xlu0 %9348
        %9350 = vrot.lane.b32.xlu0 %v9207, 122
        %v9351 = vpop.permute.xlu0 %9350
        %v9352 = vsel %vm269, %v9337, %v9339
        %v9353 = vsel %vm269, %v9341, %v9343
        %v9354 = vsel %vm269, %v9345, %v9347
        %v9355 = vsel %vm269, %v9349, %v9351
        %s9360 = scalar_lea.vmem [#allocation5], 6336
        %v9361 = vld [vmem:[%s9360] sm:$0xff]
        %v9362 = vld [vmem:[%s9360 + $0x8] sm:$0xff]
        %v9363 = vld [vmem:[%s9360 + $0x18] sm:$0xff]
        %v9364 = vld [vmem:[%s9360 + $0x20] sm:$0xff]
        %v9365 = vld [vmem:[%s9360 + $0x30] sm:$0xff]
        %v9366 = vld [vmem:[%s9360 + $0x38] sm:$0xff]
        %v9367 = vld [vmem:[%s9360 + $0x48] sm:$0xff]
        %v9368 = vld [vmem:[%s9360 + $0x50] sm:$0xff]
        %v9370 = vsel %vm7967, %v9362, 0
        %v9373 = vsel %vm7967, %v9364, 0
        %v9376 = vsel %vm7967, %v9366, 0
        %v9379 = vsel %vm7967, %v9368, 0
        %9381 = vmatprep.subr.mxu0 0.0
        %9382 = vmatpush1.msra.mxu0 %v9283
        %9383 = vmatprep.subr.mxu0 0.0
        %9384 = vmatpush1.msra.mxu0 %v9282
        %9385 = vmatprep.subr.mxu0 0.0
        %9386 = vmatpush1.msra.mxu0 %v9281
        %9387 = vmatprep.subr.mxu0 0.0
        %9388 = vmatpush1.msra.mxu0 %v9280
        %9389 = vmatprep.subr.mxu0 0.0
        %9390 = vmatpush1.msra.mxu0 %v9259
        %9391 = vmatprep.subr.mxu0 0.0
        %9392 = vmatpush1.msra.mxu0 %v9258
        %9393 = vmatprep.subr.mxu0 0.0
        %9394 = vmatpush1.msra.mxu0 %v9257
        %9395 = vmatprep.subr.mxu0 0.0
        %9396 = vmatpush1.msra.mxu0 %v9256
        %9397 = vmatprep.subr.mxu0 0.0
        %9398 = vmatpush1.msra.mxu0 %v9235
        %9399 = vmatprep.subr.mxu0 0.0
        %9400 = vmatpush1.msra.mxu0 %v9234
        %9401 = vmatprep.subr.mxu0 0.0
        %9402 = vmatpush1.msra.mxu0 %v9233
        %9403 = vmatprep.subr.mxu0 0.0
        %9404 = vmatpush1.msra.mxu0 %v9232
        %9405 = vmatprep.subr.mxu0 0.0
        %9406 = vmatpush1.msra.mxu0 %v9203
        %9407 = vmatprep.subr.mxu0 0.0
        %9408 = vmatpush1.msra.mxu0 %v9202
        %9409 = vmatprep.subr.mxu0 0.0
        %9410 = vmatpush1.msra.mxu0 %v9201
        %9411 = vmatprep.subr.mxu0 0.0
        %9412 = vmatpush1.msra.mxu0 %v9200
        %9413 = vmatprep.subr.mxu0 0.0
        %9414 = vmatpush2.msra.mxu0 0.0
        %9415 = vmatprep.subr.mxu0 0.0
        %9416 = vmatpush2.msra.mxu0 0.0
        %9417 = vmatprep.subr.mxu0 0.0
        %9418 = vmatpush2.msra.mxu0 0.0
        %9419 = vmatprep.subr.mxu0 0.0
        %9420 = vmatpush2.msra.mxu0 %v475
        %9421 = vmatprep.subr.mxu0 0.0
        %9422 = vmatpush2.msra.mxu0 %v9355
        %9423 = vmatprep.subr.mxu0 0.0
        %9424 = vmatpush2.msra.mxu0 %v9354
        %9425 = vmatprep.subr.mxu0 0.0
        %9426 = vmatpush2.msra.mxu0 %v9353
        %9427 = vmatprep.subr.mxu0 0.0
        %9428 = vmatpush2.msra.mxu0 %v9352
        %9429 = vmatprep.subr.mxu0 0.0
        %9430 = vmatpush2.msra.mxu0 %v9331
        %9431 = vmatprep.subr.mxu0 0.0
        %9432 = vmatpush2.msra.mxu0 %v9330
        %9433 = vmatprep.subr.mxu0 0.0
        %9434 = vmatpush2.msra.mxu0 %v9329
        %9435 = vmatprep.subr.mxu0 0.0
        %9436 = vmatpush2.msra.mxu0 %v9328
        %9437 = vmatprep.subr.mxu0 0.0
        %9438 = vmatpush2.msra.mxu0 %v9307
        %9439 = vmatprep.subr.mxu0 0.0
        %9440 = vmatpush2.msra.mxu0 %v9306
        %9441 = vmatprep.subr.mxu0 0.0
        %9442 = vmatpush2.msra.mxu0 %v9305
        %9443 = vmatprep.subr.mxu0 0.0
        %9444 = vmatpush2.msra.mxu0 %v9304
        %9445 = vmatprep.mubr.f32.mxu0 %v9370
        %9446 = vmatmul.mubr.f32.gmra.mxu0 %v9361
        %v9447 = vpop.f32.mrf.mxu0
        %v9448 = vadd.f32 0.0, %v9447
        %v9449 = vpop.f32.mrf.mxu0
        %9450 = vmatprep.mubr.f32.mxu0 %v9373
        %9451 = vmatmul.mubr.f32.gmra.mxu0 %v9363
        %v9452 = vpop.f32.mrf.mxu0
        %v9453 = vadd.f32 0.0, %v9452
        %v9454 = vpop.f32.mrf.mxu0
        %9455 = vmatprep.mubr.f32.mxu0 %v9376
        %9456 = vmatmul.mubr.f32.gmra.mxu0 %v9365
        %v9457 = vpop.f32.mrf.mxu0
        %v9458 = vadd.f32 0.0, %v9457
        %v9459 = vpop.f32.mrf.mxu0
        %9460 = vmatprep.mubr.f32.mxu0 %v9379
        %9461 = vmatmul.mubr.f32.gmra.mxu0 %v9367
        %v9462 = vpop.f32.mrf.mxu0
        %v9463 = vadd.f32 0.0, %v9462
        %v9464 = vpop.f32.mrf.mxu0
        %9465 = vdwg.mxu0
        %v9466 = vmax.f32 %v9448, 0.0
        %v9467 = vmax.f32 %v9453, 0.0
        %v9468 = vmax.f32 %v9458, 0.0
        %v9469 = vmax.f32 %v9463, 0.0
        %9474 = vrot.lane.b32.xlu0 %v9466, 1
        %v9475 = vpop.permute.xlu0 %9474
        %9476 = vrot.lane.b32.xlu0 %v9467, 1
        %v9477 = vpop.permute.xlu0 %9476
        %9478 = vrot.lane.b32.xlu0 %v9468, 1
        %v9479 = vpop.permute.xlu0 %9478
        %9480 = vrot.lane.b32.xlu0 %v9469, 1
        %v9481 = vpop.permute.xlu0 %9480
        %v9486 = vsel %vm2381, 0.0, %v9475
        %v9487 = vsel %vm2381, 0.0, %v9477
        %v9488 = vsel %vm2381, 0.0, %v9479
        %v9489 = vsel %vm2381, 0.0, %v9481
        %v9490 = vsel %vm2381, %v9475, 0.0
        %v9491 = vsel %vm2381, %v9477, 0.0
        %v9492 = vsel %vm2381, %v9479, 0.0
        %v9493 = vsel %vm2381, %v9481, 0.0
        %9502 = vrot.lane.b32.xlu0 %v9486, 127
        %v9503 = vpop.permute.xlu0 %9502
        %9504 = vrot.lane.b32.xlu0 %v9490, 127
        %v9505 = vpop.permute.xlu0 %9504
        %9506 = vrot.lane.b32.xlu0 %v9487, 127
        %v9507 = vpop.permute.xlu0 %9506
        %9508 = vrot.lane.b32.xlu0 %v9491, 127
        %v9509 = vpop.permute.xlu0 %9508
        %9510 = vrot.lane.b32.xlu0 %v9488, 127
        %v9511 = vpop.permute.xlu0 %9510
        %9512 = vrot.lane.b32.xlu0 %v9492, 127
        %v9513 = vpop.permute.xlu0 %9512
        %9514 = vrot.lane.b32.xlu0 %v9489, 127
        %v9515 = vpop.permute.xlu0 %9514
        %9516 = vrot.lane.b32.xlu0 %v9493, 127
        %v9517 = vpop.permute.xlu0 %9516
        %v9518 = vsel %vm230, %v9503, %v9505
        %v9519 = vsel %vm230, %v9507, %v9509
        %v9520 = vsel %vm230, %v9511, %v9513
        %v9521 = vsel %vm230, %v9515, %v9517
        %9526 = vrot.lane.b32.xlu0 %v9486, 126
        %v9527 = vpop.permute.xlu0 %9526
        %9528 = vrot.lane.b32.xlu0 %v9490, 126
        %v9529 = vpop.permute.xlu0 %9528
        %9530 = vrot.lane.b32.xlu0 %v9487, 126
        %v9531 = vpop.permute.xlu0 %9530
        %9532 = vrot.lane.b32.xlu0 %v9491, 126
        %v9533 = vpop.permute.xlu0 %9532
        %9534 = vrot.lane.b32.xlu0 %v9488, 126
        %v9535 = vpop.permute.xlu0 %9534
        %9536 = vrot.lane.b32.xlu0 %v9492, 126
        %v9537 = vpop.permute.xlu0 %9536
        %9538 = vrot.lane.b32.xlu0 %v9489, 126
        %v9539 = vpop.permute.xlu0 %9538
        %9540 = vrot.lane.b32.xlu0 %v9493, 126
        %v9541 = vpop.permute.xlu0 %9540
        %v9542 = vsel %vm239, %v9527, %v9529
        %v9543 = vsel %vm239, %v9531, %v9533
        %v9544 = vsel %vm239, %v9535, %v9537
        %v9545 = vsel %vm239, %v9539, %v9541
        %s9550 = scalar_lea.vmem [#allocation5], 6528
        %v9551 = vld [vmem:[%s9550] sm:$0xff]
        %v9552 = vld [vmem:[%s9550 + $0x18] sm:$0xff]
        %v9553 = vld [vmem:[%s9550 + $0x30] sm:$0xff]
        %v9555 = vsel %vm7967, %v9551, 0
        %v9558 = vsel %vm7967, %v9552, 0
        %v9561 = vsel %vm7967, %v9553, 0
        %9563 = vmatprep.subr.mxu0 0.0
        %9564 = vmatpush1.msra.mxu0 0.0
        %9565 = vmatprep.subr.mxu0 0.0
        %9566 = vmatpush1.msra.mxu0 0.0
        %9567 = vmatprep.subr.mxu0 0.0
        %9568 = vmatpush1.msra.mxu0 0.0
        %9569 = vmatprep.subr.mxu0 0.0
        %9570 = vmatpush1.msra.mxu0 %v475
        %9571 = vmatprep.subr.mxu0 0.0
        %9572 = vmatpush1.msra.mxu0 %v9545
        %9573 = vmatprep.subr.mxu0 0.0
        %9574 = vmatpush1.msra.mxu0 %v9544
        %9575 = vmatprep.subr.mxu0 0.0
        %9576 = vmatpush1.msra.mxu0 %v9543
        %9577 = vmatprep.subr.mxu0 0.0
        %9578 = vmatpush1.msra.mxu0 %v9542
        %9579 = vmatprep.subr.mxu0 0.0
        %9580 = vmatpush1.msra.mxu0 %v9521
        %9581 = vmatprep.subr.mxu0 0.0
        %9582 = vmatpush1.msra.mxu0 %v9520
        %9583 = vmatprep.subr.mxu0 0.0
        %9584 = vmatpush1.msra.mxu0 %v9519
        %9585 = vmatprep.subr.mxu0 0.0
        %9586 = vmatpush1.msra.mxu0 %v9518
        %9587 = vmatprep.subr.mxu0 0.0
        %9588 = vmatpush1.msra.mxu0 %v9489
        %9589 = vmatprep.subr.mxu0 0.0
        %9590 = vmatpush1.msra.mxu0 %v9488
        %9591 = vmatprep.subr.mxu0 0.0
        %9592 = vmatpush1.msra.mxu0 %v9487
        %9593 = vmatprep.subr.mxu0 0.0
        %9594 = vmatpush1.msra.mxu0 %v9486
        %9595 = vmatprep.subr.mxu0 0.0
        %9596 = vmatpush2.msra.mxu0 0.0
        %9597 = vmatprep.subr.mxu0 0.0
        %9598 = vmatpush2.msra.mxu0 0.0
        %9599 = vmatprep.subr.mxu0 0.0
        %9600 = vmatpush2.msra.mxu0 0.0
        %9601 = vmatprep.subr.mxu0 0.0
        %9602 = vmatpush2.msra.mxu0 0.0
        %9603 = vmatprep.subr.mxu0 0.0
        %9604 = vmatpush2.msra.mxu0 0.0
        %9605 = vmatprep.subr.mxu0 0.0
        %9606 = vmatpush2.msra.mxu0 0.0
        %9607 = vmatprep.subr.mxu0 0.0
        %9608 = vmatpush2.msra.mxu0 0.0
        %9609 = vmatprep.subr.mxu0 0.0
        %9610 = vmatpush2.msra.mxu0 0.0
        %9611 = vmatprep.subr.mxu0 0.0
        %9612 = vmatpush2.msra.mxu0 0.0
        %9613 = vmatprep.subr.mxu0 0.0
        %9614 = vmatpush2.msra.mxu0 0.0
        %9615 = vmatprep.subr.mxu0 0.0
        %9616 = vmatpush2.msra.mxu0 0.0
        %9617 = vmatprep.subr.mxu0 0.0
        %9618 = vmatpush2.msra.mxu0 0.0
        %9619 = vmatprep.subr.mxu0 0.0
        %9620 = vmatpush2.msra.mxu0 0.0
        %9621 = vmatprep.subr.mxu0 0.0
        %9622 = vmatpush2.msra.mxu0 0.0
        %9623 = vmatprep.subr.mxu0 0.0
        %9624 = vmatpush2.msra.mxu0 0.0
        %9625 = vmatprep.subr.mxu0 0.0
        %9626 = vmatpush2.msra.mxu0 0.0
        %9627 = vmatprep.mubr.f32.mxu0 0.0
        %9628 = vmatmul.mubr.f32.gmra.mxu0 %v9555
        %v9629 = vpop.f32.mrf.mxu0
        %v9630 = vadd.f32 0.0, %v9629
        %v9631 = vpop.f32.mrf.mxu0
        %9632 = vmatprep.mubr.f32.mxu0 0.0
        %9633 = vmatmul.mubr.f32.gmra.mxu0 %v9558
        %v9634 = vpop.f32.mrf.mxu0
        %v9635 = vadd.f32 0.0, %v9634
        %v9636 = vpop.f32.mrf.mxu0
        %9637 = vmatprep.mubr.f32.mxu0 0.0
        %9638 = vmatmul.mubr.f32.gmra.mxu0 %v9561
        %v9639 = vpop.f32.mrf.mxu0
        %v9640 = vadd.f32 0.0, %v9639
        %v9641 = vpop.f32.mrf.mxu0
        %9642 = vdwg.mxu0
        %v9643 = vmax.f32 %v9630, 0.0
        %v9644 = vmax.f32 %v9635, 0.0
        %v9645 = vmax.f32 %v9640, 0.0
        %9649 = vrot.lane.b32.xlu0 %v9643, 1
        %v9650 = vpop.permute.xlu0 %9649
        %9651 = vrot.lane.b32.xlu0 %v9644, 1
        %v9652 = vpop.permute.xlu0 %9651
        %9653 = vrot.lane.b32.xlu0 %v9645, 1
        %v9654 = vpop.permute.xlu0 %9653
        %v9658 = vsel %vm2381, 0.0, %v9650
        %v9659 = vsel %vm2381, 0.0, %v9652
        %v9660 = vsel %vm2381, 0.0, %v9654
        %v9661 = vsel %vm2381, %v9650, 0.0
        %v9662 = vsel %vm2381, %v9652, 0.0
        %v9663 = vsel %vm2381, %v9654, 0.0
        %9670 = vrot.lane.b32.xlu0 %v9658, 127
        %v9671 = vpop.permute.xlu0 %9670
        %9672 = vrot.lane.b32.xlu0 %v9661, 127
        %v9673 = vpop.permute.xlu0 %9672
        %9674 = vrot.lane.b32.xlu0 %v9659, 127
        %v9675 = vpop.permute.xlu0 %9674
        %9676 = vrot.lane.b32.xlu0 %v9662, 127
        %v9677 = vpop.permute.xlu0 %9676
        %9678 = vrot.lane.b32.xlu0 %v9660, 127
        %v9679 = vpop.permute.xlu0 %9678
        %9680 = vrot.lane.b32.xlu0 %v9663, 127
        %v9681 = vpop.permute.xlu0 %9680
        %v9682 = vsel %vm230, %v9671, %v9673
        %v9683 = vsel %vm230, %v9675, %v9677
        %v9684 = vsel %vm230, %v9679, %v9681
        %9688 = vrot.lane.b32.xlu0 %v9658, 126
        %v9689 = vpop.permute.xlu0 %9688
        %9690 = vrot.lane.b32.xlu0 %v9661, 126
        %v9691 = vpop.permute.xlu0 %9690
        %9692 = vrot.lane.b32.xlu0 %v9659, 126
        %v9693 = vpop.permute.xlu0 %9692
        %9694 = vrot.lane.b32.xlu0 %v9662, 126
        %v9695 = vpop.permute.xlu0 %9694
        %9696 = vrot.lane.b32.xlu0 %v9660, 126
        %v9697 = vpop.permute.xlu0 %9696
        %9698 = vrot.lane.b32.xlu0 %v9663, 126
        %v9699 = vpop.permute.xlu0 %9698
        %v9700 = vsel %vm239, %v9689, %v9691
        %v9701 = vsel %vm239, %v9693, %v9695
        %v9702 = vsel %vm239, %v9697, %v9699
        %s9706 = scalar_lea.vmem [#allocation5], 6720
        %v9707 = vld [vmem:[%s9706] sm:$0xff]
        %v9708 = vld [vmem:[%s9706 + $0x18] sm:$0xff]
        %v9710 = vsel %vm1484, %v9707, 0
        %v9713 = vsel %vm1484, %v9708, 0
        %9715 = vmatprep.subr.mxu0 0.0
        %9716 = vmatpush1.msra.mxu0 0.0
        %9717 = vmatprep.subr.mxu0 0.0
        %9718 = vmatpush1.msra.mxu0 0.0
        %9719 = vmatprep.subr.mxu0 0.0
        %9720 = vmatpush1.msra.mxu0 0.0
        %9721 = vmatprep.subr.mxu0 0.0
        %9722 = vmatpush1.msra.mxu0 0.0
        %9723 = vmatprep.subr.mxu0 0.0
        %9724 = vmatpush1.msra.mxu0 0.0
        %9725 = vmatprep.subr.mxu0 0.0
        %9726 = vmatpush1.msra.mxu0 0.0
        %9727 = vmatprep.subr.mxu0 0.0
        %9728 = vmatpush1.msra.mxu0 %v475
        %9729 = vmatprep.subr.mxu0 0.0
        %9730 = vmatpush1.msra.mxu0 %v9702
        %9731 = vmatprep.subr.mxu0 0.0
        %9732 = vmatpush1.msra.mxu0 %v9701
        %9733 = vmatprep.subr.mxu0 0.0
        %9734 = vmatpush1.msra.mxu0 %v9700
        %9735 = vmatprep.subr.mxu0 0.0
        %9736 = vmatpush1.msra.mxu0 %v9684
        %9737 = vmatprep.subr.mxu0 0.0
        %9738 = vmatpush1.msra.mxu0 %v9683
        %9739 = vmatprep.subr.mxu0 0.0
        %9740 = vmatpush1.msra.mxu0 %v9682
        %9741 = vmatprep.subr.mxu0 0.0
        %9742 = vmatpush1.msra.mxu0 %v9660
        %9743 = vmatprep.subr.mxu0 0.0
        %9744 = vmatpush1.msra.mxu0 %v9659
        %9745 = vmatprep.subr.mxu0 0.0
        %9746 = vmatpush1.msra.mxu0 %v9658
        %9747 = vmatprep.subr.mxu0 0.0
        %9748 = vmatpush2.msra.mxu0 0.0
        %9749 = vmatprep.subr.mxu0 0.0
        %9750 = vmatpush2.msra.mxu0 0.0
        %9751 = vmatprep.subr.mxu0 0.0
        %9752 = vmatpush2.msra.mxu0 0.0
        %9753 = vmatprep.subr.mxu0 0.0
        %9754 = vmatpush2.msra.mxu0 0.0
        %9755 = vmatprep.subr.mxu0 0.0
        %9756 = vmatpush2.msra.mxu0 0.0
        %9757 = vmatprep.subr.mxu0 0.0
        %9758 = vmatpush2.msra.mxu0 0.0
        %9759 = vmatprep.subr.mxu0 0.0
        %9760 = vmatpush2.msra.mxu0 0.0
        %9761 = vmatprep.subr.mxu0 0.0
        %9762 = vmatpush2.msra.mxu0 0.0
        %9763 = vmatprep.subr.mxu0 0.0
        %9764 = vmatpush2.msra.mxu0 0.0
        %9765 = vmatprep.subr.mxu0 0.0
        %9766 = vmatpush2.msra.mxu0 0.0
        %9767 = vmatprep.subr.mxu0 0.0
        %9768 = vmatpush2.msra.mxu0 0.0
        %9769 = vmatprep.subr.mxu0 0.0
        %9770 = vmatpush2.msra.mxu0 0.0
        %9771 = vmatprep.subr.mxu0 0.0
        %9772 = vmatpush2.msra.mxu0 0.0
        %9773 = vmatprep.subr.mxu0 0.0
        %9774 = vmatpush2.msra.mxu0 0.0
        %9775 = vmatprep.subr.mxu0 0.0
        %9776 = vmatpush2.msra.mxu0 0.0
        %9777 = vmatprep.subr.mxu0 0.0
        %9778 = vmatpush2.msra.mxu0 0.0
        %9779 = vmatprep.mubr.f32.mxu0 0.0
        %9780 = vmatmul.mubr.f32.gmra.mxu0 %v9710
        %v9781 = vpop.f32.mrf.mxu0
        %v9782 = vadd.f32 0.0, %v9781
        %v9783 = vpop.f32.mrf.mxu0
        %9784 = vmatprep.mubr.f32.mxu0 0.0
        %9785 = vmatmul.mubr.f32.gmra.mxu0 %v9713
        %v9786 = vpop.f32.mrf.mxu0
        %v9787 = vadd.f32 0.0, %v9786
        %v9788 = vpop.f32.mrf.mxu0
        %9789 = vdwg.mxu0
        %v9790 = vmax.f32 %v9782, 0.0
        %v9791 = vmax.f32 %v9787, 0.0
        %s9792 = scalar_lea.vmem [#allocation5], 6912
        %v9793 = vld [vmem:[%s9792] sm:$0x3]
        %v9795 = vsel %vm2388, %v9793, 0
        %9797 = vmatprep.subr.mxu0 0.0
        %9798 = vmatpush1.msra.mxu0 0.0
        %9799 = vmatprep.subr.mxu0 0.0
        %9800 = vmatpush1.msra.mxu0 0.0
        %9801 = vmatprep.subr.mxu0 0.0
        %9802 = vmatpush1.msra.mxu0 0.0
        %9803 = vmatprep.subr.mxu0 0.0
        %9804 = vmatpush1.msra.mxu0 0.0
        %9805 = vmatprep.subr.mxu0 0.0
        %9806 = vmatpush1.msra.mxu0 0.0
        %9807 = vmatprep.subr.mxu0 0.0
        %9808 = vmatpush1.msra.mxu0 0.0
        %9809 = vmatprep.subr.mxu0 0.0
        %9810 = vmatpush1.msra.mxu0 0.0
        %9811 = vmatprep.subr.mxu0 0.0
        %9812 = vmatpush1.msra.mxu0 0.0
        %9813 = vmatprep.subr.mxu0 0.0
        %9814 = vmatpush1.msra.mxu0 0.0
        %9815 = vmatprep.subr.mxu0 0.0
        %9816 = vmatpush1.msra.mxu0 0.0
        %9817 = vmatprep.subr.mxu0 0.0
        %9818 = vmatpush1.msra.mxu0 0.0
        %9819 = vmatprep.subr.mxu0 0.0
        %9820 = vmatpush1.msra.mxu0 0.0
        %9821 = vmatprep.subr.mxu0 0.0
        %9822 = vmatpush1.msra.mxu0 0.0
        %9823 = vmatprep.subr.mxu0 0.0
        %9824 = vmatpush1.msra.mxu0 %v475
        %9825 = vmatprep.subr.mxu0 0.0
        %9826 = vmatpush1.msra.mxu0 %v9791
        %9827 = vmatprep.subr.mxu0 0.0
        %9828 = vmatpush1.msra.mxu0 %v9790
        %9829 = vmatprep.subr.mxu0 0.0
        %9830 = vmatpush2.msra.mxu0 0.0
        %9831 = vmatprep.subr.mxu0 0.0
        %9832 = vmatpush2.msra.mxu0 0.0
        %9833 = vmatprep.subr.mxu0 0.0
        %9834 = vmatpush2.msra.mxu0 0.0
        %9835 = vmatprep.subr.mxu0 0.0
        %9836 = vmatpush2.msra.mxu0 0.0
        %9837 = vmatprep.subr.mxu0 0.0
        %9838 = vmatpush2.msra.mxu0 0.0
        %9839 = vmatprep.subr.mxu0 0.0
        %9840 = vmatpush2.msra.mxu0 0.0
        %9841 = vmatprep.subr.mxu0 0.0
        %9842 = vmatpush2.msra.mxu0 0.0
        %9843 = vmatprep.subr.mxu0 0.0
        %9844 = vmatpush2.msra.mxu0 0.0
        %9845 = vmatprep.subr.mxu0 0.0
        %9846 = vmatpush2.msra.mxu0 0.0
        %9847 = vmatprep.subr.mxu0 0.0
        %9848 = vmatpush2.msra.mxu0 0.0
        %9849 = vmatprep.subr.mxu0 0.0
        %9850 = vmatpush2.msra.mxu0 0.0
        %9851 = vmatprep.subr.mxu0 0.0
        %9852 = vmatpush2.msra.mxu0 0.0
        %9853 = vmatprep.subr.mxu0 0.0
        %9854 = vmatpush2.msra.mxu0 0.0
        %9855 = vmatprep.subr.mxu0 0.0
        %9856 = vmatpush2.msra.mxu0 0.0
        %9857 = vmatprep.subr.mxu0 0.0
        %9858 = vmatpush2.msra.mxu0 0.0
        %9859 = vmatprep.subr.mxu0 0.0
        %9860 = vmatpush2.msra.mxu0 0.0
        %9861 = vmatprep.mubr.f32.mxu0 0.0
        %9862 = vmatmul.mubr.f32.gmra.mxu0 %v9795
        %v9863 = vpop.f32.mrf.mxu0
        %v9864 = vadd.f32 0.0, %v9863
        %v9865 = vpop.f32.mrf.mxu0
        %9866 = vdwg.mxu0
        %9867 = vst [vmem:[%s208] sm:$0x3] %v9864
        %p9868 = scmp.lt.s32.totalorder %s22, 1
        %s9869 = scalar_select %p9868, %s22, 1
        %s9870 = smul.addr %s9869, 2
        %s9871 = smul.addr %s9870, 8
        %s9872 = scalar_lea.vmem %s2, %s9871
        %s9873 = sand.u32 %s103, 1
        %s9874 = scalar_lea.sflag [#allocation4], %s9873
        %s9875 = sand.u32 %s103, 1
        %s9876 = smul.addr %s9875, 2
        %s9877 = scalar_lea.vmem [#allocation7], %s9876
        // Predicated region
        $region37: #{ecg_autoencoder_forward.1} parent=27 // pred_check
          %p9878 = pneg %p87
        $region38: #{ecg_autoencoder_forward.1} parent=27 // pred_check_branch
          %9880 = sbr.rel (%p9878) target = $region40
        $region39: #{ecg_autoencoder_forward.1} parent=27 // pred_region
          _
        $region40: #{ecg_autoencoder_forward.1} parent=27 // pred_fallthru
          _
        // Predicated region
        $region41: #{ecg_autoencoder_forward.1} parent=27 // pred_check
          %p9881 = pneg %p113
        $region42: #{ecg_autoencoder_forward.1} parent=27 // pred_check_branch
          %9883 = sbr.rel (%p9881) target = $region44
        $region43: #{ecg_autoencoder_forward.1} parent=27 // pred_region
          %s9885 = ssub.s32 32, 32
          %9886 = vsyncadd %s9874, %s9885
          %s9887 = smul.addr %s22, 32
          %s9888 = scalar_lea.hbm %s3, %s9887
          %s9890 = sshll.u32 %s9877, 4
          %s9891 = int_to_ptr.vmem [resolvable:$true] %s9890
          %9893 = dma.vmem_to_hbm [thread:$0]  %s9891, 32, %s9888, %s9874
        $region44: #{ecg_autoencoder_forward.1} parent=27 // pred_fallthru
          _
      $region28: #{ecg_autoencoder_forward.1} parent=5 // pred_fallthru
        _
      %p9894 = scmp.le.s32.totalorder 2, %s17
      // Predicated region
      $region45: #{ecg_autoencoder_forward.1} parent=5 // pred_check
        %p9895 = pneg %p9894
      $region46: #{ecg_autoencoder_forward.1} parent=5 // pred_check_branch
        %9897 = sbr.rel (%p9895) target = $region48
      $region47: #{ecg_autoencoder_forward.1} parent=5 // pred_region
        %s9898 = ssub.s32 %s17, 2
        // Predicated region
        $region49: #{ecg_autoencoder_forward.1} parent=47 // pred_check
          %p9899 = pneg %p93
        $region50: #{ecg_autoencoder_forward.1} parent=47 // pred_check_branch
          %9901 = sbr.rel (%p9899) target = $region52
        $region51: #{ecg_autoencoder_forward.1} parent=47 // pred_region
          %p9902 = scmp.lt.s32.totalorder %s23, 1
          %s9903 = scalar_select %p9902, %s23, 1
          %s9904 = smul.addr %s9903, 2
          %s9905 = smul.addr %s9904, 8
          %s9906 = scalar_lea.vmem %s2, %s9905
        $region52: #{ecg_autoencoder_forward.1} parent=47 // pred_fallthru
          _
        // Predicated region
        $region53: #{ecg_autoencoder_forward.1} parent=47 // pred_check
          %p9907 = pneg %p119
        $region54: #{ecg_autoencoder_forward.1} parent=47 // pred_check_branch
          %9909 = sbr.rel (%p9907) target = $region56
        $region55: #{ecg_autoencoder_forward.1} parent=47 // pred_region
          %s9910 = sand.u32 %s104, 1
          %s9911 = scalar_lea.sflag [#allocation4], %s9910
          %s9912 = sand.u32 %s104, 1
          %s9913 = smul.addr %s9912, 2
          %s9914 = scalar_lea.vmem [#allocation7], %s9913
          %9915 = dma.done %s9911, 32
        $region56: #{ecg_autoencoder_forward.1} parent=47 // pred_fallthru
          _
      $region48: #{ecg_autoencoder_forward.1} parent=5 // pred_fallthru
        _
    $region6: #{ecg_autoencoder_forward.1} parent=1 // loop_footer
      %s21 = sadd.s32 1, %s17
    $region7: #{ecg_autoencoder_forward.1} parent=1 // loop_footer_branch
      %16 = sbr.rel target = $region3
    $region8: #{ecg_autoencoder_forward.1} parent=1 // loop_exit
      _
    %9916 = vsyncpa [#allocation3], 1
    %s9917 = scalar_lea.sflag [#allocation3], 1
    %9918 = vsyncpa %s9917, 1
    %9919 = vsyncpa [#allocation6], 1
    %9920 = vsyncpa [#allocation4], 1
    %s9921 = scalar_lea.sflag [#allocation4], 1
    %9922 = vsyncpa %s9921, 1

</llo_original>
